<compile_context>
chip_gen: v5e
topology: v5e:2x2
jax: 0.10.0
libtpu: 0.0.40
codegen_flags: <defaults>
</compile_context>

<pallas_src>
import functools
import numpy as np
import jax
import jax.numpy as jnp
from jax.experimental import pallas as pl
from jax.experimental.pallas import tpu as pltpu

EPS = 1e-5          # InstanceNorm eps
SLOPE = 0.01        # LeakyReLU negative_slope

# ------------------------- model hyper-parameters -------------------------
INPUT_CHANNELS = 4
N_STAGES = 3
FEATURES = [8, 16, 32]
KERNELS = [3, 3, 3]
STRIDES = [1, 2, 2]
N_BLOCKS = [1, 2, 1]
NUM_CLASSES = 2
N_CONV_DEC = [1, 1]

# grid=(batch,) everywhere; batch is an independent ("parallel") axis -> v7x megacore can split it.
_CP = pltpu.CompilerParams(dimension_semantics=("parallel",))


# ============================ Pallas kernels ============================
# Every kernel sees one batch element: cols (1, M=Ho*Wo, K), weights (K, C),
# gamma/beta/bias as lane-major (1, C) rows, output (1, M, C) f32.

def _in_norm(y, g, b, eps):
    """Per-channel InstanceNorm over the spatial axis of one image (biased variance)."""
    mean = jnp.mean(y, axis=0, keepdims=True)
    yc = y - mean
    var = jnp.mean(yc * yc, axis=0, keepdims=True)
    return yc * jax.lax.rsqrt(var + eps) * g + b


def _leaky(z, slope):
    return jnp.maximum(z, slope * z)       # single VPU op; slope=1.0 -> identity


def _conv_in_act_kernel(cols_ref, w_ref, g_ref, b_ref, o_ref, *, eps, slope):
    y = jnp.dot(cols_ref[0], w_ref[...], preferred_element_type=jnp.float32)
    o_ref[0] = _leaky(_in_norm(y, g_ref[...], b_ref[...], eps), slope)


def _conv_in_add_act_kernel(cols_ref, w_ref, g_ref, b_ref, skip_ref, o_ref, *, eps, slope):
    # BasicBlockD tail (identity skip): LeakyReLU(IN(conv2(x)) + skip)
    y = jnp.dot(cols_ref[0], w_ref[...], preferred_element_type=jnp.float32)
    z = _in_norm(y, g_ref[...], b_ref[...], eps) + skip_ref[0]
    o_ref[0] = _leaky(z, slope)


def _conv_in_projadd_act_kernel(cols_ref, w_ref, g_ref, b_ref,
                                scols_ref, sw_ref, sg_ref, sb_ref,
                                o_ref, *, eps, slope):
    # BasicBlockD tail (projection skip): LeakyReLU(IN(conv2(x)) + IN(conv1x1(avgpool(x_in))))
    y = jnp.dot(cols_ref[0], w_ref[...], preferred_element_type=jnp.float32)
    z = _in_norm(y, g_ref[...], b_ref[...], eps)
    sy = jnp.dot(scols_ref[0], sw_ref[...], preferred_element_type=jnp.float32)
    sz = _in_norm(sy, sg_ref[...], sb_ref[...], eps)
    o_ref[0] = _leaky(z + sz, slope)


def _matmul_bias_kernel(cols_ref, w_ref, b_ref, o_ref):
    o_ref[0] = jnp.dot(cols_ref[0], w_ref[...], preferred_element_type=jnp.float32) + b_ref[...]


def _matmul_kernel(cols_ref, w_ref, o_ref):
    o_ref[0] = jnp.dot(cols_ref[0], w_ref[...], preferred_element_type=jnp.float32)


# ============================ spec helpers ============================

def _row_spec(M, K):
    # full (M, K) slab per batch element; last two dims equal the full array dims -> no padding.
    return pl.BlockSpec((1, M, K), lambda n: (n, 0, 0))


def _shared_spec(R, C):
    return pl.BlockSpec((R, C), lambda n: (0, 0))


# ============================ fused layer wrappers ============================

def _im2col_nhwc(x, k, stride):
    """NHWC (N,H,W,C) -> (N, Ho*Wo, k*k*C) bf16 columns (tap-major, channel-minor)."""
    N, H, W, C = x.shape
    pad = (k - 1) // 2
    Ho = (H + 2 * pad - k) // stride + 1
    Wo = (W + 2 * pad - k) // stride + 1
    if k == 1 and stride == 1:
        return x.reshape(N, H * W, C).astype(jnp.bfloat16), H, W
    xp = jnp.pad(x, ((0, 0), (pad, pad), (pad, pad), (0, 0)))
    taps = [xp[:, di:di + stride * Ho:stride, dj:dj + stride * Wo:stride, :]
            for di in range(k) for dj in range(k)]
    cols = jnp.concatenate(taps, axis=-1).reshape(N, Ho * Wo, k * k * C)
    return cols.astype(jnp.bfloat16), Ho, Wo


def conv_in_act(x, p, k, stride, slope):
    """ConvDropoutNormReLU: fused conv (bf16 matmul) + InstanceNorm + LeakyReLU. One pallas_call."""
    N = x.shape[0]
    cols, Ho, Wo = _im2col_nhwc(x, k, stride)
    M, K = cols.shape[1], cols.shape[2]
    C = p['w'].shape[1]
    out = pl.pallas_call(
        functools.partial(_conv_in_act_kernel, eps=EPS, slope=slope),
        out_shape=jax.ShapeDtypeStruct((N, M, C), jnp.float32),
        grid=(N,),
        in_specs=[_row_spec(M, K), _shared_spec(K, C),
                  _shared_spec(1, C), _shared_spec(1, C)],
        out_specs=_row_spec(M, C),
        compiler_params=_CP,
    )(cols, p['w'], p['gamma'], p['beta'])
    return out.reshape(N, Ho, Wo, C)


def conv_in_add_act(x, p, k, skip, slope):
    """conv2 + IN + residual add + LeakyReLU in one pallas_call (identity skip)."""
    N = x.shape[0]
    cols, Ho, Wo = _im2col_nhwc(x, k, 1)
    M, K = cols.shape[1], cols.shape[2]
    C = p['w'].shape[1]
    skip2 = skip.reshape(N, M, C)
    out = pl.pallas_call(
        functools.partial(_conv_in_add_act_kernel, eps=EPS, slope=slope),
        out_shape=jax.ShapeDtypeStruct((N, M, C), jnp.float32),
        grid=(N,),
        in_specs=[_row_spec(M, K), _shared_spec(K, C),
                  _shared_spec(1, C), _shared_spec(1, C), _row_spec(M, C)],
        out_specs=_row_spec(M, C),
        compiler_params=_CP,
    )(cols, p['w'], p['gamma'], p['beta'], skip2)
    return out.reshape(N, Ho, Wo, C)


def conv_in_projadd_act(x, p, k, skip_in, sp, slope):
    """conv2 + IN, skip 1x1 conv + IN, residual add + LeakyReLU — one pallas_call."""
    N = x.shape[0]
    cols, Ho, Wo = _im2col_nhwc(x, k, 1)
    M, K = cols.shape[1], cols.shape[2]
    C = p['w'].shape[1]
    scols = skip_in.reshape(N, M, skip_in.shape[-1]).astype(jnp.bfloat16)
    SK = scols.shape[-1]
    out = pl.pallas_call(
        functools.partial(_conv_in_projadd_act_kernel, eps=EPS, slope=slope),
        out_shape=jax.ShapeDtypeStruct((N, M, C), jnp.float32),
        grid=(N,),
        in_specs=[_row_spec(M, K), _shared_spec(K, C),
                  _shared_spec(1, C), _shared_spec(1, C),
                  _row_spec(M, SK), _shared_spec(SK, C),
                  _shared_spec(1, C), _shared_spec(1, C)],
        out_specs=_row_spec(M, C),
        compiler_params=_CP,
    )(cols, p['w'], p['gamma'], p['beta'],
      scols, sp['w'], sp['gamma'], sp['beta'])
    return out.reshape(N, Ho, Wo, C)


def transp_conv(x, wmat, s, cout):
    """ConvTranspose2d with kernel_size == stride: matmul + pixel shuffle."""
    N, H, W, Cin = x.shape
    xf = x.reshape(N, H * W, Cin).astype(jnp.bfloat16)
    P = s * s * cout
    y = pl.pallas_call(
        _matmul_kernel,
        out_shape=jax.ShapeDtypeStruct((N, H * W, P), jnp.float32),
        grid=(N,),
        in_specs=[_row_spec(H * W, Cin), _shared_spec(Cin, P)],
        out_specs=_row_spec(H * W, P),
        compiler_params=_CP,
    )(xf, wmat)
    y = y.reshape(N, H, W, s, s, cout).transpose(0, 1, 3, 2, 4, 5)
    return y.reshape(N, H * s, W * s, cout)


def seg_head(x, p):
    """1x1 conv + bias (bias folded into the kernel epilogue)."""
    N, H, W, C = x.shape
    xf = x.reshape(N, H * W, C).astype(jnp.bfloat16)
    nc = p['w'].shape[1]
    y = pl.pallas_call(
        _matmul_bias_kernel,
        out_shape=jax.ShapeDtypeStruct((N, H * W, nc), jnp.float32),
        grid=(N,),
        in_specs=[_row_spec(H * W, C), _shared_spec(C, nc), _shared_spec(1, nc)],
        out_specs=_row_spec(H * W, nc),
        compiler_params=_CP,
    )(xf, p['w'], p['b'])
    return y.reshape(N, H, W, nc)


def avg_pool(x, s):
    N, H, W, C = x.shape
    return x.reshape(N, H // s, s, W // s, s, C).mean(axis=(2, 4))


# ============================ network blocks ============================

def basic_block(x, p, k, stride):
    out1 = conv_in_act(x, p['conv1'], k, stride, SLOPE)        # conv1 + IN + LeakyReLU
    sk = avg_pool(x, stride) if stride != 1 else x
    if 'skip' in p:                                            # projection skip: 1x1 conv + IN
        return conv_in_projadd_act(out1, p['conv2'], k, sk, p['skip'], SLOPE)
    return conv_in_add_act(out1, p['conv2'], k, sk, SLOPE)     # identity skip


def forward(params, x_nchw):
    # NHWC internally (channels on the lane axis); single transpose in, single transpose out.
    x = jnp.transpose(x_nchw, (0, 2, 3, 1))
    # ----- ResidualEncoderDropout (dropout_op=None -> identity) -----
    x = conv_in_act(x, params['stem'], KERNELS[0], 1, SLOPE)   # stem: 1x ConvDropoutNormReLU
    skips = []
    for s in range(N_STAGES):
        for bi in range(N_BLOCKS[s]):
            stride = STRIDES[s] if bi == 0 else 1
            x = basic_block(x, params['stages'][s][bi], KERNELS[s], stride)
        skips.append(x)
    # ----- UNetDecoderDropout (deep_supervision=False) -----
    lres = skips[-1]
    for d in range(N_STAGES - 1):
        dp = params['decoder'][d]
        s = STRIDES[-(d + 1)]
        c_skip = FEATURES[-(d + 2)]
        up = transp_conv(lres, dp['transp_w'], s, c_skip)
        y = jnp.concatenate([up, skips[-(d + 2)]], axis=-1)    # torch.cat((up, skip), 1)
        for cp in dp['convs']:
            y = conv_in_act(y, cp, KERNELS[-(d + 2)], 1, SLOPE)
        lres = y
    seg = seg_head(lres, params['seg'])
    return jnp.transpose(seg, (0, 3, 1, 2))                    # back to NCHW


# ============================ parameter init & packing ============================

def init_raw_params(key):
    """Parameters in PyTorch layout: conv (Cout,Cin,k,k), transp conv (Cin,Cout,s,s)."""
    counter = [key]

    def nk():
        counter[0], sub = jax.random.split(counter[0])
        return sub

    def conv_w(cin, cout, k):
        return jax.random.normal(nk(), (cout, cin, k, k), jnp.float32) / np.sqrt(cin * k * k)

    def cnr(cin, cout, k):
        return {'w': conv_w(cin, cout, k),
                'gamma': 1.0 + 0.05 * jax.random.normal(nk(), (cout,), jnp.float32),
                'beta': 0.05 * jax.random.normal(nk(), (cout,), jnp.float32)}

    params = {'stem': cnr(INPUT_CHANNELS, FEATURES[0], KERNELS[0])}

    stages = []
    in_ch = FEATURES[0]
    for s in range(N_STAGES):
        blocks = []
        for bi in range(N_BLOCKS[s]):
            cin = in_ch if bi == 0 else FEATURES[s]
            cout = FEATURES[s]
            bp = {'conv1': cnr(cin, cout, KERNELS[s]),
                  'conv2': cnr(cout, cout, KERNELS[s])}
            if cin != cout:        # BasicBlockD skip: AvgPool(stride) + 1x1 conv + IN
                bp['skip'] = cnr(cin, cout, 1)
            blocks.append(bp)
        stages.append(blocks)
        in_ch = FEATURES[s]
    params['stages'] = stages

    decoder = []
    for d in range(N_STAGES - 1):
        c_below = FEATURES[-(d + 1)]
        c_skip = FEATURES[-(d + 2)]
        s = STRIDES[-(d + 1)]
        tw = jax.random.normal(nk(), (c_below, c_skip, s, s), jnp.float32) / np.sqrt(c_below * s * s)
        convs = []
        cin = 2 * c_skip
        for _ in range(N_CONV_DEC[d]):
            convs.append(cnr(cin, c_skip, KERNELS[-(d + 2)]))
            cin = c_skip
        decoder.append({'transp_w': tw, 'convs': convs})
    params['decoder'] = decoder

    params['seg'] = {'w': conv_w(FEATURES[0], NUM_CLASSES, 1),
                     'b': 0.01 * jax.random.normal(nk(), (NUM_CLASSES,), jnp.float32)}
    return params


def _pack_cnr(p):
    """torch (Cout,Cin,k,k) -> (k*k*Cin, Cout) bf16 RHS matching the tap-major/channel-minor
    im2col column order; gamma/beta -> lane-major (1,Cout) f32 rows."""
    cout, cin, k, _ = p['w'].shape
    wmat = jnp.transpose(p['w'], (2, 3, 1, 0)).reshape(k * k * cin, cout).astype(jnp.bfloat16)
    return {'w': wmat,
            'gamma': p['gamma'].reshape(1, cout).astype(jnp.float32),
            'beta': p['beta'].reshape(1, cout).astype(jnp.float32)}


def pack_params(raw):
    """One-time (outside jit) repack of weights into MXU-ready bf16 matrices."""
    packed = {'stem': _pack_cnr(raw['stem'])}
    packed['stages'] = [[{name: _pack_cnr(cp) for name, cp in bp.items()} for bp in st]
                        for st in raw['stages']]
    dec = []
    for dp in raw['decoder']:
        cin, cout, s, _ = dp['transp_w'].shape
        tw = jnp.transpose(dp['transp_w'], (0, 2, 3, 1)).reshape(cin, s * s * cout).astype(jnp.bfloat16)
        dec.append({'transp_w': tw, 'convs': [_pack_cnr(c) for c in dp['convs']]})
    packed['decoder'] = dec
    sw = raw['seg']['w'].reshape(NUM_CLASSES, FEATURES[0]).T.astype(jnp.bfloat16)
    packed['seg'] = {'w': sw, 'b': raw['seg']['b'].reshape(1, NUM_CLASSES).astype(jnp.float32)}
    return packed


# ============================ main ============================

if __name__ == "__main__":
    key = jax.random.PRNGKey(0)
    pkey, xkey = jax.random.split(key)
    params = pack_params(init_raw_params(pkey))          # weight packing happens once, outside jit

    x = jax.random.normal(xkey, (2, INPUT_CHANNELS, 16, 16), jnp.float32)   # NCHW

    fwd = jax.jit(forward)
    out = jax.block_until_ready(fwd(params, x))

    assert out.shape == (2, NUM_CLASSES, 16, 16), out.shape
    assert bool(jnp.all(jnp.isfinite(out)))
    print("KERNEL_OK")
</pallas_src>

<mosaic_0001>
module attributes {stable_mosaic.version = 11 : i64} {
  func.func @_conv_in_act_kernel(%arg0: i32, %arg1: memref<1x256x36xbf16, #tpu.memory_space<vmem>>, %arg2: memref<36x8xbf16, #tpu.memory_space<vmem>>, %arg3: memref<1x8xf32, #tpu.memory_space<vmem>>, %arg4: memref<1x8xf32, #tpu.memory_space<vmem>>, %arg5: memref<1x256x8xf32, #tpu.memory_space<vmem>>) attributes {dimension_semantics = [#tpu.dimension_semantics<parallel>], iteration_bounds = array<i64: 2>, scalar_prefetch = 0 : i64, scratch_operands = 0 : i64, tpu.core_type = #tpu.core_type<tc>, window_params = [{transform_indices = @transform_0, window_bounds = array<i64: 1, 256, 36>}, {pipeline_mode = #tpu.pipeline_mode<synchronous>, transform_indices = @transform_1, window_bounds = array<i64: 36, 8>}, {pipeline_mode = #tpu.pipeline_mode<synchronous>, transform_indices = @transform_2, window_bounds = array<i64: 1, 8>}, {pipeline_mode = #tpu.pipeline_mode<synchronous>, transform_indices = @transform_3, window_bounds = array<i64: 1, 8>}, {transform_indices = @transform_4, window_bounds = array<i64: 1, 256, 8>}]} {
    %c0 = arith.constant 0 : index
    %c0_0 = arith.constant 0 : index
    %c0_1 = arith.constant 0 : index
    %0 = vector.load %arg1[%c0, %c0_0, %c0_1] : memref<1x256x36xbf16, #tpu.memory_space<vmem>>, vector<1x256x36xbf16>
    %1 = vector.shape_cast %0 : vector<1x256x36xbf16> to vector<256x36xbf16>
    %c0_2 = arith.constant 0 : index
    %c0_3 = arith.constant 0 : index
    %2 = vector.load %arg2[%c0_2, %c0_3] : memref<36x8xbf16, #tpu.memory_space<vmem>>, vector<36x8xbf16>
    %cst = arith.constant dense<0.000000e+00> : vector<256x8xf32>
    %3 = tpu.matmul %1, %2, %cst {dimension_numbers = #tpu.dot_dimension_numbers<[1], [0], [0], [1], [0, 0, 1, 1], [], []>} : vector<256x36xbf16>, vector<36x8xbf16>, vector<256x8xf32> -> vector<256x8xf32>
    %c0_4 = arith.constant 0 : index
    %c0_5 = arith.constant 0 : index
    %4 = vector.load %arg3[%c0_4, %c0_5] : memref<1x8xf32, #tpu.memory_space<vmem>>, vector<1x8xf32>
    %c0_6 = arith.constant 0 : index
    %c0_7 = arith.constant 0 : index
    %5 = vector.load %arg4[%c0_6, %c0_7] : memref<1x8xf32, #tpu.memory_space<vmem>>, vector<1x8xf32>
    %cst_8 = arith.constant dense<0.000000e+00> : vector<8xf32>
    %6 = vector.multi_reduction <add>, %3, %cst_8 [0] : vector<256x8xf32> to vector<8xf32>
    %7 = vector.shape_cast %6 : vector<8xf32> to vector<1x8xf32>
    %cst_9 = arith.constant 2.560000e+02 : f32
    %8 = vector.broadcast %cst_9 : f32 to vector<1x8xf32>
    %9 = arith.divf %7, %8 : vector<1x8xf32>
    %10 = vector.broadcast %9 : vector<1x8xf32> to vector<256x8xf32>
    %11 = arith.subf %3, %10 : vector<256x8xf32>
    %12 = arith.mulf %11, %11 : vector<256x8xf32>
    %cst_10 = arith.constant dense<0.000000e+00> : vector<8xf32>
    %13 = vector.multi_reduction <add>, %12, %cst_10 [0] : vector<256x8xf32> to vector<8xf32>
    %14 = vector.shape_cast %13 : vector<8xf32> to vector<1x8xf32>
    %cst_11 = arith.constant 2.560000e+02 : f32
    %15 = vector.broadcast %cst_11 : f32 to vector<1x8xf32>
    %16 = arith.divf %14, %15 : vector<1x8xf32>
    %cst_12 = arith.constant 9.99999974E-6 : f32
    %17 = vector.broadcast %cst_12 : f32 to vector<1x8xf32>
    %18 = arith.addf %16, %17 : vector<1x8xf32>
    %19 = math.rsqrt %18 : vector<1x8xf32>
    %20 = vector.broadcast %19 : vector<1x8xf32> to vector<256x8xf32>
    %21 = arith.mulf %11, %20 : vector<256x8xf32>
    %22 = vector.broadcast %4 : vector<1x8xf32> to vector<256x8xf32>
    %23 = arith.mulf %21, %22 : vector<256x8xf32>
    %24 = vector.broadcast %5 : vector<1x8xf32> to vector<256x8xf32>
    %25 = arith.addf %23, %24 : vector<256x8xf32>
    %cst_13 = arith.constant 0.00999999977 : f32
    %26 = vector.broadcast %cst_13 : f32 to vector<256x8xf32>
    %27 = arith.mulf %26, %25 : vector<256x8xf32>
    %28 = arith.maximumf %25, %27 : vector<256x8xf32>
    %c0_14 = arith.constant 0 : index
    %c0_15 = arith.constant 0 : index
    %c0_16 = arith.constant 0 : index
    %29 = vector.load %arg5[%c0_14, %c0_15, %c0_16] : memref<1x256x8xf32, #tpu.memory_space<vmem>>, vector<1x256x8xf32>
    %30 = vector.shape_cast %29 : vector<1x256x8xf32> to vector<256x8xf32>
    %31 = vector.shape_cast %28 : vector<256x8xf32> to vector<1x256x8xf32>
    tpu.vector_store %arg5[%c0_14, %c0_15, %c0_16], %31 {strides = array<i32>} : memref<1x256x8xf32, #tpu.memory_space<vmem>>, vector<1x256x8xf32>,
    return
  }
  func.func @transform_0(%arg0: i32) -> (i32, i32, i32) {
    %c0_i32 = arith.constant 0 : i32
    %c0_i32_0 = arith.constant 0 : i32
    %c0_i32_1 = arith.constant 0 : i32
    return %arg0, %c0_i32, %c0_i32_0 : i32, i32, i32
  }
  func.func @transform_1(%arg0: i32) -> (i32, i32) {
    %c0_i32 = arith.constant 0 : i32
    %c0_i32_0 = arith.constant 0 : i32
    %c0_i32_1 = arith.constant 0 : i32
    return %c0_i32, %c0_i32_0 : i32, i32
  }
  func.func @transform_2(%arg0: i32) -> (i32, i32) {
    %c0_i32 = arith.constant 0 : i32
    %c0_i32_0 = arith.constant 0 : i32
    %c0_i32_1 = arith.constant 0 : i32
    return %c0_i32, %c0_i32_0 : i32, i32
  }
  func.func @transform_3(%arg0: i32) -> (i32, i32) {
    %c0_i32 = arith.constant 0 : i32
    %c0_i32_0 = arith.constant 0 : i32
    %c0_i32_1 = arith.constant 0 : i32
    return %c0_i32, %c0_i32_0 : i32, i32
  }
  func.func @transform_4(%arg0: i32) -> (i32, i32, i32) {
    %c0_i32 = arith.constant 0 : i32
    %c0_i32_0 = arith.constant 0 : i32
    %c0_i32_1 = arith.constant 0 : i32
    return %arg0, %c0_i32, %c0_i32_0 : i32, i32, i32
  }
}

module attributes {stable_mosaic.version = 11 : i64} {
  func.func @_conv_in_act_kernel(%arg0: i32, %arg1: memref<1x256x72xbf16, #tpu.memory_space<vmem>>, %arg2: memref<72x8xbf16, #tpu.memory_space<vmem>>, %arg3: memref<1x8xf32, #tpu.memory_space<vmem>>, %arg4: memref<1x8xf32, #tpu.memory_space<vmem>>, %arg5: memref<1x256x8xf32, #tpu.memory_space<vmem>>) attributes {dimension_semantics = [#tpu.dimension_semantics<parallel>], iteration_bounds = array<i64: 2>, scalar_prefetch = 0 : i64, scratch_operands = 0 : i64, tpu.core_type = #tpu.core_type<tc>, window_params = [{transform_indices = @transform_0, window_bounds = array<i64: 1, 256, 72>}, {pipeline_mode = #tpu.pipeline_mode<synchronous>, transform_indices = @transform_1, window_bounds = array<i64: 72, 8>}, {pipeline_mode = #tpu.pipeline_mode<synchronous>, transform_indices = @transform_2, window_bounds = array<i64: 1, 8>}, {pipeline_mode = #tpu.pipeline_mode<synchronous>, transform_indices = @transform_3, window_bounds = array<i64: 1, 8>}, {transform_indices = @transform_4, window_bounds = array<i64: 1, 256, 8>}]} {
    %c0 = arith.constant 0 : index
    %c0_0 = arith.constant 0 : index
    %c0_1 = arith.constant 0 : index
    %0 = vector.load %arg1[%c0, %c0_0, %c0_1] : memref<1x256x72xbf16, #tpu.memory_space<vmem>>, vector<1x256x72xbf16>
    %1 = vector.shape_cast %0 : vector<1x256x72xbf16> to vector<256x72xbf16>
    %c0_2 = arith.constant 0 : index
    %c0_3 = arith.constant 0 : index
    %2 = vector.load %arg2[%c0_2, %c0_3] : memref<72x8xbf16, #tpu.memory_space<vmem>>, vector<72x8xbf16>
    %cst = arith.constant dense<0.000000e+00> : vector<256x8xf32>
    %3 = tpu.matmul %1, %2, %cst {dimension_numbers = #tpu.dot_dimension_numbers<[1], [0], [0], [1], [0, 0, 1, 1], [], []>} : vector<256x72xbf16>, vector<72x8xbf16>, vector<256x8xf32> -> vector<256x8xf32>
    %c0_4 = arith.constant 0 : index
    %c0_5 = arith.constant 0 : index
    %4 = vector.load %arg3[%c0_4, %c0_5] : memref<1x8xf32, #tpu.memory_space<vmem>>, vector<1x8xf32>
    %c0_6 = arith.constant 0 : index
    %c0_7 = arith.constant 0 : index
    %5 = vector.load %arg4[%c0_6, %c0_7] : memref<1x8xf32, #tpu.memory_space<vmem>>, vector<1x8xf32>
    %cst_8 = arith.constant dense<0.000000e+00> : vector<8xf32>
    %6 = vector.multi_reduction <add>, %3, %cst_8 [0] : vector<256x8xf32> to vector<8xf32>
    %7 = vector.shape_cast %6 : vector<8xf32> to vector<1x8xf32>
    %cst_9 = arith.constant 2.560000e+02 : f32
    %8 = vector.broadcast %cst_9 : f32 to vector<1x8xf32>
    %9 = arith.divf %7, %8 : vector<1x8xf32>
    %10 = vector.broadcast %9 : vector<1x8xf32> to vector<256x8xf32>
    %11 = arith.subf %3, %10 : vector<256x8xf32>
    %12 = arith.mulf %11, %11 : vector<256x8xf32>
    %cst_10 = arith.constant dense<0.000000e+00> : vector<8xf32>
    %13 = vector.multi_reduction <add>, %12, %cst_10 [0] : vector<256x8xf32> to vector<8xf32>
    %14 = vector.shape_cast %13 : vector<8xf32> to vector<1x8xf32>
    %cst_11 = arith.constant 2.560000e+02 : f32
    %15 = vector.broadcast %cst_11 : f32 to vector<1x8xf32>
    %16 = arith.divf %14, %15 : vector<1x8xf32>
    %cst_12 = arith.constant 9.99999974E-6 : f32
    %17 = vector.broadcast %cst_12 : f32 to vector<1x8xf32>
    %18 = arith.addf %16, %17 : vector<1x8xf32>
    %19 = math.rsqrt %18 : vector<1x8xf32>
    %20 = vector.broadcast %19 : vector<1x8xf32> to vector<256x8xf32>
    %21 = arith.mulf %11, %20 : vector<256x8xf32>
    %22 = vector.broadcast %4 : vector<1x8xf32> to vector<256x8xf32>
    %23 = arith.mulf %21, %22 : vector<256x8xf32>
    %24 = vector.broadcast %5 : vector<1x8xf32> to vector<256x8xf32>
    %25 = arith.addf %23, %24 : vector<256x8xf32>
    %cst_13 = arith.constant 0.00999999977 : f32
    %26 = vector.broadcast %cst_13 : f32 to vector<256x8xf32>
    %27 = arith.mulf %26, %25 : vector<256x8xf32>
    %28 = arith.maximumf %25, %27 : vector<256x8xf32>
    %c0_14 = arith.constant 0 : index
    %c0_15 = arith.constant 0 : index
    %c0_16 = arith.constant 0 : index
    %29 = vector.load %arg5[%c0_14, %c0_15, %c0_16] : memref<1x256x8xf32, #tpu.memory_space<vmem>>, vector<1x256x8xf32>
    %30 = vector.shape_cast %29 : vector<1x256x8xf32> to vector<256x8xf32>
    %31 = vector.shape_cast %28 : vector<256x8xf32> to vector<1x256x8xf32>
    tpu.vector_store %arg5[%c0_14, %c0_15, %c0_16], %31 {strides = array<i32>} : memref<1x256x8xf32, #tpu.memory_space<vmem>>, vector<1x256x8xf32>,
    return
  }
  func.func @transform_0(%arg0: i32) -> (i32, i32, i32) {
    %c0_i32 = arith.constant 0 : i32
    %c0_i32_0 = arith.constant 0 : i32
    %c0_i32_1 = arith.constant 0 : i32
    return %arg0, %c0_i32, %c0_i32_0 : i32, i32, i32
  }
  func.func @transform_1(%arg0: i32) -> (i32, i32) {
    %c0_i32 = arith.constant 0 : i32
    %c0_i32_0 = arith.constant 0 : i32
    %c0_i32_1 = arith.constant 0 : i32
    return %c0_i32, %c0_i32_0 : i32, i32
  }
  func.func @transform_2(%arg0: i32) -> (i32, i32) {
    %c0_i32 = arith.constant 0 : i32
    %c0_i32_0 = arith.constant 0 : i32
    %c0_i32_1 = arith.constant 0 : i32
    return %c0_i32, %c0_i32_0 : i32, i32
  }
  func.func @transform_3(%arg0: i32) -> (i32, i32) {
    %c0_i32 = arith.constant 0 : i32
    %c0_i32_0 = arith.constant 0 : i32
    %c0_i32_1 = arith.constant 0 : i32
    return %c0_i32, %c0_i32_0 : i32, i32
  }
  func.func @transform_4(%arg0: i32) -> (i32, i32, i32) {
    %c0_i32 = arith.constant 0 : i32
    %c0_i32_0 = arith.constant 0 : i32
    %c0_i32_1 = arith.constant 0 : i32
    return %arg0, %c0_i32, %c0_i32_0 : i32, i32, i32
  }
}

module attributes {stable_mosaic.version = 11 : i64} {
  func.func @_conv_in_add_act_kernel(%arg0: i32, %arg1: memref<1x256x72xbf16, #tpu.memory_space<vmem>>, %arg2: memref<72x8xbf16, #tpu.memory_space<vmem>>, %arg3: memref<1x8xf32, #tpu.memory_space<vmem>>, %arg4: memref<1x8xf32, #tpu.memory_space<vmem>>, %arg5: memref<1x256x8xf32, #tpu.memory_space<vmem>>, %arg6: memref<1x256x8xf32, #tpu.memory_space<vmem>>) attributes {dimension_semantics = [#tpu.dimension_semantics<parallel>], iteration_bounds = array<i64: 2>, scalar_prefetch = 0 : i64, scratch_operands = 0 : i64, tpu.core_type = #tpu.core_type<tc>, window_params = [{transform_indices = @transform_0, window_bounds = array<i64: 1, 256, 72>}, {pipeline_mode = #tpu.pipeline_mode<synchronous>, transform_indices = @transform_1, window_bounds = array<i64: 72, 8>}, {pipeline_mode = #tpu.pipeline_mode<synchronous>, transform_indices = @transform_2, window_bounds = array<i64: 1, 8>}, {pipeline_mode = #tpu.pipeline_mode<synchronous>, transform_indices = @transform_3, window_bounds = array<i64: 1, 8>}, {transform_indices = @transform_4, window_bounds = array<i64: 1, 256, 8>}, {transform_indices = @transform_5, window_bounds = array<i64: 1, 256, 8>}]} {
    %c0 = arith.constant 0 : index
    %c0_0 = arith.constant 0 : index
    %c0_1 = arith.constant 0 : index
    %0 = vector.load %arg1[%c0, %c0_0, %c0_1] : memref<1x256x72xbf16, #tpu.memory_space<vmem>>, vector<1x256x72xbf16>
    %1 = vector.shape_cast %0 : vector<1x256x72xbf16> to vector<256x72xbf16>
    %c0_2 = arith.constant 0 : index
    %c0_3 = arith.constant 0 : index
    %2 = vector.load %arg2[%c0_2, %c0_3] : memref<72x8xbf16, #tpu.memory_space<vmem>>, vector<72x8xbf16>
    %cst = arith.constant dense<0.000000e+00> : vector<256x8xf32>
    %3 = tpu.matmul %1, %2, %cst {dimension_numbers = #tpu.dot_dimension_numbers<[1], [0], [0], [1], [0, 0, 1, 1], [], []>} : vector<256x72xbf16>, vector<72x8xbf16>, vector<256x8xf32> -> vector<256x8xf32>
    %c0_4 = arith.constant 0 : index
    %c0_5 = arith.constant 0 : index
    %4 = vector.load %arg3[%c0_4, %c0_5] : memref<1x8xf32, #tpu.memory_space<vmem>>, vector<1x8xf32>
    %c0_6 = arith.constant 0 : index
    %c0_7 = arith.constant 0 : index
    %5 = vector.load %arg4[%c0_6, %c0_7] : memref<1x8xf32, #tpu.memory_space<vmem>>, vector<1x8xf32>
    %cst_8 = arith.constant dense<0.000000e+00> : vector<8xf32>
    %6 = vector.multi_reduction <add>, %3, %cst_8 [0] : vector<256x8xf32> to vector<8xf32>
    %7 = vector.shape_cast %6 : vector<8xf32> to vector<1x8xf32>
    %cst_9 = arith.constant 2.560000e+02 : f32
    %8 = vector.broadcast %cst_9 : f32 to vector<1x8xf32>
    %9 = arith.divf %7, %8 : vector<1x8xf32>
    %10 = vector.broadcast %9 : vector<1x8xf32> to vector<256x8xf32>
    %11 = arith.subf %3, %10 : vector<256x8xf32>
    %12 = arith.mulf %11, %11 : vector<256x8xf32>
    %cst_10 = arith.constant dense<0.000000e+00> : vector<8xf32>
    %13 = vector.multi_reduction <add>, %12, %cst_10 [0] : vector<256x8xf32> to vector<8xf32>
    %14 = vector.shape_cast %13 : vector<8xf32> to vector<1x8xf32>
    %cst_11 = arith.constant 2.560000e+02 : f32
    %15 = vector.broadcast %cst_11 : f32 to vector<1x8xf32>
    %16 = arith.divf %14, %15 : vector<1x8xf32>
    %cst_12 = arith.constant 9.99999974E-6 : f32
    %17 = vector.broadcast %cst_12 : f32 to vector<1x8xf32>
    %18 = arith.addf %16, %17 : vector<1x8xf32>
    %19 = math.rsqrt %18 : vector<1x8xf32>
    %20 = vector.broadcast %19 : vector<1x8xf32> to vector<256x8xf32>
    %21 = arith.mulf %11, %20 : vector<256x8xf32>
    %22 = vector.broadcast %4 : vector<1x8xf32> to vector<256x8xf32>
    %23 = arith.mulf %21, %22 : vector<256x8xf32>
    %24 = vector.broadcast %5 : vector<1x8xf32> to vector<256x8xf32>
    %25 = arith.addf %23, %24 : vector<256x8xf32>
    %c0_13 = arith.constant 0 : index
    %c0_14 = arith.constant 0 : index
    %c0_15 = arith.constant 0 : index
    %26 = vector.load %arg5[%c0_13, %c0_14, %c0_15] : memref<1x256x8xf32, #tpu.memory_space<vmem>>, vector<1x256x8xf32>
    %27 = vector.shape_cast %26 : vector<1x256x8xf32> to vector<256x8xf32>
    %28 = arith.addf %25, %27 : vector<256x8xf32>
    %cst_16 = arith.constant 0.00999999977 : f32
    %29 = vector.broadcast %cst_16 : f32 to vector<256x8xf32>
    %30 = arith.mulf %29, %28 : vector<256x8xf32>
    %31 = arith.maximumf %28, %30 : vector<256x8xf32>
    %c0_17 = arith.constant 0 : index
    %c0_18 = arith.constant 0 : index
    %c0_19 = arith.constant 0 : index
    %32 = vector.load %arg6[%c0_17, %c0_18, %c0_19] : memref<1x256x8xf32, #tpu.memory_space<vmem>>, vector<1x256x8xf32>
    %33 = vector.shape_cast %32 : vector<1x256x8xf32> to vector<256x8xf32>
    %34 = vector.shape_cast %31 : vector<256x8xf32> to vector<1x256x8xf32>
    tpu.vector_store %arg6[%c0_17, %c0_18, %c0_19], %34 {strides = array<i32>} : memref<1x256x8xf32, #tpu.memory_space<vmem>>, vector<1x256x8xf32>,
    return
  }
  func.func @transform_0(%arg0: i32) -> (i32, i32, i32) {
    %c0_i32 = arith.constant 0 : i32
    %c0_i32_0 = arith.constant 0 : i32
    %c0_i32_1 = arith.constant 0 : i32
    return %arg0, %c0_i32, %c0_i32_0 : i32, i32, i32
  }
  func.func @transform_1(%arg0: i32) -> (i32, i32) {
    %c0_i32 = arith.constant 0 : i32
    %c0_i32_0 = arith.constant 0 : i32
    %c0_i32_1 = arith.constant 0 : i32
    return %c0_i32, %c0_i32_0 : i32, i32
  }
  func.func @transform_2(%arg0: i32) -> (i32, i32) {
    %c0_i32 = arith.constant 0 : i32
    %c0_i32_0 = arith.constant 0 : i32
    %c0_i32_1 = arith.constant 0 : i32
    return %c0_i32, %c0_i32_0 : i32, i32
  }
  func.func @transform_3(%arg0: i32) -> (i32, i32) {
    %c0_i32 = arith.constant 0 : i32
    %c0_i32_0 = arith.constant 0 : i32
    %c0_i32_1 = arith.constant 0 : i32
    return %c0_i32, %c0_i32_0 : i32, i32
  }
  func.func @transform_4(%arg0: i32) -> (i32, i32, i32) {
    %c0_i32 = arith.constant 0 : i32
    %c0_i32_0 = arith.constant 0 : i32
    %c0_i32_1 = arith.constant 0 : i32
    return %arg0, %c0_i32, %c0_i32_0 : i32, i32, i32
  }
  func.func @transform_5(%arg0: i32) -> (i32, i32, i32) {
    %c0_i32 = arith.constant 0 : i32
    %c0_i32_0 = arith.constant 0 : i32
    %c0_i32_1 = arith.constant 0 : i32
    return %arg0, %c0_i32, %c0_i32_0 : i32, i32, i32
  }
}

module attributes {stable_mosaic.version = 11 : i64} {
  func.func @_conv_in_act_kernel(%arg0: i32, %arg1: memref<1x64x72xbf16, #tpu.memory_space<vmem>>, %arg2: memref<72x16xbf16, #tpu.memory_space<vmem>>, %arg3: memref<1x16xf32, #tpu.memory_space<vmem>>, %arg4: memref<1x16xf32, #tpu.memory_space<vmem>>, %arg5: memref<1x64x16xf32, #tpu.memory_space<vmem>>) attributes {dimension_semantics = [#tpu.dimension_semantics<parallel>], iteration_bounds = array<i64: 2>, scalar_prefetch = 0 : i64, scratch_operands = 0 : i64, tpu.core_type = #tpu.core_type<tc>, window_params = [{transform_indices = @transform_0, window_bounds = array<i64: 1, 64, 72>}, {pipeline_mode = #tpu.pipeline_mode<synchronous>, transform_indices = @transform_1, window_bounds = array<i64: 72, 16>}, {pipeline_mode = #tpu.pipeline_mode<synchronous>, transform_indices = @transform_2, window_bounds = array<i64: 1, 16>}, {pipeline_mode = #tpu.pipeline_mode<synchronous>, transform_indices = @transform_3, window_bounds = array<i64: 1, 16>}, {transform_indices = @transform_4, window_bounds = array<i64: 1, 64, 16>}]} {
    %c0 = arith.constant 0 : index
    %c0_0 = arith.constant 0 : index
    %c0_1 = arith.constant 0 : index
    %0 = vector.load %arg1[%c0, %c0_0, %c0_1] : memref<1x64x72xbf16, #tpu.memory_space<vmem>>, vector<1x64x72xbf16>
    %1 = vector.shape_cast %0 : vector<1x64x72xbf16> to vector<64x72xbf16>
    %c0_2 = arith.constant 0 : index
    %c0_3 = arith.constant 0 : index
    %2 = vector.load %arg2[%c0_2, %c0_3] : memref<72x16xbf16, #tpu.memory_space<vmem>>, vector<72x16xbf16>
    %cst = arith.constant dense<0.000000e+00> : vector<64x16xf32>
    %3 = tpu.matmul %1, %2, %cst {dimension_numbers = #tpu.dot_dimension_numbers<[1], [0], [0], [1], [0, 0, 1, 1], [], []>} : vector<64x72xbf16>, vector<72x16xbf16>, vector<64x16xf32> -> vector<64x16xf32>
    %c0_4 = arith.constant 0 : index
    %c0_5 = arith.constant 0 : index
    %4 = vector.load %arg3[%c0_4, %c0_5] : memref<1x16xf32, #tpu.memory_space<vmem>>, vector<1x16xf32>
    %c0_6 = arith.constant 0 : index
    %c0_7 = arith.constant 0 : index
    %5 = vector.load %arg4[%c0_6, %c0_7] : memref<1x16xf32, #tpu.memory_space<vmem>>, vector<1x16xf32>
    %cst_8 = arith.constant dense<0.000000e+00> : vector<16xf32>
    %6 = vector.multi_reduction <add>, %3, %cst_8 [0] : vector<64x16xf32> to vector<16xf32>
    %7 = vector.shape_cast %6 : vector<16xf32> to vector<1x16xf32>
    %cst_9 = arith.constant 6.400000e+01 : f32
    %8 = vector.broadcast %cst_9 : f32 to vector<1x16xf32>
    %9 = arith.divf %7, %8 : vector<1x16xf32>
    %10 = vector.broadcast %9 : vector<1x16xf32> to vector<64x16xf32>
    %11 = arith.subf %3, %10 : vector<64x16xf32>
    %12 = arith.mulf %11, %11 : vector<64x16xf32>
    %cst_10 = arith.constant dense<0.000000e+00> : vector<16xf32>
    %13 = vector.multi_reduction <add>, %12, %cst_10 [0] : vector<64x16xf32> to vector<16xf32>
    %14 = vector.shape_cast %13 : vector<16xf32> to vector<1x16xf32>
    %cst_11 = arith.constant 6.400000e+01 : f32
    %15 = vector.broadcast %cst_11 : f32 to vector<1x16xf32>
    %16 = arith.divf %14, %15 : vector<1x16xf32>
    %cst_12 = arith.constant 9.99999974E-6 : f32
    %17 = vector.broadcast %cst_12 : f32 to vector<1x16xf32>
    %18 = arith.addf %16, %17 : vector<1x16xf32>
    %19 = math.rsqrt %18 : vector<1x16xf32>
    %20 = vector.broadcast %19 : vector<1x16xf32> to vector<64x16xf32>
    %21 = arith.mulf %11, %20 : vector<64x16xf32>
    %22 = vector.broadcast %4 : vector<1x16xf32> to vector<64x16xf32>
    %23 = arith.mulf %21, %22 : vector<64x16xf32>
    %24 = vector.broadcast %5 : vector<1x16xf32> to vector<64x16xf32>
    %25 = arith.addf %23, %24 : vector<64x16xf32>
    %cst_13 = arith.constant 0.00999999977 : f32
    %26 = vector.broadcast %cst_13 : f32 to vector<64x16xf32>
    %27 = arith.mulf %26, %25 : vector<64x16xf32>
    %28 = arith.maximumf %25, %27 : vector<64x16xf32>
    %c0_14 = arith.constant 0 : index
    %c0_15 = arith.constant 0 : index
    %c0_16 = arith.constant 0 : index
    %29 = vector.load %arg5[%c0_14, %c0_15, %c0_16] : memref<1x64x16xf32, #tpu.memory_space<vmem>>, vector<1x64x16xf32>
    %30 = vector.shape_cast %29 : vector<1x64x16xf32> to vector<64x16xf32>
    %31 = vector.shape_cast %28 : vector<64x16xf32> to vector<1x64x16xf32>
    tpu.vector_store %arg5[%c0_14, %c0_15, %c0_16], %31 {strides = array<i32>} : memref<1x64x16xf32, #tpu.memory_space<vmem>>, vector<1x64x16xf32>,
    return
  }
  func.func @transform_0(%arg0: i32) -> (i32, i32, i32) {
    %c0_i32 = arith.constant 0 : i32
    %c0_i32_0 = arith.constant 0 : i32
    %c0_i32_1 = arith.constant 0 : i32
    return %arg0, %c0_i32, %c0_i32_0 : i32, i32, i32
  }
  func.func @transform_1(%arg0: i32) -> (i32, i32) {
    %c0_i32 = arith.constant 0 : i32
    %c0_i32_0 = arith.constant 0 : i32
    %c0_i32_1 = arith.constant 0 : i32
    return %c0_i32, %c0_i32_0 : i32, i32
  }
  func.func @transform_2(%arg0: i32) -> (i32, i32) {
    %c0_i32 = arith.constant 0 : i32
    %c0_i32_0 = arith.constant 0 : i32
    %c0_i32_1 = arith.constant 0 : i32
    return %c0_i32, %c0_i32_0 : i32, i32
  }
  func.func @transform_3(%arg0: i32) -> (i32, i32) {
    %c0_i32 = arith.constant 0 : i32
    %c0_i32_0 = arith.constant 0 : i32
    %c0_i32_1 = arith.constant 0 : i32
    return %c0_i32, %c0_i32_0 : i32, i32
  }
  func.func @transform_4(%arg0: i32) -> (i32, i32, i32) {
    %c0_i32 = arith.constant 0 : i32
    %c0_i32_0 = arith.constant 0 : i32
    %c0_i32_1 = arith.constant 0 : i32
    return %arg0, %c0_i32, %c0_i32_0 : i32, i32, i32
  }
}

module attributes {stable_mosaic.version = 11 : i64} {
  func.func @_conv_in_projadd_act_kernel(%arg0: i32, %arg1: memref<1x64x144xbf16, #tpu.memory_space<vmem>>, %arg2: memref<144x16xbf16, #tpu.memory_space<vmem>>, %arg3: memref<1x16xf32, #tpu.memory_space<vmem>>, %arg4: memref<1x16xf32, #tpu.memory_space<vmem>>, %arg5: memref<1x64x8xbf16, #tpu.memory_space<vmem>>, %arg6: memref<8x16xbf16, #tpu.memory_space<vmem>>, %arg7: memref<1x16xf32, #tpu.memory_space<vmem>>, %arg8: memref<1x16xf32, #tpu.memory_space<vmem>>, %arg9: memref<1x64x16xf32, #tpu.memory_space<vmem>>) attributes {dimension_semantics = [#tpu.dimension_semantics<parallel>], iteration_bounds = array<i64: 2>, scalar_prefetch = 0 : i64, scratch_operands = 0 : i64, tpu.core_type = #tpu.core_type<tc>, window_params = [{transform_indices = @transform_0, window_bounds = array<i64: 1, 64, 144>}, {pipeline_mode = #tpu.pipeline_mode<synchronous>, transform_indices = @transform_1, window_bounds = array<i64: 144, 16>}, {pipeline_mode = #tpu.pipeline_mode<synchronous>, transform_indices = @transform_2, window_bounds = array<i64: 1, 16>}, {pipeline_mode = #tpu.pipeline_mode<synchronous>, transform_indices = @transform_3, window_bounds = array<i64: 1, 16>}, {transform_indices = @transform_4, window_bounds = array<i64: 1, 64, 8>}, {pipeline_mode = #tpu.pipeline_mode<synchronous>, transform_indices = @transform_5, window_bounds = array<i64: 8, 16>}, {pipeline_mode = #tpu.pipeline_mode<synchronous>, transform_indices = @transform_6, window_bounds = array<i64: 1, 16>}, {pipeline_mode = #tpu.pipeline_mode<synchronous>, transform_indices = @transform_7, window_bounds = array<i64: 1, 16>}, {transform_indices = @transform_8, window_bounds = array<i64: 1, 64, 16>}]} {
    %c0 = arith.constant 0 : index
    %c0_0 = arith.constant 0 : index
    %c0_1 = arith.constant 0 : index
    %0 = vector.load %arg1[%c0, %c0_0, %c0_1] : memref<1x64x144xbf16, #tpu.memory_space<vmem>>, vector<1x64x144xbf16>
    %1 = vector.shape_cast %0 : vector<1x64x144xbf16> to vector<64x144xbf16>
    %c0_2 = arith.constant 0 : index
    %c0_3 = arith.constant 0 : index
    %2 = vector.load %arg2[%c0_2, %c0_3] : memref<144x16xbf16, #tpu.memory_space<vmem>>, vector<144x16xbf16>
    %cst = arith.constant dense<0.000000e+00> : vector<64x16xf32>
    %3 = tpu.matmul %1, %2, %cst {dimension_numbers = #tpu.dot_dimension_numbers<[1], [0], [0], [1], [0, 0, 1, 1], [], []>} : vector<64x144xbf16>, vector<144x16xbf16>, vector<64x16xf32> -> vector<64x16xf32>
    %c0_4 = arith.constant 0 : index
    %c0_5 = arith.constant 0 : index
    %4 = vector.load %arg3[%c0_4, %c0_5] : memref<1x16xf32, #tpu.memory_space<vmem>>, vector<1x16xf32>
    %c0_6 = arith.constant 0 : index
    %c0_7 = arith.constant 0 : index
    %5 = vector.load %arg4[%c0_6, %c0_7] : memref<1x16xf32, #tpu.memory_space<vmem>>, vector<1x16xf32>
    %cst_8 = arith.constant dense<0.000000e+00> : vector<16xf32>
    %6 = vector.multi_reduction <add>, %3, %cst_8 [0] : vector<64x16xf32> to vector<16xf32>
    %7 = vector.shape_cast %6 : vector<16xf32> to vector<1x16xf32>
    %cst_9 = arith.constant 6.400000e+01 : f32
    %8 = vector.broadcast %cst_9 : f32 to vector<1x16xf32>
    %9 = arith.divf %7, %8 : vector<1x16xf32>
    %10 = vector.broadcast %9 : vector<1x16xf32> to vector<64x16xf32>
    %11 = arith.subf %3, %10 : vector<64x16xf32>
    %12 = arith.mulf %11, %11 : vector<64x16xf32>
    %cst_10 = arith.constant dense<0.000000e+00> : vector<16xf32>
    %13 = vector.multi_reduction <add>, %12, %cst_10 [0] : vector<64x16xf32> to vector<16xf32>
    %14 = vector.shape_cast %13 : vector<16xf32> to vector<1x16xf32>
    %cst_11 = arith.constant 6.400000e+01 : f32
    %15 = vector.broadcast %cst_11 : f32 to vector<1x16xf32>
    %16 = arith.divf %14, %15 : vector<1x16xf32>
    %cst_12 = arith.constant 9.99999974E-6 : f32
    %17 = vector.broadcast %cst_12 : f32 to vector<1x16xf32>
    %18 = arith.addf %16, %17 : vector<1x16xf32>
    %19 = math.rsqrt %18 : vector<1x16xf32>
    %20 = vector.broadcast %19 : vector<1x16xf32> to vector<64x16xf32>
    %21 = arith.mulf %11, %20 : vector<64x16xf32>
    %22 = vector.broadcast %4 : vector<1x16xf32> to vector<64x16xf32>
    %23 = arith.mulf %21, %22 : vector<64x16xf32>
    %24 = vector.broadcast %5 : vector<1x16xf32> to vector<64x16xf32>
    %25 = arith.addf %23, %24 : vector<64x16xf32>
    %c0_13 = arith.constant 0 : index
    %c0_14 = arith.constant 0 : index
    %c0_15 = arith.constant 0 : index
    %26 = vector.load %arg5[%c0_13, %c0_14, %c0_15] : memref<1x64x8xbf16, #tpu.memory_space<vmem>>, vector<1x64x8xbf16>
    %27 = vector.shape_cast %26 : vector<1x64x8xbf16> to vector<64x8xbf16>
    %c0_16 = arith.constant 0 : index
    %c0_17 = arith.constant 0 : index
    %28 = vector.load %arg6[%c0_16, %c0_17] : memref<8x16xbf16, #tpu.memory_space<vmem>>, vector<8x16xbf16>
    %cst_18 = arith.constant dense<0.000000e+00> : vector<64x16xf32>
    %29 = tpu.matmul %27, %28, %cst_18 {dimension_numbers = #tpu.dot_dimension_numbers<[1], [0], [0], [1], [0, 0, 1, 1], [], []>} : vector<64x8xbf16>, vector<8x16xbf16>, vector<64x16xf32> -> vector<64x16xf32>
    %c0_19 = arith.constant 0 : index
    %c0_20 = arith.constant 0 : index
    %30 = vector.load %arg7[%c0_19, %c0_20] : memref<1x16xf32, #tpu.memory_space<vmem>>, vector<1x16xf32>
    %c0_21 = arith.constant 0 : index
    %c0_22 = arith.constant 0 : index
    %31 = vector.load %arg8[%c0_21, %c0_22] : memref<1x16xf32, #tpu.memory_space<vmem>>, vector<1x16xf32>
    %cst_23 = arith.constant dense<0.000000e+00> : vector<16xf32>
    %32 = vector.multi_reduction <add>, %29, %cst_23 [0] : vector<64x16xf32> to vector<16xf32>
    %33 = vector.shape_cast %32 : vector<16xf32> to vector<1x16xf32>
    %cst_24 = arith.constant 6.400000e+01 : f32
    %34 = vector.broadcast %cst_24 : f32 to vector<1x16xf32>
    %35 = arith.divf %33, %34 : vector<1x16xf32>
    %36 = vector.broadcast %35 : vector<1x16xf32> to vector<64x16xf32>
    %37 = arith.subf %29, %36 : vector<64x16xf32>
    %38 = arith.mulf %37, %37 : vector<64x16xf32>
    %cst_25 = arith.constant dense<0.000000e+00> : vector<16xf32>
    %39 = vector.multi_reduction <add>, %38, %cst_25 [0] : vector<64x16xf32> to vector<16xf32>
    %40 = vector.shape_cast %39 : vector<16xf32> to vector<1x16xf32>
    %cst_26 = arith.constant 6.400000e+01 : f32
    %41 = vector.broadcast %cst_26 : f32 to vector<1x16xf32>
    %42 = arith.divf %40, %41 : vector<1x16xf32>
    %cst_27 = arith.constant 9.99999974E-6 : f32
    %43 = vector.broadcast %cst_27 : f32 to vector<1x16xf32>
    %44 = arith.addf %42, %43 : vector<1x16xf32>
    %45 = math.rsqrt %44 : vector<1x16xf32>
    %46 = vector.broadcast %45 : vector<1x16xf32> to vector<64x16xf32>
    %47 = arith.mulf %37, %46 : vector<64x16xf32>
    %48 = vector.broadcast %30 : vector<1x16xf32> to vector<64x16xf32>
    %49 = arith.mulf %47, %48 : vector<64x16xf32>
    %50 = vector.broadcast %31 : vector<1x16xf32> to vector<64x16xf32>
    %51 = arith.addf %49, %50 : vector<64x16xf32>
    %52 = arith.addf %25, %51 : vector<64x16xf32>
    %cst_28 = arith.constant 0.00999999977 : f32
    %53 = vector.broadcast %cst_28 : f32 to vector<64x16xf32>
    %54 = arith.mulf %53, %52 : vector<64x16xf32>
    %55 = arith.maximumf %52, %54 : vector<64x16xf32>
    %c0_29 = arith.constant 0 : index
    %c0_30 = arith.constant 0 : index
    %c0_31 = arith.constant 0 : index
    %56 = vector.load %arg9[%c0_29, %c0_30, %c0_31] : memref<1x64x16xf32, #tpu.memory_space<vmem>>, vector<1x64x16xf32>
    %57 = vector.shape_cast %56 : vector<1x64x16xf32> to vector<64x16xf32>
    %58 = vector.shape_cast %55 : vector<64x16xf32> to vector<1x64x16xf32>
    tpu.vector_store %arg9[%c0_29, %c0_30, %c0_31], %58 {strides = array<i32>} : memref<1x64x16xf32, #tpu.memory_space<vmem>>, vector<1x64x16xf32>,
    return
  }
  func.func @transform_0(%arg0: i32) -> (i32, i32, i32) {
    %c0_i32 = arith.constant 0 : i32
    %c0_i32_0 = arith.constant 0 : i32
    %c0_i32_1 = arith.constant 0 : i32
    return %arg0, %c0_i32, %c0_i32_0 : i32, i32, i32
  }
  func.func @transform_1(%arg0: i32) -> (i32, i32) {
    %c0_i32 = arith.constant 0 : i32
    %c0_i32_0 = arith.constant 0 : i32
    %c0_i32_1 = arith.constant 0 : i32
    return %c0_i32, %c0_i32_0 : i32, i32
  }
  func.func @transform_2(%arg0: i32) -> (i32, i32) {
    %c0_i32 = arith.constant 0 : i32
    %c0_i32_0 = arith.constant 0 : i32
    %c0_i32_1 = arith.constant 0 : i32
    return %c0_i32, %c0_i32_0 : i32, i32
  }
  func.func @transform_3(%arg0: i32) -> (i32, i32) {
    %c0_i32 = arith.constant 0 : i32
    %c0_i32_0 = arith.constant 0 : i32
    %c0_i32_1 = arith.constant 0 : i32
    return %c0_i32, %c0_i32_0 : i32, i32
  }
  func.func @transform_4(%arg0: i32) -> (i32, i32, i32) {
    %c0_i32 = arith.constant 0 : i32
    %c0_i32_0 = arith.constant 0 : i32
    %c0_i32_1 = arith.constant 0 : i32
    return %arg0, %c0_i32, %c0_i32_0 : i32, i32, i32
  }
  func.func @transform_5(%arg0: i32) -> (i32, i32) {
    %c0_i32 = arith.constant 0 : i32
    %c0_i32_0 = arith.constant 0 : i32
    %c0_i32_1 = arith.constant 0 : i32
    return %c0_i32, %c0_i32_0 : i32, i32
  }
  func.func @transform_6(%arg0: i32) -> (i32, i32) {
    %c0_i32 = arith.constant 0 : i32
    %c0_i32_0 = arith.constant 0 : i32
    %c0_i32_1 = arith.constant 0 : i32
    return %c0_i32, %c0_i32_0 : i32, i32
  }
  func.func @transform_7(%arg0: i32) -> (i32, i32) {
    %c0_i32 = arith.constant 0 : i32
    %c0_i32_0 = arith.constant 0 : i32
    %c0_i32_1 = arith.constant 0 : i32
    return %c0_i32, %c0_i32_0 : i32, i32
  }
  func.func @transform_8(%arg0: i32) -> (i32, i32, i32) {
    %c0_i32 = arith.constant 0 : i32
    %c0_i32_0 = arith.constant 0 : i32
    %c0_i32_1 = arith.constant 0 : i32
    return %arg0, %c0_i32, %c0_i32_0 : i32, i32, i32
  }
}

module attributes {stable_mosaic.version = 11 : i64} {
  func.func @_conv_in_act_kernel(%arg0: i32, %arg1: memref<1x64x144xbf16, #tpu.memory_space<vmem>>, %arg2: memref<144x16xbf16, #tpu.memory_space<vmem>>, %arg3: memref<1x16xf32, #tpu.memory_space<vmem>>, %arg4: memref<1x16xf32, #tpu.memory_space<vmem>>, %arg5: memref<1x64x16xf32, #tpu.memory_space<vmem>>) attributes {dimension_semantics = [#tpu.dimension_semantics<parallel>], iteration_bounds = array<i64: 2>, scalar_prefetch = 0 : i64, scratch_operands = 0 : i64, tpu.core_type = #tpu.core_type<tc>, window_params = [{transform_indices = @transform_0, window_bounds = array<i64: 1, 64, 144>}, {pipeline_mode = #tpu.pipeline_mode<synchronous>, transform_indices = @transform_1, window_bounds = array<i64: 144, 16>}, {pipeline_mode = #tpu.pipeline_mode<synchronous>, transform_indices = @transform_2, window_bounds = array<i64: 1, 16>}, {pipeline_mode = #tpu.pipeline_mode<synchronous>, transform_indices = @transform_3, window_bounds = array<i64: 1, 16>}, {transform_indices = @transform_4, window_bounds = array<i64: 1, 64, 16>}]} {
    %c0 = arith.constant 0 : index
    %c0_0 = arith.constant 0 : index
    %c0_1 = arith.constant 0 : index
    %0 = vector.load %arg1[%c0, %c0_0, %c0_1] : memref<1x64x144xbf16, #tpu.memory_space<vmem>>, vector<1x64x144xbf16>
    %1 = vector.shape_cast %0 : vector<1x64x144xbf16> to vector<64x144xbf16>
    %c0_2 = arith.constant 0 : index
    %c0_3 = arith.constant 0 : index
    %2 = vector.load %arg2[%c0_2, %c0_3] : memref<144x16xbf16, #tpu.memory_space<vmem>>, vector<144x16xbf16>
    %cst = arith.constant dense<0.000000e+00> : vector<64x16xf32>
    %3 = tpu.matmul %1, %2, %cst {dimension_numbers = #tpu.dot_dimension_numbers<[1], [0], [0], [1], [0, 0, 1, 1], [], []>} : vector<64x144xbf16>, vector<144x16xbf16>, vector<64x16xf32> -> vector<64x16xf32>
    %c0_4 = arith.constant 0 : index
    %c0_5 = arith.constant 0 : index
    %4 = vector.load %arg3[%c0_4, %c0_5] : memref<1x16xf32, #tpu.memory_space<vmem>>, vector<1x16xf32>
    %c0_6 = arith.constant 0 : index
    %c0_7 = arith.constant 0 : index
    %5 = vector.load %arg4[%c0_6, %c0_7] : memref<1x16xf32, #tpu.memory_space<vmem>>, vector<1x16xf32>
    %cst_8 = arith.constant dense<0.000000e+00> : vector<16xf32>
    %6 = vector.multi_reduction <add>, %3, %cst_8 [0] : vector<64x16xf32> to vector<16xf32>
    %7 = vector.shape_cast %6 : vector<16xf32> to vector<1x16xf32>
    %cst_9 = arith.constant 6.400000e+01 : f32
    %8 = vector.broadcast %cst_9 : f32 to vector<1x16xf32>
    %9 = arith.divf %7, %8 : vector<1x16xf32>
    %10 = vector.broadcast %9 : vector<1x16xf32> to vector<64x16xf32>
    %11 = arith.subf %3, %10 : vector<64x16xf32>
    %12 = arith.mulf %11, %11 : vector<64x16xf32>
    %cst_10 = arith.constant dense<0.000000e+00> : vector<16xf32>
    %13 = vector.multi_reduction <add>, %12, %cst_10 [0] : vector<64x16xf32> to vector<16xf32>
    %14 = vector.shape_cast %13 : vector<16xf32> to vector<1x16xf32>
    %cst_11 = arith.constant 6.400000e+01 : f32
    %15 = vector.broadcast %cst_11 : f32 to vector<1x16xf32>
    %16 = arith.divf %14, %15 : vector<1x16xf32>
    %cst_12 = arith.constant 9.99999974E-6 : f32
    %17 = vector.broadcast %cst_12 : f32 to vector<1x16xf32>
    %18 = arith.addf %16, %17 : vector<1x16xf32>
    %19 = math.rsqrt %18 : vector<1x16xf32>
    %20 = vector.broadcast %19 : vector<1x16xf32> to vector<64x16xf32>
    %21 = arith.mulf %11, %20 : vector<64x16xf32>
    %22 = vector.broadcast %4 : vector<1x16xf32> to vector<64x16xf32>
    %23 = arith.mulf %21, %22 : vector<64x16xf32>
    %24 = vector.broadcast %5 : vector<1x16xf32> to vector<64x16xf32>
    %25 = arith.addf %23, %24 : vector<64x16xf32>
    %cst_13 = arith.constant 0.00999999977 : f32
    %26 = vector.broadcast %cst_13 : f32 to vector<64x16xf32>
    %27 = arith.mulf %26, %25 : vector<64x16xf32>
    %28 = arith.maximumf %25, %27 : vector<64x16xf32>
    %c0_14 = arith.constant 0 : index
    %c0_15 = arith.constant 0 : index
    %c0_16 = arith.constant 0 : index
    %29 = vector.load %arg5[%c0_14, %c0_15, %c0_16] : memref<1x64x16xf32, #tpu.memory_space<vmem>>, vector<1x64x16xf32>
    %30 = vector.shape_cast %29 : vector<1x64x16xf32> to vector<64x16xf32>
    %31 = vector.shape_cast %28 : vector<64x16xf32> to vector<1x64x16xf32>
    tpu.vector_store %arg5[%c0_14, %c0_15, %c0_16], %31 {strides = array<i32>} : memref<1x64x16xf32, #tpu.memory_space<vmem>>, vector<1x64x16xf32>,
    return
  }
  func.func @transform_0(%arg0: i32) -> (i32, i32, i32) {
    %c0_i32 = arith.constant 0 : i32
    %c0_i32_0 = arith.constant 0 : i32
    %c0_i32_1 = arith.constant 0 : i32
    return %arg0, %c0_i32, %c0_i32_0 : i32, i32, i32
  }
  func.func @transform_1(%arg0: i32) -> (i32, i32) {
    %c0_i32 = arith.constant 0 : i32
    %c0_i32_0 = arith.constant 0 : i32
    %c0_i32_1 = arith.constant 0 : i32
    return %c0_i32, %c0_i32_0 : i32, i32
  }
  func.func @transform_2(%arg0: i32) -> (i32, i32) {
    %c0_i32 = arith.constant 0 : i32
    %c0_i32_0 = arith.constant 0 : i32
    %c0_i32_1 = arith.constant 0 : i32
    return %c0_i32, %c0_i32_0 : i32, i32
  }
  func.func @transform_3(%arg0: i32) -> (i32, i32) {
    %c0_i32 = arith.constant 0 : i32
    %c0_i32_0 = arith.constant 0 : i32
    %c0_i32_1 = arith.constant 0 : i32
    return %c0_i32, %c0_i32_0 : i32, i32
  }
  func.func @transform_4(%arg0: i32) -> (i32, i32, i32) {
    %c0_i32 = arith.constant 0 : i32
    %c0_i32_0 = arith.constant 0 : i32
    %c0_i32_1 = arith.constant 0 : i32
    return %arg0, %c0_i32, %c0_i32_0 : i32, i32, i32
  }
}

module attributes {stable_mosaic.version = 11 : i64} {
  func.func @_conv_in_add_act_kernel(%arg0: i32, %arg1: memref<1x64x144xbf16, #tpu.memory_space<vmem>>, %arg2: memref<144x16xbf16, #tpu.memory_space<vmem>>, %arg3: memref<1x16xf32, #tpu.memory_space<vmem>>, %arg4: memref<1x16xf32, #tpu.memory_space<vmem>>, %arg5: memref<1x64x16xf32, #tpu.memory_space<vmem>>, %arg6: memref<1x64x16xf32, #tpu.memory_space<vmem>>) attributes {dimension_semantics = [#tpu.dimension_semantics<parallel>], iteration_bounds = array<i64: 2>, scalar_prefetch = 0 : i64, scratch_operands = 0 : i64, tpu.core_type = #tpu.core_type<tc>, window_params = [{transform_indices = @transform_0, window_bounds = array<i64: 1, 64, 144>}, {pipeline_mode = #tpu.pipeline_mode<synchronous>, transform_indices = @transform_1, window_bounds = array<i64: 144, 16>}, {pipeline_mode = #tpu.pipeline_mode<synchronous>, transform_indices = @transform_2, window_bounds = array<i64: 1, 16>}, {pipeline_mode = #tpu.pipeline_mode<synchronous>, transform_indices = @transform_3, window_bounds = array<i64: 1, 16>}, {transform_indices = @transform_4, window_bounds = array<i64: 1, 64, 16>}, {transform_indices = @transform_5, window_bounds = array<i64: 1, 64, 16>}]} {
    %c0 = arith.constant 0 : index
    %c0_0 = arith.constant 0 : index
    %c0_1 = arith.constant 0 : index
    %0 = vector.load %arg1[%c0, %c0_0, %c0_1] : memref<1x64x144xbf16, #tpu.memory_space<vmem>>, vector<1x64x144xbf16>
    %1 = vector.shape_cast %0 : vector<1x64x144xbf16> to vector<64x144xbf16>
    %c0_2 = arith.constant 0 : index
    %c0_3 = arith.constant 0 : index
    %2 = vector.load %arg2[%c0_2, %c0_3] : memref<144x16xbf16, #tpu.memory_space<vmem>>, vector<144x16xbf16>
    %cst = arith.constant dense<0.000000e+00> : vector<64x16xf32>
    %3 = tpu.matmul %1, %2, %cst {dimension_numbers = #tpu.dot_dimension_numbers<[1], [0], [0], [1], [0, 0, 1, 1], [], []>} : vector<64x144xbf16>, vector<144x16xbf16>, vector<64x16xf32> -> vector<64x16xf32>
    %c0_4 = arith.constant 0 : index
    %c0_5 = arith.constant 0 : index
    %4 = vector.load %arg3[%c0_4, %c0_5] : memref<1x16xf32, #tpu.memory_space<vmem>>, vector<1x16xf32>
    %c0_6 = arith.constant 0 : index
    %c0_7 = arith.constant 0 : index
    %5 = vector.load %arg4[%c0_6, %c0_7] : memref<1x16xf32, #tpu.memory_space<vmem>>, vector<1x16xf32>
    %cst_8 = arith.constant dense<0.000000e+00> : vector<16xf32>
    %6 = vector.multi_reduction <add>, %3, %cst_8 [0] : vector<64x16xf32> to vector<16xf32>
    %7 = vector.shape_cast %6 : vector<16xf32> to vector<1x16xf32>
    %cst_9 = arith.constant 6.400000e+01 : f32
    %8 = vector.broadcast %cst_9 : f32 to vector<1x16xf32>
    %9 = arith.divf %7, %8 : vector<1x16xf32>
    %10 = vector.broadcast %9 : vector<1x16xf32> to vector<64x16xf32>
    %11 = arith.subf %3, %10 : vector<64x16xf32>
    %12 = arith.mulf %11, %11 : vector<64x16xf32>
    %cst_10 = arith.constant dense<0.000000e+00> : vector<16xf32>
    %13 = vector.multi_reduction <add>, %12, %cst_10 [0] : vector<64x16xf32> to vector<16xf32>
    %14 = vector.shape_cast %13 : vector<16xf32> to vector<1x16xf32>
    %cst_11 = arith.constant 6.400000e+01 : f32
    %15 = vector.broadcast %cst_11 : f32 to vector<1x16xf32>
    %16 = arith.divf %14, %15 : vector<1x16xf32>
    %cst_12 = arith.constant 9.99999974E-6 : f32
    %17 = vector.broadcast %cst_12 : f32 to vector<1x16xf32>
    %18 = arith.addf %16, %17 : vector<1x16xf32>
    %19 = math.rsqrt %18 : vector<1x16xf32>
    %20 = vector.broadcast %19 : vector<1x16xf32> to vector<64x16xf32>
    %21 = arith.mulf %11, %20 : vector<64x16xf32>
    %22 = vector.broadcast %4 : vector<1x16xf32> to vector<64x16xf32>
    %23 = arith.mulf %21, %22 : vector<64x16xf32>
    %24 = vector.broadcast %5 : vector<1x16xf32> to vector<64x16xf32>
    %25 = arith.addf %23, %24 : vector<64x16xf32>
    %c0_13 = arith.constant 0 : index
    %c0_14 = arith.constant 0 : index
    %c0_15 = arith.constant 0 : index
    %26 = vector.load %arg5[%c0_13, %c0_14, %c0_15] : memref<1x64x16xf32, #tpu.memory_space<vmem>>, vector<1x64x16xf32>
    %27 = vector.shape_cast %26 : vector<1x64x16xf32> to vector<64x16xf32>
    %28 = arith.addf %25, %27 : vector<64x16xf32>
    %cst_16 = arith.constant 0.00999999977 : f32
    %29 = vector.broadcast %cst_16 : f32 to vector<64x16xf32>
    %30 = arith.mulf %29, %28 : vector<64x16xf32>
    %31 = arith.maximumf %28, %30 : vector<64x16xf32>
    %c0_17 = arith.constant 0 : index
    %c0_18 = arith.constant 0 : index
    %c0_19 = arith.constant 0 : index
    %32 = vector.load %arg6[%c0_17, %c0_18, %c0_19] : memref<1x64x16xf32, #tpu.memory_space<vmem>>, vector<1x64x16xf32>
    %33 = vector.shape_cast %32 : vector<1x64x16xf32> to vector<64x16xf32>
    %34 = vector.shape_cast %31 : vector<64x16xf32> to vector<1x64x16xf32>
    tpu.vector_store %arg6[%c0_17, %c0_18, %c0_19], %34 {strides = array<i32>} : memref<1x64x16xf32, #tpu.memory_space<vmem>>, vector<1x64x16xf32>,
    return
  }
  func.func @transform_0(%arg0: i32) -> (i32, i32, i32) {
    %c0_i32 = arith.constant 0 : i32
    %c0_i32_0 = arith.constant 0 : i32
    %c0_i32_1 = arith.constant 0 : i32
    return %arg0, %c0_i32, %c0_i32_0 : i32, i32, i32
  }
  func.func @transform_1(%arg0: i32) -> (i32, i32) {
    %c0_i32 = arith.constant 0 : i32
    %c0_i32_0 = arith.constant 0 : i32
    %c0_i32_1 = arith.constant 0 : i32
    return %c0_i32, %c0_i32_0 : i32, i32
  }
  func.func @transform_2(%arg0: i32) -> (i32, i32) {
    %c0_i32 = arith.constant 0 : i32
    %c0_i32_0 = arith.constant 0 : i32
    %c0_i32_1 = arith.constant 0 : i32
    return %c0_i32, %c0_i32_0 : i32, i32
  }
  func.func @transform_3(%arg0: i32) -> (i32, i32) {
    %c0_i32 = arith.constant 0 : i32
    %c0_i32_0 = arith.constant 0 : i32
    %c0_i32_1 = arith.constant 0 : i32
    return %c0_i32, %c0_i32_0 : i32, i32
  }
  func.func @transform_4(%arg0: i32) -> (i32, i32, i32) {
    %c0_i32 = arith.constant 0 : i32
    %c0_i32_0 = arith.constant 0 : i32
    %c0_i32_1 = arith.constant 0 : i32
    return %arg0, %c0_i32, %c0_i32_0 : i32, i32, i32
  }
  func.func @transform_5(%arg0: i32) -> (i32, i32, i32) {
    %c0_i32 = arith.constant 0 : i32
    %c0_i32_0 = arith.constant 0 : i32
    %c0_i32_1 = arith.constant 0 : i32
    return %arg0, %c0_i32, %c0_i32_0 : i32, i32, i32
  }
}

module attributes {stable_mosaic.version = 11 : i64} {
  func.func @_conv_in_act_kernel(%arg0: i32, %arg1: memref<1x16x144xbf16, #tpu.memory_space<vmem>>, %arg2: memref<144x32xbf16, #tpu.memory_space<vmem>>, %arg3: memref<1x32xf32, #tpu.memory_space<vmem>>, %arg4: memref<1x32xf32, #tpu.memory_space<vmem>>, %arg5: memref<1x16x32xf32, #tpu.memory_space<vmem>>) attributes {dimension_semantics = [#tpu.dimension_semantics<parallel>], iteration_bounds = array<i64: 2>, scalar_prefetch = 0 : i64, scratch_operands = 0 : i64, tpu.core_type = #tpu.core_type<tc>, window_params = [{transform_indices = @transform_0, window_bounds = array<i64: 1, 16, 144>}, {pipeline_mode = #tpu.pipeline_mode<synchronous>, transform_indices = @transform_1, window_bounds = array<i64: 144, 32>}, {pipeline_mode = #tpu.pipeline_mode<synchronous>, transform_indices = @transform_2, window_bounds = array<i64: 1, 32>}, {pipeline_mode = #tpu.pipeline_mode<synchronous>, transform_indices = @transform_3, window_bounds = array<i64: 1, 32>}, {transform_indices = @transform_4, window_bounds = array<i64: 1, 16, 32>}]} {
    %c0 = arith.constant 0 : index
    %c0_0 = arith.constant 0 : index
    %c0_1 = arith.constant 0 : index
    %0 = vector.load %arg1[%c0, %c0_0, %c0_1] : memref<1x16x144xbf16, #tpu.memory_space<vmem>>, vector<1x16x144xbf16>
    %1 = vector.shape_cast %0 : vector<1x16x144xbf16> to vector<16x144xbf16>
    %c0_2 = arith.constant 0 : index
    %c0_3 = arith.constant 0 : index
    %2 = vector.load %arg2[%c0_2, %c0_3] : memref<144x32xbf16, #tpu.memory_space<vmem>>, vector<144x32xbf16>
    %cst = arith.constant dense<0.000000e+00> : vector<16x32xf32>
    %3 = tpu.matmul %1, %2, %cst {dimension_numbers = #tpu.dot_dimension_numbers<[1], [0], [0], [1], [0, 0, 1, 1], [], []>} : vector<16x144xbf16>, vector<144x32xbf16>, vector<16x32xf32> -> vector<16x32xf32>
    %c0_4 = arith.constant 0 : index
    %c0_5 = arith.constant 0 : index
    %4 = vector.load %arg3[%c0_4, %c0_5] : memref<1x32xf32, #tpu.memory_space<vmem>>, vector<1x32xf32>
    %c0_6 = arith.constant 0 : index
    %c0_7 = arith.constant 0 : index
    %5 = vector.load %arg4[%c0_6, %c0_7] : memref<1x32xf32, #tpu.memory_space<vmem>>, vector<1x32xf32>
    %cst_8 = arith.constant dense<0.000000e+00> : vector<32xf32>
    %6 = vector.multi_reduction <add>, %3, %cst_8 [0] : vector<16x32xf32> to vector<32xf32>
    %7 = vector.shape_cast %6 : vector<32xf32> to vector<1x32xf32>
    %cst_9 = arith.constant 1.600000e+01 : f32
    %8 = vector.broadcast %cst_9 : f32 to vector<1x32xf32>
    %9 = arith.divf %7, %8 : vector<1x32xf32>
    %10 = vector.broadcast %9 : vector<1x32xf32> to vector<16x32xf32>
    %11 = arith.subf %3, %10 : vector<16x32xf32>
    %12 = arith.mulf %11, %11 : vector<16x32xf32>
    %cst_10 = arith.constant dense<0.000000e+00> : vector<32xf32>
    %13 = vector.multi_reduction <add>, %12, %cst_10 [0] : vector<16x32xf32> to vector<32xf32>
    %14 = vector.shape_cast %13 : vector<32xf32> to vector<1x32xf32>
    %cst_11 = arith.constant 1.600000e+01 : f32
    %15 = vector.broadcast %cst_11 : f32 to vector<1x32xf32>
    %16 = arith.divf %14, %15 : vector<1x32xf32>
    %cst_12 = arith.constant 9.99999974E-6 : f32
    %17 = vector.broadcast %cst_12 : f32 to vector<1x32xf32>
    %18 = arith.addf %16, %17 : vector<1x32xf32>
    %19 = math.rsqrt %18 : vector<1x32xf32>
    %20 = vector.broadcast %19 : vector<1x32xf32> to vector<16x32xf32>
    %21 = arith.mulf %11, %20 : vector<16x32xf32>
    %22 = vector.broadcast %4 : vector<1x32xf32> to vector<16x32xf32>
    %23 = arith.mulf %21, %22 : vector<16x32xf32>
    %24 = vector.broadcast %5 : vector<1x32xf32> to vector<16x32xf32>
    %25 = arith.addf %23, %24 : vector<16x32xf32>
    %cst_13 = arith.constant 0.00999999977 : f32
    %26 = vector.broadcast %cst_13 : f32 to vector<16x32xf32>
    %27 = arith.mulf %26, %25 : vector<16x32xf32>
    %28 = arith.maximumf %25, %27 : vector<16x32xf32>
    %c0_14 = arith.constant 0 : index
    %c0_15 = arith.constant 0 : index
    %c0_16 = arith.constant 0 : index
    %29 = vector.load %arg5[%c0_14, %c0_15, %c0_16] : memref<1x16x32xf32, #tpu.memory_space<vmem>>, vector<1x16x32xf32>
    %30 = vector.shape_cast %29 : vector<1x16x32xf32> to vector<16x32xf32>
    %31 = vector.shape_cast %28 : vector<16x32xf32> to vector<1x16x32xf32>
    tpu.vector_store %arg5[%c0_14, %c0_15, %c0_16], %31 {strides = array<i32>} : memref<1x16x32xf32, #tpu.memory_space<vmem>>, vector<1x16x32xf32>,
    return
  }
  func.func @transform_0(%arg0: i32) -> (i32, i32, i32) {
    %c0_i32 = arith.constant 0 : i32
    %c0_i32_0 = arith.constant 0 : i32
    %c0_i32_1 = arith.constant 0 : i32
    return %arg0, %c0_i32, %c0_i32_0 : i32, i32, i32
  }
  func.func @transform_1(%arg0: i32) -> (i32, i32) {
    %c0_i32 = arith.constant 0 : i32
    %c0_i32_0 = arith.constant 0 : i32
    %c0_i32_1 = arith.constant 0 : i32
    return %c0_i32, %c0_i32_0 : i32, i32
  }
  func.func @transform_2(%arg0: i32) -> (i32, i32) {
    %c0_i32 = arith.constant 0 : i32
    %c0_i32_0 = arith.constant 0 : i32
    %c0_i32_1 = arith.constant 0 : i32
    return %c0_i32, %c0_i32_0 : i32, i32
  }
  func.func @transform_3(%arg0: i32) -> (i32, i32) {
    %c0_i32 = arith.constant 0 : i32
    %c0_i32_0 = arith.constant 0 : i32
    %c0_i32_1 = arith.constant 0 : i32
    return %c0_i32, %c0_i32_0 : i32, i32
  }
  func.func @transform_4(%arg0: i32) -> (i32, i32, i32) {
    %c0_i32 = arith.constant 0 : i32
    %c0_i32_0 = arith.constant 0 : i32
    %c0_i32_1 = arith.constant 0 : i32
    return %arg0, %c0_i32, %c0_i32_0 : i32, i32, i32
  }
}

module attributes {stable_mosaic.version = 11 : i64} {
  func.func @_conv_in_projadd_act_kernel(%arg0: i32, %arg1: memref<1x16x288xbf16, #tpu.memory_space<vmem>>, %arg2: memref<288x32xbf16, #tpu.memory_space<vmem>>, %arg3: memref<1x32xf32, #tpu.memory_space<vmem>>, %arg4: memref<1x32xf32, #tpu.memory_space<vmem>>, %arg5: memref<1x16x16xbf16, #tpu.memory_space<vmem>>, %arg6: memref<16x32xbf16, #tpu.memory_space<vmem>>, %arg7: memref<1x32xf32, #tpu.memory_space<vmem>>, %arg8: memref<1x32xf32, #tpu.memory_space<vmem>>, %arg9: memref<1x16x32xf32, #tpu.memory_space<vmem>>) attributes {dimension_semantics = [#tpu.dimension_semantics<parallel>], iteration_bounds = array<i64: 2>, scalar_prefetch = 0 : i64, scratch_operands = 0 : i64, tpu.core_type = #tpu.core_type<tc>, window_params = [{transform_indices = @transform_0, window_bounds = array<i64: 1, 16, 288>}, {pipeline_mode = #tpu.pipeline_mode<synchronous>, transform_indices = @transform_1, window_bounds = array<i64: 288, 32>}, {pipeline_mode = #tpu.pipeline_mode<synchronous>, transform_indices = @transform_2, window_bounds = array<i64: 1, 32>}, {pipeline_mode = #tpu.pipeline_mode<synchronous>, transform_indices = @transform_3, window_bounds = array<i64: 1, 32>}, {transform_indices = @transform_4, window_bounds = array<i64: 1, 16, 16>}, {pipeline_mode = #tpu.pipeline_mode<synchronous>, transform_indices = @transform_5, window_bounds = array<i64: 16, 32>}, {pipeline_mode = #tpu.pipeline_mode<synchronous>, transform_indices = @transform_6, window_bounds = array<i64: 1, 32>}, {pipeline_mode = #tpu.pipeline_mode<synchronous>, transform_indices = @transform_7, window_bounds = array<i64: 1, 32>}, {transform_indices = @transform_8, window_bounds = array<i64: 1, 16, 32>}]} {
    %c0 = arith.constant 0 : index
    %c0_0 = arith.constant 0 : index
    %c0_1 = arith.constant 0 : index
    %0 = vector.load %arg1[%c0, %c0_0, %c0_1] : memref<1x16x288xbf16, #tpu.memory_space<vmem>>, vector<1x16x288xbf16>
    %1 = vector.shape_cast %0 : vector<1x16x288xbf16> to vector<16x288xbf16>
    %c0_2 = arith.constant 0 : index
    %c0_3 = arith.constant 0 : index
    %2 = vector.load %arg2[%c0_2, %c0_3] : memref<288x32xbf16, #tpu.memory_space<vmem>>, vector<288x32xbf16>
    %cst = arith.constant dense<0.000000e+00> : vector<16x32xf32>
    %3 = tpu.matmul %1, %2, %cst {dimension_numbers = #tpu.dot_dimension_numbers<[1], [0], [0], [1], [0, 0, 1, 1], [], []>} : vector<16x288xbf16>, vector<288x32xbf16>, vector<16x32xf32> -> vector<16x32xf32>
    %c0_4 = arith.constant 0 : index
    %c0_5 = arith.constant 0 : index
    %4 = vector.load %arg3[%c0_4, %c0_5] : memref<1x32xf32, #tpu.memory_space<vmem>>, vector<1x32xf32>
    %c0_6 = arith.constant 0 : index
    %c0_7 = arith.constant 0 : index
    %5 = vector.load %arg4[%c0_6, %c0_7] : memref<1x32xf32, #tpu.memory_space<vmem>>, vector<1x32xf32>
    %cst_8 = arith.constant dense<0.000000e+00> : vector<32xf32>
    %6 = vector.multi_reduction <add>, %3, %cst_8 [0] : vector<16x32xf32> to vector<32xf32>
    %7 = vector.shape_cast %6 : vector<32xf32> to vector<1x32xf32>
    %cst_9 = arith.constant 1.600000e+01 : f32
    %8 = vector.broadcast %cst_9 : f32 to vector<1x32xf32>
    %9 = arith.divf %7, %8 : vector<1x32xf32>
    %10 = vector.broadcast %9 : vector<1x32xf32> to vector<16x32xf32>
    %11 = arith.subf %3, %10 : vector<16x32xf32>
    %12 = arith.mulf %11, %11 : vector<16x32xf32>
    %cst_10 = arith.constant dense<0.000000e+00> : vector<32xf32>
    %13 = vector.multi_reduction <add>, %12, %cst_10 [0] : vector<16x32xf32> to vector<32xf32>
    %14 = vector.shape_cast %13 : vector<32xf32> to vector<1x32xf32>
    %cst_11 = arith.constant 1.600000e+01 : f32
    %15 = vector.broadcast %cst_11 : f32 to vector<1x32xf32>
    %16 = arith.divf %14, %15 : vector<1x32xf32>
    %cst_12 = arith.constant 9.99999974E-6 : f32
    %17 = vector.broadcast %cst_12 : f32 to vector<1x32xf32>
    %18 = arith.addf %16, %17 : vector<1x32xf32>
    %19 = math.rsqrt %18 : vector<1x32xf32>
    %20 = vector.broadcast %19 : vector<1x32xf32> to vector<16x32xf32>
    %21 = arith.mulf %11, %20 : vector<16x32xf32>
    %22 = vector.broadcast %4 : vector<1x32xf32> to vector<16x32xf32>
    %23 = arith.mulf %21, %22 : vector<16x32xf32>
    %24 = vector.broadcast %5 : vector<1x32xf32> to vector<16x32xf32>
    %25 = arith.addf %23, %24 : vector<16x32xf32>
    %c0_13 = arith.constant 0 : index
    %c0_14 = arith.constant 0 : index
    %c0_15 = arith.constant 0 : index
    %26 = vector.load %arg5[%c0_13, %c0_14, %c0_15] : memref<1x16x16xbf16, #tpu.memory_space<vmem>>, vector<1x16x16xbf16>
    %27 = vector.shape_cast %26 : vector<1x16x16xbf16> to vector<16x16xbf16>
    %c0_16 = arith.constant 0 : index
    %c0_17 = arith.constant 0 : index
    %28 = vector.load %arg6[%c0_16, %c0_17] : memref<16x32xbf16, #tpu.memory_space<vmem>>, vector<16x32xbf16>
    %cst_18 = arith.constant dense<0.000000e+00> : vector<16x32xf32>
    %29 = tpu.matmul %27, %28, %cst_18 {dimension_numbers = #tpu.dot_dimension_numbers<[1], [0], [0], [1], [0, 0, 1, 1], [], []>} : vector<16x16xbf16>, vector<16x32xbf16>, vector<16x32xf32> -> vector<16x32xf32>
    %c0_19 = arith.constant 0 : index
    %c0_20 = arith.constant 0 : index
    %30 = vector.load %arg7[%c0_19, %c0_20] : memref<1x32xf32, #tpu.memory_space<vmem>>, vector<1x32xf32>
    %c0_21 = arith.constant 0 : index
    %c0_22 = arith.constant 0 : index
    %31 = vector.load %arg8[%c0_21, %c0_22] : memref<1x32xf32, #tpu.memory_space<vmem>>, vector<1x32xf32>
    %cst_23 = arith.constant dense<0.000000e+00> : vector<32xf32>
    %32 = vector.multi_reduction <add>, %29, %cst_23 [0] : vector<16x32xf32> to vector<32xf32>
    %33 = vector.shape_cast %32 : vector<32xf32> to vector<1x32xf32>
    %cst_24 = arith.constant 1.600000e+01 : f32
    %34 = vector.broadcast %cst_24 : f32 to vector<1x32xf32>
    %35 = arith.divf %33, %34 : vector<1x32xf32>
    %36 = vector.broadcast %35 : vector<1x32xf32> to vector<16x32xf32>
    %37 = arith.subf %29, %36 : vector<16x32xf32>
    %38 = arith.mulf %37, %37 : vector<16x32xf32>
    %cst_25 = arith.constant dense<0.000000e+00> : vector<32xf32>
    %39 = vector.multi_reduction <add>, %38, %cst_25 [0] : vector<16x32xf32> to vector<32xf32>
    %40 = vector.shape_cast %39 : vector<32xf32> to vector<1x32xf32>
    %cst_26 = arith.constant 1.600000e+01 : f32
    %41 = vector.broadcast %cst_26 : f32 to vector<1x32xf32>
    %42 = arith.divf %40, %41 : vector<1x32xf32>
    %cst_27 = arith.constant 9.99999974E-6 : f32
    %43 = vector.broadcast %cst_27 : f32 to vector<1x32xf32>
    %44 = arith.addf %42, %43 : vector<1x32xf32>
    %45 = math.rsqrt %44 : vector<1x32xf32>
    %46 = vector.broadcast %45 : vector<1x32xf32> to vector<16x32xf32>
    %47 = arith.mulf %37, %46 : vector<16x32xf32>
    %48 = vector.broadcast %30 : vector<1x32xf32> to vector<16x32xf32>
    %49 = arith.mulf %47, %48 : vector<16x32xf32>
    %50 = vector.broadcast %31 : vector<1x32xf32> to vector<16x32xf32>
    %51 = arith.addf %49, %50 : vector<16x32xf32>
    %52 = arith.addf %25, %51 : vector<16x32xf32>
    %cst_28 = arith.constant 0.00999999977 : f32
    %53 = vector.broadcast %cst_28 : f32 to vector<16x32xf32>
    %54 = arith.mulf %53, %52 : vector<16x32xf32>
    %55 = arith.maximumf %52, %54 : vector<16x32xf32>
    %c0_29 = arith.constant 0 : index
    %c0_30 = arith.constant 0 : index
    %c0_31 = arith.constant 0 : index
    %56 = vector.load %arg9[%c0_29, %c0_30, %c0_31] : memref<1x16x32xf32, #tpu.memory_space<vmem>>, vector<1x16x32xf32>
    %57 = vector.shape_cast %56 : vector<1x16x32xf32> to vector<16x32xf32>
    %58 = vector.shape_cast %55 : vector<16x32xf32> to vector<1x16x32xf32>
    tpu.vector_store %arg9[%c0_29, %c0_30, %c0_31], %58 {strides = array<i32>} : memref<1x16x32xf32, #tpu.memory_space<vmem>>, vector<1x16x32xf32>,
    return
  }
  func.func @transform_0(%arg0: i32) -> (i32, i32, i32) {
    %c0_i32 = arith.constant 0 : i32
    %c0_i32_0 = arith.constant 0 : i32
    %c0_i32_1 = arith.constant 0 : i32
    return %arg0, %c0_i32, %c0_i32_0 : i32, i32, i32
  }
  func.func @transform_1(%arg0: i32) -> (i32, i32) {
    %c0_i32 = arith.constant 0 : i32
    %c0_i32_0 = arith.constant 0 : i32
    %c0_i32_1 = arith.constant 0 : i32
    return %c0_i32, %c0_i32_0 : i32, i32
  }
  func.func @transform_2(%arg0: i32) -> (i32, i32) {
    %c0_i32 = arith.constant 0 : i32
    %c0_i32_0 = arith.constant 0 : i32
    %c0_i32_1 = arith.constant 0 : i32
    return %c0_i32, %c0_i32_0 : i32, i32
  }
  func.func @transform_3(%arg0: i32) -> (i32, i32) {
    %c0_i32 = arith.constant 0 : i32
    %c0_i32_0 = arith.constant 0 : i32
    %c0_i32_1 = arith.constant 0 : i32
    return %c0_i32, %c0_i32_0 : i32, i32
  }
  func.func @transform_4(%arg0: i32) -> (i32, i32, i32) {
    %c0_i32 = arith.constant 0 : i32
    %c0_i32_0 = arith.constant 0 : i32
    %c0_i32_1 = arith.constant 0 : i32
    return %arg0, %c0_i32, %c0_i32_0 : i32, i32, i32
  }
  func.func @transform_5(%arg0: i32) -> (i32, i32) {
    %c0_i32 = arith.constant 0 : i32
    %c0_i32_0 = arith.constant 0 : i32
    %c0_i32_1 = arith.constant 0 : i32
    return %c0_i32, %c0_i32_0 : i32, i32
  }
  func.func @transform_6(%arg0: i32) -> (i32, i32) {
    %c0_i32 = arith.constant 0 : i32
    %c0_i32_0 = arith.constant 0 : i32
    %c0_i32_1 = arith.constant 0 : i32
    return %c0_i32, %c0_i32_0 : i32, i32
  }
  func.func @transform_7(%arg0: i32) -> (i32, i32) {
    %c0_i32 = arith.constant 0 : i32
    %c0_i32_0 = arith.constant 0 : i32
    %c0_i32_1 = arith.constant 0 : i32
    return %c0_i32, %c0_i32_0 : i32, i32
  }
  func.func @transform_8(%arg0: i32) -> (i32, i32, i32) {
    %c0_i32 = arith.constant 0 : i32
    %c0_i32_0 = arith.constant 0 : i32
    %c0_i32_1 = arith.constant 0 : i32
    return %arg0, %c0_i32, %c0_i32_0 : i32, i32, i32
  }
}

module attributes {stable_mosaic.version = 11 : i64} {
  func.func @_matmul_kernel(%arg0: i32, %arg1: memref<1x16x32xbf16, #tpu.memory_space<vmem>>, %arg2: memref<32x64xbf16, #tpu.memory_space<vmem>>, %arg3: memref<1x16x64xf32, #tpu.memory_space<vmem>>) attributes {dimension_semantics = [#tpu.dimension_semantics<parallel>], iteration_bounds = array<i64: 2>, scalar_prefetch = 0 : i64, scratch_operands = 0 : i64, tpu.core_type = #tpu.core_type<tc>, window_params = [{transform_indices = @transform_0, window_bounds = array<i64: 1, 16, 32>}, {pipeline_mode = #tpu.pipeline_mode<synchronous>, transform_indices = @transform_1, window_bounds = array<i64: 32, 64>}, {transform_indices = @transform_2, window_bounds = array<i64: 1, 16, 64>}]} {
    %c0 = arith.constant 0 : index
    %c0_0 = arith.constant 0 : index
    %c0_1 = arith.constant 0 : index
    %0 = vector.load %arg1[%c0, %c0_0, %c0_1] : memref<1x16x32xbf16, #tpu.memory_space<vmem>>, vector<1x16x32xbf16>
    %1 = vector.shape_cast %0 : vector<1x16x32xbf16> to vector<16x32xbf16>
    %c0_2 = arith.constant 0 : index
    %c0_3 = arith.constant 0 : index
    %2 = vector.load %arg2[%c0_2, %c0_3] : memref<32x64xbf16, #tpu.memory_space<vmem>>, vector<32x64xbf16>
    %cst = arith.constant dense<0.000000e+00> : vector<16x64xf32>
    %3 = tpu.matmul %1, %2, %cst {dimension_numbers = #tpu.dot_dimension_numbers<[1], [0], [0], [1], [0, 0, 1, 1], [], []>} : vector<16x32xbf16>, vector<32x64xbf16>, vector<16x64xf32> -> vector<16x64xf32>
    %c0_4 = arith.constant 0 : index
    %c0_5 = arith.constant 0 : index
    %c0_6 = arith.constant 0 : index
    %4 = vector.load %arg3[%c0_4, %c0_5, %c0_6] : memref<1x16x64xf32, #tpu.memory_space<vmem>>, vector<1x16x64xf32>
    %5 = vector.shape_cast %4 : vector<1x16x64xf32> to vector<16x64xf32>
    %6 = vector.shape_cast %3 : vector<16x64xf32> to vector<1x16x64xf32>
    tpu.vector_store %arg3[%c0_4, %c0_5, %c0_6], %6 {strides = array<i32>} : memref<1x16x64xf32, #tpu.memory_space<vmem>>, vector<1x16x64xf32>,
    return
  }
  func.func @transform_0(%arg0: i32) -> (i32, i32, i32) {
    %c0_i32 = arith.constant 0 : i32
    %c0_i32_0 = arith.constant 0 : i32
    %c0_i32_1 = arith.constant 0 : i32
    return %arg0, %c0_i32, %c0_i32_0 : i32, i32, i32
  }
  func.func @transform_1(%arg0: i32) -> (i32, i32) {
    %c0_i32 = arith.constant 0 : i32
    %c0_i32_0 = arith.constant 0 : i32
    %c0_i32_1 = arith.constant 0 : i32
    return %c0_i32, %c0_i32_0 : i32, i32
  }
  func.func @transform_2(%arg0: i32) -> (i32, i32, i32) {
    %c0_i32 = arith.constant 0 : i32
    %c0_i32_0 = arith.constant 0 : i32
    %c0_i32_1 = arith.constant 0 : i32
    return %arg0, %c0_i32, %c0_i32_0 : i32, i32, i32
  }
}

module attributes {stable_mosaic.version = 11 : i64} {
  func.func @_matmul_kernel(%arg0: i32, %arg1: memref<1x64x16xbf16, #tpu.memory_space<vmem>>, %arg2: memref<16x32xbf16, #tpu.memory_space<vmem>>, %arg3: memref<1x64x32xf32, #tpu.memory_space<vmem>>) attributes {dimension_semantics = [#tpu.dimension_semantics<parallel>], iteration_bounds = array<i64: 2>, scalar_prefetch = 0 : i64, scratch_operands = 0 : i64, tpu.core_type = #tpu.core_type<tc>, window_params = [{transform_indices = @transform_0, window_bounds = array<i64: 1, 64, 16>}, {pipeline_mode = #tpu.pipeline_mode<synchronous>, transform_indices = @transform_1, window_bounds = array<i64: 16, 32>}, {transform_indices = @transform_2, window_bounds = array<i64: 1, 64, 32>}]} {
    %c0 = arith.constant 0 : index
    %c0_0 = arith.constant 0 : index
    %c0_1 = arith.constant 0 : index
    %0 = vector.load %arg1[%c0, %c0_0, %c0_1] : memref<1x64x16xbf16, #tpu.memory_space<vmem>>, vector<1x64x16xbf16>
    %1 = vector.shape_cast %0 : vector<1x64x16xbf16> to vector<64x16xbf16>
    %c0_2 = arith.constant 0 : index
    %c0_3 = arith.constant 0 : index
    %2 = vector.load %arg2[%c0_2, %c0_3] : memref<16x32xbf16, #tpu.memory_space<vmem>>, vector<16x32xbf16>
    %cst = arith.constant dense<0.000000e+00> : vector<64x32xf32>
    %3 = tpu.matmul %1, %2, %cst {dimension_numbers = #tpu.dot_dimension_numbers<[1], [0], [0], [1], [0, 0, 1, 1], [], []>} : vector<64x16xbf16>, vector<16x32xbf16>, vector<64x32xf32> -> vector<64x32xf32>
    %c0_4 = arith.constant 0 : index
    %c0_5 = arith.constant 0 : index
    %c0_6 = arith.constant 0 : index
    %4 = vector.load %arg3[%c0_4, %c0_5, %c0_6] : memref<1x64x32xf32, #tpu.memory_space<vmem>>, vector<1x64x32xf32>
    %5 = vector.shape_cast %4 : vector<1x64x32xf32> to vector<64x32xf32>
    %6 = vector.shape_cast %3 : vector<64x32xf32> to vector<1x64x32xf32>
    tpu.vector_store %arg3[%c0_4, %c0_5, %c0_6], %6 {strides = array<i32>} : memref<1x64x32xf32, #tpu.memory_space<vmem>>, vector<1x64x32xf32>,
    return
  }
  func.func @transform_0(%arg0: i32) -> (i32, i32, i32) {
    %c0_i32 = arith.constant 0 : i32
    %c0_i32_0 = arith.constant 0 : i32
    %c0_i32_1 = arith.constant 0 : i32
    return %arg0, %c0_i32, %c0_i32_0 : i32, i32, i32
  }
  func.func @transform_1(%arg0: i32) -> (i32, i32) {
    %c0_i32 = arith.constant 0 : i32
    %c0_i32_0 = arith.constant 0 : i32
    %c0_i32_1 = arith.constant 0 : i32
    return %c0_i32, %c0_i32_0 : i32, i32
  }
  func.func @transform_2(%arg0: i32) -> (i32, i32, i32) {
    %c0_i32 = arith.constant 0 : i32
    %c0_i32_0 = arith.constant 0 : i32
    %c0_i32_1 = arith.constant 0 : i32
    return %arg0, %c0_i32, %c0_i32_0 : i32, i32, i32
  }
}

module attributes {stable_mosaic.version = 11 : i64} {
  func.func @_conv_in_act_kernel(%arg0: i32, %arg1: memref<1x64x288xbf16, #tpu.memory_space<vmem>>, %arg2: memref<288x16xbf16, #tpu.memory_space<vmem>>, %arg3: memref<1x16xf32, #tpu.memory_space<vmem>>, %arg4: memref<1x16xf32, #tpu.memory_space<vmem>>, %arg5: memref<1x64x16xf32, #tpu.memory_space<vmem>>) attributes {dimension_semantics = [#tpu.dimension_semantics<parallel>], iteration_bounds = array<i64: 2>, scalar_prefetch = 0 : i64, scratch_operands = 0 : i64, tpu.core_type = #tpu.core_type<tc>, window_params = [{transform_indices = @transform_0, window_bounds = array<i64: 1, 64, 288>}, {pipeline_mode = #tpu.pipeline_mode<synchronous>, transform_indices = @transform_1, window_bounds = array<i64: 288, 16>}, {pipeline_mode = #tpu.pipeline_mode<synchronous>, transform_indices = @transform_2, window_bounds = array<i64: 1, 16>}, {pipeline_mode = #tpu.pipeline_mode<synchronous>, transform_indices = @transform_3, window_bounds = array<i64: 1, 16>}, {transform_indices = @transform_4, window_bounds = array<i64: 1, 64, 16>}]} {
    %c0 = arith.constant 0 : index
    %c0_0 = arith.constant 0 : index
    %c0_1 = arith.constant 0 : index
    %0 = vector.load %arg1[%c0, %c0_0, %c0_1] : memref<1x64x288xbf16, #tpu.memory_space<vmem>>, vector<1x64x288xbf16>
    %1 = vector.shape_cast %0 : vector<1x64x288xbf16> to vector<64x288xbf16>
    %c0_2 = arith.constant 0 : index
    %c0_3 = arith.constant 0 : index
    %2 = vector.load %arg2[%c0_2, %c0_3] : memref<288x16xbf16, #tpu.memory_space<vmem>>, vector<288x16xbf16>
    %cst = arith.constant dense<0.000000e+00> : vector<64x16xf32>
    %3 = tpu.matmul %1, %2, %cst {dimension_numbers = #tpu.dot_dimension_numbers<[1], [0], [0], [1], [0, 0, 1, 1], [], []>} : vector<64x288xbf16>, vector<288x16xbf16>, vector<64x16xf32> -> vector<64x16xf32>
    %c0_4 = arith.constant 0 : index
    %c0_5 = arith.constant 0 : index
    %4 = vector.load %arg3[%c0_4, %c0_5] : memref<1x16xf32, #tpu.memory_space<vmem>>, vector<1x16xf32>
    %c0_6 = arith.constant 0 : index
    %c0_7 = arith.constant 0 : index
    %5 = vector.load %arg4[%c0_6, %c0_7] : memref<1x16xf32, #tpu.memory_space<vmem>>, vector<1x16xf32>
    %cst_8 = arith.constant dense<0.000000e+00> : vector<16xf32>
    %6 = vector.multi_reduction <add>, %3, %cst_8 [0] : vector<64x16xf32> to vector<16xf32>
    %7 = vector.shape_cast %6 : vector<16xf32> to vector<1x16xf32>
    %cst_9 = arith.constant 6.400000e+01 : f32
    %8 = vector.broadcast %cst_9 : f32 to vector<1x16xf32>
    %9 = arith.divf %7, %8 : vector<1x16xf32>
    %10 = vector.broadcast %9 : vector<1x16xf32> to vector<64x16xf32>
    %11 = arith.subf %3, %10 : vector<64x16xf32>
    %12 = arith.mulf %11, %11 : vector<64x16xf32>
    %cst_10 = arith.constant dense<0.000000e+00> : vector<16xf32>
    %13 = vector.multi_reduction <add>, %12, %cst_10 [0] : vector<64x16xf32> to vector<16xf32>
    %14 = vector.shape_cast %13 : vector<16xf32> to vector<1x16xf32>
    %cst_11 = arith.constant 6.400000e+01 : f32
    %15 = vector.broadcast %cst_11 : f32 to vector<1x16xf32>
    %16 = arith.divf %14, %15 : vector<1x16xf32>
    %cst_12 = arith.constant 9.99999974E-6 : f32
    %17 = vector.broadcast %cst_12 : f32 to vector<1x16xf32>
    %18 = arith.addf %16, %17 : vector<1x16xf32>
    %19 = math.rsqrt %18 : vector<1x16xf32>
    %20 = vector.broadcast %19 : vector<1x16xf32> to vector<64x16xf32>
    %21 = arith.mulf %11, %20 : vector<64x16xf32>
    %22 = vector.broadcast %4 : vector<1x16xf32> to vector<64x16xf32>
    %23 = arith.mulf %21, %22 : vector<64x16xf32>
    %24 = vector.broadcast %5 : vector<1x16xf32> to vector<64x16xf32>
    %25 = arith.addf %23, %24 : vector<64x16xf32>
    %cst_13 = arith.constant 0.00999999977 : f32
    %26 = vector.broadcast %cst_13 : f32 to vector<64x16xf32>
    %27 = arith.mulf %26, %25 : vector<64x16xf32>
    %28 = arith.maximumf %25, %27 : vector<64x16xf32>
    %c0_14 = arith.constant 0 : index
    %c0_15 = arith.constant 0 : index
    %c0_16 = arith.constant 0 : index
    %29 = vector.load %arg5[%c0_14, %c0_15, %c0_16] : memref<1x64x16xf32, #tpu.memory_space<vmem>>, vector<1x64x16xf32>
    %30 = vector.shape_cast %29 : vector<1x64x16xf32> to vector<64x16xf32>
    %31 = vector.shape_cast %28 : vector<64x16xf32> to vector<1x64x16xf32>
    tpu.vector_store %arg5[%c0_14, %c0_15, %c0_16], %31 {strides = array<i32>} : memref<1x64x16xf32, #tpu.memory_space<vmem>>, vector<1x64x16xf32>,
    return
  }
  func.func @transform_0(%arg0: i32) -> (i32, i32, i32) {
    %c0_i32 = arith.constant 0 : i32
    %c0_i32_0 = arith.constant 0 : i32
    %c0_i32_1 = arith.constant 0 : i32
    return %arg0, %c0_i32, %c0_i32_0 : i32, i32, i32
  }
  func.func @transform_1(%arg0: i32) -> (i32, i32) {
    %c0_i32 = arith.constant 0 : i32
    %c0_i32_0 = arith.constant 0 : i32
    %c0_i32_1 = arith.constant 0 : i32
    return %c0_i32, %c0_i32_0 : i32, i32
  }
  func.func @transform_2(%arg0: i32) -> (i32, i32) {
    %c0_i32 = arith.constant 0 : i32
    %c0_i32_0 = arith.constant 0 : i32
    %c0_i32_1 = arith.constant 0 : i32
    return %c0_i32, %c0_i32_0 : i32, i32
  }
  func.func @transform_3(%arg0: i32) -> (i32, i32) {
    %c0_i32 = arith.constant 0 : i32
    %c0_i32_0 = arith.constant 0 : i32
    %c0_i32_1 = arith.constant 0 : i32
    return %c0_i32, %c0_i32_0 : i32, i32
  }
  func.func @transform_4(%arg0: i32) -> (i32, i32, i32) {
    %c0_i32 = arith.constant 0 : i32
    %c0_i32_0 = arith.constant 0 : i32
    %c0_i32_1 = arith.constant 0 : i32
    return %arg0, %c0_i32, %c0_i32_0 : i32, i32, i32
  }
}

module attributes {stable_mosaic.version = 11 : i64} {
  func.func @_conv_in_act_kernel(%arg0: i32, %arg1: memref<1x256x144xbf16, #tpu.memory_space<vmem>>, %arg2: memref<144x8xbf16, #tpu.memory_space<vmem>>, %arg3: memref<1x8xf32, #tpu.memory_space<vmem>>, %arg4: memref<1x8xf32, #tpu.memory_space<vmem>>, %arg5: memref<1x256x8xf32, #tpu.memory_space<vmem>>) attributes {dimension_semantics = [#tpu.dimension_semantics<parallel>], iteration_bounds = array<i64: 2>, scalar_prefetch = 0 : i64, scratch_operands = 0 : i64, tpu.core_type = #tpu.core_type<tc>, window_params = [{transform_indices = @transform_0, window_bounds = array<i64: 1, 256, 144>}, {pipeline_mode = #tpu.pipeline_mode<synchronous>, transform_indices = @transform_1, window_bounds = array<i64: 144, 8>}, {pipeline_mode = #tpu.pipeline_mode<synchronous>, transform_indices = @transform_2, window_bounds = array<i64: 1, 8>}, {pipeline_mode = #tpu.pipeline_mode<synchronous>, transform_indices = @transform_3, window_bounds = array<i64: 1, 8>}, {transform_indices = @transform_4, window_bounds = array<i64: 1, 256, 8>}]} {
    %c0 = arith.constant 0 : index
    %c0_0 = arith.constant 0 : index
    %c0_1 = arith.constant 0 : index
    %0 = vector.load %arg1[%c0, %c0_0, %c0_1] : memref<1x256x144xbf16, #tpu.memory_space<vmem>>, vector<1x256x144xbf16>
    %1 = vector.shape_cast %0 : vector<1x256x144xbf16> to vector<256x144xbf16>
    %c0_2 = arith.constant 0 : index
    %c0_3 = arith.constant 0 : index
    %2 = vector.load %arg2[%c0_2, %c0_3] : memref<144x8xbf16, #tpu.memory_space<vmem>>, vector<144x8xbf16>
    %cst = arith.constant dense<0.000000e+00> : vector<256x8xf32>
    %3 = tpu.matmul %1, %2, %cst {dimension_numbers = #tpu.dot_dimension_numbers<[1], [0], [0], [1], [0, 0, 1, 1], [], []>} : vector<256x144xbf16>, vector<144x8xbf16>, vector<256x8xf32> -> vector<256x8xf32>
    %c0_4 = arith.constant 0 : index
    %c0_5 = arith.constant 0 : index
    %4 = vector.load %arg3[%c0_4, %c0_5] : memref<1x8xf32, #tpu.memory_space<vmem>>, vector<1x8xf32>
    %c0_6 = arith.constant 0 : index
    %c0_7 = arith.constant 0 : index
    %5 = vector.load %arg4[%c0_6, %c0_7] : memref<1x8xf32, #tpu.memory_space<vmem>>, vector<1x8xf32>
    %cst_8 = arith.constant dense<0.000000e+00> : vector<8xf32>
    %6 = vector.multi_reduction <add>, %3, %cst_8 [0] : vector<256x8xf32> to vector<8xf32>
    %7 = vector.shape_cast %6 : vector<8xf32> to vector<1x8xf32>
    %cst_9 = arith.constant 2.560000e+02 : f32
    %8 = vector.broadcast %cst_9 : f32 to vector<1x8xf32>
    %9 = arith.divf %7, %8 : vector<1x8xf32>
    %10 = vector.broadcast %9 : vector<1x8xf32> to vector<256x8xf32>
    %11 = arith.subf %3, %10 : vector<256x8xf32>
    %12 = arith.mulf %11, %11 : vector<256x8xf32>
    %cst_10 = arith.constant dense<0.000000e+00> : vector<8xf32>
    %13 = vector.multi_reduction <add>, %12, %cst_10 [0] : vector<256x8xf32> to vector<8xf32>
    %14 = vector.shape_cast %13 : vector<8xf32> to vector<1x8xf32>
    %cst_11 = arith.constant 2.560000e+02 : f32
    %15 = vector.broadcast %cst_11 : f32 to vector<1x8xf32>
    %16 = arith.divf %14, %15 : vector<1x8xf32>
    %cst_12 = arith.constant 9.99999974E-6 : f32
    %17 = vector.broadcast %cst_12 : f32 to vector<1x8xf32>
    %18 = arith.addf %16, %17 : vector<1x8xf32>
    %19 = math.rsqrt %18 : vector<1x8xf32>
    %20 = vector.broadcast %19 : vector<1x8xf32> to vector<256x8xf32>
    %21 = arith.mulf %11, %20 : vector<256x8xf32>
    %22 = vector.broadcast %4 : vector<1x8xf32> to vector<256x8xf32>
    %23 = arith.mulf %21, %22 : vector<256x8xf32>
    %24 = vector.broadcast %5 : vector<1x8xf32> to vector<256x8xf32>
    %25 = arith.addf %23, %24 : vector<256x8xf32>
    %cst_13 = arith.constant 0.00999999977 : f32
    %26 = vector.broadcast %cst_13 : f32 to vector<256x8xf32>
    %27 = arith.mulf %26, %25 : vector<256x8xf32>
    %28 = arith.maximumf %25, %27 : vector<256x8xf32>
    %c0_14 = arith.constant 0 : index
    %c0_15 = arith.constant 0 : index
    %c0_16 = arith.constant 0 : index
    %29 = vector.load %arg5[%c0_14, %c0_15, %c0_16] : memref<1x256x8xf32, #tpu.memory_space<vmem>>, vector<1x256x8xf32>
    %30 = vector.shape_cast %29 : vector<1x256x8xf32> to vector<256x8xf32>
    %31 = vector.shape_cast %28 : vector<256x8xf32> to vector<1x256x8xf32>
    tpu.vector_store %arg5[%c0_14, %c0_15, %c0_16], %31 {strides = array<i32>} : memref<1x256x8xf32, #tpu.memory_space<vmem>>, vector<1x256x8xf32>,
    return
  }
  func.func @transform_0(%arg0: i32) -> (i32, i32, i32) {
    %c0_i32 = arith.constant 0 : i32
    %c0_i32_0 = arith.constant 0 : i32
    %c0_i32_1 = arith.constant 0 : i32
    return %arg0, %c0_i32, %c0_i32_0 : i32, i32, i32
  }
  func.func @transform_1(%arg0: i32) -> (i32, i32) {
    %c0_i32 = arith.constant 0 : i32
    %c0_i32_0 = arith.constant 0 : i32
    %c0_i32_1 = arith.constant 0 : i32
    return %c0_i32, %c0_i32_0 : i32, i32
  }
  func.func @transform_2(%arg0: i32) -> (i32, i32) {
    %c0_i32 = arith.constant 0 : i32
    %c0_i32_0 = arith.constant 0 : i32
    %c0_i32_1 = arith.constant 0 : i32
    return %c0_i32, %c0_i32_0 : i32, i32
  }
  func.func @transform_3(%arg0: i32) -> (i32, i32) {
    %c0_i32 = arith.constant 0 : i32
    %c0_i32_0 = arith.constant 0 : i32
    %c0_i32_1 = arith.constant 0 : i32
    return %c0_i32, %c0_i32_0 : i32, i32
  }
  func.func @transform_4(%arg0: i32) -> (i32, i32, i32) {
    %c0_i32 = arith.constant 0 : i32
    %c0_i32_0 = arith.constant 0 : i32
    %c0_i32_1 = arith.constant 0 : i32
    return %arg0, %c0_i32, %c0_i32_0 : i32, i32, i32
  }
}

module attributes {stable_mosaic.version = 11 : i64} {
  func.func @_matmul_bias_kernel(%arg0: i32, %arg1: memref<1x256x8xbf16, #tpu.memory_space<vmem>>, %arg2: memref<8x2xbf16, #tpu.memory_space<vmem>>, %arg3: memref<1x2xf32, #tpu.memory_space<vmem>>, %arg4: memref<1x256x2xf32, #tpu.memory_space<vmem>>) attributes {dimension_semantics = [#tpu.dimension_semantics<parallel>], iteration_bounds = array<i64: 2>, scalar_prefetch = 0 : i64, scratch_operands = 0 : i64, tpu.core_type = #tpu.core_type<tc>, window_params = [{transform_indices = @transform_0, window_bounds = array<i64: 1, 256, 8>}, {pipeline_mode = #tpu.pipeline_mode<synchronous>, transform_indices = @transform_1, window_bounds = array<i64: 8, 2>}, {pipeline_mode = #tpu.pipeline_mode<synchronous>, transform_indices = @transform_2, window_bounds = array<i64: 1, 2>}, {transform_indices = @transform_3, window_bounds = array<i64: 1, 256, 2>}]} {
    %c0 = arith.constant 0 : index
    %c0_0 = arith.constant 0 : index
    %c0_1 = arith.constant 0 : index
    %0 = vector.load %arg1[%c0, %c0_0, %c0_1] : memref<1x256x8xbf16, #tpu.memory_space<vmem>>, vector<1x256x8xbf16>
    %1 = vector.shape_cast %0 : vector<1x256x8xbf16> to vector<256x8xbf16>
    %c0_2 = arith.constant 0 : index
    %c0_3 = arith.constant 0 : index
    %2 = vector.load %arg2[%c0_2, %c0_3] : memref<8x2xbf16, #tpu.memory_space<vmem>>, vector<8x2xbf16>
    %cst = arith.constant dense<0.000000e+00> : vector<256x2xf32>
    %3 = tpu.matmul %1, %2, %cst {dimension_numbers = #tpu.dot_dimension_numbers<[1], [0], [0], [1], [0, 0, 1, 1], [], []>} : vector<256x8xbf16>, vector<8x2xbf16>, vector<256x2xf32> -> vector<256x2xf32>
    %c0_4 = arith.constant 0 : index
    %c0_5 = arith.constant 0 : index
    %4 = vector.load %arg3[%c0_4, %c0_5] : memref<1x2xf32, #tpu.memory_space<vmem>>, vector<1x2xf32>
    %5 = vector.broadcast %4 : vector<1x2xf32> to vector<256x2xf32>
    %6 = arith.addf %3, %5 : vector<256x2xf32>
    %c0_6 = arith.constant 0 : index
    %c0_7 = arith.constant 0 : index
    %c0_8 = arith.constant 0 : index
    %7 = vector.load %arg4[%c0_6, %c0_7, %c0_8] : memref<1x256x2xf32, #tpu.memory_space<vmem>>, vector<1x256x2xf32>
    %8 = vector.shape_cast %7 : vector<1x256x2xf32> to vector<256x2xf32>
    %9 = vector.shape_cast %6 : vector<256x2xf32> to vector<1x256x2xf32>
    tpu.vector_store %arg4[%c0_6, %c0_7, %c0_8], %9 {strides = array<i32>} : memref<1x256x2xf32, #tpu.memory_space<vmem>>, vector<1x256x2xf32>,
    return
  }
  func.func @transform_0(%arg0: i32) -> (i32, i32, i32) {
    %c0_i32 = arith.constant 0 : i32
    %c0_i32_0 = arith.constant 0 : i32
    %c0_i32_1 = arith.constant 0 : i32
    return %arg0, %c0_i32, %c0_i32_0 : i32, i32, i32
  }
  func.func @transform_1(%arg0: i32) -> (i32, i32) {
    %c0_i32 = arith.constant 0 : i32
    %c0_i32_0 = arith.constant 0 : i32
    %c0_i32_1 = arith.constant 0 : i32
    return %c0_i32, %c0_i32_0 : i32, i32
  }
  func.func @transform_2(%arg0: i32) -> (i32, i32) {
    %c0_i32 = arith.constant 0 : i32
    %c0_i32_0 = arith.constant 0 : i32
    %c0_i32_1 = arith.constant 0 : i32
    return %c0_i32, %c0_i32_0 : i32, i32
  }
  func.func @transform_3(%arg0: i32) -> (i32, i32, i32) {
    %c0_i32 = arith.constant 0 : i32
    %c0_i32_0 = arith.constant 0 : i32
    %c0_i32_1 = arith.constant 0 : i32
    return %arg0, %c0_i32, %c0_i32_0 : i32, i32, i32
  }
}

</mosaic_0001>

<llo_original>
// kernel: forward.14
$region0: #{forward.14}
  #allocation0 [shape = 'u32[]', space=smem, size = 0x4, offset = 0x4, fixed_abs, tag = 'smem constant byte address 0x4 - core index']
  #allocation1 [shape = 'u32[72,128]{1,0:T(1,128)}', space=vmem, size = 0x9000, scoped, tag = 'internal scratch']
  %s0 = inlined_call_operand.vmem [shape: bf16[2,256,36], index: 0, kind: input, shape index: {}]
  %s1 = inlined_call_operand.vmem [shape: bf16[36,8], index: 1, kind: input, shape index: {}]
  %s2 = inlined_call_operand.vmem [shape: f32[1,8], index: 2, kind: input, shape index: {}]
  %s3 = inlined_call_operand.vmem [shape: f32[1,8], index: 3, kind: input, shape index: {}]
  %s4 = inlined_call_operand.vmem [shape: f32[2,256,8], index: 4, kind: output, shape index: {}]
  %s5 = sld [smem:[#allocation0]]
  $region49: #{forward.14} parent=0
    _
  %s7 = ssub.s32 1, %s5
  %s8 = scalar_select 0, %s7, %s5
  loop: start=0, step=1, limit=4
  $region2: #{forward.14} parent=0 // loop_pre_header
    _
  $region3: #{forward.14} parent=0 // loop_header
    %s10 = sphi 0, %s14
    %p11 = scmp.ge.s32.totalorder %s10, 4
    %s20 = sphi 0, %s22
    %s23 = sphi 0, %s20
    %s24 = sphi 0, %s23
    %s40 = sphi 0, %s24
    %s44 = sphi 0, %s44
    %s46 = sphi 0, %s44
    %s47 = sphi 0, %s46
    %s61 = sphi 0, %s47
    %s65 = sphi 0, %s65
    %s67 = sphi 0, %s65
    %s68 = sphi 0, %s67
    %s82 = sphi 0, %s68
    %s86 = sphi 0, %s86
    %s88 = sphi 0, %s86
    %s89 = sphi 0, %s88
    %s103 = sphi 0, %s89
    %s109 = sphi 0, %s111
    %s112 = sphi 0, %s109
    %s113 = sphi 0, %s112
    %s129 = sphi 0, %s113
  $region4: #{forward.14} parent=0 // loop_header_branch
    %13 = sbr.rel (%p11) target = $region8
  $region5: #{forward.14} parent=0 // loop_body
    %s15 = ssub.s32 %s10, 1
    %s16 = ssub.s32 %s10, 2
    %s17 = sadd.s32 %s10, 1
    %s18 = ssub.s32 %s10, %s17
    %p19 = scmp.eq.s32.totalorder %s18, 0
    %s21 = sadd.s32 %s20, 1
    %s22 = scalar_select %p19, %s20, %s21
    %p25 = pneg %p19
    %p26 = scmp.eq.s32.totalorder %s10, 1
    %p27 = por %p25, %p26
    %p28 = scmp.ne.s32.totalorder %s20, %s23
    %p29 = scmp.eq.s32.totalorder %s10, 0
    %p30 = por %p28, %p29
    %p31 = scmp.ne.s32.totalorder %s20, %s23
    %p32 = scmp.eq.s32.totalorder %s15, 1
    %p33 = por %p31, %p32
    %p34 = scmp.ne.s32.totalorder %s23, %s24
    %p35 = scmp.eq.s32.totalorder %s15, 0
    %p36 = por %p34, %p35
    %p37 = scmp.ne.s32.totalorder %s23, %s24
    %p38 = scmp.eq.s32.totalorder %s16, 1
    %p39 = por %p37, %p38
    %p41 = scmp.ne.s32.totalorder %s24, %s40
    %p42 = scmp.eq.s32.totalorder %s16, 0
    %p43 = por %p41, %p42
    %s45 = sadd.s32 %s44, 1
    %p48 = scmp.eq.s32.totalorder %s10, 1
    %p49 = scmp.ne.s32.totalorder %s44, %s46
    %p50 = scmp.eq.s32.totalorder %s10, 0
    %p51 = por %p49, %p50
    %p52 = scmp.ne.s32.totalorder %s44, %s46
    %p53 = scmp.eq.s32.totalorder %s15, 1
    %p54 = por %p52, %p53
    %p55 = scmp.ne.s32.totalorder %s46, %s47
    %p56 = scmp.eq.s32.totalorder %s15, 0
    %p57 = por %p55, %p56
    %p58 = scmp.ne.s32.totalorder %s46, %s47
    %p59 = scmp.eq.s32.totalorder %s16, 1
    %p60 = por %p58, %p59
    %p62 = scmp.ne.s32.totalorder %s47, %s61
    %p63 = scmp.eq.s32.totalorder %s16, 0
    %p64 = por %p62, %p63
    %s66 = sadd.s32 %s65, 1
    %p69 = scmp.eq.s32.totalorder %s10, 1
    %p70 = scmp.ne.s32.totalorder %s65, %s67
    %p71 = scmp.eq.s32.totalorder %s10, 0
    %p72 = por %p70, %p71
    %p73 = scmp.ne.s32.totalorder %s65, %s67
    %p74 = scmp.eq.s32.totalorder %s15, 1
    %p75 = por %p73, %p74
    %p76 = scmp.ne.s32.totalorder %s67, %s68
    %p77 = scmp.eq.s32.totalorder %s15, 0
    %p78 = por %p76, %p77
    %p79 = scmp.ne.s32.totalorder %s67, %s68
    %p80 = scmp.eq.s32.totalorder %s16, 1
    %p81 = por %p79, %p80
    %p83 = scmp.ne.s32.totalorder %s68, %s82
    %p84 = scmp.eq.s32.totalorder %s16, 0
    %p85 = por %p83, %p84
    %s87 = sadd.s32 %s86, 1
    %p90 = scmp.eq.s32.totalorder %s10, 1
    %p91 = scmp.ne.s32.totalorder %s86, %s88
    %p92 = scmp.eq.s32.totalorder %s10, 0
    %p93 = por %p91, %p92
    %p94 = scmp.ne.s32.totalorder %s86, %s88
    %p95 = scmp.eq.s32.totalorder %s15, 1
    %p96 = por %p94, %p95
    %p97 = scmp.ne.s32.totalorder %s88, %s89
    %p98 = scmp.eq.s32.totalorder %s15, 0
    %p99 = por %p97, %p98
    %p100 = scmp.ne.s32.totalorder %s88, %s89
    %p101 = scmp.eq.s32.totalorder %s16, 1
    %p102 = por %p100, %p101
    %p104 = scmp.ne.s32.totalorder %s89, %s103
    %p105 = scmp.eq.s32.totalorder %s16, 0
    %p106 = por %p104, %p105
    %s107 = ssub.s32 %s10, %s17
    %p108 = scmp.eq.s32.totalorder %s107, 0
    %s110 = sadd.s32 %s109, 1
    %s111 = scalar_select %p108, %s109, %s110
    %p114 = pneg %p108
    %p115 = scmp.eq.s32.totalorder %s10, 1
    %p116 = por %p114, %p115
    %p117 = scmp.ne.s32.totalorder %s109, %s112
    %p118 = scmp.eq.s32.totalorder %s10, 0
    %p119 = por %p117, %p118
    %p120 = scmp.ne.s32.totalorder %s109, %s112
    %p121 = scmp.eq.s32.totalorder %s15, 1
    %p122 = por %p120, %p121
    %p123 = scmp.ne.s32.totalorder %s112, %s113
    %p124 = scmp.eq.s32.totalorder %s15, 0
    %p125 = por %p123, %p124
    %p126 = scmp.ne.s32.totalorder %s112, %s113
    %p127 = scmp.eq.s32.totalorder %s16, 1
    %p128 = por %p126, %p127
    %p130 = scmp.ne.s32.totalorder %s113, %s129
    %p131 = scmp.eq.s32.totalorder %s16, 0
    %p132 = por %p130, %p131
    %p133 = scmp.le.s32.totalorder 1, %s10
    %p134 = scmp.lt.s32.totalorder %s10, 3
    %p135 = pnand %p133, %p134
    %p136 = pneg %p135
    // Predicated region
    $region9: #{forward.14} parent=5 // pred_check
      _
    $region10: #{forward.14} parent=5 // pred_check_branch
      %138 = sbr.rel (%p135) target = $region12
    $region11: #{forward.14} parent=5 // pred_region
      %s139 = ssub.s32 %s10, 1
      // Predicated region
      $region13: #{forward.14} parent=11 // pred_check
        %p140 = pneg %p57
      $region14: #{forward.14} parent=11 // pred_check_branch
        %142 = sbr.rel (%p140) target = $region16
      $region15: #{forward.14} parent=11 // pred_region
        _
      $region16: #{forward.14} parent=11 // pred_fallthru
        _
      // Predicated region
      $region17: #{forward.14} parent=11 // pred_check
        %p143 = pneg %p78
      $region18: #{forward.14} parent=11 // pred_check_branch
        %145 = sbr.rel (%p143) target = $region20
      $region19: #{forward.14} parent=11 // pred_region
        _
      $region20: #{forward.14} parent=11 // pred_fallthru
        _
      // Predicated region
      $region21: #{forward.14} parent=11 // pred_check
        %p146 = pneg %p99
      $region22: #{forward.14} parent=11 // pred_check_branch
        %148 = sbr.rel (%p146) target = $region24
      $region23: #{forward.14} parent=11 // pred_region
        _
      $region24: #{forward.14} parent=11 // pred_fallthru
        _
    $region12: #{forward.14} parent=5 // pred_fallthru
      _
    %p149 = scmp.lt.s32.totalorder %s10, 2
    // Predicated region
    $region25: #{forward.14} parent=5 // pred_check
      %p150 = pneg %p149
    $region26: #{forward.14} parent=5 // pred_check_branch
      %152 = sbr.rel (%p150) target = $region28
    $region27: #{forward.14} parent=5 // pred_region
      // Predicated region
      $region29: #{forward.14} parent=27 // pred_check
        %p153 = pneg %p30
      $region30: #{forward.14} parent=27 // pred_check_branch
        %155 = sbr.rel (%p153) target = $region32
      $region31: #{forward.14} parent=27 // pred_region
        %p156 = scmp.lt.s32.totalorder %s10, 1
        %s157 = scalar_select %p156, %s10, 1
        %s158 = smul.addr %s157, 32
        %s159 = smul.addr %s158, 4
        %s160 = scalar_lea.vmem %s0, %s159
      $region32: #{forward.14} parent=27 // pred_fallthru
        _
    $region28: #{forward.14} parent=5 // pred_fallthru
      _
    %p161 = scmp.le.s32.totalorder 1, %s10
    %p162 = scmp.lt.s32.totalorder %s10, 3
    %p163 = pnand %p161, %p162
    %p164 = pneg %p163
    // Predicated region
    $region33: #{forward.14} parent=5 // pred_check
      _
    $region34: #{forward.14} parent=5 // pred_check_branch
      %166 = sbr.rel (%p163) target = $region36
    $region35: #{forward.14} parent=5 // pred_region
      %s167 = ssub.s32 %s10, 1
      %p168 = scmp.lt.s32.totalorder %s15, 1
      %s169 = scalar_select %p168, %s15, 1
      %s170 = smul.addr %s169, 32
      %s171 = smul.addr %s170, 4
      %s172 = scalar_lea.vmem %s0, %s171
      %p173 = pneg %p36
      %p174 = pneg %p33
      %p175 = pneg %p57
      %p176 = pneg %p54
      %p177 = pneg %p78
      %p178 = pneg %p75
      %p179 = pneg %p99
      %p180 = pneg %p96
      %p181 = pneg %p125
      %p182 = pneg %p122
      %p183 = scmp.lt.s32.totalorder %s15, 1
      %s184 = scalar_select %p183, %s15, 1
      %s185 = smul.addr %s184, 32
      %s186 = smul.addr %s185, 8
      %s187 = scalar_lea.vmem %s4, %s186
      %p188 = scmp.lt.s32.totalorder %s15, 1
      %s189 = scalar_select %p188, %s15, 1
      %s190 = smul.addr %s189, 32
      %s191 = smul.addr %s190, 4
      %s192 = scalar_lea.vmem %s0, %s191
      %p193 = scmp.lt.s32.totalorder %s15, 1
      %s194 = scalar_select %p193, %s15, 1
      %s195 = smul.addr %s194, 32
      %s196 = smul.addr %s195, 8
      %s197 = scalar_lea.vmem %s4, %s196
      %v199 = vld [vmem:[%s192] sm:$0xf]
      %v200 = vld [vmem:[%s192 + $0x4] sm:$0xf]
      %v201 = vld [vmem:[%s192 + $0x8] sm:$0xf]
      %v202 = vld [vmem:[%s192 + $0xc] sm:$0xf]
      %v203 = vld [vmem:[%s192 + $0x10] sm:$0xf]
      %v204 = vld [vmem:[%s192 + $0x14] sm:$0xf]
      %v205 = vld [vmem:[%s192 + $0x18] sm:$0xf]
      %v206 = vld [vmem:[%s192 + $0x1c] sm:$0xf]
      %v207 = vld [vmem:[%s192 + $0x20] sm:$0xf]
      %v208 = vld [vmem:[%s192 + $0x24] sm:$0xf]
      %v209 = vld [vmem:[%s192 + $0x28] sm:$0xf]
      %v210 = vld [vmem:[%s192 + $0x2c] sm:$0xf]
      %v211 = vld [vmem:[%s192 + $0x30] sm:$0xf]
      %v212 = vld [vmem:[%s192 + $0x34] sm:$0xf]
      %v213 = vld [vmem:[%s192 + $0x38] sm:$0xf]
      %v214 = vld [vmem:[%s192 + $0x3c] sm:$0xf]
      %v215 = vld [vmem:[%s192 + $0x40] sm:$0xf]
      %v216 = vld [vmem:[%s192 + $0x44] sm:$0xf]
      %v217 = vld [vmem:[%s192 + $0x48] sm:$0xf]
      %v218 = vld [vmem:[%s192 + $0x4c] sm:$0xf]
      %v219 = vld [vmem:[%s192 + $0x50] sm:$0xf]
      %v220 = vld [vmem:[%s192 + $0x54] sm:$0xf]
      %v221 = vld [vmem:[%s192 + $0x58] sm:$0xf]
      %v222 = vld [vmem:[%s192 + $0x5c] sm:$0xf]
      %v223 = vld [vmem:[%s192 + $0x60] sm:$0xf]
      %v224 = vld [vmem:[%s192 + $0x64] sm:$0xf]
      %v225 = vld [vmem:[%s192 + $0x68] sm:$0xf]
      %v226 = vld [vmem:[%s192 + $0x6c] sm:$0xf]
      %v227 = vld [vmem:[%s192 + $0x70] sm:$0xf]
      %v228 = vld [vmem:[%s192 + $0x74] sm:$0xf]
      %v229 = vld [vmem:[%s192 + $0x78] sm:$0xf]
      %v230 = vld [vmem:[%s192 + $0x7c] sm:$0xf]
      %v231 = vld [vmem:[%s1] sm:$0xf]
      %v232 = vld [vmem:[%s1 + $0x4] sm:$0xf]
      %v233 = vld [vmem:[%s1 + $0x8] sm:$0xf]
      %v234 = vld [vmem:[%s1 + $0xc] sm:$0xf]
      %v235 = vld [vmem:[%s1 + $0x10] sm:$0x3]
      %v268 = vunpack.c.l.b16 %v199
      %v269 = vunpack.c.l.b16 %v200
      %v270 = vunpack.c.l.b16 %v201
      %v271 = vunpack.c.l.b16 %v202
      %v272 = vunpack.c.l.b16 %v203
      %v273 = vunpack.c.l.b16 %v204
      %v274 = vunpack.c.l.b16 %v205
      %v275 = vunpack.c.l.b16 %v206
      %v276 = vunpack.c.l.b16 %v207
      %v277 = vunpack.c.l.b16 %v208
      %v278 = vunpack.c.l.b16 %v209
      %v279 = vunpack.c.l.b16 %v210
      %v280 = vunpack.c.l.b16 %v211
      %v281 = vunpack.c.l.b16 %v212
      %v282 = vunpack.c.l.b16 %v213
      %v283 = vunpack.c.l.b16 %v214
      %v284 = vunpack.c.l.b16 %v215
      %v285 = vunpack.c.l.b16 %v216
      %v286 = vunpack.c.l.b16 %v217
      %v287 = vunpack.c.l.b16 %v218
      %v288 = vunpack.c.l.b16 %v219
      %v289 = vunpack.c.l.b16 %v220
      %v290 = vunpack.c.l.b16 %v221
      %v291 = vunpack.c.l.b16 %v222
      %v292 = vunpack.c.l.b16 %v223
      %v293 = vunpack.c.l.b16 %v224
      %v294 = vunpack.c.l.b16 %v225
      %v295 = vunpack.c.l.b16 %v226
      %v296 = vunpack.c.l.b16 %v227
      %v297 = vunpack.c.l.b16 %v228
      %v298 = vunpack.c.l.b16 %v229
      %v299 = vunpack.c.l.b16 %v230
      %v300 = vpack.c.b16 %v269, %v268
      %v301 = vpack.c.b16 %v271, %v270
      %v302 = vpack.c.b16 %v273, %v272
      %v303 = vpack.c.b16 %v275, %v274
      %v304 = vpack.c.b16 %v277, %v276
      %v305 = vpack.c.b16 %v279, %v278
      %v306 = vpack.c.b16 %v281, %v280
      %v307 = vpack.c.b16 %v283, %v282
      %v308 = vpack.c.b16 %v285, %v284
      %v309 = vpack.c.b16 %v287, %v286
      %v310 = vpack.c.b16 %v289, %v288
      %v311 = vpack.c.b16 %v291, %v290
      %v312 = vpack.c.b16 %v293, %v292
      %v313 = vpack.c.b16 %v295, %v294
      %v314 = vpack.c.b16 %v297, %v296
      %v315 = vpack.c.b16 %v299, %v298
      %v321 = vunpack.c.l.b16 %v231
      %v322 = vunpack.c.l.b16 %v232
      %v323 = vunpack.c.l.b16 %v233
      %v324 = vunpack.c.l.b16 %v234
      %v325 = vunpack.c.l.b16 %v235
      %v326 = vpack.c.b16 %v322, %v321
      %v327 = vpack.c.b16 %v324, %v323
      %v328 = vpack.c.b16 %v325, %v325
      %vm331 = vcmask 293888
      %v333 = vsel %vm331, %v300, 0
      %v336 = vsel %vm331, %v301, 0
      %v339 = vsel %vm331, %v302, 0
      %v342 = vsel %vm331, %v303, 0
      %v345 = vsel %vm331, %v304, 0
      %v348 = vsel %vm331, %v305, 0
      %v351 = vsel %vm331, %v306, 0
      %v354 = vsel %vm331, %v307, 0
      %v357 = vsel %vm331, %v308, 0
      %v360 = vsel %vm331, %v309, 0
      %v363 = vsel %vm331, %v310, 0
      %v366 = vsel %vm331, %v311, 0
      %v369 = vsel %vm331, %v312, 0
      %v372 = vsel %vm331, %v313, 0
      %v375 = vsel %vm331, %v314, 0
      %v378 = vsel %vm331, %v315, 0
      %vm380 = vcmask 1041408
      %v382 = vsel %vm380, %v328, 0
      %384 = vmatpush.bf16.msra.mxu0 0
      %385 = vmatpush.bf16.msra.mxu0 0
      %386 = vmatpush.bf16.msra.mxu0 0
      %387 = vmatpush.bf16.msra.mxu0 0
      %388 = vmatpush.bf16.msra.mxu0 0
      %389 = vmatpush.bf16.msra.mxu0 %v382
      %390 = vmatpush.bf16.msra.mxu0 %v327
      %391 = vmatpush.bf16.msra.mxu0 %v326
      %392 = vmatmul.bf16.gmra.mxu0 %v333
      %v393 = vpop.f32.mrf.mxu0
      %v394 = vadd.f32 0.0, %v393
      %v395 = vpop.f32.mrf.mxu0
      %v396 = vadd.f32 0.0, %v395
      %397 = vmatmul.bf16.gmra.mxu0 %v336
      %v398 = vpop.f32.mrf.mxu0
      %v399 = vadd.f32 0.0, %v398
      %v400 = vpop.f32.mrf.mxu0
      %v401 = vadd.f32 0.0, %v400
      %402 = vmatmul.bf16.gmra.mxu0 %v339
      %v403 = vpop.f32.mrf.mxu0
      %v404 = vadd.f32 0.0, %v403
      %v405 = vpop.f32.mrf.mxu0
      %v406 = vadd.f32 0.0, %v405
      %407 = vmatmul.bf16.gmra.mxu0 %v342
      %v408 = vpop.f32.mrf.mxu0
      %v409 = vadd.f32 0.0, %v408
      %v410 = vpop.f32.mrf.mxu0
      %v411 = vadd.f32 0.0, %v410
      %412 = vmatmul.bf16.gmra.mxu0 %v345
      %v413 = vpop.f32.mrf.mxu0
      %v414 = vadd.f32 0.0, %v413
      %v415 = vpop.f32.mrf.mxu0
      %v416 = vadd.f32 0.0, %v415
      %417 = vmatmul.bf16.gmra.mxu0 %v348
      %v418 = vpop.f32.mrf.mxu0
      %v419 = vadd.f32 0.0, %v418
      %v420 = vpop.f32.mrf.mxu0
      %v421 = vadd.f32 0.0, %v420
      %422 = vmatmul.bf16.gmra.mxu0 %v351
      %v423 = vpop.f32.mrf.mxu0
      %v424 = vadd.f32 0.0, %v423
      %v425 = vpop.f32.mrf.mxu0
      %v426 = vadd.f32 0.0, %v425
      %427 = vmatmul.bf16.gmra.mxu0 %v354
      %v428 = vpop.f32.mrf.mxu0
      %v429 = vadd.f32 0.0, %v428
      %v430 = vpop.f32.mrf.mxu0
      %v431 = vadd.f32 0.0, %v430
      %432 = vmatmul.bf16.gmra.mxu0 %v357
      %v433 = vpop.f32.mrf.mxu0
      %v434 = vadd.f32 0.0, %v433
      %v435 = vpop.f32.mrf.mxu0
      %v436 = vadd.f32 0.0, %v435
      %437 = vmatmul.bf16.gmra.mxu0 %v360
      %v438 = vpop.f32.mrf.mxu0
      %v439 = vadd.f32 0.0, %v438
      %v440 = vpop.f32.mrf.mxu0
      %v441 = vadd.f32 0.0, %v440
      %442 = vmatmul.bf16.gmra.mxu0 %v363
      %v443 = vpop.f32.mrf.mxu0
      %v444 = vadd.f32 0.0, %v443
      %v445 = vpop.f32.mrf.mxu0
      %v446 = vadd.f32 0.0, %v445
      %447 = vmatmul.bf16.gmra.mxu0 %v366
      %v448 = vpop.f32.mrf.mxu0
      %v449 = vadd.f32 0.0, %v448
      %v450 = vpop.f32.mrf.mxu0
      %v451 = vadd.f32 0.0, %v450
      %452 = vmatmul.bf16.gmra.mxu0 %v369
      %v453 = vpop.f32.mrf.mxu0
      %v454 = vadd.f32 0.0, %v453
      %v455 = vpop.f32.mrf.mxu0
      %v456 = vadd.f32 0.0, %v455
      %457 = vmatmul.bf16.gmra.mxu0 %v372
      %v458 = vpop.f32.mrf.mxu0
      %v459 = vadd.f32 0.0, %v458
      %v460 = vpop.f32.mrf.mxu0
      %v461 = vadd.f32 0.0, %v460
      %462 = vmatmul.bf16.gmra.mxu0 %v375
      %v463 = vpop.f32.mrf.mxu0
      %v464 = vadd.f32 0.0, %v463
      %v465 = vpop.f32.mrf.mxu0
      %v466 = vadd.f32 0.0, %v465
      %467 = vmatmul.bf16.gmra.mxu0 %v378
      %v468 = vpop.f32.mrf.mxu0
      %v469 = vadd.f32 0.0, %v468
      %v470 = vpop.f32.mrf.mxu0
      %v471 = vadd.f32 0.0, %v470
      %472 = vdwg.mxu0
      %v473 = vld [vmem:[%s2] sm:$0x1]
      %v474 = vld [vmem:[%s3] sm:$0x1]
      %vm475 = vcmask 64512
      %v476 = vsel %vm475, %v394, 0.0
      %v477 = vsel %vm475, %v396, 0.0
      %v478 = vadd.f32 %v476, %v477
      %v479 = vsel %vm475, %v399, 0.0
      %v480 = vadd.f32 %v478, %v479
      %v481 = vsel %vm475, %v401, 0.0
      %v482 = vadd.f32 %v480, %v481
      %v483 = vsel %vm475, %v404, 0.0
      %v484 = vadd.f32 %v482, %v483
      %v485 = vsel %vm475, %v406, 0.0
      %v486 = vadd.f32 %v484, %v485
      %v487 = vsel %vm475, %v409, 0.0
      %v488 = vadd.f32 %v486, %v487
      %v489 = vsel %vm475, %v411, 0.0
      %v490 = vadd.f32 %v488, %v489
      %v491 = vsel %vm475, %v414, 0.0
      %v492 = vadd.f32 %v490, %v491
      %v493 = vsel %vm475, %v416, 0.0
      %v494 = vadd.f32 %v492, %v493
      %v495 = vsel %vm475, %v419, 0.0
      %v496 = vadd.f32 %v494, %v495
      %v497 = vsel %vm475, %v421, 0.0
      %v498 = vadd.f32 %v496, %v497
      %v499 = vsel %vm475, %v424, 0.0
      %v500 = vadd.f32 %v498, %v499
      %v501 = vsel %vm475, %v426, 0.0
      %v502 = vadd.f32 %v500, %v501
      %v503 = vsel %vm475, %v429, 0.0
      %v504 = vadd.f32 %v502, %v503
      %v505 = vsel %vm475, %v431, 0.0
      %v506 = vadd.f32 %v504, %v505
      %v507 = vsel %vm475, %v434, 0.0
      %v508 = vadd.f32 %v506, %v507
      %v509 = vsel %vm475, %v436, 0.0
      %v510 = vadd.f32 %v508, %v509
      %v511 = vsel %vm475, %v439, 0.0
      %v512 = vadd.f32 %v510, %v511
      %v513 = vsel %vm475, %v441, 0.0
      %v514 = vadd.f32 %v512, %v513
      %v515 = vsel %vm475, %v444, 0.0
      %v516 = vadd.f32 %v514, %v515
      %v517 = vsel %vm475, %v446, 0.0
      %v518 = vadd.f32 %v516, %v517
      %v519 = vsel %vm475, %v449, 0.0
      %v520 = vadd.f32 %v518, %v519
      %v521 = vsel %vm475, %v451, 0.0
      %v522 = vadd.f32 %v520, %v521
      %v523 = vsel %vm475, %v454, 0.0
      %v524 = vadd.f32 %v522, %v523
      %v525 = vsel %vm475, %v456, 0.0
      %v526 = vadd.f32 %v524, %v525
      %v527 = vsel %vm475, %v459, 0.0
      %v528 = vadd.f32 %v526, %v527
      %v529 = vsel %vm475, %v461, 0.0
      %v530 = vadd.f32 %v528, %v529
      %v531 = vsel %vm475, %v464, 0.0
      %v532 = vadd.f32 %v530, %v531
      %v533 = vsel %vm475, %v466, 0.0
      %v534 = vadd.f32 %v532, %v533
      %v535 = vsel %vm475, %v469, 0.0
      %v536 = vadd.f32 %v534, %v535
      %v537 = vsel %vm475, %v471, 0.0
      %v538 = vadd.f32 %v536, %v537
      %v539 = vrot.slane %v538, 4
      %v540 = vadd.f32 %v538, %v539
      %v541 = vrot.slane %v540, 2
      %v542 = vadd.f32 %v540, %v541
      %v543 = vrot.slane %v542, 1
      %v544 = vadd.f32 %v542, %v543
      %v545 = vrcp.pop 256.0
      %v546 = vmul.f32 256.0, %v545
      %v547 = vsub.f32 1.0, %v546
      %v548 = vmul.f32 %v545, %v547
      %v549 = vadd.f32 %v545, %v548
      %vm550 = vweird.f32 %v545
      %v551 = vsel %vm550, %v545, %v549
      %v552 = vmul.f32 %v544, %v551
      %v553 = vsub.f32 %v394, %v552
      %v554 = vsub.f32 %v396, %v552
      %v555 = vsub.f32 %v399, %v552
      %v556 = vsub.f32 %v401, %v552
      %v557 = vsub.f32 %v404, %v552
      %v558 = vsub.f32 %v406, %v552
      %v559 = vsub.f32 %v409, %v552
      %v560 = vsub.f32 %v411, %v552
      %v561 = vsub.f32 %v414, %v552
      %v562 = vsub.f32 %v416, %v552
      %v563 = vsub.f32 %v419, %v552
      %v564 = vsub.f32 %v421, %v552
      %v565 = vsub.f32 %v424, %v552
      %v566 = vsub.f32 %v426, %v552
      %v567 = vsub.f32 %v429, %v552
      %v568 = vsub.f32 %v431, %v552
      %v569 = vsub.f32 %v434, %v552
      %v570 = vsub.f32 %v436, %v552
      %v571 = vsub.f32 %v439, %v552
      %v572 = vsub.f32 %v441, %v552
      %v573 = vsub.f32 %v444, %v552
      %v574 = vsub.f32 %v446, %v552
      %v575 = vsub.f32 %v449, %v552
      %v576 = vsub.f32 %v451, %v552
      %v577 = vsub.f32 %v454, %v552
      %v578 = vsub.f32 %v456, %v552
      %v579 = vsub.f32 %v459, %v552
      %v580 = vsub.f32 %v461, %v552
      %v581 = vsub.f32 %v464, %v552
      %v582 = vsub.f32 %v466, %v552
      %v583 = vsub.f32 %v469, %v552
      %v584 = vsub.f32 %v471, %v552
      %v585 = vmul.f32 %v553, %v553
      %v586 = vmul.f32 %v554, %v554
      %v587 = vmul.f32 %v555, %v555
      %v588 = vmul.f32 %v556, %v556
      %v589 = vmul.f32 %v557, %v557
      %v590 = vmul.f32 %v558, %v558
      %v591 = vmul.f32 %v559, %v559
      %v592 = vmul.f32 %v560, %v560
      %v593 = vmul.f32 %v561, %v561
      %v594 = vmul.f32 %v562, %v562
      %v595 = vmul.f32 %v563, %v563
      %v596 = vmul.f32 %v564, %v564
      %v597 = vmul.f32 %v565, %v565
      %v598 = vmul.f32 %v566, %v566
      %v599 = vmul.f32 %v567, %v567
      %v600 = vmul.f32 %v568, %v568
      %v601 = vmul.f32 %v569, %v569
      %v602 = vmul.f32 %v570, %v570
      %v603 = vmul.f32 %v571, %v571
      %v604 = vmul.f32 %v572, %v572
      %v605 = vmul.f32 %v573, %v573
      %v606 = vmul.f32 %v574, %v574
      %v607 = vmul.f32 %v575, %v575
      %v608 = vmul.f32 %v576, %v576
      %v609 = vmul.f32 %v577, %v577
      %v610 = vmul.f32 %v578, %v578
      %v611 = vmul.f32 %v579, %v579
      %v612 = vmul.f32 %v580, %v580
      %v613 = vmul.f32 %v581, %v581
      %v614 = vmul.f32 %v582, %v582
      %v615 = vmul.f32 %v583, %v583
      %v616 = vmul.f32 %v584, %v584
      %v617 = vsel %vm475, %v585, 0.0
      %v618 = vsel %vm475, %v586, 0.0
      %v619 = vadd.f32 %v617, %v618
      %v620 = vsel %vm475, %v587, 0.0
      %v621 = vadd.f32 %v619, %v620
      %v622 = vsel %vm475, %v588, 0.0
      %v623 = vadd.f32 %v621, %v622
      %v624 = vsel %vm475, %v589, 0.0
      %v625 = vadd.f32 %v623, %v624
      %v626 = vsel %vm475, %v590, 0.0
      %v627 = vadd.f32 %v625, %v626
      %v628 = vsel %vm475, %v591, 0.0
      %v629 = vadd.f32 %v627, %v628
      %v630 = vsel %vm475, %v592, 0.0
      %v631 = vadd.f32 %v629, %v630
      %v632 = vsel %vm475, %v593, 0.0
      %v633 = vadd.f32 %v631, %v632
      %v634 = vsel %vm475, %v594, 0.0
      %v635 = vadd.f32 %v633, %v634
      %v636 = vsel %vm475, %v595, 0.0
      %v637 = vadd.f32 %v635, %v636
      %v638 = vsel %vm475, %v596, 0.0
      %v639 = vadd.f32 %v637, %v638
      %v640 = vsel %vm475, %v597, 0.0
      %v641 = vadd.f32 %v639, %v640
      %v642 = vsel %vm475, %v598, 0.0
      %v643 = vadd.f32 %v641, %v642
      %v644 = vsel %vm475, %v599, 0.0
      %v645 = vadd.f32 %v643, %v644
      %v646 = vsel %vm475, %v600, 0.0
      %v647 = vadd.f32 %v645, %v646
      %v648 = vsel %vm475, %v601, 0.0
      %v649 = vadd.f32 %v647, %v648
      %v650 = vsel %vm475, %v602, 0.0
      %v651 = vadd.f32 %v649, %v650
      %v652 = vsel %vm475, %v603, 0.0
      %v653 = vadd.f32 %v651, %v652
      %v654 = vsel %vm475, %v604, 0.0
      %v655 = vadd.f32 %v653, %v654
      %v656 = vsel %vm475, %v605, 0.0
      %v657 = vadd.f32 %v655, %v656
      %v658 = vsel %vm475, %v606, 0.0
      %v659 = vadd.f32 %v657, %v658
      %v660 = vsel %vm475, %v607, 0.0
      %v661 = vadd.f32 %v659, %v660
      %v662 = vsel %vm475, %v608, 0.0
      %v663 = vadd.f32 %v661, %v662
      %v664 = vsel %vm475, %v609, 0.0
      %v665 = vadd.f32 %v663, %v664
      %v666 = vsel %vm475, %v610, 0.0
      %v667 = vadd.f32 %v665, %v666
      %v668 = vsel %vm475, %v611, 0.0
      %v669 = vadd.f32 %v667, %v668
      %v670 = vsel %vm475, %v612, 0.0
      %v671 = vadd.f32 %v669, %v670
      %v672 = vsel %vm475, %v613, 0.0
      %v673 = vadd.f32 %v671, %v672
      %v674 = vsel %vm475, %v614, 0.0
      %v675 = vadd.f32 %v673, %v674
      %v676 = vsel %vm475, %v615, 0.0
      %v677 = vadd.f32 %v675, %v676
      %v678 = vsel %vm475, %v616, 0.0
      %v679 = vadd.f32 %v677, %v678
      %v680 = vrot.slane %v679, 4
      %v681 = vadd.f32 %v679, %v680
      %v682 = vrot.slane %v681, 2
      %v683 = vadd.f32 %v681, %v682
      %v684 = vrot.slane %v683, 1
      %v685 = vadd.f32 %v683, %v684
      %v686 = vmul.f32 %v685, %v551
      %v687 = vadd.f32 %v686, 1e-05
      %v688 = vrsqrt.pop %v687
      %v689 = vmul.f32 %v688, %v687
      %v690 = vmul.f32 %v689, %v688
      %v691 = vmul.f32 0.5, %v690
      %v692 = vsub.f32 1.5, %v691
      %v693 = vmul.f32 %v688, %v692
      %vm694 = vweird.f32 %v687
      %vm695 = vweird.f32 %v688
      %vm696 = vmor %vm694, %vm695
      %v697 = vsel %vm696, %v688, %v693
      %v698 = vmul.f32 %v553, %v697
      %v699 = vmul.f32 %v554, %v697
      %v700 = vmul.f32 %v555, %v697
      %v701 = vmul.f32 %v556, %v697
      %v702 = vmul.f32 %v557, %v697
      %v703 = vmul.f32 %v558, %v697
      %v704 = vmul.f32 %v559, %v697
      %v705 = vmul.f32 %v560, %v697
      %v706 = vmul.f32 %v561, %v697
      %v707 = vmul.f32 %v562, %v697
      %v708 = vmul.f32 %v563, %v697
      %v709 = vmul.f32 %v564, %v697
      %v710 = vmul.f32 %v565, %v697
      %v711 = vmul.f32 %v566, %v697
      %v712 = vmul.f32 %v567, %v697
      %v713 = vmul.f32 %v568, %v697
      %v714 = vmul.f32 %v569, %v697
      %v715 = vmul.f32 %v570, %v697
      %v716 = vmul.f32 %v571, %v697
      %v717 = vmul.f32 %v572, %v697
      %v718 = vmul.f32 %v573, %v697
      %v719 = vmul.f32 %v574, %v697
      %v720 = vmul.f32 %v575, %v697
      %v721 = vmul.f32 %v576, %v697
      %v722 = vmul.f32 %v577, %v697
      %v723 = vmul.f32 %v578, %v697
      %v724 = vmul.f32 %v579, %v697
      %v725 = vmul.f32 %v580, %v697
      %v726 = vmul.f32 %v581, %v697
      %v727 = vmul.f32 %v582, %v697
      %v728 = vmul.f32 %v583, %v697
      %v729 = vmul.f32 %v584, %v697
      %v731 = vperm.slane %v473, 0
      %v733 = vmul.f32 %v698, %v731
      %v734 = vmul.f32 %v699, %v731
      %v735 = vmul.f32 %v700, %v731
      %v736 = vmul.f32 %v701, %v731
      %v737 = vmul.f32 %v702, %v731
      %v738 = vmul.f32 %v703, %v731
      %v739 = vmul.f32 %v704, %v731
      %v740 = vmul.f32 %v705, %v731
      %v741 = vmul.f32 %v706, %v731
      %v742 = vmul.f32 %v707, %v731
      %v743 = vmul.f32 %v708, %v731
      %v744 = vmul.f32 %v709, %v731
      %v745 = vmul.f32 %v710, %v731
      %v746 = vmul.f32 %v711, %v731
      %v747 = vmul.f32 %v712, %v731
      %v748 = vmul.f32 %v713, %v731
      %v749 = vmul.f32 %v714, %v731
      %v750 = vmul.f32 %v715, %v731
      %v751 = vmul.f32 %v716, %v731
      %v752 = vmul.f32 %v717, %v731
      %v753 = vmul.f32 %v718, %v731
      %v754 = vmul.f32 %v719, %v731
      %v755 = vmul.f32 %v720, %v731
      %v756 = vmul.f32 %v721, %v731
      %v757 = vmul.f32 %v722, %v731
      %v758 = vmul.f32 %v723, %v731
      %v759 = vmul.f32 %v724, %v731
      %v760 = vmul.f32 %v725, %v731
      %v761 = vmul.f32 %v726, %v731
      %v762 = vmul.f32 %v727, %v731
      %v763 = vmul.f32 %v728, %v731
      %v764 = vmul.f32 %v729, %v731
      %v766 = vperm.slane %v474, 0
      %v768 = vadd.f32 %v733, %v766
      %v769 = vadd.f32 %v734, %v766
      %v770 = vadd.f32 %v735, %v766
      %v771 = vadd.f32 %v736, %v766
      %v772 = vadd.f32 %v737, %v766
      %v773 = vadd.f32 %v738, %v766
      %v774 = vadd.f32 %v739, %v766
      %v775 = vadd.f32 %v740, %v766
      %v776 = vadd.f32 %v741, %v766
      %v777 = vadd.f32 %v742, %v766
      %v778 = vadd.f32 %v743, %v766
      %v779 = vadd.f32 %v744, %v766
      %v780 = vadd.f32 %v745, %v766
      %v781 = vadd.f32 %v746, %v766
      %v782 = vadd.f32 %v747, %v766
      %v783 = vadd.f32 %v748, %v766
      %v784 = vadd.f32 %v749, %v766
      %v785 = vadd.f32 %v750, %v766
      %v786 = vadd.f32 %v751, %v766
      %v787 = vadd.f32 %v752, %v766
      %v788 = vadd.f32 %v753, %v766
      %v789 = vadd.f32 %v754, %v766
      %v790 = vadd.f32 %v755, %v766
      %v791 = vadd.f32 %v756, %v766
      %v792 = vadd.f32 %v757, %v766
      %v793 = vadd.f32 %v758, %v766
      %v794 = vadd.f32 %v759, %v766
      %v795 = vadd.f32 %v760, %v766
      %v796 = vadd.f32 %v761, %v766
      %v797 = vadd.f32 %v762, %v766
      %v798 = vadd.f32 %v763, %v766
      %v799 = vadd.f32 %v764, %v766
      %v800 = vmul.f32 %v768, 0.01
      %v801 = vmul.f32 %v769, 0.01
      %v802 = vmul.f32 %v770, 0.01
      %v803 = vmul.f32 %v771, 0.01
      %v804 = vmul.f32 %v772, 0.01
      %v805 = vmul.f32 %v773, 0.01
      %v806 = vmul.f32 %v774, 0.01
      %v807 = vmul.f32 %v775, 0.01
      %v808 = vmul.f32 %v776, 0.01
      %v809 = vmul.f32 %v777, 0.01
      %v810 = vmul.f32 %v778, 0.01
      %v811 = vmul.f32 %v779, 0.01
      %v812 = vmul.f32 %v780, 0.01
      %v813 = vmul.f32 %v781, 0.01
      %v814 = vmul.f32 %v782, 0.01
      %v815 = vmul.f32 %v783, 0.01
      %v816 = vmul.f32 %v784, 0.01
      %v817 = vmul.f32 %v785, 0.01
      %v818 = vmul.f32 %v786, 0.01
      %v819 = vmul.f32 %v787, 0.01
      %v820 = vmul.f32 %v788, 0.01
      %v821 = vmul.f32 %v789, 0.01
      %v822 = vmul.f32 %v790, 0.01
      %v823 = vmul.f32 %v791, 0.01
      %v824 = vmul.f32 %v792, 0.01
      %v825 = vmul.f32 %v793, 0.01
      %v826 = vmul.f32 %v794, 0.01
      %v827 = vmul.f32 %v795, 0.01
      %v828 = vmul.f32 %v796, 0.01
      %v829 = vmul.f32 %v797, 0.01
      %v830 = vmul.f32 %v798, 0.01
      %v831 = vmul.f32 %v799, 0.01
      %v832 = vmax.f32 %v768, %v800
      %v833 = vmax.f32 %v769, %v801
      %v834 = vmax.f32 %v770, %v802
      %v835 = vmax.f32 %v771, %v803
      %v836 = vmax.f32 %v772, %v804
      %v837 = vmax.f32 %v773, %v805
      %v838 = vmax.f32 %v774, %v806
      %v839 = vmax.f32 %v775, %v807
      %v840 = vmax.f32 %v776, %v808
      %v841 = vmax.f32 %v777, %v809
      %v842 = vmax.f32 %v778, %v810
      %v843 = vmax.f32 %v779, %v811
      %v844 = vmax.f32 %v780, %v812
      %v845 = vmax.f32 %v781, %v813
      %v846 = vmax.f32 %v782, %v814
      %v847 = vmax.f32 %v783, %v815
      %v848 = vmax.f32 %v784, %v816
      %v849 = vmax.f32 %v785, %v817
      %v850 = vmax.f32 %v786, %v818
      %v851 = vmax.f32 %v787, %v819
      %v852 = vmax.f32 %v788, %v820
      %v853 = vmax.f32 %v789, %v821
      %v854 = vmax.f32 %v790, %v822
      %v855 = vmax.f32 %v791, %v823
      %v856 = vmax.f32 %v792, %v824
      %v857 = vmax.f32 %v793, %v825
      %v858 = vmax.f32 %v794, %v826
      %v859 = vmax.f32 %v795, %v827
      %v860 = vmax.f32 %v796, %v828
      %v861 = vmax.f32 %v797, %v829
      %v862 = vmax.f32 %v798, %v830
      %v863 = vmax.f32 %v799, %v831
      %864 = vst.msk [vmem:[%s197] sm:$0xff] %vm475, %v832
      %865 = vst.msk [vmem:[%s197 + $0x8] sm:$0xff] %vm475, %v833
      %866 = vst.msk [vmem:[%s197 + $0x10] sm:$0xff] %vm475, %v834
      %867 = vst.msk [vmem:[%s197 + $0x18] sm:$0xff] %vm475, %v835
      %868 = vst.msk [vmem:[%s197 + $0x20] sm:$0xff] %vm475, %v836
      %869 = vst.msk [vmem:[%s197 + $0x28] sm:$0xff] %vm475, %v837
      %870 = vst.msk [vmem:[%s197 + $0x30] sm:$0xff] %vm475, %v838
      %871 = vst.msk [vmem:[%s197 + $0x38] sm:$0xff] %vm475, %v839
      %872 = vst.msk [vmem:[%s197 + $0x40] sm:$0xff] %vm475, %v840
      %873 = vst.msk [vmem:[%s197 + $0x48] sm:$0xff] %vm475, %v841
      %874 = vst.msk [vmem:[%s197 + $0x50] sm:$0xff] %vm475, %v842
      %875 = vst.msk [vmem:[%s197 + $0x58] sm:$0xff] %vm475, %v843
      %876 = vst.msk [vmem:[%s197 + $0x60] sm:$0xff] %vm475, %v844
      %877 = vst.msk [vmem:[%s197 + $0x68] sm:$0xff] %vm475, %v845
      %878 = vst.msk [vmem:[%s197 + $0x70] sm:$0xff] %vm475, %v846
      %879 = vst.msk [vmem:[%s197 + $0x78] sm:$0xff] %vm475, %v847
      %880 = vst.msk [vmem:[%s197 + $0x80] sm:$0xff] %vm475, %v848
      %881 = vst.msk [vmem:[%s197 + $0x88] sm:$0xff] %vm475, %v849
      %882 = vst.msk [vmem:[%s197 + $0x90] sm:$0xff] %vm475, %v850
      %883 = vst.msk [vmem:[%s197 + $0x98] sm:$0xff] %vm475, %v851
      %884 = vst.msk [vmem:[%s197 + $0xa0] sm:$0xff] %vm475, %v852
      %885 = vst.msk [vmem:[%s197 + $0xa8] sm:$0xff] %vm475, %v853
      %886 = vst.msk [vmem:[%s197 + $0xb0] sm:$0xff] %vm475, %v854
      %887 = vst.msk [vmem:[%s197 + $0xb8] sm:$0xff] %vm475, %v855
      %888 = vst.msk [vmem:[%s197 + $0xc0] sm:$0xff] %vm475, %v856
      %889 = vst.msk [vmem:[%s197 + $0xc8] sm:$0xff] %vm475, %v857
      %890 = vst.msk [vmem:[%s197 + $0xd0] sm:$0xff] %vm475, %v858
      %891 = vst.msk [vmem:[%s197 + $0xd8] sm:$0xff] %vm475, %v859
      %892 = vst.msk [vmem:[%s197 + $0xe0] sm:$0xff] %vm475, %v860
      %893 = vst.msk [vmem:[%s197 + $0xe8] sm:$0xff] %vm475, %v861
      %894 = vst.msk [vmem:[%s197 + $0xf0] sm:$0xff] %vm475, %v862
      %895 = vst.msk [vmem:[%s197 + $0xf8] sm:$0xff] %vm475, %v863
      %p896 = scmp.lt.s32.totalorder %s15, 1
      %s897 = scalar_select %p896, %s15, 1
      %s898 = smul.addr %s897, 32
      %s899 = smul.addr %s898, 8
      %s900 = scalar_lea.vmem %s4, %s899
      // Predicated region
      $region37: #{forward.14} parent=35 // pred_check
        %p901 = pneg %p122
      $region38: #{forward.14} parent=35 // pred_check_branch
        %903 = sbr.rel (%p901) target = $region40
      $region39: #{forward.14} parent=35 // pred_region
        _
      $region40: #{forward.14} parent=35 // pred_fallthru
        _
    $region36: #{forward.14} parent=5 // pred_fallthru
      _
    %p904 = scmp.le.s32.totalorder 2, %s10
    // Predicated region
    $region41: #{forward.14} parent=5 // pred_check
      %p905 = pneg %p904
    $region42: #{forward.14} parent=5 // pred_check_branch
      %907 = sbr.rel (%p905) target = $region44
    $region43: #{forward.14} parent=5 // pred_region
      %s908 = ssub.s32 %s10, 2
      // Predicated region
      $region45: #{forward.14} parent=43 // pred_check
        %p909 = pneg %p128
      $region46: #{forward.14} parent=43 // pred_check_branch
        %911 = sbr.rel (%p909) target = $region48
      $region47: #{forward.14} parent=43 // pred_region
        %p912 = scmp.lt.s32.totalorder %s16, 1
        %s913 = scalar_select %p912, %s16, 1
        %s914 = smul.addr %s913, 32
        %s915 = smul.addr %s914, 8
        %s916 = scalar_lea.vmem %s4, %s915
      $region48: #{forward.14} parent=43 // pred_fallthru
        _
    $region44: #{forward.14} parent=5 // pred_fallthru
      _
  $region6: #{forward.14} parent=0 // loop_footer
    %s14 = sadd.s32 1, %s10
  $region7: #{forward.14} parent=0 // loop_footer_branch
    %9 = sbr.rel target = $region3
  $region8: #{forward.14} parent=0 // loop_exit
    _

// kernel: forward.15
$region0: #{forward.15}
  #allocation0 [shape = 'u32[]', space=smem, size = 0x4, offset = 0x4, fixed_abs, tag = 'smem constant byte address 0x4 - core index']
  #allocation1 [shape = 'u32[72,128]{1,0:T(1,128)}', space=vmem, size = 0x9000, scoped, tag = 'internal scratch']
  %s0 = inlined_call_operand.vmem [shape: bf16[2,256,72], index: 0, kind: input, shape index: {}]
  %s1 = inlined_call_operand.vmem [shape: bf16[72,8], index: 1, kind: input, shape index: {}]
  %s2 = inlined_call_operand.vmem [shape: f32[1,8], index: 2, kind: input, shape index: {}]
  %s3 = inlined_call_operand.vmem [shape: f32[1,8], index: 3, kind: input, shape index: {}]
  %s4 = inlined_call_operand.vmem [shape: f32[2,256,8], index: 4, kind: output, shape index: {}]
  %s5 = sld [smem:[#allocation0]]
  $region49: #{forward.15} parent=0
    _
  %s7 = ssub.s32 1, %s5
  %s8 = scalar_select 0, %s7, %s5
  loop: start=0, step=1, limit=4
  $region2: #{forward.15} parent=0 // loop_pre_header
    _
  $region3: #{forward.15} parent=0 // loop_header
    %s10 = sphi 0, %s14
    %p11 = scmp.ge.s32.totalorder %s10, 4
    %s20 = sphi 0, %s22
    %s23 = sphi 0, %s20
    %s24 = sphi 0, %s23
    %s40 = sphi 0, %s24
    %s44 = sphi 0, %s44
    %s46 = sphi 0, %s44
    %s47 = sphi 0, %s46
    %s61 = sphi 0, %s47
    %s65 = sphi 0, %s65
    %s67 = sphi 0, %s65
    %s68 = sphi 0, %s67
    %s82 = sphi 0, %s68
    %s86 = sphi 0, %s86
    %s88 = sphi 0, %s86
    %s89 = sphi 0, %s88
    %s103 = sphi 0, %s89
    %s109 = sphi 0, %s111
    %s112 = sphi 0, %s109
    %s113 = sphi 0, %s112
    %s129 = sphi 0, %s113
  $region4: #{forward.15} parent=0 // loop_header_branch
    %13 = sbr.rel (%p11) target = $region8
  $region5: #{forward.15} parent=0 // loop_body
    %s15 = ssub.s32 %s10, 1
    %s16 = ssub.s32 %s10, 2
    %s17 = sadd.s32 %s10, 1
    %s18 = ssub.s32 %s10, %s17
    %p19 = scmp.eq.s32.totalorder %s18, 0
    %s21 = sadd.s32 %s20, 1
    %s22 = scalar_select %p19, %s20, %s21
    %p25 = pneg %p19
    %p26 = scmp.eq.s32.totalorder %s10, 1
    %p27 = por %p25, %p26
    %p28 = scmp.ne.s32.totalorder %s20, %s23
    %p29 = scmp.eq.s32.totalorder %s10, 0
    %p30 = por %p28, %p29
    %p31 = scmp.ne.s32.totalorder %s20, %s23
    %p32 = scmp.eq.s32.totalorder %s15, 1
    %p33 = por %p31, %p32
    %p34 = scmp.ne.s32.totalorder %s23, %s24
    %p35 = scmp.eq.s32.totalorder %s15, 0
    %p36 = por %p34, %p35
    %p37 = scmp.ne.s32.totalorder %s23, %s24
    %p38 = scmp.eq.s32.totalorder %s16, 1
    %p39 = por %p37, %p38
    %p41 = scmp.ne.s32.totalorder %s24, %s40
    %p42 = scmp.eq.s32.totalorder %s16, 0
    %p43 = por %p41, %p42
    %s45 = sadd.s32 %s44, 1
    %p48 = scmp.eq.s32.totalorder %s10, 1
    %p49 = scmp.ne.s32.totalorder %s44, %s46
    %p50 = scmp.eq.s32.totalorder %s10, 0
    %p51 = por %p49, %p50
    %p52 = scmp.ne.s32.totalorder %s44, %s46
    %p53 = scmp.eq.s32.totalorder %s15, 1
    %p54 = por %p52, %p53
    %p55 = scmp.ne.s32.totalorder %s46, %s47
    %p56 = scmp.eq.s32.totalorder %s15, 0
    %p57 = por %p55, %p56
    %p58 = scmp.ne.s32.totalorder %s46, %s47
    %p59 = scmp.eq.s32.totalorder %s16, 1
    %p60 = por %p58, %p59
    %p62 = scmp.ne.s32.totalorder %s47, %s61
    %p63 = scmp.eq.s32.totalorder %s16, 0
    %p64 = por %p62, %p63
    %s66 = sadd.s32 %s65, 1
    %p69 = scmp.eq.s32.totalorder %s10, 1
    %p70 = scmp.ne.s32.totalorder %s65, %s67
    %p71 = scmp.eq.s32.totalorder %s10, 0
    %p72 = por %p70, %p71
    %p73 = scmp.ne.s32.totalorder %s65, %s67
    %p74 = scmp.eq.s32.totalorder %s15, 1
    %p75 = por %p73, %p74
    %p76 = scmp.ne.s32.totalorder %s67, %s68
    %p77 = scmp.eq.s32.totalorder %s15, 0
    %p78 = por %p76, %p77
    %p79 = scmp.ne.s32.totalorder %s67, %s68
    %p80 = scmp.eq.s32.totalorder %s16, 1
    %p81 = por %p79, %p80
    %p83 = scmp.ne.s32.totalorder %s68, %s82
    %p84 = scmp.eq.s32.totalorder %s16, 0
    %p85 = por %p83, %p84
    %s87 = sadd.s32 %s86, 1
    %p90 = scmp.eq.s32.totalorder %s10, 1
    %p91 = scmp.ne.s32.totalorder %s86, %s88
    %p92 = scmp.eq.s32.totalorder %s10, 0
    %p93 = por %p91, %p92
    %p94 = scmp.ne.s32.totalorder %s86, %s88
    %p95 = scmp.eq.s32.totalorder %s15, 1
    %p96 = por %p94, %p95
    %p97 = scmp.ne.s32.totalorder %s88, %s89
    %p98 = scmp.eq.s32.totalorder %s15, 0
    %p99 = por %p97, %p98
    %p100 = scmp.ne.s32.totalorder %s88, %s89
    %p101 = scmp.eq.s32.totalorder %s16, 1
    %p102 = por %p100, %p101
    %p104 = scmp.ne.s32.totalorder %s89, %s103
    %p105 = scmp.eq.s32.totalorder %s16, 0
    %p106 = por %p104, %p105
    %s107 = ssub.s32 %s10, %s17
    %p108 = scmp.eq.s32.totalorder %s107, 0
    %s110 = sadd.s32 %s109, 1
    %s111 = scalar_select %p108, %s109, %s110
    %p114 = pneg %p108
    %p115 = scmp.eq.s32.totalorder %s10, 1
    %p116 = por %p114, %p115
    %p117 = scmp.ne.s32.totalorder %s109, %s112
    %p118 = scmp.eq.s32.totalorder %s10, 0
    %p119 = por %p117, %p118
    %p120 = scmp.ne.s32.totalorder %s109, %s112
    %p121 = scmp.eq.s32.totalorder %s15, 1
    %p122 = por %p120, %p121
    %p123 = scmp.ne.s32.totalorder %s112, %s113
    %p124 = scmp.eq.s32.totalorder %s15, 0
    %p125 = por %p123, %p124
    %p126 = scmp.ne.s32.totalorder %s112, %s113
    %p127 = scmp.eq.s32.totalorder %s16, 1
    %p128 = por %p126, %p127
    %p130 = scmp.ne.s32.totalorder %s113, %s129
    %p131 = scmp.eq.s32.totalorder %s16, 0
    %p132 = por %p130, %p131
    %p133 = scmp.le.s32.totalorder 1, %s10
    %p134 = scmp.lt.s32.totalorder %s10, 3
    %p135 = pnand %p133, %p134
    %p136 = pneg %p135
    // Predicated region
    $region9: #{forward.15} parent=5 // pred_check
      _
    $region10: #{forward.15} parent=5 // pred_check_branch
      %138 = sbr.rel (%p135) target = $region12
    $region11: #{forward.15} parent=5 // pred_region
      %s139 = ssub.s32 %s10, 1
      // Predicated region
      $region13: #{forward.15} parent=11 // pred_check
        %p140 = pneg %p57
      $region14: #{forward.15} parent=11 // pred_check_branch
        %142 = sbr.rel (%p140) target = $region16
      $region15: #{forward.15} parent=11 // pred_region
        _
      $region16: #{forward.15} parent=11 // pred_fallthru
        _
      // Predicated region
      $region17: #{forward.15} parent=11 // pred_check
        %p143 = pneg %p78
      $region18: #{forward.15} parent=11 // pred_check_branch
        %145 = sbr.rel (%p143) target = $region20
      $region19: #{forward.15} parent=11 // pred_region
        _
      $region20: #{forward.15} parent=11 // pred_fallthru
        _
      // Predicated region
      $region21: #{forward.15} parent=11 // pred_check
        %p146 = pneg %p99
      $region22: #{forward.15} parent=11 // pred_check_branch
        %148 = sbr.rel (%p146) target = $region24
      $region23: #{forward.15} parent=11 // pred_region
        _
      $region24: #{forward.15} parent=11 // pred_fallthru
        _
    $region12: #{forward.15} parent=5 // pred_fallthru
      _
    %p149 = scmp.lt.s32.totalorder %s10, 2
    // Predicated region
    $region25: #{forward.15} parent=5 // pred_check
      %p150 = pneg %p149
    $region26: #{forward.15} parent=5 // pred_check_branch
      %152 = sbr.rel (%p150) target = $region28
    $region27: #{forward.15} parent=5 // pred_region
      // Predicated region
      $region29: #{forward.15} parent=27 // pred_check
        %p153 = pneg %p30
      $region30: #{forward.15} parent=27 // pred_check_branch
        %155 = sbr.rel (%p153) target = $region32
      $region31: #{forward.15} parent=27 // pred_region
        %p156 = scmp.lt.s32.totalorder %s10, 1
        %s157 = scalar_select %p156, %s10, 1
        %s158 = smul.addr %s157, 32
        %s159 = smul.addr %s158, 4
        %s160 = scalar_lea.vmem %s0, %s159
      $region32: #{forward.15} parent=27 // pred_fallthru
        _
    $region28: #{forward.15} parent=5 // pred_fallthru
      _
    %p161 = scmp.le.s32.totalorder 1, %s10
    %p162 = scmp.lt.s32.totalorder %s10, 3
    %p163 = pnand %p161, %p162
    %p164 = pneg %p163
    // Predicated region
    $region33: #{forward.15} parent=5 // pred_check
      _
    $region34: #{forward.15} parent=5 // pred_check_branch
      %166 = sbr.rel (%p163) target = $region36
    $region35: #{forward.15} parent=5 // pred_region
      %s167 = ssub.s32 %s10, 1
      %p168 = scmp.lt.s32.totalorder %s15, 1
      %s169 = scalar_select %p168, %s15, 1
      %s170 = smul.addr %s169, 32
      %s171 = smul.addr %s170, 4
      %s172 = scalar_lea.vmem %s0, %s171
      %p173 = pneg %p36
      %p174 = pneg %p33
      %p175 = pneg %p57
      %p176 = pneg %p54
      %p177 = pneg %p78
      %p178 = pneg %p75
      %p179 = pneg %p99
      %p180 = pneg %p96
      %p181 = pneg %p125
      %p182 = pneg %p122
      %p183 = scmp.lt.s32.totalorder %s15, 1
      %s184 = scalar_select %p183, %s15, 1
      %s185 = smul.addr %s184, 32
      %s186 = smul.addr %s185, 8
      %s187 = scalar_lea.vmem %s4, %s186
      %p188 = scmp.lt.s32.totalorder %s15, 1
      %s189 = scalar_select %p188, %s15, 1
      %s190 = smul.addr %s189, 32
      %s191 = smul.addr %s190, 4
      %s192 = scalar_lea.vmem %s0, %s191
      %p193 = scmp.lt.s32.totalorder %s15, 1
      %s194 = scalar_select %p193, %s15, 1
      %s195 = smul.addr %s194, 32
      %s196 = smul.addr %s195, 8
      %s197 = scalar_lea.vmem %s4, %s196
      %v199 = vld [vmem:[%s192] sm:$0xf]
      %v200 = vld [vmem:[%s192 + $0x4] sm:$0xf]
      %v201 = vld [vmem:[%s192 + $0x8] sm:$0xf]
      %v202 = vld [vmem:[%s192 + $0xc] sm:$0xf]
      %v203 = vld [vmem:[%s192 + $0x10] sm:$0xf]
      %v204 = vld [vmem:[%s192 + $0x14] sm:$0xf]
      %v205 = vld [vmem:[%s192 + $0x18] sm:$0xf]
      %v206 = vld [vmem:[%s192 + $0x1c] sm:$0xf]
      %v207 = vld [vmem:[%s192 + $0x20] sm:$0xf]
      %v208 = vld [vmem:[%s192 + $0x24] sm:$0xf]
      %v209 = vld [vmem:[%s192 + $0x28] sm:$0xf]
      %v210 = vld [vmem:[%s192 + $0x2c] sm:$0xf]
      %v211 = vld [vmem:[%s192 + $0x30] sm:$0xf]
      %v212 = vld [vmem:[%s192 + $0x34] sm:$0xf]
      %v213 = vld [vmem:[%s192 + $0x38] sm:$0xf]
      %v214 = vld [vmem:[%s192 + $0x3c] sm:$0xf]
      %v215 = vld [vmem:[%s192 + $0x40] sm:$0xf]
      %v216 = vld [vmem:[%s192 + $0x44] sm:$0xf]
      %v217 = vld [vmem:[%s192 + $0x48] sm:$0xf]
      %v218 = vld [vmem:[%s192 + $0x4c] sm:$0xf]
      %v219 = vld [vmem:[%s192 + $0x50] sm:$0xf]
      %v220 = vld [vmem:[%s192 + $0x54] sm:$0xf]
      %v221 = vld [vmem:[%s192 + $0x58] sm:$0xf]
      %v222 = vld [vmem:[%s192 + $0x5c] sm:$0xf]
      %v223 = vld [vmem:[%s192 + $0x60] sm:$0xf]
      %v224 = vld [vmem:[%s192 + $0x64] sm:$0xf]
      %v225 = vld [vmem:[%s192 + $0x68] sm:$0xf]
      %v226 = vld [vmem:[%s192 + $0x6c] sm:$0xf]
      %v227 = vld [vmem:[%s192 + $0x70] sm:$0xf]
      %v228 = vld [vmem:[%s192 + $0x74] sm:$0xf]
      %v229 = vld [vmem:[%s192 + $0x78] sm:$0xf]
      %v230 = vld [vmem:[%s192 + $0x7c] sm:$0xf]
      %v231 = vld [vmem:[%s1] sm:$0xf]
      %v232 = vld [vmem:[%s1 + $0x4] sm:$0xf]
      %v233 = vld [vmem:[%s1 + $0x8] sm:$0xf]
      %v234 = vld [vmem:[%s1 + $0xc] sm:$0xf]
      %v235 = vld [vmem:[%s1 + $0x10] sm:$0xf]
      %v236 = vld [vmem:[%s1 + $0x14] sm:$0xf]
      %v237 = vld [vmem:[%s1 + $0x18] sm:$0xf]
      %v238 = vld [vmem:[%s1 + $0x1c] sm:$0xf]
      %v239 = vld [vmem:[%s1 + $0x20] sm:$0xf]
      %v272 = vunpack.c.l.b16 %v199
      %v273 = vunpack.c.l.b16 %v200
      %v274 = vunpack.c.l.b16 %v201
      %v275 = vunpack.c.l.b16 %v202
      %v276 = vunpack.c.l.b16 %v203
      %v277 = vunpack.c.l.b16 %v204
      %v278 = vunpack.c.l.b16 %v205
      %v279 = vunpack.c.l.b16 %v206
      %v280 = vunpack.c.l.b16 %v207
      %v281 = vunpack.c.l.b16 %v208
      %v282 = vunpack.c.l.b16 %v209
      %v283 = vunpack.c.l.b16 %v210
      %v284 = vunpack.c.l.b16 %v211
      %v285 = vunpack.c.l.b16 %v212
      %v286 = vunpack.c.l.b16 %v213
      %v287 = vunpack.c.l.b16 %v214
      %v288 = vunpack.c.l.b16 %v215
      %v289 = vunpack.c.l.b16 %v216
      %v290 = vunpack.c.l.b16 %v217
      %v291 = vunpack.c.l.b16 %v218
      %v292 = vunpack.c.l.b16 %v219
      %v293 = vunpack.c.l.b16 %v220
      %v294 = vunpack.c.l.b16 %v221
      %v295 = vunpack.c.l.b16 %v222
      %v296 = vunpack.c.l.b16 %v223
      %v297 = vunpack.c.l.b16 %v224
      %v298 = vunpack.c.l.b16 %v225
      %v299 = vunpack.c.l.b16 %v226
      %v300 = vunpack.c.l.b16 %v227
      %v301 = vunpack.c.l.b16 %v228
      %v302 = vunpack.c.l.b16 %v229
      %v303 = vunpack.c.l.b16 %v230
      %v304 = vpack.c.b16 %v273, %v272
      %v305 = vpack.c.b16 %v275, %v274
      %v306 = vpack.c.b16 %v277, %v276
      %v307 = vpack.c.b16 %v279, %v278
      %v308 = vpack.c.b16 %v281, %v280
      %v309 = vpack.c.b16 %v283, %v282
      %v310 = vpack.c.b16 %v285, %v284
      %v311 = vpack.c.b16 %v287, %v286
      %v312 = vpack.c.b16 %v289, %v288
      %v313 = vpack.c.b16 %v291, %v290
      %v314 = vpack.c.b16 %v293, %v292
      %v315 = vpack.c.b16 %v295, %v294
      %v316 = vpack.c.b16 %v297, %v296
      %v317 = vpack.c.b16 %v299, %v298
      %v318 = vpack.c.b16 %v301, %v300
      %v319 = vpack.c.b16 %v303, %v302
      %v329 = vunpack.c.l.b16 %v231
      %v330 = vunpack.c.l.b16 %v232
      %v331 = vunpack.c.l.b16 %v233
      %v332 = vunpack.c.l.b16 %v234
      %v333 = vunpack.c.l.b16 %v235
      %v334 = vunpack.c.l.b16 %v236
      %v335 = vunpack.c.l.b16 %v237
      %v336 = vunpack.c.l.b16 %v238
      %v337 = vunpack.c.l.b16 %v239
      %v338 = vpack.c.b16 %v330, %v329
      %v339 = vpack.c.b16 %v332, %v331
      %v340 = vpack.c.b16 %v334, %v333
      %v341 = vpack.c.b16 %v336, %v335
      %v342 = vpack.c.b16 %v337, %v337
      %vm347 = vcmask 588800
      %v349 = vsel %vm347, %v304, 0
      %v352 = vsel %vm347, %v305, 0
      %v355 = vsel %vm347, %v306, 0
      %v358 = vsel %vm347, %v307, 0
      %v361 = vsel %vm347, %v308, 0
      %v364 = vsel %vm347, %v309, 0
      %v367 = vsel %vm347, %v310, 0
      %v370 = vsel %vm347, %v311, 0
      %v373 = vsel %vm347, %v312, 0
      %v376 = vsel %vm347, %v313, 0
      %v379 = vsel %vm347, %v314, 0
      %v382 = vsel %vm347, %v315, 0
      %v385 = vsel %vm347, %v316, 0
      %v388 = vsel %vm347, %v317, 0
      %v391 = vsel %vm347, %v318, 0
      %v394 = vsel %vm347, %v319, 0
      %vm396 = vcmask 1043456
      %v398 = vsel %vm396, %v342, 0
      %400 = vmatpush.bf16.msra.mxu0 0
      %401 = vmatpush.bf16.msra.mxu0 0
      %402 = vmatpush.bf16.msra.mxu0 0
      %403 = vmatpush.bf16.msra.mxu0 %v398
      %404 = vmatpush.bf16.msra.mxu0 %v341
      %405 = vmatpush.bf16.msra.mxu0 %v340
      %406 = vmatpush.bf16.msra.mxu0 %v339
      %407 = vmatpush.bf16.msra.mxu0 %v338
      %408 = vmatmul.bf16.gmra.mxu0 %v349
      %v409 = vpop.f32.mrf.mxu0
      %v410 = vadd.f32 0.0, %v409
      %v411 = vpop.f32.mrf.mxu0
      %v412 = vadd.f32 0.0, %v411
      %413 = vmatmul.bf16.gmra.mxu0 %v352
      %v414 = vpop.f32.mrf.mxu0
      %v415 = vadd.f32 0.0, %v414
      %v416 = vpop.f32.mrf.mxu0
      %v417 = vadd.f32 0.0, %v416
      %418 = vmatmul.bf16.gmra.mxu0 %v355
      %v419 = vpop.f32.mrf.mxu0
      %v420 = vadd.f32 0.0, %v419
      %v421 = vpop.f32.mrf.mxu0
      %v422 = vadd.f32 0.0, %v421
      %423 = vmatmul.bf16.gmra.mxu0 %v358
      %v424 = vpop.f32.mrf.mxu0
      %v425 = vadd.f32 0.0, %v424
      %v426 = vpop.f32.mrf.mxu0
      %v427 = vadd.f32 0.0, %v426
      %428 = vmatmul.bf16.gmra.mxu0 %v361
      %v429 = vpop.f32.mrf.mxu0
      %v430 = vadd.f32 0.0, %v429
      %v431 = vpop.f32.mrf.mxu0
      %v432 = vadd.f32 0.0, %v431
      %433 = vmatmul.bf16.gmra.mxu0 %v364
      %v434 = vpop.f32.mrf.mxu0
      %v435 = vadd.f32 0.0, %v434
      %v436 = vpop.f32.mrf.mxu0
      %v437 = vadd.f32 0.0, %v436
      %438 = vmatmul.bf16.gmra.mxu0 %v367
      %v439 = vpop.f32.mrf.mxu0
      %v440 = vadd.f32 0.0, %v439
      %v441 = vpop.f32.mrf.mxu0
      %v442 = vadd.f32 0.0, %v441
      %443 = vmatmul.bf16.gmra.mxu0 %v370
      %v444 = vpop.f32.mrf.mxu0
      %v445 = vadd.f32 0.0, %v444
      %v446 = vpop.f32.mrf.mxu0
      %v447 = vadd.f32 0.0, %v446
      %448 = vmatmul.bf16.gmra.mxu0 %v373
      %v449 = vpop.f32.mrf.mxu0
      %v450 = vadd.f32 0.0, %v449
      %v451 = vpop.f32.mrf.mxu0
      %v452 = vadd.f32 0.0, %v451
      %453 = vmatmul.bf16.gmra.mxu0 %v376
      %v454 = vpop.f32.mrf.mxu0
      %v455 = vadd.f32 0.0, %v454
      %v456 = vpop.f32.mrf.mxu0
      %v457 = vadd.f32 0.0, %v456
      %458 = vmatmul.bf16.gmra.mxu0 %v379
      %v459 = vpop.f32.mrf.mxu0
      %v460 = vadd.f32 0.0, %v459
      %v461 = vpop.f32.mrf.mxu0
      %v462 = vadd.f32 0.0, %v461
      %463 = vmatmul.bf16.gmra.mxu0 %v382
      %v464 = vpop.f32.mrf.mxu0
      %v465 = vadd.f32 0.0, %v464
      %v466 = vpop.f32.mrf.mxu0
      %v467 = vadd.f32 0.0, %v466
      %468 = vmatmul.bf16.gmra.mxu0 %v385
      %v469 = vpop.f32.mrf.mxu0
      %v470 = vadd.f32 0.0, %v469
      %v471 = vpop.f32.mrf.mxu0
      %v472 = vadd.f32 0.0, %v471
      %473 = vmatmul.bf16.gmra.mxu0 %v388
      %v474 = vpop.f32.mrf.mxu0
      %v475 = vadd.f32 0.0, %v474
      %v476 = vpop.f32.mrf.mxu0
      %v477 = vadd.f32 0.0, %v476
      %478 = vmatmul.bf16.gmra.mxu0 %v391
      %v479 = vpop.f32.mrf.mxu0
      %v480 = vadd.f32 0.0, %v479
      %v481 = vpop.f32.mrf.mxu0
      %v482 = vadd.f32 0.0, %v481
      %483 = vmatmul.bf16.gmra.mxu0 %v394
      %v484 = vpop.f32.mrf.mxu0
      %v485 = vadd.f32 0.0, %v484
      %v486 = vpop.f32.mrf.mxu0
      %v487 = vadd.f32 0.0, %v486
      %488 = vdwg.mxu0
      %v489 = vld [vmem:[%s2] sm:$0x1]
      %v490 = vld [vmem:[%s3] sm:$0x1]
      %vm491 = vcmask 64512
      %v492 = vsel %vm491, %v410, 0.0
      %v493 = vsel %vm491, %v412, 0.0
      %v494 = vadd.f32 %v492, %v493
      %v495 = vsel %vm491, %v415, 0.0
      %v496 = vadd.f32 %v494, %v495
      %v497 = vsel %vm491, %v417, 0.0
      %v498 = vadd.f32 %v496, %v497
      %v499 = vsel %vm491, %v420, 0.0
      %v500 = vadd.f32 %v498, %v499
      %v501 = vsel %vm491, %v422, 0.0
      %v502 = vadd.f32 %v500, %v501
      %v503 = vsel %vm491, %v425, 0.0
      %v504 = vadd.f32 %v502, %v503
      %v505 = vsel %vm491, %v427, 0.0
      %v506 = vadd.f32 %v504, %v505
      %v507 = vsel %vm491, %v430, 0.0
      %v508 = vadd.f32 %v506, %v507
      %v509 = vsel %vm491, %v432, 0.0
      %v510 = vadd.f32 %v508, %v509
      %v511 = vsel %vm491, %v435, 0.0
      %v512 = vadd.f32 %v510, %v511
      %v513 = vsel %vm491, %v437, 0.0
      %v514 = vadd.f32 %v512, %v513
      %v515 = vsel %vm491, %v440, 0.0
      %v516 = vadd.f32 %v514, %v515
      %v517 = vsel %vm491, %v442, 0.0
      %v518 = vadd.f32 %v516, %v517
      %v519 = vsel %vm491, %v445, 0.0
      %v520 = vadd.f32 %v518, %v519
      %v521 = vsel %vm491, %v447, 0.0
      %v522 = vadd.f32 %v520, %v521
      %v523 = vsel %vm491, %v450, 0.0
      %v524 = vadd.f32 %v522, %v523
      %v525 = vsel %vm491, %v452, 0.0
      %v526 = vadd.f32 %v524, %v525
      %v527 = vsel %vm491, %v455, 0.0
      %v528 = vadd.f32 %v526, %v527
      %v529 = vsel %vm491, %v457, 0.0
      %v530 = vadd.f32 %v528, %v529
      %v531 = vsel %vm491, %v460, 0.0
      %v532 = vadd.f32 %v530, %v531
      %v533 = vsel %vm491, %v462, 0.0
      %v534 = vadd.f32 %v532, %v533
      %v535 = vsel %vm491, %v465, 0.0
      %v536 = vadd.f32 %v534, %v535
      %v537 = vsel %vm491, %v467, 0.0
      %v538 = vadd.f32 %v536, %v537
      %v539 = vsel %vm491, %v470, 0.0
      %v540 = vadd.f32 %v538, %v539
      %v541 = vsel %vm491, %v472, 0.0
      %v542 = vadd.f32 %v540, %v541
      %v543 = vsel %vm491, %v475, 0.0
      %v544 = vadd.f32 %v542, %v543
      %v545 = vsel %vm491, %v477, 0.0
      %v546 = vadd.f32 %v544, %v545
      %v547 = vsel %vm491, %v480, 0.0
      %v548 = vadd.f32 %v546, %v547
      %v549 = vsel %vm491, %v482, 0.0
      %v550 = vadd.f32 %v548, %v549
      %v551 = vsel %vm491, %v485, 0.0
      %v552 = vadd.f32 %v550, %v551
      %v553 = vsel %vm491, %v487, 0.0
      %v554 = vadd.f32 %v552, %v553
      %v555 = vrot.slane %v554, 4
      %v556 = vadd.f32 %v554, %v555
      %v557 = vrot.slane %v556, 2
      %v558 = vadd.f32 %v556, %v557
      %v559 = vrot.slane %v558, 1
      %v560 = vadd.f32 %v558, %v559
      %v561 = vrcp.pop 256.0
      %v562 = vmul.f32 256.0, %v561
      %v563 = vsub.f32 1.0, %v562
      %v564 = vmul.f32 %v561, %v563
      %v565 = vadd.f32 %v561, %v564
      %vm566 = vweird.f32 %v561
      %v567 = vsel %vm566, %v561, %v565
      %v568 = vmul.f32 %v560, %v567
      %v569 = vsub.f32 %v410, %v568
      %v570 = vsub.f32 %v412, %v568
      %v571 = vsub.f32 %v415, %v568
      %v572 = vsub.f32 %v417, %v568
      %v573 = vsub.f32 %v420, %v568
      %v574 = vsub.f32 %v422, %v568
      %v575 = vsub.f32 %v425, %v568
      %v576 = vsub.f32 %v427, %v568
      %v577 = vsub.f32 %v430, %v568
      %v578 = vsub.f32 %v432, %v568
      %v579 = vsub.f32 %v435, %v568
      %v580 = vsub.f32 %v437, %v568
      %v581 = vsub.f32 %v440, %v568
      %v582 = vsub.f32 %v442, %v568
      %v583 = vsub.f32 %v445, %v568
      %v584 = vsub.f32 %v447, %v568
      %v585 = vsub.f32 %v450, %v568
      %v586 = vsub.f32 %v452, %v568
      %v587 = vsub.f32 %v455, %v568
      %v588 = vsub.f32 %v457, %v568
      %v589 = vsub.f32 %v460, %v568
      %v590 = vsub.f32 %v462, %v568
      %v591 = vsub.f32 %v465, %v568
      %v592 = vsub.f32 %v467, %v568
      %v593 = vsub.f32 %v470, %v568
      %v594 = vsub.f32 %v472, %v568
      %v595 = vsub.f32 %v475, %v568
      %v596 = vsub.f32 %v477, %v568
      %v597 = vsub.f32 %v480, %v568
      %v598 = vsub.f32 %v482, %v568
      %v599 = vsub.f32 %v485, %v568
      %v600 = vsub.f32 %v487, %v568
      %v601 = vmul.f32 %v569, %v569
      %v602 = vmul.f32 %v570, %v570
      %v603 = vmul.f32 %v571, %v571
      %v604 = vmul.f32 %v572, %v572
      %v605 = vmul.f32 %v573, %v573
      %v606 = vmul.f32 %v574, %v574
      %v607 = vmul.f32 %v575, %v575
      %v608 = vmul.f32 %v576, %v576
      %v609 = vmul.f32 %v577, %v577
      %v610 = vmul.f32 %v578, %v578
      %v611 = vmul.f32 %v579, %v579
      %v612 = vmul.f32 %v580, %v580
      %v613 = vmul.f32 %v581, %v581
      %v614 = vmul.f32 %v582, %v582
      %v615 = vmul.f32 %v583, %v583
      %v616 = vmul.f32 %v584, %v584
      %v617 = vmul.f32 %v585, %v585
      %v618 = vmul.f32 %v586, %v586
      %v619 = vmul.f32 %v587, %v587
      %v620 = vmul.f32 %v588, %v588
      %v621 = vmul.f32 %v589, %v589
      %v622 = vmul.f32 %v590, %v590
      %v623 = vmul.f32 %v591, %v591
      %v624 = vmul.f32 %v592, %v592
      %v625 = vmul.f32 %v593, %v593
      %v626 = vmul.f32 %v594, %v594
      %v627 = vmul.f32 %v595, %v595
      %v628 = vmul.f32 %v596, %v596
      %v629 = vmul.f32 %v597, %v597
      %v630 = vmul.f32 %v598, %v598
      %v631 = vmul.f32 %v599, %v599
      %v632 = vmul.f32 %v600, %v600
      %v633 = vsel %vm491, %v601, 0.0
      %v634 = vsel %vm491, %v602, 0.0
      %v635 = vadd.f32 %v633, %v634
      %v636 = vsel %vm491, %v603, 0.0
      %v637 = vadd.f32 %v635, %v636
      %v638 = vsel %vm491, %v604, 0.0
      %v639 = vadd.f32 %v637, %v638
      %v640 = vsel %vm491, %v605, 0.0
      %v641 = vadd.f32 %v639, %v640
      %v642 = vsel %vm491, %v606, 0.0
      %v643 = vadd.f32 %v641, %v642
      %v644 = vsel %vm491, %v607, 0.0
      %v645 = vadd.f32 %v643, %v644
      %v646 = vsel %vm491, %v608, 0.0
      %v647 = vadd.f32 %v645, %v646
      %v648 = vsel %vm491, %v609, 0.0
      %v649 = vadd.f32 %v647, %v648
      %v650 = vsel %vm491, %v610, 0.0
      %v651 = vadd.f32 %v649, %v650
      %v652 = vsel %vm491, %v611, 0.0
      %v653 = vadd.f32 %v651, %v652
      %v654 = vsel %vm491, %v612, 0.0
      %v655 = vadd.f32 %v653, %v654
      %v656 = vsel %vm491, %v613, 0.0
      %v657 = vadd.f32 %v655, %v656
      %v658 = vsel %vm491, %v614, 0.0
      %v659 = vadd.f32 %v657, %v658
      %v660 = vsel %vm491, %v615, 0.0
      %v661 = vadd.f32 %v659, %v660
      %v662 = vsel %vm491, %v616, 0.0
      %v663 = vadd.f32 %v661, %v662
      %v664 = vsel %vm491, %v617, 0.0
      %v665 = vadd.f32 %v663, %v664
      %v666 = vsel %vm491, %v618, 0.0
      %v667 = vadd.f32 %v665, %v666
      %v668 = vsel %vm491, %v619, 0.0
      %v669 = vadd.f32 %v667, %v668
      %v670 = vsel %vm491, %v620, 0.0
      %v671 = vadd.f32 %v669, %v670
      %v672 = vsel %vm491, %v621, 0.0
      %v673 = vadd.f32 %v671, %v672
      %v674 = vsel %vm491, %v622, 0.0
      %v675 = vadd.f32 %v673, %v674
      %v676 = vsel %vm491, %v623, 0.0
      %v677 = vadd.f32 %v675, %v676
      %v678 = vsel %vm491, %v624, 0.0
      %v679 = vadd.f32 %v677, %v678
      %v680 = vsel %vm491, %v625, 0.0
      %v681 = vadd.f32 %v679, %v680
      %v682 = vsel %vm491, %v626, 0.0
      %v683 = vadd.f32 %v681, %v682
      %v684 = vsel %vm491, %v627, 0.0
      %v685 = vadd.f32 %v683, %v684
      %v686 = vsel %vm491, %v628, 0.0
      %v687 = vadd.f32 %v685, %v686
      %v688 = vsel %vm491, %v629, 0.0
      %v689 = vadd.f32 %v687, %v688
      %v690 = vsel %vm491, %v630, 0.0
      %v691 = vadd.f32 %v689, %v690
      %v692 = vsel %vm491, %v631, 0.0
      %v693 = vadd.f32 %v691, %v692
      %v694 = vsel %vm491, %v632, 0.0
      %v695 = vadd.f32 %v693, %v694
      %v696 = vrot.slane %v695, 4
      %v697 = vadd.f32 %v695, %v696
      %v698 = vrot.slane %v697, 2
      %v699 = vadd.f32 %v697, %v698
      %v700 = vrot.slane %v699, 1
      %v701 = vadd.f32 %v699, %v700
      %v702 = vmul.f32 %v701, %v567
      %v703 = vadd.f32 %v702, 1e-05
      %v704 = vrsqrt.pop %v703
      %v705 = vmul.f32 %v704, %v703
      %v706 = vmul.f32 %v705, %v704
      %v707 = vmul.f32 0.5, %v706
      %v708 = vsub.f32 1.5, %v707
      %v709 = vmul.f32 %v704, %v708
      %vm710 = vweird.f32 %v703
      %vm711 = vweird.f32 %v704
      %vm712 = vmor %vm710, %vm711
      %v713 = vsel %vm712, %v704, %v709
      %v714 = vmul.f32 %v569, %v713
      %v715 = vmul.f32 %v570, %v713
      %v716 = vmul.f32 %v571, %v713
      %v717 = vmul.f32 %v572, %v713
      %v718 = vmul.f32 %v573, %v713
      %v719 = vmul.f32 %v574, %v713
      %v720 = vmul.f32 %v575, %v713
      %v721 = vmul.f32 %v576, %v713
      %v722 = vmul.f32 %v577, %v713
      %v723 = vmul.f32 %v578, %v713
      %v724 = vmul.f32 %v579, %v713
      %v725 = vmul.f32 %v580, %v713
      %v726 = vmul.f32 %v581, %v713
      %v727 = vmul.f32 %v582, %v713
      %v728 = vmul.f32 %v583, %v713
      %v729 = vmul.f32 %v584, %v713
      %v730 = vmul.f32 %v585, %v713
      %v731 = vmul.f32 %v586, %v713
      %v732 = vmul.f32 %v587, %v713
      %v733 = vmul.f32 %v588, %v713
      %v734 = vmul.f32 %v589, %v713
      %v735 = vmul.f32 %v590, %v713
      %v736 = vmul.f32 %v591, %v713
      %v737 = vmul.f32 %v592, %v713
      %v738 = vmul.f32 %v593, %v713
      %v739 = vmul.f32 %v594, %v713
      %v740 = vmul.f32 %v595, %v713
      %v741 = vmul.f32 %v596, %v713
      %v742 = vmul.f32 %v597, %v713
      %v743 = vmul.f32 %v598, %v713
      %v744 = vmul.f32 %v599, %v713
      %v745 = vmul.f32 %v600, %v713
      %v747 = vperm.slane %v489, 0
      %v749 = vmul.f32 %v714, %v747
      %v750 = vmul.f32 %v715, %v747
      %v751 = vmul.f32 %v716, %v747
      %v752 = vmul.f32 %v717, %v747
      %v753 = vmul.f32 %v718, %v747
      %v754 = vmul.f32 %v719, %v747
      %v755 = vmul.f32 %v720, %v747
      %v756 = vmul.f32 %v721, %v747
      %v757 = vmul.f32 %v722, %v747
      %v758 = vmul.f32 %v723, %v747
      %v759 = vmul.f32 %v724, %v747
      %v760 = vmul.f32 %v725, %v747
      %v761 = vmul.f32 %v726, %v747
      %v762 = vmul.f32 %v727, %v747
      %v763 = vmul.f32 %v728, %v747
      %v764 = vmul.f32 %v729, %v747
      %v765 = vmul.f32 %v730, %v747
      %v766 = vmul.f32 %v731, %v747
      %v767 = vmul.f32 %v732, %v747
      %v768 = vmul.f32 %v733, %v747
      %v769 = vmul.f32 %v734, %v747
      %v770 = vmul.f32 %v735, %v747
      %v771 = vmul.f32 %v736, %v747
      %v772 = vmul.f32 %v737, %v747
      %v773 = vmul.f32 %v738, %v747
      %v774 = vmul.f32 %v739, %v747
      %v775 = vmul.f32 %v740, %v747
      %v776 = vmul.f32 %v741, %v747
      %v777 = vmul.f32 %v742, %v747
      %v778 = vmul.f32 %v743, %v747
      %v779 = vmul.f32 %v744, %v747
      %v780 = vmul.f32 %v745, %v747
      %v782 = vperm.slane %v490, 0
      %v784 = vadd.f32 %v749, %v782
      %v785 = vadd.f32 %v750, %v782
      %v786 = vadd.f32 %v751, %v782
      %v787 = vadd.f32 %v752, %v782
      %v788 = vadd.f32 %v753, %v782
      %v789 = vadd.f32 %v754, %v782
      %v790 = vadd.f32 %v755, %v782
      %v791 = vadd.f32 %v756, %v782
      %v792 = vadd.f32 %v757, %v782
      %v793 = vadd.f32 %v758, %v782
      %v794 = vadd.f32 %v759, %v782
      %v795 = vadd.f32 %v760, %v782
      %v796 = vadd.f32 %v761, %v782
      %v797 = vadd.f32 %v762, %v782
      %v798 = vadd.f32 %v763, %v782
      %v799 = vadd.f32 %v764, %v782
      %v800 = vadd.f32 %v765, %v782
      %v801 = vadd.f32 %v766, %v782
      %v802 = vadd.f32 %v767, %v782
      %v803 = vadd.f32 %v768, %v782
      %v804 = vadd.f32 %v769, %v782
      %v805 = vadd.f32 %v770, %v782
      %v806 = vadd.f32 %v771, %v782
      %v807 = vadd.f32 %v772, %v782
      %v808 = vadd.f32 %v773, %v782
      %v809 = vadd.f32 %v774, %v782
      %v810 = vadd.f32 %v775, %v782
      %v811 = vadd.f32 %v776, %v782
      %v812 = vadd.f32 %v777, %v782
      %v813 = vadd.f32 %v778, %v782
      %v814 = vadd.f32 %v779, %v782
      %v815 = vadd.f32 %v780, %v782
      %v816 = vmul.f32 %v784, 0.01
      %v817 = vmul.f32 %v785, 0.01
      %v818 = vmul.f32 %v786, 0.01
      %v819 = vmul.f32 %v787, 0.01
      %v820 = vmul.f32 %v788, 0.01
      %v821 = vmul.f32 %v789, 0.01
      %v822 = vmul.f32 %v790, 0.01
      %v823 = vmul.f32 %v791, 0.01
      %v824 = vmul.f32 %v792, 0.01
      %v825 = vmul.f32 %v793, 0.01
      %v826 = vmul.f32 %v794, 0.01
      %v827 = vmul.f32 %v795, 0.01
      %v828 = vmul.f32 %v796, 0.01
      %v829 = vmul.f32 %v797, 0.01
      %v830 = vmul.f32 %v798, 0.01
      %v831 = vmul.f32 %v799, 0.01
      %v832 = vmul.f32 %v800, 0.01
      %v833 = vmul.f32 %v801, 0.01
      %v834 = vmul.f32 %v802, 0.01
      %v835 = vmul.f32 %v803, 0.01
      %v836 = vmul.f32 %v804, 0.01
      %v837 = vmul.f32 %v805, 0.01
      %v838 = vmul.f32 %v806, 0.01
      %v839 = vmul.f32 %v807, 0.01
      %v840 = vmul.f32 %v808, 0.01
      %v841 = vmul.f32 %v809, 0.01
      %v842 = vmul.f32 %v810, 0.01
      %v843 = vmul.f32 %v811, 0.01
      %v844 = vmul.f32 %v812, 0.01
      %v845 = vmul.f32 %v813, 0.01
      %v846 = vmul.f32 %v814, 0.01
      %v847 = vmul.f32 %v815, 0.01
      %v848 = vmax.f32 %v784, %v816
      %v849 = vmax.f32 %v785, %v817
      %v850 = vmax.f32 %v786, %v818
      %v851 = vmax.f32 %v787, %v819
      %v852 = vmax.f32 %v788, %v820
      %v853 = vmax.f32 %v789, %v821
      %v854 = vmax.f32 %v790, %v822
      %v855 = vmax.f32 %v791, %v823
      %v856 = vmax.f32 %v792, %v824
      %v857 = vmax.f32 %v793, %v825
      %v858 = vmax.f32 %v794, %v826
      %v859 = vmax.f32 %v795, %v827
      %v860 = vmax.f32 %v796, %v828
      %v861 = vmax.f32 %v797, %v829
      %v862 = vmax.f32 %v798, %v830
      %v863 = vmax.f32 %v799, %v831
      %v864 = vmax.f32 %v800, %v832
      %v865 = vmax.f32 %v801, %v833
      %v866 = vmax.f32 %v802, %v834
      %v867 = vmax.f32 %v803, %v835
      %v868 = vmax.f32 %v804, %v836
      %v869 = vmax.f32 %v805, %v837
      %v870 = vmax.f32 %v806, %v838
      %v871 = vmax.f32 %v807, %v839
      %v872 = vmax.f32 %v808, %v840
      %v873 = vmax.f32 %v809, %v841
      %v874 = vmax.f32 %v810, %v842
      %v875 = vmax.f32 %v811, %v843
      %v876 = vmax.f32 %v812, %v844
      %v877 = vmax.f32 %v813, %v845
      %v878 = vmax.f32 %v814, %v846
      %v879 = vmax.f32 %v815, %v847
      %880 = vst.msk [vmem:[%s197] sm:$0xff] %vm491, %v848
      %881 = vst.msk [vmem:[%s197 + $0x8] sm:$0xff] %vm491, %v849
      %882 = vst.msk [vmem:[%s197 + $0x10] sm:$0xff] %vm491, %v850
      %883 = vst.msk [vmem:[%s197 + $0x18] sm:$0xff] %vm491, %v851
      %884 = vst.msk [vmem:[%s197 + $0x20] sm:$0xff] %vm491, %v852
      %885 = vst.msk [vmem:[%s197 + $0x28] sm:$0xff] %vm491, %v853
      %886 = vst.msk [vmem:[%s197 + $0x30] sm:$0xff] %vm491, %v854
      %887 = vst.msk [vmem:[%s197 + $0x38] sm:$0xff] %vm491, %v855
      %888 = vst.msk [vmem:[%s197 + $0x40] sm:$0xff] %vm491, %v856
      %889 = vst.msk [vmem:[%s197 + $0x48] sm:$0xff] %vm491, %v857
      %890 = vst.msk [vmem:[%s197 + $0x50] sm:$0xff] %vm491, %v858
      %891 = vst.msk [vmem:[%s197 + $0x58] sm:$0xff] %vm491, %v859
      %892 = vst.msk [vmem:[%s197 + $0x60] sm:$0xff] %vm491, %v860
      %893 = vst.msk [vmem:[%s197 + $0x68] sm:$0xff] %vm491, %v861
      %894 = vst.msk [vmem:[%s197 + $0x70] sm:$0xff] %vm491, %v862
      %895 = vst.msk [vmem:[%s197 + $0x78] sm:$0xff] %vm491, %v863
      %896 = vst.msk [vmem:[%s197 + $0x80] sm:$0xff] %vm491, %v864
      %897 = vst.msk [vmem:[%s197 + $0x88] sm:$0xff] %vm491, %v865
      %898 = vst.msk [vmem:[%s197 + $0x90] sm:$0xff] %vm491, %v866
      %899 = vst.msk [vmem:[%s197 + $0x98] sm:$0xff] %vm491, %v867
      %900 = vst.msk [vmem:[%s197 + $0xa0] sm:$0xff] %vm491, %v868
      %901 = vst.msk [vmem:[%s197 + $0xa8] sm:$0xff] %vm491, %v869
      %902 = vst.msk [vmem:[%s197 + $0xb0] sm:$0xff] %vm491, %v870
      %903 = vst.msk [vmem:[%s197 + $0xb8] sm:$0xff] %vm491, %v871
      %904 = vst.msk [vmem:[%s197 + $0xc0] sm:$0xff] %vm491, %v872
      %905 = vst.msk [vmem:[%s197 + $0xc8] sm:$0xff] %vm491, %v873
      %906 = vst.msk [vmem:[%s197 + $0xd0] sm:$0xff] %vm491, %v874
      %907 = vst.msk [vmem:[%s197 + $0xd8] sm:$0xff] %vm491, %v875
      %908 = vst.msk [vmem:[%s197 + $0xe0] sm:$0xff] %vm491, %v876
      %909 = vst.msk [vmem:[%s197 + $0xe8] sm:$0xff] %vm491, %v877
      %910 = vst.msk [vmem:[%s197 + $0xf0] sm:$0xff] %vm491, %v878
      %911 = vst.msk [vmem:[%s197 + $0xf8] sm:$0xff] %vm491, %v879
      %p912 = scmp.lt.s32.totalorder %s15, 1
      %s913 = scalar_select %p912, %s15, 1
      %s914 = smul.addr %s913, 32
      %s915 = smul.addr %s914, 8
      %s916 = scalar_lea.vmem %s4, %s915
      // Predicated region
      $region37: #{forward.15} parent=35 // pred_check
        %p917 = pneg %p122
      $region38: #{forward.15} parent=35 // pred_check_branch
        %919 = sbr.rel (%p917) target = $region40
      $region39: #{forward.15} parent=35 // pred_region
        _
      $region40: #{forward.15} parent=35 // pred_fallthru
        _
    $region36: #{forward.15} parent=5 // pred_fallthru
      _
    %p920 = scmp.le.s32.totalorder 2, %s10
    // Predicated region
    $region41: #{forward.15} parent=5 // pred_check
      %p921 = pneg %p920
    $region42: #{forward.15} parent=5 // pred_check_branch
      %923 = sbr.rel (%p921) target = $region44
    $region43: #{forward.15} parent=5 // pred_region
      %s924 = ssub.s32 %s10, 2
      // Predicated region
      $region45: #{forward.15} parent=43 // pred_check
        %p925 = pneg %p128
      $region46: #{forward.15} parent=43 // pred_check_branch
        %927 = sbr.rel (%p925) target = $region48
      $region47: #{forward.15} parent=43 // pred_region
        %p928 = scmp.lt.s32.totalorder %s16, 1
        %s929 = scalar_select %p928, %s16, 1
        %s930 = smul.addr %s929, 32
        %s931 = smul.addr %s930, 8
        %s932 = scalar_lea.vmem %s4, %s931
      $region48: #{forward.15} parent=43 // pred_fallthru
        _
    $region44: #{forward.15} parent=5 // pred_fallthru
      _
  $region6: #{forward.15} parent=0 // loop_footer
    %s14 = sadd.s32 1, %s10
  $region7: #{forward.15} parent=0 // loop_footer_branch
    %9 = sbr.rel target = $region3
  $region8: #{forward.15} parent=0 // loop_exit
    _

// kernel: forward.16
$region0: #{forward.16}
  #allocation0 [shape = 'u32[]', space=smem, size = 0x4, offset = 0x4, fixed_abs, tag = 'smem constant byte address 0x4 - core index']
  #allocation1 [shape = 'u32[72,128]{1,0:T(1,128)}', space=vmem, size = 0x9000, scoped, tag = 'internal scratch']
  %s0 = inlined_call_operand.vmem [shape: bf16[2,256,72], index: 0, kind: input, shape index: {}]
  %s1 = inlined_call_operand.vmem [shape: bf16[72,8], index: 1, kind: input, shape index: {}]
  %s2 = inlined_call_operand.vmem [shape: f32[1,8], index: 2, kind: input, shape index: {}]
  %s3 = inlined_call_operand.vmem [shape: f32[1,8], index: 3, kind: input, shape index: {}]
  %s4 = inlined_call_operand.vmem [shape: f32[2,256,8], index: 4, kind: input, shape index: {}]
  %s5 = inlined_call_operand.vmem [shape: f32[2,256,8], index: 5, kind: output, shape index: {}]
  %s6 = sld [smem:[#allocation0]]
  $region53: #{forward.16} parent=0
    _
  %s8 = ssub.s32 1, %s6
  %s9 = scalar_select 0, %s8, %s6
  loop: start=0, step=1, limit=4
  $region2: #{forward.16} parent=0 // loop_pre_header
    _
  $region3: #{forward.16} parent=0 // loop_header
    %s11 = sphi 0, %s15
    %p12 = scmp.ge.s32.totalorder %s11, 4
    %s21 = sphi 0, %s23
    %s24 = sphi 0, %s21
    %s25 = sphi 0, %s24
    %s41 = sphi 0, %s25
    %s45 = sphi 0, %s45
    %s47 = sphi 0, %s45
    %s48 = sphi 0, %s47
    %s62 = sphi 0, %s48
    %s66 = sphi 0, %s66
    %s68 = sphi 0, %s66
    %s69 = sphi 0, %s68
    %s83 = sphi 0, %s69
    %s87 = sphi 0, %s87
    %s89 = sphi 0, %s87
    %s90 = sphi 0, %s89
    %s104 = sphi 0, %s90
    %s110 = sphi 0, %s112
    %s113 = sphi 0, %s110
    %s114 = sphi 0, %s113
    %s130 = sphi 0, %s114
    %s136 = sphi 0, %s138
    %s139 = sphi 0, %s136
    %s140 = sphi 0, %s139
    %s156 = sphi 0, %s140
  $region4: #{forward.16} parent=0 // loop_header_branch
    %14 = sbr.rel (%p12) target = $region8
  $region5: #{forward.16} parent=0 // loop_body
    %s16 = ssub.s32 %s11, 1
    %s17 = ssub.s32 %s11, 2
    %s18 = sadd.s32 %s11, 1
    %s19 = ssub.s32 %s11, %s18
    %p20 = scmp.eq.s32.totalorder %s19, 0
    %s22 = sadd.s32 %s21, 1
    %s23 = scalar_select %p20, %s21, %s22
    %p26 = pneg %p20
    %p27 = scmp.eq.s32.totalorder %s11, 1
    %p28 = por %p26, %p27
    %p29 = scmp.ne.s32.totalorder %s21, %s24
    %p30 = scmp.eq.s32.totalorder %s11, 0
    %p31 = por %p29, %p30
    %p32 = scmp.ne.s32.totalorder %s21, %s24
    %p33 = scmp.eq.s32.totalorder %s16, 1
    %p34 = por %p32, %p33
    %p35 = scmp.ne.s32.totalorder %s24, %s25
    %p36 = scmp.eq.s32.totalorder %s16, 0
    %p37 = por %p35, %p36
    %p38 = scmp.ne.s32.totalorder %s24, %s25
    %p39 = scmp.eq.s32.totalorder %s17, 1
    %p40 = por %p38, %p39
    %p42 = scmp.ne.s32.totalorder %s25, %s41
    %p43 = scmp.eq.s32.totalorder %s17, 0
    %p44 = por %p42, %p43
    %s46 = sadd.s32 %s45, 1
    %p49 = scmp.eq.s32.totalorder %s11, 1
    %p50 = scmp.ne.s32.totalorder %s45, %s47
    %p51 = scmp.eq.s32.totalorder %s11, 0
    %p52 = por %p50, %p51
    %p53 = scmp.ne.s32.totalorder %s45, %s47
    %p54 = scmp.eq.s32.totalorder %s16, 1
    %p55 = por %p53, %p54
    %p56 = scmp.ne.s32.totalorder %s47, %s48
    %p57 = scmp.eq.s32.totalorder %s16, 0
    %p58 = por %p56, %p57
    %p59 = scmp.ne.s32.totalorder %s47, %s48
    %p60 = scmp.eq.s32.totalorder %s17, 1
    %p61 = por %p59, %p60
    %p63 = scmp.ne.s32.totalorder %s48, %s62
    %p64 = scmp.eq.s32.totalorder %s17, 0
    %p65 = por %p63, %p64
    %s67 = sadd.s32 %s66, 1
    %p70 = scmp.eq.s32.totalorder %s11, 1
    %p71 = scmp.ne.s32.totalorder %s66, %s68
    %p72 = scmp.eq.s32.totalorder %s11, 0
    %p73 = por %p71, %p72
    %p74 = scmp.ne.s32.totalorder %s66, %s68
    %p75 = scmp.eq.s32.totalorder %s16, 1
    %p76 = por %p74, %p75
    %p77 = scmp.ne.s32.totalorder %s68, %s69
    %p78 = scmp.eq.s32.totalorder %s16, 0
    %p79 = por %p77, %p78
    %p80 = scmp.ne.s32.totalorder %s68, %s69
    %p81 = scmp.eq.s32.totalorder %s17, 1
    %p82 = por %p80, %p81
    %p84 = scmp.ne.s32.totalorder %s69, %s83
    %p85 = scmp.eq.s32.totalorder %s17, 0
    %p86 = por %p84, %p85
    %s88 = sadd.s32 %s87, 1
    %p91 = scmp.eq.s32.totalorder %s11, 1
    %p92 = scmp.ne.s32.totalorder %s87, %s89
    %p93 = scmp.eq.s32.totalorder %s11, 0
    %p94 = por %p92, %p93
    %p95 = scmp.ne.s32.totalorder %s87, %s89
    %p96 = scmp.eq.s32.totalorder %s16, 1
    %p97 = por %p95, %p96
    %p98 = scmp.ne.s32.totalorder %s89, %s90
    %p99 = scmp.eq.s32.totalorder %s16, 0
    %p100 = por %p98, %p99
    %p101 = scmp.ne.s32.totalorder %s89, %s90
    %p102 = scmp.eq.s32.totalorder %s17, 1
    %p103 = por %p101, %p102
    %p105 = scmp.ne.s32.totalorder %s90, %s104
    %p106 = scmp.eq.s32.totalorder %s17, 0
    %p107 = por %p105, %p106
    %s108 = ssub.s32 %s11, %s18
    %p109 = scmp.eq.s32.totalorder %s108, 0
    %s111 = sadd.s32 %s110, 1
    %s112 = scalar_select %p109, %s110, %s111
    %p115 = pneg %p109
    %p116 = scmp.eq.s32.totalorder %s11, 1
    %p117 = por %p115, %p116
    %p118 = scmp.ne.s32.totalorder %s110, %s113
    %p119 = scmp.eq.s32.totalorder %s11, 0
    %p120 = por %p118, %p119
    %p121 = scmp.ne.s32.totalorder %s110, %s113
    %p122 = scmp.eq.s32.totalorder %s16, 1
    %p123 = por %p121, %p122
    %p124 = scmp.ne.s32.totalorder %s113, %s114
    %p125 = scmp.eq.s32.totalorder %s16, 0
    %p126 = por %p124, %p125
    %p127 = scmp.ne.s32.totalorder %s113, %s114
    %p128 = scmp.eq.s32.totalorder %s17, 1
    %p129 = por %p127, %p128
    %p131 = scmp.ne.s32.totalorder %s114, %s130
    %p132 = scmp.eq.s32.totalorder %s17, 0
    %p133 = por %p131, %p132
    %s134 = ssub.s32 %s11, %s18
    %p135 = scmp.eq.s32.totalorder %s134, 0
    %s137 = sadd.s32 %s136, 1
    %s138 = scalar_select %p135, %s136, %s137
    %p141 = pneg %p135
    %p142 = scmp.eq.s32.totalorder %s11, 1
    %p143 = por %p141, %p142
    %p144 = scmp.ne.s32.totalorder %s136, %s139
    %p145 = scmp.eq.s32.totalorder %s11, 0
    %p146 = por %p144, %p145
    %p147 = scmp.ne.s32.totalorder %s136, %s139
    %p148 = scmp.eq.s32.totalorder %s16, 1
    %p149 = por %p147, %p148
    %p150 = scmp.ne.s32.totalorder %s139, %s140
    %p151 = scmp.eq.s32.totalorder %s16, 0
    %p152 = por %p150, %p151
    %p153 = scmp.ne.s32.totalorder %s139, %s140
    %p154 = scmp.eq.s32.totalorder %s17, 1
    %p155 = por %p153, %p154
    %p157 = scmp.ne.s32.totalorder %s140, %s156
    %p158 = scmp.eq.s32.totalorder %s17, 0
    %p159 = por %p157, %p158
    %p160 = scmp.le.s32.totalorder 1, %s11
    %p161 = scmp.lt.s32.totalorder %s11, 3
    %p162 = pnand %p160, %p161
    %p163 = pneg %p162
    // Predicated region
    $region9: #{forward.16} parent=5 // pred_check
      _
    $region10: #{forward.16} parent=5 // pred_check_branch
      %165 = sbr.rel (%p162) target = $region12
    $region11: #{forward.16} parent=5 // pred_region
      %s166 = ssub.s32 %s11, 1
      // Predicated region
      $region13: #{forward.16} parent=11 // pred_check
        %p167 = pneg %p58
      $region14: #{forward.16} parent=11 // pred_check_branch
        %169 = sbr.rel (%p167) target = $region16
      $region15: #{forward.16} parent=11 // pred_region
        _
      $region16: #{forward.16} parent=11 // pred_fallthru
        _
      // Predicated region
      $region17: #{forward.16} parent=11 // pred_check
        %p170 = pneg %p79
      $region18: #{forward.16} parent=11 // pred_check_branch
        %172 = sbr.rel (%p170) target = $region20
      $region19: #{forward.16} parent=11 // pred_region
        _
      $region20: #{forward.16} parent=11 // pred_fallthru
        _
      // Predicated region
      $region21: #{forward.16} parent=11 // pred_check
        %p173 = pneg %p100
      $region22: #{forward.16} parent=11 // pred_check_branch
        %175 = sbr.rel (%p173) target = $region24
      $region23: #{forward.16} parent=11 // pred_region
        _
      $region24: #{forward.16} parent=11 // pred_fallthru
        _
    $region12: #{forward.16} parent=5 // pred_fallthru
      _
    %p176 = scmp.lt.s32.totalorder %s11, 2
    // Predicated region
    $region25: #{forward.16} parent=5 // pred_check
      %p177 = pneg %p176
    $region26: #{forward.16} parent=5 // pred_check_branch
      %179 = sbr.rel (%p177) target = $region28
    $region27: #{forward.16} parent=5 // pred_region
      // Predicated region
      $region29: #{forward.16} parent=27 // pred_check
        %p180 = pneg %p31
      $region30: #{forward.16} parent=27 // pred_check_branch
        %182 = sbr.rel (%p180) target = $region32
      $region31: #{forward.16} parent=27 // pred_region
        %p183 = scmp.lt.s32.totalorder %s11, 1
        %s184 = scalar_select %p183, %s11, 1
        %s185 = smul.addr %s184, 32
        %s186 = smul.addr %s185, 4
        %s187 = scalar_lea.vmem %s0, %s186
      $region32: #{forward.16} parent=27 // pred_fallthru
        _
      // Predicated region
      $region33: #{forward.16} parent=27 // pred_check
        %p188 = pneg %p120
      $region34: #{forward.16} parent=27 // pred_check_branch
        %190 = sbr.rel (%p188) target = $region36
      $region35: #{forward.16} parent=27 // pred_region
        %p191 = scmp.lt.s32.totalorder %s11, 1
        %s192 = scalar_select %p191, %s11, 1
        %s193 = smul.addr %s192, 32
        %s194 = smul.addr %s193, 8
        %s195 = scalar_lea.vmem %s4, %s194
      $region36: #{forward.16} parent=27 // pred_fallthru
        _
    $region28: #{forward.16} parent=5 // pred_fallthru
      _
    %p196 = scmp.le.s32.totalorder 1, %s11
    %p197 = scmp.lt.s32.totalorder %s11, 3
    %p198 = pnand %p196, %p197
    %p199 = pneg %p198
    // Predicated region
    $region37: #{forward.16} parent=5 // pred_check
      _
    $region38: #{forward.16} parent=5 // pred_check_branch
      %201 = sbr.rel (%p198) target = $region40
    $region39: #{forward.16} parent=5 // pred_region
      %s202 = ssub.s32 %s11, 1
      %p203 = scmp.lt.s32.totalorder %s16, 1
      %s204 = scalar_select %p203, %s16, 1
      %s205 = smul.addr %s204, 32
      %s206 = smul.addr %s205, 4
      %s207 = scalar_lea.vmem %s0, %s206
      %p208 = pneg %p37
      %p209 = pneg %p34
      %p210 = pneg %p58
      %p211 = pneg %p55
      %p212 = pneg %p79
      %p213 = pneg %p76
      %p214 = pneg %p100
      %p215 = pneg %p97
      %p216 = scmp.lt.s32.totalorder %s16, 1
      %s217 = scalar_select %p216, %s16, 1
      %s218 = smul.addr %s217, 32
      %s219 = smul.addr %s218, 8
      %s220 = scalar_lea.vmem %s4, %s219
      %p221 = pneg %p126
      %p222 = pneg %p123
      %p223 = pneg %p152
      %p224 = pneg %p149
      %p225 = scmp.lt.s32.totalorder %s16, 1
      %s226 = scalar_select %p225, %s16, 1
      %s227 = smul.addr %s226, 32
      %s228 = smul.addr %s227, 8
      %s229 = scalar_lea.vmem %s5, %s228
      %p230 = scmp.lt.s32.totalorder %s16, 1
      %s231 = scalar_select %p230, %s16, 1
      %s232 = smul.addr %s231, 32
      %s233 = smul.addr %s232, 4
      %s234 = scalar_lea.vmem %s0, %s233
      %p235 = scmp.lt.s32.totalorder %s16, 1
      %s236 = scalar_select %p235, %s16, 1
      %s237 = smul.addr %s236, 32
      %s238 = smul.addr %s237, 8
      %s239 = scalar_lea.vmem %s4, %s238
      %p240 = scmp.lt.s32.totalorder %s16, 1
      %s241 = scalar_select %p240, %s16, 1
      %s242 = smul.addr %s241, 32
      %s243 = smul.addr %s242, 8
      %s244 = scalar_lea.vmem %s5, %s243
      %v246 = vld [vmem:[%s234] sm:$0xf]
      %v247 = vld [vmem:[%s234 + $0x4] sm:$0xf]
      %v248 = vld [vmem:[%s234 + $0x8] sm:$0xf]
      %v249 = vld [vmem:[%s234 + $0xc] sm:$0xf]
      %v250 = vld [vmem:[%s234 + $0x10] sm:$0xf]
      %v251 = vld [vmem:[%s234 + $0x14] sm:$0xf]
      %v252 = vld [vmem:[%s234 + $0x18] sm:$0xf]
      %v253 = vld [vmem:[%s234 + $0x1c] sm:$0xf]
      %v254 = vld [vmem:[%s234 + $0x20] sm:$0xf]
      %v255 = vld [vmem:[%s234 + $0x24] sm:$0xf]
      %v256 = vld [vmem:[%s234 + $0x28] sm:$0xf]
      %v257 = vld [vmem:[%s234 + $0x2c] sm:$0xf]
      %v258 = vld [vmem:[%s234 + $0x30] sm:$0xf]
      %v259 = vld [vmem:[%s234 + $0x34] sm:$0xf]
      %v260 = vld [vmem:[%s234 + $0x38] sm:$0xf]
      %v261 = vld [vmem:[%s234 + $0x3c] sm:$0xf]
      %v262 = vld [vmem:[%s234 + $0x40] sm:$0xf]
      %v263 = vld [vmem:[%s234 + $0x44] sm:$0xf]
      %v264 = vld [vmem:[%s234 + $0x48] sm:$0xf]
      %v265 = vld [vmem:[%s234 + $0x4c] sm:$0xf]
      %v266 = vld [vmem:[%s234 + $0x50] sm:$0xf]
      %v267 = vld [vmem:[%s234 + $0x54] sm:$0xf]
      %v268 = vld [vmem:[%s234 + $0x58] sm:$0xf]
      %v269 = vld [vmem:[%s234 + $0x5c] sm:$0xf]
      %v270 = vld [vmem:[%s234 + $0x60] sm:$0xf]
      %v271 = vld [vmem:[%s234 + $0x64] sm:$0xf]
      %v272 = vld [vmem:[%s234 + $0x68] sm:$0xf]
      %v273 = vld [vmem:[%s234 + $0x6c] sm:$0xf]
      %v274 = vld [vmem:[%s234 + $0x70] sm:$0xf]
      %v275 = vld [vmem:[%s234 + $0x74] sm:$0xf]
      %v276 = vld [vmem:[%s234 + $0x78] sm:$0xf]
      %v277 = vld [vmem:[%s234 + $0x7c] sm:$0xf]
      %v278 = vld [vmem:[%s1] sm:$0xf]
      %v279 = vld [vmem:[%s1 + $0x4] sm:$0xf]
      %v280 = vld [vmem:[%s1 + $0x8] sm:$0xf]
      %v281 = vld [vmem:[%s1 + $0xc] sm:$0xf]
      %v282 = vld [vmem:[%s1 + $0x10] sm:$0xf]
      %v283 = vld [vmem:[%s1 + $0x14] sm:$0xf]
      %v284 = vld [vmem:[%s1 + $0x18] sm:$0xf]
      %v285 = vld [vmem:[%s1 + $0x1c] sm:$0xf]
      %v286 = vld [vmem:[%s1 + $0x20] sm:$0xf]
      %v319 = vunpack.c.l.b16 %v246
      %v320 = vunpack.c.l.b16 %v247
      %v321 = vunpack.c.l.b16 %v248
      %v322 = vunpack.c.l.b16 %v249
      %v323 = vunpack.c.l.b16 %v250
      %v324 = vunpack.c.l.b16 %v251
      %v325 = vunpack.c.l.b16 %v252
      %v326 = vunpack.c.l.b16 %v253
      %v327 = vunpack.c.l.b16 %v254
      %v328 = vunpack.c.l.b16 %v255
      %v329 = vunpack.c.l.b16 %v256
      %v330 = vunpack.c.l.b16 %v257
      %v331 = vunpack.c.l.b16 %v258
      %v332 = vunpack.c.l.b16 %v259
      %v333 = vunpack.c.l.b16 %v260
      %v334 = vunpack.c.l.b16 %v261
      %v335 = vunpack.c.l.b16 %v262
      %v336 = vunpack.c.l.b16 %v263
      %v337 = vunpack.c.l.b16 %v264
      %v338 = vunpack.c.l.b16 %v265
      %v339 = vunpack.c.l.b16 %v266
      %v340 = vunpack.c.l.b16 %v267
      %v341 = vunpack.c.l.b16 %v268
      %v342 = vunpack.c.l.b16 %v269
      %v343 = vunpack.c.l.b16 %v270
      %v344 = vunpack.c.l.b16 %v271
      %v345 = vunpack.c.l.b16 %v272
      %v346 = vunpack.c.l.b16 %v273
      %v347 = vunpack.c.l.b16 %v274
      %v348 = vunpack.c.l.b16 %v275
      %v349 = vunpack.c.l.b16 %v276
      %v350 = vunpack.c.l.b16 %v277
      %v351 = vpack.c.b16 %v320, %v319
      %v352 = vpack.c.b16 %v322, %v321
      %v353 = vpack.c.b16 %v324, %v323
      %v354 = vpack.c.b16 %v326, %v325
      %v355 = vpack.c.b16 %v328, %v327
      %v356 = vpack.c.b16 %v330, %v329
      %v357 = vpack.c.b16 %v332, %v331
      %v358 = vpack.c.b16 %v334, %v333
      %v359 = vpack.c.b16 %v336, %v335
      %v360 = vpack.c.b16 %v338, %v337
      %v361 = vpack.c.b16 %v340, %v339
      %v362 = vpack.c.b16 %v342, %v341
      %v363 = vpack.c.b16 %v344, %v343
      %v364 = vpack.c.b16 %v346, %v345
      %v365 = vpack.c.b16 %v348, %v347
      %v366 = vpack.c.b16 %v350, %v349
      %v376 = vunpack.c.l.b16 %v278
      %v377 = vunpack.c.l.b16 %v279
      %v378 = vunpack.c.l.b16 %v280
      %v379 = vunpack.c.l.b16 %v281
      %v380 = vunpack.c.l.b16 %v282
      %v381 = vunpack.c.l.b16 %v283
      %v382 = vunpack.c.l.b16 %v284
      %v383 = vunpack.c.l.b16 %v285
      %v384 = vunpack.c.l.b16 %v286
      %v385 = vpack.c.b16 %v377, %v376
      %v386 = vpack.c.b16 %v379, %v378
      %v387 = vpack.c.b16 %v381, %v380
      %v388 = vpack.c.b16 %v383, %v382
      %v389 = vpack.c.b16 %v384, %v384
      %vm394 = vcmask 588800
      %v396 = vsel %vm394, %v351, 0
      %v399 = vsel %vm394, %v352, 0
      %v402 = vsel %vm394, %v353, 0
      %v405 = vsel %vm394, %v354, 0
      %v408 = vsel %vm394, %v355, 0
      %v411 = vsel %vm394, %v356, 0
      %v414 = vsel %vm394, %v357, 0
      %v417 = vsel %vm394, %v358, 0
      %v420 = vsel %vm394, %v359, 0
      %v423 = vsel %vm394, %v360, 0
      %v426 = vsel %vm394, %v361, 0
      %v429 = vsel %vm394, %v362, 0
      %v432 = vsel %vm394, %v363, 0
      %v435 = vsel %vm394, %v364, 0
      %v438 = vsel %vm394, %v365, 0
      %v441 = vsel %vm394, %v366, 0
      %vm443 = vcmask 1043456
      %v445 = vsel %vm443, %v389, 0
      %447 = vmatpush.bf16.msra.mxu0 0
      %448 = vmatpush.bf16.msra.mxu0 0
      %449 = vmatpush.bf16.msra.mxu0 0
      %450 = vmatpush.bf16.msra.mxu0 %v445
      %451 = vmatpush.bf16.msra.mxu0 %v388
      %452 = vmatpush.bf16.msra.mxu0 %v387
      %453 = vmatpush.bf16.msra.mxu0 %v386
      %454 = vmatpush.bf16.msra.mxu0 %v385
      %455 = vmatmul.bf16.gmra.mxu0 %v396
      %v456 = vpop.f32.mrf.mxu0
      %v457 = vadd.f32 0.0, %v456
      %v458 = vpop.f32.mrf.mxu0
      %v459 = vadd.f32 0.0, %v458
      %460 = vmatmul.bf16.gmra.mxu0 %v399
      %v461 = vpop.f32.mrf.mxu0
      %v462 = vadd.f32 0.0, %v461
      %v463 = vpop.f32.mrf.mxu0
      %v464 = vadd.f32 0.0, %v463
      %465 = vmatmul.bf16.gmra.mxu0 %v402
      %v466 = vpop.f32.mrf.mxu0
      %v467 = vadd.f32 0.0, %v466
      %v468 = vpop.f32.mrf.mxu0
      %v469 = vadd.f32 0.0, %v468
      %470 = vmatmul.bf16.gmra.mxu0 %v405
      %v471 = vpop.f32.mrf.mxu0
      %v472 = vadd.f32 0.0, %v471
      %v473 = vpop.f32.mrf.mxu0
      %v474 = vadd.f32 0.0, %v473
      %475 = vmatmul.bf16.gmra.mxu0 %v408
      %v476 = vpop.f32.mrf.mxu0
      %v477 = vadd.f32 0.0, %v476
      %v478 = vpop.f32.mrf.mxu0
      %v479 = vadd.f32 0.0, %v478
      %480 = vmatmul.bf16.gmra.mxu0 %v411
      %v481 = vpop.f32.mrf.mxu0
      %v482 = vadd.f32 0.0, %v481
      %v483 = vpop.f32.mrf.mxu0
      %v484 = vadd.f32 0.0, %v483
      %485 = vmatmul.bf16.gmra.mxu0 %v414
      %v486 = vpop.f32.mrf.mxu0
      %v487 = vadd.f32 0.0, %v486
      %v488 = vpop.f32.mrf.mxu0
      %v489 = vadd.f32 0.0, %v488
      %490 = vmatmul.bf16.gmra.mxu0 %v417
      %v491 = vpop.f32.mrf.mxu0
      %v492 = vadd.f32 0.0, %v491
      %v493 = vpop.f32.mrf.mxu0
      %v494 = vadd.f32 0.0, %v493
      %495 = vmatmul.bf16.gmra.mxu0 %v420
      %v496 = vpop.f32.mrf.mxu0
      %v497 = vadd.f32 0.0, %v496
      %v498 = vpop.f32.mrf.mxu0
      %v499 = vadd.f32 0.0, %v498
      %500 = vmatmul.bf16.gmra.mxu0 %v423
      %v501 = vpop.f32.mrf.mxu0
      %v502 = vadd.f32 0.0, %v501
      %v503 = vpop.f32.mrf.mxu0
      %v504 = vadd.f32 0.0, %v503
      %505 = vmatmul.bf16.gmra.mxu0 %v426
      %v506 = vpop.f32.mrf.mxu0
      %v507 = vadd.f32 0.0, %v506
      %v508 = vpop.f32.mrf.mxu0
      %v509 = vadd.f32 0.0, %v508
      %510 = vmatmul.bf16.gmra.mxu0 %v429
      %v511 = vpop.f32.mrf.mxu0
      %v512 = vadd.f32 0.0, %v511
      %v513 = vpop.f32.mrf.mxu0
      %v514 = vadd.f32 0.0, %v513
      %515 = vmatmul.bf16.gmra.mxu0 %v432
      %v516 = vpop.f32.mrf.mxu0
      %v517 = vadd.f32 0.0, %v516
      %v518 = vpop.f32.mrf.mxu0
      %v519 = vadd.f32 0.0, %v518
      %520 = vmatmul.bf16.gmra.mxu0 %v435
      %v521 = vpop.f32.mrf.mxu0
      %v522 = vadd.f32 0.0, %v521
      %v523 = vpop.f32.mrf.mxu0
      %v524 = vadd.f32 0.0, %v523
      %525 = vmatmul.bf16.gmra.mxu0 %v438
      %v526 = vpop.f32.mrf.mxu0
      %v527 = vadd.f32 0.0, %v526
      %v528 = vpop.f32.mrf.mxu0
      %v529 = vadd.f32 0.0, %v528
      %530 = vmatmul.bf16.gmra.mxu0 %v441
      %v531 = vpop.f32.mrf.mxu0
      %v532 = vadd.f32 0.0, %v531
      %v533 = vpop.f32.mrf.mxu0
      %v534 = vadd.f32 0.0, %v533
      %535 = vdwg.mxu0
      %v536 = vld [vmem:[%s2] sm:$0x1]
      %v537 = vld [vmem:[%s3] sm:$0x1]
      %vm538 = vcmask 64512
      %v539 = vsel %vm538, %v457, 0.0
      %v540 = vsel %vm538, %v459, 0.0
      %v541 = vadd.f32 %v539, %v540
      %v542 = vsel %vm538, %v462, 0.0
      %v543 = vadd.f32 %v541, %v542
      %v544 = vsel %vm538, %v464, 0.0
      %v545 = vadd.f32 %v543, %v544
      %v546 = vsel %vm538, %v467, 0.0
      %v547 = vadd.f32 %v545, %v546
      %v548 = vsel %vm538, %v469, 0.0
      %v549 = vadd.f32 %v547, %v548
      %v550 = vsel %vm538, %v472, 0.0
      %v551 = vadd.f32 %v549, %v550
      %v552 = vsel %vm538, %v474, 0.0
      %v553 = vadd.f32 %v551, %v552
      %v554 = vsel %vm538, %v477, 0.0
      %v555 = vadd.f32 %v553, %v554
      %v556 = vsel %vm538, %v479, 0.0
      %v557 = vadd.f32 %v555, %v556
      %v558 = vsel %vm538, %v482, 0.0
      %v559 = vadd.f32 %v557, %v558
      %v560 = vsel %vm538, %v484, 0.0
      %v561 = vadd.f32 %v559, %v560
      %v562 = vsel %vm538, %v487, 0.0
      %v563 = vadd.f32 %v561, %v562
      %v564 = vsel %vm538, %v489, 0.0
      %v565 = vadd.f32 %v563, %v564
      %v566 = vsel %vm538, %v492, 0.0
      %v567 = vadd.f32 %v565, %v566
      %v568 = vsel %vm538, %v494, 0.0
      %v569 = vadd.f32 %v567, %v568
      %v570 = vsel %vm538, %v497, 0.0
      %v571 = vadd.f32 %v569, %v570
      %v572 = vsel %vm538, %v499, 0.0
      %v573 = vadd.f32 %v571, %v572
      %v574 = vsel %vm538, %v502, 0.0
      %v575 = vadd.f32 %v573, %v574
      %v576 = vsel %vm538, %v504, 0.0
      %v577 = vadd.f32 %v575, %v576
      %v578 = vsel %vm538, %v507, 0.0
      %v579 = vadd.f32 %v577, %v578
      %v580 = vsel %vm538, %v509, 0.0
      %v581 = vadd.f32 %v579, %v580
      %v582 = vsel %vm538, %v512, 0.0
      %v583 = vadd.f32 %v581, %v582
      %v584 = vsel %vm538, %v514, 0.0
      %v585 = vadd.f32 %v583, %v584
      %v586 = vsel %vm538, %v517, 0.0
      %v587 = vadd.f32 %v585, %v586
      %v588 = vsel %vm538, %v519, 0.0
      %v589 = vadd.f32 %v587, %v588
      %v590 = vsel %vm538, %v522, 0.0
      %v591 = vadd.f32 %v589, %v590
      %v592 = vsel %vm538, %v524, 0.0
      %v593 = vadd.f32 %v591, %v592
      %v594 = vsel %vm538, %v527, 0.0
      %v595 = vadd.f32 %v593, %v594
      %v596 = vsel %vm538, %v529, 0.0
      %v597 = vadd.f32 %v595, %v596
      %v598 = vsel %vm538, %v532, 0.0
      %v599 = vadd.f32 %v597, %v598
      %v600 = vsel %vm538, %v534, 0.0
      %v601 = vadd.f32 %v599, %v600
      %v602 = vrot.slane %v601, 4
      %v603 = vadd.f32 %v601, %v602
      %v604 = vrot.slane %v603, 2
      %v605 = vadd.f32 %v603, %v604
      %v606 = vrot.slane %v605, 1
      %v607 = vadd.f32 %v605, %v606
      %v608 = vrcp.pop 256.0
      %v609 = vmul.f32 256.0, %v608
      %v610 = vsub.f32 1.0, %v609
      %v611 = vmul.f32 %v608, %v610
      %v612 = vadd.f32 %v608, %v611
      %vm613 = vweird.f32 %v608
      %v614 = vsel %vm613, %v608, %v612
      %v615 = vmul.f32 %v607, %v614
      %v616 = vsub.f32 %v457, %v615
      %v617 = vsub.f32 %v459, %v615
      %v618 = vsub.f32 %v462, %v615
      %v619 = vsub.f32 %v464, %v615
      %v620 = vsub.f32 %v467, %v615
      %v621 = vsub.f32 %v469, %v615
      %v622 = vsub.f32 %v472, %v615
      %v623 = vsub.f32 %v474, %v615
      %v624 = vsub.f32 %v477, %v615
      %v625 = vsub.f32 %v479, %v615
      %v626 = vsub.f32 %v482, %v615
      %v627 = vsub.f32 %v484, %v615
      %v628 = vsub.f32 %v487, %v615
      %v629 = vsub.f32 %v489, %v615
      %v630 = vsub.f32 %v492, %v615
      %v631 = vsub.f32 %v494, %v615
      %v632 = vsub.f32 %v497, %v615
      %v633 = vsub.f32 %v499, %v615
      %v634 = vsub.f32 %v502, %v615
      %v635 = vsub.f32 %v504, %v615
      %v636 = vsub.f32 %v507, %v615
      %v637 = vsub.f32 %v509, %v615
      %v638 = vsub.f32 %v512, %v615
      %v639 = vsub.f32 %v514, %v615
      %v640 = vsub.f32 %v517, %v615
      %v641 = vsub.f32 %v519, %v615
      %v642 = vsub.f32 %v522, %v615
      %v643 = vsub.f32 %v524, %v615
      %v644 = vsub.f32 %v527, %v615
      %v645 = vsub.f32 %v529, %v615
      %v646 = vsub.f32 %v532, %v615
      %v647 = vsub.f32 %v534, %v615
      %v648 = vmul.f32 %v616, %v616
      %v649 = vmul.f32 %v617, %v617
      %v650 = vmul.f32 %v618, %v618
      %v651 = vmul.f32 %v619, %v619
      %v652 = vmul.f32 %v620, %v620
      %v653 = vmul.f32 %v621, %v621
      %v654 = vmul.f32 %v622, %v622
      %v655 = vmul.f32 %v623, %v623
      %v656 = vmul.f32 %v624, %v624
      %v657 = vmul.f32 %v625, %v625
      %v658 = vmul.f32 %v626, %v626
      %v659 = vmul.f32 %v627, %v627
      %v660 = vmul.f32 %v628, %v628
      %v661 = vmul.f32 %v629, %v629
      %v662 = vmul.f32 %v630, %v630
      %v663 = vmul.f32 %v631, %v631
      %v664 = vmul.f32 %v632, %v632
      %v665 = vmul.f32 %v633, %v633
      %v666 = vmul.f32 %v634, %v634
      %v667 = vmul.f32 %v635, %v635
      %v668 = vmul.f32 %v636, %v636
      %v669 = vmul.f32 %v637, %v637
      %v670 = vmul.f32 %v638, %v638
      %v671 = vmul.f32 %v639, %v639
      %v672 = vmul.f32 %v640, %v640
      %v673 = vmul.f32 %v641, %v641
      %v674 = vmul.f32 %v642, %v642
      %v675 = vmul.f32 %v643, %v643
      %v676 = vmul.f32 %v644, %v644
      %v677 = vmul.f32 %v645, %v645
      %v678 = vmul.f32 %v646, %v646
      %v679 = vmul.f32 %v647, %v647
      %v680 = vsel %vm538, %v648, 0.0
      %v681 = vsel %vm538, %v649, 0.0
      %v682 = vadd.f32 %v680, %v681
      %v683 = vsel %vm538, %v650, 0.0
      %v684 = vadd.f32 %v682, %v683
      %v685 = vsel %vm538, %v651, 0.0
      %v686 = vadd.f32 %v684, %v685
      %v687 = vsel %vm538, %v652, 0.0
      %v688 = vadd.f32 %v686, %v687
      %v689 = vsel %vm538, %v653, 0.0
      %v690 = vadd.f32 %v688, %v689
      %v691 = vsel %vm538, %v654, 0.0
      %v692 = vadd.f32 %v690, %v691
      %v693 = vsel %vm538, %v655, 0.0
      %v694 = vadd.f32 %v692, %v693
      %v695 = vsel %vm538, %v656, 0.0
      %v696 = vadd.f32 %v694, %v695
      %v697 = vsel %vm538, %v657, 0.0
      %v698 = vadd.f32 %v696, %v697
      %v699 = vsel %vm538, %v658, 0.0
      %v700 = vadd.f32 %v698, %v699
      %v701 = vsel %vm538, %v659, 0.0
      %v702 = vadd.f32 %v700, %v701
      %v703 = vsel %vm538, %v660, 0.0
      %v704 = vadd.f32 %v702, %v703
      %v705 = vsel %vm538, %v661, 0.0
      %v706 = vadd.f32 %v704, %v705
      %v707 = vsel %vm538, %v662, 0.0
      %v708 = vadd.f32 %v706, %v707
      %v709 = vsel %vm538, %v663, 0.0
      %v710 = vadd.f32 %v708, %v709
      %v711 = vsel %vm538, %v664, 0.0
      %v712 = vadd.f32 %v710, %v711
      %v713 = vsel %vm538, %v665, 0.0
      %v714 = vadd.f32 %v712, %v713
      %v715 = vsel %vm538, %v666, 0.0
      %v716 = vadd.f32 %v714, %v715
      %v717 = vsel %vm538, %v667, 0.0
      %v718 = vadd.f32 %v716, %v717
      %v719 = vsel %vm538, %v668, 0.0
      %v720 = vadd.f32 %v718, %v719
      %v721 = vsel %vm538, %v669, 0.0
      %v722 = vadd.f32 %v720, %v721
      %v723 = vsel %vm538, %v670, 0.0
      %v724 = vadd.f32 %v722, %v723
      %v725 = vsel %vm538, %v671, 0.0
      %v726 = vadd.f32 %v724, %v725
      %v727 = vsel %vm538, %v672, 0.0
      %v728 = vadd.f32 %v726, %v727
      %v729 = vsel %vm538, %v673, 0.0
      %v730 = vadd.f32 %v728, %v729
      %v731 = vsel %vm538, %v674, 0.0
      %v732 = vadd.f32 %v730, %v731
      %v733 = vsel %vm538, %v675, 0.0
      %v734 = vadd.f32 %v732, %v733
      %v735 = vsel %vm538, %v676, 0.0
      %v736 = vadd.f32 %v734, %v735
      %v737 = vsel %vm538, %v677, 0.0
      %v738 = vadd.f32 %v736, %v737
      %v739 = vsel %vm538, %v678, 0.0
      %v740 = vadd.f32 %v738, %v739
      %v741 = vsel %vm538, %v679, 0.0
      %v742 = vadd.f32 %v740, %v741
      %v743 = vrot.slane %v742, 4
      %v744 = vadd.f32 %v742, %v743
      %v745 = vrot.slane %v744, 2
      %v746 = vadd.f32 %v744, %v745
      %v747 = vrot.slane %v746, 1
      %v748 = vadd.f32 %v746, %v747
      %v749 = vmul.f32 %v748, %v614
      %v750 = vadd.f32 %v749, 1e-05
      %v751 = vrsqrt.pop %v750
      %v752 = vmul.f32 %v751, %v750
      %v753 = vmul.f32 %v752, %v751
      %v754 = vmul.f32 0.5, %v753
      %v755 = vsub.f32 1.5, %v754
      %v756 = vmul.f32 %v751, %v755
      %vm757 = vweird.f32 %v750
      %vm758 = vweird.f32 %v751
      %vm759 = vmor %vm757, %vm758
      %v760 = vsel %vm759, %v751, %v756
      %v761 = vmul.f32 %v616, %v760
      %v762 = vmul.f32 %v617, %v760
      %v763 = vmul.f32 %v618, %v760
      %v764 = vmul.f32 %v619, %v760
      %v765 = vmul.f32 %v620, %v760
      %v766 = vmul.f32 %v621, %v760
      %v767 = vmul.f32 %v622, %v760
      %v768 = vmul.f32 %v623, %v760
      %v769 = vmul.f32 %v624, %v760
      %v770 = vmul.f32 %v625, %v760
      %v771 = vmul.f32 %v626, %v760
      %v772 = vmul.f32 %v627, %v760
      %v773 = vmul.f32 %v628, %v760
      %v774 = vmul.f32 %v629, %v760
      %v775 = vmul.f32 %v630, %v760
      %v776 = vmul.f32 %v631, %v760
      %v777 = vmul.f32 %v632, %v760
      %v778 = vmul.f32 %v633, %v760
      %v779 = vmul.f32 %v634, %v760
      %v780 = vmul.f32 %v635, %v760
      %v781 = vmul.f32 %v636, %v760
      %v782 = vmul.f32 %v637, %v760
      %v783 = vmul.f32 %v638, %v760
      %v784 = vmul.f32 %v639, %v760
      %v785 = vmul.f32 %v640, %v760
      %v786 = vmul.f32 %v641, %v760
      %v787 = vmul.f32 %v642, %v760
      %v788 = vmul.f32 %v643, %v760
      %v789 = vmul.f32 %v644, %v760
      %v790 = vmul.f32 %v645, %v760
      %v791 = vmul.f32 %v646, %v760
      %v792 = vmul.f32 %v647, %v760
      %v794 = vperm.slane %v536, 0
      %v796 = vmul.f32 %v761, %v794
      %v797 = vmul.f32 %v762, %v794
      %v798 = vmul.f32 %v763, %v794
      %v799 = vmul.f32 %v764, %v794
      %v800 = vmul.f32 %v765, %v794
      %v801 = vmul.f32 %v766, %v794
      %v802 = vmul.f32 %v767, %v794
      %v803 = vmul.f32 %v768, %v794
      %v804 = vmul.f32 %v769, %v794
      %v805 = vmul.f32 %v770, %v794
      %v806 = vmul.f32 %v771, %v794
      %v807 = vmul.f32 %v772, %v794
      %v808 = vmul.f32 %v773, %v794
      %v809 = vmul.f32 %v774, %v794
      %v810 = vmul.f32 %v775, %v794
      %v811 = vmul.f32 %v776, %v794
      %v812 = vmul.f32 %v777, %v794
      %v813 = vmul.f32 %v778, %v794
      %v814 = vmul.f32 %v779, %v794
      %v815 = vmul.f32 %v780, %v794
      %v816 = vmul.f32 %v781, %v794
      %v817 = vmul.f32 %v782, %v794
      %v818 = vmul.f32 %v783, %v794
      %v819 = vmul.f32 %v784, %v794
      %v820 = vmul.f32 %v785, %v794
      %v821 = vmul.f32 %v786, %v794
      %v822 = vmul.f32 %v787, %v794
      %v823 = vmul.f32 %v788, %v794
      %v824 = vmul.f32 %v789, %v794
      %v825 = vmul.f32 %v790, %v794
      %v826 = vmul.f32 %v791, %v794
      %v827 = vmul.f32 %v792, %v794
      %v829 = vperm.slane %v537, 0
      %v831 = vadd.f32 %v796, %v829
      %v832 = vadd.f32 %v797, %v829
      %v833 = vadd.f32 %v798, %v829
      %v834 = vadd.f32 %v799, %v829
      %v835 = vadd.f32 %v800, %v829
      %v836 = vadd.f32 %v801, %v829
      %v837 = vadd.f32 %v802, %v829
      %v838 = vadd.f32 %v803, %v829
      %v839 = vadd.f32 %v804, %v829
      %v840 = vadd.f32 %v805, %v829
      %v841 = vadd.f32 %v806, %v829
      %v842 = vadd.f32 %v807, %v829
      %v843 = vadd.f32 %v808, %v829
      %v844 = vadd.f32 %v809, %v829
      %v845 = vadd.f32 %v810, %v829
      %v846 = vadd.f32 %v811, %v829
      %v847 = vadd.f32 %v812, %v829
      %v848 = vadd.f32 %v813, %v829
      %v849 = vadd.f32 %v814, %v829
      %v850 = vadd.f32 %v815, %v829
      %v851 = vadd.f32 %v816, %v829
      %v852 = vadd.f32 %v817, %v829
      %v853 = vadd.f32 %v818, %v829
      %v854 = vadd.f32 %v819, %v829
      %v855 = vadd.f32 %v820, %v829
      %v856 = vadd.f32 %v821, %v829
      %v857 = vadd.f32 %v822, %v829
      %v858 = vadd.f32 %v823, %v829
      %v859 = vadd.f32 %v824, %v829
      %v860 = vadd.f32 %v825, %v829
      %v861 = vadd.f32 %v826, %v829
      %v862 = vadd.f32 %v827, %v829
      %v863 = vld [vmem:[%s239] sm:$0xff]
      %v864 = vld [vmem:[%s239 + $0x8] sm:$0xff]
      %v865 = vld [vmem:[%s239 + $0x10] sm:$0xff]
      %v866 = vld [vmem:[%s239 + $0x18] sm:$0xff]
      %v867 = vld [vmem:[%s239 + $0x20] sm:$0xff]
      %v868 = vld [vmem:[%s239 + $0x28] sm:$0xff]
      %v869 = vld [vmem:[%s239 + $0x30] sm:$0xff]
      %v870 = vld [vmem:[%s239 + $0x38] sm:$0xff]
      %v871 = vld [vmem:[%s239 + $0x40] sm:$0xff]
      %v872 = vld [vmem:[%s239 + $0x48] sm:$0xff]
      %v873 = vld [vmem:[%s239 + $0x50] sm:$0xff]
      %v874 = vld [vmem:[%s239 + $0x58] sm:$0xff]
      %v875 = vld [vmem:[%s239 + $0x60] sm:$0xff]
      %v876 = vld [vmem:[%s239 + $0x68] sm:$0xff]
      %v877 = vld [vmem:[%s239 + $0x70] sm:$0xff]
      %v878 = vld [vmem:[%s239 + $0x78] sm:$0xff]
      %v879 = vld [vmem:[%s239 + $0x80] sm:$0xff]
      %v880 = vld [vmem:[%s239 + $0x88] sm:$0xff]
      %v881 = vld [vmem:[%s239 + $0x90] sm:$0xff]
      %v882 = vld [vmem:[%s239 + $0x98] sm:$0xff]
      %v883 = vld [vmem:[%s239 + $0xa0] sm:$0xff]
      %v884 = vld [vmem:[%s239 + $0xa8] sm:$0xff]
      %v885 = vld [vmem:[%s239 + $0xb0] sm:$0xff]
      %v886 = vld [vmem:[%s239 + $0xb8] sm:$0xff]
      %v887 = vld [vmem:[%s239 + $0xc0] sm:$0xff]
      %v888 = vld [vmem:[%s239 + $0xc8] sm:$0xff]
      %v889 = vld [vmem:[%s239 + $0xd0] sm:$0xff]
      %v890 = vld [vmem:[%s239 + $0xd8] sm:$0xff]
      %v891 = vld [vmem:[%s239 + $0xe0] sm:$0xff]
      %v892 = vld [vmem:[%s239 + $0xe8] sm:$0xff]
      %v893 = vld [vmem:[%s239 + $0xf0] sm:$0xff]
      %v894 = vld [vmem:[%s239 + $0xf8] sm:$0xff]
      %v895 = vadd.f32 %v831, %v863
      %v896 = vadd.f32 %v832, %v864
      %v897 = vadd.f32 %v833, %v865
      %v898 = vadd.f32 %v834, %v866
      %v899 = vadd.f32 %v835, %v867
      %v900 = vadd.f32 %v836, %v868
      %v901 = vadd.f32 %v837, %v869
      %v902 = vadd.f32 %v838, %v870
      %v903 = vadd.f32 %v839, %v871
      %v904 = vadd.f32 %v840, %v872
      %v905 = vadd.f32 %v841, %v873
      %v906 = vadd.f32 %v842, %v874
      %v907 = vadd.f32 %v843, %v875
      %v908 = vadd.f32 %v844, %v876
      %v909 = vadd.f32 %v845, %v877
      %v910 = vadd.f32 %v846, %v878
      %v911 = vadd.f32 %v847, %v879
      %v912 = vadd.f32 %v848, %v880
      %v913 = vadd.f32 %v849, %v881
      %v914 = vadd.f32 %v850, %v882
      %v915 = vadd.f32 %v851, %v883
      %v916 = vadd.f32 %v852, %v884
      %v917 = vadd.f32 %v853, %v885
      %v918 = vadd.f32 %v854, %v886
      %v919 = vadd.f32 %v855, %v887
      %v920 = vadd.f32 %v856, %v888
      %v921 = vadd.f32 %v857, %v889
      %v922 = vadd.f32 %v858, %v890
      %v923 = vadd.f32 %v859, %v891
      %v924 = vadd.f32 %v860, %v892
      %v925 = vadd.f32 %v861, %v893
      %v926 = vadd.f32 %v862, %v894
      %v927 = vmul.f32 %v895, 0.01
      %v928 = vmul.f32 %v896, 0.01
      %v929 = vmul.f32 %v897, 0.01
      %v930 = vmul.f32 %v898, 0.01
      %v931 = vmul.f32 %v899, 0.01
      %v932 = vmul.f32 %v900, 0.01
      %v933 = vmul.f32 %v901, 0.01
      %v934 = vmul.f32 %v902, 0.01
      %v935 = vmul.f32 %v903, 0.01
      %v936 = vmul.f32 %v904, 0.01
      %v937 = vmul.f32 %v905, 0.01
      %v938 = vmul.f32 %v906, 0.01
      %v939 = vmul.f32 %v907, 0.01
      %v940 = vmul.f32 %v908, 0.01
      %v941 = vmul.f32 %v909, 0.01
      %v942 = vmul.f32 %v910, 0.01
      %v943 = vmul.f32 %v911, 0.01
      %v944 = vmul.f32 %v912, 0.01
      %v945 = vmul.f32 %v913, 0.01
      %v946 = vmul.f32 %v914, 0.01
      %v947 = vmul.f32 %v915, 0.01
      %v948 = vmul.f32 %v916, 0.01
      %v949 = vmul.f32 %v917, 0.01
      %v950 = vmul.f32 %v918, 0.01
      %v951 = vmul.f32 %v919, 0.01
      %v952 = vmul.f32 %v920, 0.01
      %v953 = vmul.f32 %v921, 0.01
      %v954 = vmul.f32 %v922, 0.01
      %v955 = vmul.f32 %v923, 0.01
      %v956 = vmul.f32 %v924, 0.01
      %v957 = vmul.f32 %v925, 0.01
      %v958 = vmul.f32 %v926, 0.01
      %v959 = vmax.f32 %v895, %v927
      %v960 = vmax.f32 %v896, %v928
      %v961 = vmax.f32 %v897, %v929
      %v962 = vmax.f32 %v898, %v930
      %v963 = vmax.f32 %v899, %v931
      %v964 = vmax.f32 %v900, %v932
      %v965 = vmax.f32 %v901, %v933
      %v966 = vmax.f32 %v902, %v934
      %v967 = vmax.f32 %v903, %v935
      %v968 = vmax.f32 %v904, %v936
      %v969 = vmax.f32 %v905, %v937
      %v970 = vmax.f32 %v906, %v938
      %v971 = vmax.f32 %v907, %v939
      %v972 = vmax.f32 %v908, %v940
      %v973 = vmax.f32 %v909, %v941
      %v974 = vmax.f32 %v910, %v942
      %v975 = vmax.f32 %v911, %v943
      %v976 = vmax.f32 %v912, %v944
      %v977 = vmax.f32 %v913, %v945
      %v978 = vmax.f32 %v914, %v946
      %v979 = vmax.f32 %v915, %v947
      %v980 = vmax.f32 %v916, %v948
      %v981 = vmax.f32 %v917, %v949
      %v982 = vmax.f32 %v918, %v950
      %v983 = vmax.f32 %v919, %v951
      %v984 = vmax.f32 %v920, %v952
      %v985 = vmax.f32 %v921, %v953
      %v986 = vmax.f32 %v922, %v954
      %v987 = vmax.f32 %v923, %v955
      %v988 = vmax.f32 %v924, %v956
      %v989 = vmax.f32 %v925, %v957
      %v990 = vmax.f32 %v926, %v958
      %991 = vst.msk [vmem:[%s244] sm:$0xff] %vm538, %v959
      %992 = vst.msk [vmem:[%s244 + $0x8] sm:$0xff] %vm538, %v960
      %993 = vst.msk [vmem:[%s244 + $0x10] sm:$0xff] %vm538, %v961
      %994 = vst.msk [vmem:[%s244 + $0x18] sm:$0xff] %vm538, %v962
      %995 = vst.msk [vmem:[%s244 + $0x20] sm:$0xff] %vm538, %v963
      %996 = vst.msk [vmem:[%s244 + $0x28] sm:$0xff] %vm538, %v964
      %997 = vst.msk [vmem:[%s244 + $0x30] sm:$0xff] %vm538, %v965
      %998 = vst.msk [vmem:[%s244 + $0x38] sm:$0xff] %vm538, %v966
      %999 = vst.msk [vmem:[%s244 + $0x40] sm:$0xff] %vm538, %v967
      %1000 = vst.msk [vmem:[%s244 + $0x48] sm:$0xff] %vm538, %v968
      %1001 = vst.msk [vmem:[%s244 + $0x50] sm:$0xff] %vm538, %v969
      %1002 = vst.msk [vmem:[%s244 + $0x58] sm:$0xff] %vm538, %v970
      %1003 = vst.msk [vmem:[%s244 + $0x60] sm:$0xff] %vm538, %v971
      %1004 = vst.msk [vmem:[%s244 + $0x68] sm:$0xff] %vm538, %v972
      %1005 = vst.msk [vmem:[%s244 + $0x70] sm:$0xff] %vm538, %v973
      %1006 = vst.msk [vmem:[%s244 + $0x78] sm:$0xff] %vm538, %v974
      %1007 = vst.msk [vmem:[%s244 + $0x80] sm:$0xff] %vm538, %v975
      %1008 = vst.msk [vmem:[%s244 + $0x88] sm:$0xff] %vm538, %v976
      %1009 = vst.msk [vmem:[%s244 + $0x90] sm:$0xff] %vm538, %v977
      %1010 = vst.msk [vmem:[%s244 + $0x98] sm:$0xff] %vm538, %v978
      %1011 = vst.msk [vmem:[%s244 + $0xa0] sm:$0xff] %vm538, %v979
      %1012 = vst.msk [vmem:[%s244 + $0xa8] sm:$0xff] %vm538, %v980
      %1013 = vst.msk [vmem:[%s244 + $0xb0] sm:$0xff] %vm538, %v981
      %1014 = vst.msk [vmem:[%s244 + $0xb8] sm:$0xff] %vm538, %v982
      %1015 = vst.msk [vmem:[%s244 + $0xc0] sm:$0xff] %vm538, %v983
      %1016 = vst.msk [vmem:[%s244 + $0xc8] sm:$0xff] %vm538, %v984
      %1017 = vst.msk [vmem:[%s244 + $0xd0] sm:$0xff] %vm538, %v985
      %1018 = vst.msk [vmem:[%s244 + $0xd8] sm:$0xff] %vm538, %v986
      %1019 = vst.msk [vmem:[%s244 + $0xe0] sm:$0xff] %vm538, %v987
      %1020 = vst.msk [vmem:[%s244 + $0xe8] sm:$0xff] %vm538, %v988
      %1021 = vst.msk [vmem:[%s244 + $0xf0] sm:$0xff] %vm538, %v989
      %1022 = vst.msk [vmem:[%s244 + $0xf8] sm:$0xff] %vm538, %v990
      %p1023 = scmp.lt.s32.totalorder %s16, 1
      %s1024 = scalar_select %p1023, %s16, 1
      %s1025 = smul.addr %s1024, 32
      %s1026 = smul.addr %s1025, 8
      %s1027 = scalar_lea.vmem %s5, %s1026
      // Predicated region
      $region41: #{forward.16} parent=39 // pred_check
        %p1028 = pneg %p149
      $region42: #{forward.16} parent=39 // pred_check_branch
        %1030 = sbr.rel (%p1028) target = $region44
      $region43: #{forward.16} parent=39 // pred_region
        _
      $region44: #{forward.16} parent=39 // pred_fallthru
        _
    $region40: #{forward.16} parent=5 // pred_fallthru
      _
    %p1031 = scmp.le.s32.totalorder 2, %s11
    // Predicated region
    $region45: #{forward.16} parent=5 // pred_check
      %p1032 = pneg %p1031
    $region46: #{forward.16} parent=5 // pred_check_branch
      %1034 = sbr.rel (%p1032) target = $region48
    $region47: #{forward.16} parent=5 // pred_region
      %s1035 = ssub.s32 %s11, 2
      // Predicated region
      $region49: #{forward.16} parent=47 // pred_check
        %p1036 = pneg %p155
      $region50: #{forward.16} parent=47 // pred_check_branch
        %1038 = sbr.rel (%p1036) target = $region52
      $region51: #{forward.16} parent=47 // pred_region
        %p1039 = scmp.lt.s32.totalorder %s17, 1
        %s1040 = scalar_select %p1039, %s17, 1
        %s1041 = smul.addr %s1040, 32
        %s1042 = smul.addr %s1041, 8
        %s1043 = scalar_lea.vmem %s5, %s1042
      $region52: #{forward.16} parent=47 // pred_fallthru
        _
    $region48: #{forward.16} parent=5 // pred_fallthru
      _
  $region6: #{forward.16} parent=0 // loop_footer
    %s15 = sadd.s32 1, %s11
  $region7: #{forward.16} parent=0 // loop_footer_branch
    %10 = sbr.rel target = $region3
  $region8: #{forward.16} parent=0 // loop_exit
    _

// kernel: forward.17
$region0: #{forward.17}
  #allocation0 [shape = 'u32[]', space=smem, size = 0x4, offset = 0x4, fixed_abs, tag = 'smem constant byte address 0x4 - core index']
  #allocation1 [shape = 'u32[72,128]{1,0:T(1,128)}', space=vmem, size = 0x9000, scoped, tag = 'internal scratch']
  %s0 = inlined_call_operand.vmem [shape: bf16[2,64,72], index: 0, kind: input, shape index: {}]
  %s1 = inlined_call_operand.vmem [shape: bf16[72,16], index: 1, kind: input, shape index: {}]
  %s2 = inlined_call_operand.vmem [shape: f32[1,16], index: 2, kind: input, shape index: {}]
  %s3 = inlined_call_operand.vmem [shape: f32[1,16], index: 3, kind: input, shape index: {}]
  %s4 = inlined_call_operand.vmem [shape: f32[2,64,16], index: 4, kind: output, shape index: {}]
  %s5 = sld [smem:[#allocation0]]
  $region49: #{forward.17} parent=0
    _
  %s7 = ssub.s32 1, %s5
  %s8 = scalar_select 0, %s7, %s5
  loop: start=0, step=1, limit=4
  $region2: #{forward.17} parent=0 // loop_pre_header
    _
  $region3: #{forward.17} parent=0 // loop_header
    %s10 = sphi 0, %s14
    %p11 = scmp.ge.s32.totalorder %s10, 4
    %s20 = sphi 0, %s22
    %s23 = sphi 0, %s20
    %s24 = sphi 0, %s23
    %s40 = sphi 0, %s24
    %s44 = sphi 0, %s44
    %s46 = sphi 0, %s44
    %s47 = sphi 0, %s46
    %s61 = sphi 0, %s47
    %s65 = sphi 0, %s65
    %s67 = sphi 0, %s65
    %s68 = sphi 0, %s67
    %s82 = sphi 0, %s68
    %s86 = sphi 0, %s86
    %s88 = sphi 0, %s86
    %s89 = sphi 0, %s88
    %s103 = sphi 0, %s89
    %s109 = sphi 0, %s111
    %s112 = sphi 0, %s109
    %s113 = sphi 0, %s112
    %s129 = sphi 0, %s113
  $region4: #{forward.17} parent=0 // loop_header_branch
    %13 = sbr.rel (%p11) target = $region8
  $region5: #{forward.17} parent=0 // loop_body
    %s15 = ssub.s32 %s10, 1
    %s16 = ssub.s32 %s10, 2
    %s17 = sadd.s32 %s10, 1
    %s18 = ssub.s32 %s10, %s17
    %p19 = scmp.eq.s32.totalorder %s18, 0
    %s21 = sadd.s32 %s20, 1
    %s22 = scalar_select %p19, %s20, %s21
    %p25 = pneg %p19
    %p26 = scmp.eq.s32.totalorder %s10, 1
    %p27 = por %p25, %p26
    %p28 = scmp.ne.s32.totalorder %s20, %s23
    %p29 = scmp.eq.s32.totalorder %s10, 0
    %p30 = por %p28, %p29
    %p31 = scmp.ne.s32.totalorder %s20, %s23
    %p32 = scmp.eq.s32.totalorder %s15, 1
    %p33 = por %p31, %p32
    %p34 = scmp.ne.s32.totalorder %s23, %s24
    %p35 = scmp.eq.s32.totalorder %s15, 0
    %p36 = por %p34, %p35
    %p37 = scmp.ne.s32.totalorder %s23, %s24
    %p38 = scmp.eq.s32.totalorder %s16, 1
    %p39 = por %p37, %p38
    %p41 = scmp.ne.s32.totalorder %s24, %s40
    %p42 = scmp.eq.s32.totalorder %s16, 0
    %p43 = por %p41, %p42
    %s45 = sadd.s32 %s44, 1
    %p48 = scmp.eq.s32.totalorder %s10, 1
    %p49 = scmp.ne.s32.totalorder %s44, %s46
    %p50 = scmp.eq.s32.totalorder %s10, 0
    %p51 = por %p49, %p50
    %p52 = scmp.ne.s32.totalorder %s44, %s46
    %p53 = scmp.eq.s32.totalorder %s15, 1
    %p54 = por %p52, %p53
    %p55 = scmp.ne.s32.totalorder %s46, %s47
    %p56 = scmp.eq.s32.totalorder %s15, 0
    %p57 = por %p55, %p56
    %p58 = scmp.ne.s32.totalorder %s46, %s47
    %p59 = scmp.eq.s32.totalorder %s16, 1
    %p60 = por %p58, %p59
    %p62 = scmp.ne.s32.totalorder %s47, %s61
    %p63 = scmp.eq.s32.totalorder %s16, 0
    %p64 = por %p62, %p63
    %s66 = sadd.s32 %s65, 1
    %p69 = scmp.eq.s32.totalorder %s10, 1
    %p70 = scmp.ne.s32.totalorder %s65, %s67
    %p71 = scmp.eq.s32.totalorder %s10, 0
    %p72 = por %p70, %p71
    %p73 = scmp.ne.s32.totalorder %s65, %s67
    %p74 = scmp.eq.s32.totalorder %s15, 1
    %p75 = por %p73, %p74
    %p76 = scmp.ne.s32.totalorder %s67, %s68
    %p77 = scmp.eq.s32.totalorder %s15, 0
    %p78 = por %p76, %p77
    %p79 = scmp.ne.s32.totalorder %s67, %s68
    %p80 = scmp.eq.s32.totalorder %s16, 1
    %p81 = por %p79, %p80
    %p83 = scmp.ne.s32.totalorder %s68, %s82
    %p84 = scmp.eq.s32.totalorder %s16, 0
    %p85 = por %p83, %p84
    %s87 = sadd.s32 %s86, 1
    %p90 = scmp.eq.s32.totalorder %s10, 1
    %p91 = scmp.ne.s32.totalorder %s86, %s88
    %p92 = scmp.eq.s32.totalorder %s10, 0
    %p93 = por %p91, %p92
    %p94 = scmp.ne.s32.totalorder %s86, %s88
    %p95 = scmp.eq.s32.totalorder %s15, 1
    %p96 = por %p94, %p95
    %p97 = scmp.ne.s32.totalorder %s88, %s89
    %p98 = scmp.eq.s32.totalorder %s15, 0
    %p99 = por %p97, %p98
    %p100 = scmp.ne.s32.totalorder %s88, %s89
    %p101 = scmp.eq.s32.totalorder %s16, 1
    %p102 = por %p100, %p101
    %p104 = scmp.ne.s32.totalorder %s89, %s103
    %p105 = scmp.eq.s32.totalorder %s16, 0
    %p106 = por %p104, %p105
    %s107 = ssub.s32 %s10, %s17
    %p108 = scmp.eq.s32.totalorder %s107, 0
    %s110 = sadd.s32 %s109, 1
    %s111 = scalar_select %p108, %s109, %s110
    %p114 = pneg %p108
    %p115 = scmp.eq.s32.totalorder %s10, 1
    %p116 = por %p114, %p115
    %p117 = scmp.ne.s32.totalorder %s109, %s112
    %p118 = scmp.eq.s32.totalorder %s10, 0
    %p119 = por %p117, %p118
    %p120 = scmp.ne.s32.totalorder %s109, %s112
    %p121 = scmp.eq.s32.totalorder %s15, 1
    %p122 = por %p120, %p121
    %p123 = scmp.ne.s32.totalorder %s112, %s113
    %p124 = scmp.eq.s32.totalorder %s15, 0
    %p125 = por %p123, %p124
    %p126 = scmp.ne.s32.totalorder %s112, %s113
    %p127 = scmp.eq.s32.totalorder %s16, 1
    %p128 = por %p126, %p127
    %p130 = scmp.ne.s32.totalorder %s113, %s129
    %p131 = scmp.eq.s32.totalorder %s16, 0
    %p132 = por %p130, %p131
    %p133 = scmp.le.s32.totalorder 1, %s10
    %p134 = scmp.lt.s32.totalorder %s10, 3
    %p135 = pnand %p133, %p134
    %p136 = pneg %p135
    // Predicated region
    $region9: #{forward.17} parent=5 // pred_check
      _
    $region10: #{forward.17} parent=5 // pred_check_branch
      %138 = sbr.rel (%p135) target = $region12
    $region11: #{forward.17} parent=5 // pred_region
      %s139 = ssub.s32 %s10, 1
      // Predicated region
      $region13: #{forward.17} parent=11 // pred_check
        %p140 = pneg %p57
      $region14: #{forward.17} parent=11 // pred_check_branch
        %142 = sbr.rel (%p140) target = $region16
      $region15: #{forward.17} parent=11 // pred_region
        _
      $region16: #{forward.17} parent=11 // pred_fallthru
        _
      // Predicated region
      $region17: #{forward.17} parent=11 // pred_check
        %p143 = pneg %p78
      $region18: #{forward.17} parent=11 // pred_check_branch
        %145 = sbr.rel (%p143) target = $region20
      $region19: #{forward.17} parent=11 // pred_region
        _
      $region20: #{forward.17} parent=11 // pred_fallthru
        _
      // Predicated region
      $region21: #{forward.17} parent=11 // pred_check
        %p146 = pneg %p99
      $region22: #{forward.17} parent=11 // pred_check_branch
        %148 = sbr.rel (%p146) target = $region24
      $region23: #{forward.17} parent=11 // pred_region
        _
      $region24: #{forward.17} parent=11 // pred_fallthru
        _
    $region12: #{forward.17} parent=5 // pred_fallthru
      _
    %p149 = scmp.lt.s32.totalorder %s10, 2
    // Predicated region
    $region25: #{forward.17} parent=5 // pred_check
      %p150 = pneg %p149
    $region26: #{forward.17} parent=5 // pred_check_branch
      %152 = sbr.rel (%p150) target = $region28
    $region27: #{forward.17} parent=5 // pred_region
      // Predicated region
      $region29: #{forward.17} parent=27 // pred_check
        %p153 = pneg %p30
      $region30: #{forward.17} parent=27 // pred_check_branch
        %155 = sbr.rel (%p153) target = $region32
      $region31: #{forward.17} parent=27 // pred_region
        %p156 = scmp.lt.s32.totalorder %s10, 1
        %s157 = scalar_select %p156, %s10, 1
        %s158 = smul.addr %s157, 8
        %s159 = smul.addr %s158, 4
        %s160 = scalar_lea.vmem %s0, %s159
      $region32: #{forward.17} parent=27 // pred_fallthru
        _
    $region28: #{forward.17} parent=5 // pred_fallthru
      _
    %p161 = scmp.le.s32.totalorder 1, %s10
    %p162 = scmp.lt.s32.totalorder %s10, 3
    %p163 = pnand %p161, %p162
    %p164 = pneg %p163
    // Predicated region
    $region33: #{forward.17} parent=5 // pred_check
      _
    $region34: #{forward.17} parent=5 // pred_check_branch
      %166 = sbr.rel (%p163) target = $region36
    $region35: #{forward.17} parent=5 // pred_region
      %s167 = ssub.s32 %s10, 1
      %p168 = scmp.lt.s32.totalorder %s15, 1
      %s169 = scalar_select %p168, %s15, 1
      %s170 = smul.addr %s169, 8
      %s171 = smul.addr %s170, 4
      %s172 = scalar_lea.vmem %s0, %s171
      %p173 = pneg %p36
      %p174 = pneg %p33
      %p175 = pneg %p57
      %p176 = pneg %p54
      %p177 = pneg %p78
      %p178 = pneg %p75
      %p179 = pneg %p99
      %p180 = pneg %p96
      %p181 = pneg %p125
      %p182 = pneg %p122
      %p183 = scmp.lt.s32.totalorder %s15, 1
      %s184 = scalar_select %p183, %s15, 1
      %s185 = smul.addr %s184, 8
      %s186 = smul.addr %s185, 8
      %s187 = scalar_lea.vmem %s4, %s186
      %p188 = scmp.lt.s32.totalorder %s15, 1
      %s189 = scalar_select %p188, %s15, 1
      %s190 = smul.addr %s189, 8
      %s191 = smul.addr %s190, 4
      %s192 = scalar_lea.vmem %s0, %s191
      %p193 = scmp.lt.s32.totalorder %s15, 1
      %s194 = scalar_select %p193, %s15, 1
      %s195 = smul.addr %s194, 8
      %s196 = smul.addr %s195, 8
      %s197 = scalar_lea.vmem %s4, %s196
      %v199 = vld [vmem:[%s192] sm:$0xf]
      %v200 = vld [vmem:[%s192 + $0x4] sm:$0xf]
      %v201 = vld [vmem:[%s192 + $0x8] sm:$0xf]
      %v202 = vld [vmem:[%s192 + $0xc] sm:$0xf]
      %v203 = vld [vmem:[%s192 + $0x10] sm:$0xf]
      %v204 = vld [vmem:[%s192 + $0x14] sm:$0xf]
      %v205 = vld [vmem:[%s192 + $0x18] sm:$0xf]
      %v206 = vld [vmem:[%s192 + $0x1c] sm:$0xf]
      %v207 = vld [vmem:[%s1] sm:$0xf]
      %v208 = vld [vmem:[%s1 + $0x4] sm:$0xf]
      %v209 = vld [vmem:[%s1 + $0x8] sm:$0xf]
      %v210 = vld [vmem:[%s1 + $0xc] sm:$0xf]
      %v211 = vld [vmem:[%s1 + $0x10] sm:$0xf]
      %v212 = vld [vmem:[%s1 + $0x14] sm:$0xf]
      %v213 = vld [vmem:[%s1 + $0x18] sm:$0xf]
      %v214 = vld [vmem:[%s1 + $0x1c] sm:$0xf]
      %v215 = vld [vmem:[%s1 + $0x20] sm:$0xf]
      %v224 = vunpack.c.l.b16 %v199
      %v225 = vunpack.c.l.b16 %v200
      %v226 = vunpack.c.l.b16 %v201
      %v227 = vunpack.c.l.b16 %v202
      %v228 = vunpack.c.l.b16 %v203
      %v229 = vunpack.c.l.b16 %v204
      %v230 = vunpack.c.l.b16 %v205
      %v231 = vunpack.c.l.b16 %v206
      %v232 = vpack.c.b16 %v225, %v224
      %v233 = vpack.c.b16 %v227, %v226
      %v234 = vpack.c.b16 %v229, %v228
      %v235 = vpack.c.b16 %v231, %v230
      %v245 = vunpack.c.l.b16 %v207
      %v246 = vunpack.c.l.b16 %v208
      %v247 = vunpack.c.l.b16 %v209
      %v248 = vunpack.c.l.b16 %v210
      %v249 = vunpack.c.l.b16 %v211
      %v250 = vunpack.c.l.b16 %v212
      %v251 = vunpack.c.l.b16 %v213
      %v252 = vunpack.c.l.b16 %v214
      %v253 = vunpack.c.l.b16 %v215
      %v254 = vpack.c.b16 %v246, %v245
      %v255 = vpack.c.b16 %v248, %v247
      %v256 = vpack.c.b16 %v250, %v249
      %v257 = vpack.c.b16 %v252, %v251
      %v258 = vpack.c.b16 %v253, %v253
      %vm263 = vcmask 588800
      %v265 = vsel %vm263, %v232, 0
      %v268 = vsel %vm263, %v233, 0
      %v271 = vsel %vm263, %v234, 0
      %v274 = vsel %vm263, %v235, 0
      %vm276 = vcmask 1043456
      %v278 = vsel %vm276, %v258, 0
      %280 = vmatpush.bf16.msra.mxu0 0
      %281 = vmatpush.bf16.msra.mxu0 0
      %282 = vmatpush.bf16.msra.mxu0 0
      %283 = vmatpush.bf16.msra.mxu0 %v278
      %284 = vmatpush.bf16.msra.mxu0 %v257
      %285 = vmatpush.bf16.msra.mxu0 %v256
      %286 = vmatpush.bf16.msra.mxu0 %v255
      %287 = vmatpush.bf16.msra.mxu0 %v254
      %288 = vmatmul.bf16.gmra.mxu0 %v265
      %v289 = vpop.f32.mrf.mxu0
      %v290 = vadd.f32 0.0, %v289
      %v291 = vpop.f32.mrf.mxu0
      %v292 = vadd.f32 0.0, %v291
      %293 = vmatmul.bf16.gmra.mxu0 %v268
      %v294 = vpop.f32.mrf.mxu0
      %v295 = vadd.f32 0.0, %v294
      %v296 = vpop.f32.mrf.mxu0
      %v297 = vadd.f32 0.0, %v296
      %298 = vmatmul.bf16.gmra.mxu0 %v271
      %v299 = vpop.f32.mrf.mxu0
      %v300 = vadd.f32 0.0, %v299
      %v301 = vpop.f32.mrf.mxu0
      %v302 = vadd.f32 0.0, %v301
      %303 = vmatmul.bf16.gmra.mxu0 %v274
      %v304 = vpop.f32.mrf.mxu0
      %v305 = vadd.f32 0.0, %v304
      %v306 = vpop.f32.mrf.mxu0
      %v307 = vadd.f32 0.0, %v306
      %308 = vdwg.mxu0
      %v309 = vld [vmem:[%s2] sm:$0x1]
      %v310 = vld [vmem:[%s3] sm:$0x1]
      %vm311 = vcmask 130048
      %v312 = vsel %vm311, %v290, 0.0
      %v313 = vsel %vm311, %v292, 0.0
      %v314 = vadd.f32 %v312, %v313
      %v315 = vsel %vm311, %v295, 0.0
      %v316 = vadd.f32 %v314, %v315
      %v317 = vsel %vm311, %v297, 0.0
      %v318 = vadd.f32 %v316, %v317
      %v319 = vsel %vm311, %v300, 0.0
      %v320 = vadd.f32 %v318, %v319
      %v321 = vsel %vm311, %v302, 0.0
      %v322 = vadd.f32 %v320, %v321
      %v323 = vsel %vm311, %v305, 0.0
      %v324 = vadd.f32 %v322, %v323
      %v325 = vsel %vm311, %v307, 0.0
      %v326 = vadd.f32 %v324, %v325
      %v327 = vrot.slane %v326, 4
      %v328 = vadd.f32 %v326, %v327
      %v329 = vrot.slane %v328, 2
      %v330 = vadd.f32 %v328, %v329
      %v331 = vrot.slane %v330, 1
      %v332 = vadd.f32 %v330, %v331
      %v333 = vrcp.pop 64.0
      %v334 = vmul.f32 64.0, %v333
      %v335 = vsub.f32 1.0, %v334
      %v336 = vmul.f32 %v333, %v335
      %v337 = vadd.f32 %v333, %v336
      %vm338 = vweird.f32 %v333
      %v339 = vsel %vm338, %v333, %v337
      %v340 = vmul.f32 %v332, %v339
      %v341 = vsub.f32 %v290, %v340
      %v342 = vsub.f32 %v292, %v340
      %v343 = vsub.f32 %v295, %v340
      %v344 = vsub.f32 %v297, %v340
      %v345 = vsub.f32 %v300, %v340
      %v346 = vsub.f32 %v302, %v340
      %v347 = vsub.f32 %v305, %v340
      %v348 = vsub.f32 %v307, %v340
      %v349 = vmul.f32 %v341, %v341
      %v350 = vmul.f32 %v342, %v342
      %v351 = vmul.f32 %v343, %v343
      %v352 = vmul.f32 %v344, %v344
      %v353 = vmul.f32 %v345, %v345
      %v354 = vmul.f32 %v346, %v346
      %v355 = vmul.f32 %v347, %v347
      %v356 = vmul.f32 %v348, %v348
      %v357 = vsel %vm311, %v349, 0.0
      %v358 = vsel %vm311, %v350, 0.0
      %v359 = vadd.f32 %v357, %v358
      %v360 = vsel %vm311, %v351, 0.0
      %v361 = vadd.f32 %v359, %v360
      %v362 = vsel %vm311, %v352, 0.0
      %v363 = vadd.f32 %v361, %v362
      %v364 = vsel %vm311, %v353, 0.0
      %v365 = vadd.f32 %v363, %v364
      %v366 = vsel %vm311, %v354, 0.0
      %v367 = vadd.f32 %v365, %v366
      %v368 = vsel %vm311, %v355, 0.0
      %v369 = vadd.f32 %v367, %v368
      %v370 = vsel %vm311, %v356, 0.0
      %v371 = vadd.f32 %v369, %v370
      %v372 = vrot.slane %v371, 4
      %v373 = vadd.f32 %v371, %v372
      %v374 = vrot.slane %v373, 2
      %v375 = vadd.f32 %v373, %v374
      %v376 = vrot.slane %v375, 1
      %v377 = vadd.f32 %v375, %v376
      %v378 = vmul.f32 %v377, %v339
      %v379 = vadd.f32 %v378, 1e-05
      %v380 = vrsqrt.pop %v379
      %v381 = vmul.f32 %v380, %v379
      %v382 = vmul.f32 %v381, %v380
      %v383 = vmul.f32 0.5, %v382
      %v384 = vsub.f32 1.5, %v383
      %v385 = vmul.f32 %v380, %v384
      %vm386 = vweird.f32 %v379
      %vm387 = vweird.f32 %v380
      %vm388 = vmor %vm386, %vm387
      %v389 = vsel %vm388, %v380, %v385
      %v390 = vmul.f32 %v341, %v389
      %v391 = vmul.f32 %v342, %v389
      %v392 = vmul.f32 %v343, %v389
      %v393 = vmul.f32 %v344, %v389
      %v394 = vmul.f32 %v345, %v389
      %v395 = vmul.f32 %v346, %v389
      %v396 = vmul.f32 %v347, %v389
      %v397 = vmul.f32 %v348, %v389
      %v399 = vperm.slane %v309, 0
      %v401 = vmul.f32 %v390, %v399
      %v402 = vmul.f32 %v391, %v399
      %v403 = vmul.f32 %v392, %v399
      %v404 = vmul.f32 %v393, %v399
      %v405 = vmul.f32 %v394, %v399
      %v406 = vmul.f32 %v395, %v399
      %v407 = vmul.f32 %v396, %v399
      %v408 = vmul.f32 %v397, %v399
      %v410 = vperm.slane %v310, 0
      %v412 = vadd.f32 %v401, %v410
      %v413 = vadd.f32 %v402, %v410
      %v414 = vadd.f32 %v403, %v410
      %v415 = vadd.f32 %v404, %v410
      %v416 = vadd.f32 %v405, %v410
      %v417 = vadd.f32 %v406, %v410
      %v418 = vadd.f32 %v407, %v410
      %v419 = vadd.f32 %v408, %v410
      %v420 = vmul.f32 %v412, 0.01
      %v421 = vmul.f32 %v413, 0.01
      %v422 = vmul.f32 %v414, 0.01
      %v423 = vmul.f32 %v415, 0.01
      %v424 = vmul.f32 %v416, 0.01
      %v425 = vmul.f32 %v417, 0.01
      %v426 = vmul.f32 %v418, 0.01
      %v427 = vmul.f32 %v419, 0.01
      %v428 = vmax.f32 %v412, %v420
      %v429 = vmax.f32 %v413, %v421
      %v430 = vmax.f32 %v414, %v422
      %v431 = vmax.f32 %v415, %v423
      %v432 = vmax.f32 %v416, %v424
      %v433 = vmax.f32 %v417, %v425
      %v434 = vmax.f32 %v418, %v426
      %v435 = vmax.f32 %v419, %v427
      %436 = vst.msk [vmem:[%s197] sm:$0xff] %vm311, %v428
      %437 = vst.msk [vmem:[%s197 + $0x8] sm:$0xff] %vm311, %v429
      %438 = vst.msk [vmem:[%s197 + $0x10] sm:$0xff] %vm311, %v430
      %439 = vst.msk [vmem:[%s197 + $0x18] sm:$0xff] %vm311, %v431
      %440 = vst.msk [vmem:[%s197 + $0x20] sm:$0xff] %vm311, %v432
      %441 = vst.msk [vmem:[%s197 + $0x28] sm:$0xff] %vm311, %v433
      %442 = vst.msk [vmem:[%s197 + $0x30] sm:$0xff] %vm311, %v434
      %443 = vst.msk [vmem:[%s197 + $0x38] sm:$0xff] %vm311, %v435
      %p444 = scmp.lt.s32.totalorder %s15, 1
      %s445 = scalar_select %p444, %s15, 1
      %s446 = smul.addr %s445, 8
      %s447 = smul.addr %s446, 8
      %s448 = scalar_lea.vmem %s4, %s447
      // Predicated region
      $region37: #{forward.17} parent=35 // pred_check
        %p449 = pneg %p122
      $region38: #{forward.17} parent=35 // pred_check_branch
        %451 = sbr.rel (%p449) target = $region40
      $region39: #{forward.17} parent=35 // pred_region
        _
      $region40: #{forward.17} parent=35 // pred_fallthru
        _
    $region36: #{forward.17} parent=5 // pred_fallthru
      _
    %p452 = scmp.le.s32.totalorder 2, %s10
    // Predicated region
    $region41: #{forward.17} parent=5 // pred_check
      %p453 = pneg %p452
    $region42: #{forward.17} parent=5 // pred_check_branch
      %455 = sbr.rel (%p453) target = $region44
    $region43: #{forward.17} parent=5 // pred_region
      %s456 = ssub.s32 %s10, 2
      // Predicated region
      $region45: #{forward.17} parent=43 // pred_check
        %p457 = pneg %p128
      $region46: #{forward.17} parent=43 // pred_check_branch
        %459 = sbr.rel (%p457) target = $region48
      $region47: #{forward.17} parent=43 // pred_region
        %p460 = scmp.lt.s32.totalorder %s16, 1
        %s461 = scalar_select %p460, %s16, 1
        %s462 = smul.addr %s461, 8
        %s463 = smul.addr %s462, 8
        %s464 = scalar_lea.vmem %s4, %s463
      $region48: #{forward.17} parent=43 // pred_fallthru
        _
    $region44: #{forward.17} parent=5 // pred_fallthru
      _
  $region6: #{forward.17} parent=0 // loop_footer
    %s14 = sadd.s32 1, %s10
  $region7: #{forward.17} parent=0 // loop_footer_branch
    %9 = sbr.rel target = $region3
  $region8: #{forward.17} parent=0 // loop_exit
    _

// kernel: forward.18
$region0: #{forward.18}
  #allocation0 [shape = 'u32[]', space=smem, size = 0x4, offset = 0x4, fixed_abs, tag = 'smem constant byte address 0x4 - core index']
  #allocation1 [shape = 'u32[72,128]{1,0:T(1,128)}', space=vmem, size = 0x9000, scoped, tag = 'internal scratch']
  %s0 = inlined_call_operand.vmem [shape: bf16[2,64,144], index: 0, kind: input, shape index: {}]
  %s1 = inlined_call_operand.vmem [shape: bf16[144,16], index: 1, kind: input, shape index: {}]
  %s2 = inlined_call_operand.vmem [shape: f32[1,16], index: 2, kind: input, shape index: {}]
  %s3 = inlined_call_operand.vmem [shape: f32[1,16], index: 3, kind: input, shape index: {}]
  %s4 = inlined_call_operand.vmem [shape: bf16[2,64,8], index: 4, kind: input, shape index: {}]
  %s5 = inlined_call_operand.vmem [shape: bf16[8,16], index: 5, kind: input, shape index: {}]
  %s6 = inlined_call_operand.vmem [shape: f32[1,16], index: 6, kind: input, shape index: {}]
  %s7 = inlined_call_operand.vmem [shape: f32[1,16], index: 7, kind: input, shape index: {}]
  %s8 = inlined_call_operand.vmem [shape: f32[2,64,16], index: 8, kind: output, shape index: {}]
  %s9 = sld [smem:[#allocation0]]
  $region65: #{forward.18} parent=0
    _
  %s11 = ssub.s32 1, %s9
  %s12 = scalar_select 0, %s11, %s9
  loop: start=0, step=1, limit=4
  $region2: #{forward.18} parent=0 // loop_pre_header
    _
  $region3: #{forward.18} parent=0 // loop_header
    %s14 = sphi 0, %s18
    %p15 = scmp.ge.s32.totalorder %s14, 4
    %s24 = sphi 0, %s26
    %s27 = sphi 0, %s24
    %s28 = sphi 0, %s27
    %s44 = sphi 0, %s28
    %s48 = sphi 0, %s48
    %s50 = sphi 0, %s48
    %s51 = sphi 0, %s50
    %s65 = sphi 0, %s51
    %s69 = sphi 0, %s69
    %s71 = sphi 0, %s69
    %s72 = sphi 0, %s71
    %s86 = sphi 0, %s72
    %s90 = sphi 0, %s90
    %s92 = sphi 0, %s90
    %s93 = sphi 0, %s92
    %s107 = sphi 0, %s93
    %s113 = sphi 0, %s115
    %s116 = sphi 0, %s113
    %s117 = sphi 0, %s116
    %s133 = sphi 0, %s117
    %s137 = sphi 0, %s137
    %s139 = sphi 0, %s137
    %s140 = sphi 0, %s139
    %s154 = sphi 0, %s140
    %s158 = sphi 0, %s158
    %s160 = sphi 0, %s158
    %s161 = sphi 0, %s160
    %s175 = sphi 0, %s161
    %s179 = sphi 0, %s179
    %s181 = sphi 0, %s179
    %s182 = sphi 0, %s181
    %s196 = sphi 0, %s182
    %s202 = sphi 0, %s204
    %s205 = sphi 0, %s202
    %s206 = sphi 0, %s205
    %s222 = sphi 0, %s206
  $region4: #{forward.18} parent=0 // loop_header_branch
    %17 = sbr.rel (%p15) target = $region8
  $region5: #{forward.18} parent=0 // loop_body
    %s19 = ssub.s32 %s14, 1
    %s20 = ssub.s32 %s14, 2
    %s21 = sadd.s32 %s14, 1
    %s22 = ssub.s32 %s14, %s21
    %p23 = scmp.eq.s32.totalorder %s22, 0
    %s25 = sadd.s32 %s24, 1
    %s26 = scalar_select %p23, %s24, %s25
    %p29 = pneg %p23
    %p30 = scmp.eq.s32.totalorder %s14, 1
    %p31 = por %p29, %p30
    %p32 = scmp.ne.s32.totalorder %s24, %s27
    %p33 = scmp.eq.s32.totalorder %s14, 0
    %p34 = por %p32, %p33
    %p35 = scmp.ne.s32.totalorder %s24, %s27
    %p36 = scmp.eq.s32.totalorder %s19, 1
    %p37 = por %p35, %p36
    %p38 = scmp.ne.s32.totalorder %s27, %s28
    %p39 = scmp.eq.s32.totalorder %s19, 0
    %p40 = por %p38, %p39
    %p41 = scmp.ne.s32.totalorder %s27, %s28
    %p42 = scmp.eq.s32.totalorder %s20, 1
    %p43 = por %p41, %p42
    %p45 = scmp.ne.s32.totalorder %s28, %s44
    %p46 = scmp.eq.s32.totalorder %s20, 0
    %p47 = por %p45, %p46
    %s49 = sadd.s32 %s48, 1
    %p52 = scmp.eq.s32.totalorder %s14, 1
    %p53 = scmp.ne.s32.totalorder %s48, %s50
    %p54 = scmp.eq.s32.totalorder %s14, 0
    %p55 = por %p53, %p54
    %p56 = scmp.ne.s32.totalorder %s48, %s50
    %p57 = scmp.eq.s32.totalorder %s19, 1
    %p58 = por %p56, %p57
    %p59 = scmp.ne.s32.totalorder %s50, %s51
    %p60 = scmp.eq.s32.totalorder %s19, 0
    %p61 = por %p59, %p60
    %p62 = scmp.ne.s32.totalorder %s50, %s51
    %p63 = scmp.eq.s32.totalorder %s20, 1
    %p64 = por %p62, %p63
    %p66 = scmp.ne.s32.totalorder %s51, %s65
    %p67 = scmp.eq.s32.totalorder %s20, 0
    %p68 = por %p66, %p67
    %s70 = sadd.s32 %s69, 1
    %p73 = scmp.eq.s32.totalorder %s14, 1
    %p74 = scmp.ne.s32.totalorder %s69, %s71
    %p75 = scmp.eq.s32.totalorder %s14, 0
    %p76 = por %p74, %p75
    %p77 = scmp.ne.s32.totalorder %s69, %s71
    %p78 = scmp.eq.s32.totalorder %s19, 1
    %p79 = por %p77, %p78
    %p80 = scmp.ne.s32.totalorder %s71, %s72
    %p81 = scmp.eq.s32.totalorder %s19, 0
    %p82 = por %p80, %p81
    %p83 = scmp.ne.s32.totalorder %s71, %s72
    %p84 = scmp.eq.s32.totalorder %s20, 1
    %p85 = por %p83, %p84
    %p87 = scmp.ne.s32.totalorder %s72, %s86
    %p88 = scmp.eq.s32.totalorder %s20, 0
    %p89 = por %p87, %p88
    %s91 = sadd.s32 %s90, 1
    %p94 = scmp.eq.s32.totalorder %s14, 1
    %p95 = scmp.ne.s32.totalorder %s90, %s92
    %p96 = scmp.eq.s32.totalorder %s14, 0
    %p97 = por %p95, %p96
    %p98 = scmp.ne.s32.totalorder %s90, %s92
    %p99 = scmp.eq.s32.totalorder %s19, 1
    %p100 = por %p98, %p99
    %p101 = scmp.ne.s32.totalorder %s92, %s93
    %p102 = scmp.eq.s32.totalorder %s19, 0
    %p103 = por %p101, %p102
    %p104 = scmp.ne.s32.totalorder %s92, %s93
    %p105 = scmp.eq.s32.totalorder %s20, 1
    %p106 = por %p104, %p105
    %p108 = scmp.ne.s32.totalorder %s93, %s107
    %p109 = scmp.eq.s32.totalorder %s20, 0
    %p110 = por %p108, %p109
    %s111 = ssub.s32 %s14, %s21
    %p112 = scmp.eq.s32.totalorder %s111, 0
    %s114 = sadd.s32 %s113, 1
    %s115 = scalar_select %p112, %s113, %s114
    %p118 = pneg %p112
    %p119 = scmp.eq.s32.totalorder %s14, 1
    %p120 = por %p118, %p119
    %p121 = scmp.ne.s32.totalorder %s113, %s116
    %p122 = scmp.eq.s32.totalorder %s14, 0
    %p123 = por %p121, %p122
    %p124 = scmp.ne.s32.totalorder %s113, %s116
    %p125 = scmp.eq.s32.totalorder %s19, 1
    %p126 = por %p124, %p125
    %p127 = scmp.ne.s32.totalorder %s116, %s117
    %p128 = scmp.eq.s32.totalorder %s19, 0
    %p129 = por %p127, %p128
    %p130 = scmp.ne.s32.totalorder %s116, %s117
    %p131 = scmp.eq.s32.totalorder %s20, 1
    %p132 = por %p130, %p131
    %p134 = scmp.ne.s32.totalorder %s117, %s133
    %p135 = scmp.eq.s32.totalorder %s20, 0
    %p136 = por %p134, %p135
    %s138 = sadd.s32 %s137, 1
    %p141 = scmp.eq.s32.totalorder %s14, 1
    %p142 = scmp.ne.s32.totalorder %s137, %s139
    %p143 = scmp.eq.s32.totalorder %s14, 0
    %p144 = por %p142, %p143
    %p145 = scmp.ne.s32.totalorder %s137, %s139
    %p146 = scmp.eq.s32.totalorder %s19, 1
    %p147 = por %p145, %p146
    %p148 = scmp.ne.s32.totalorder %s139, %s140
    %p149 = scmp.eq.s32.totalorder %s19, 0
    %p150 = por %p148, %p149
    %p151 = scmp.ne.s32.totalorder %s139, %s140
    %p152 = scmp.eq.s32.totalorder %s20, 1
    %p153 = por %p151, %p152
    %p155 = scmp.ne.s32.totalorder %s140, %s154
    %p156 = scmp.eq.s32.totalorder %s20, 0
    %p157 = por %p155, %p156
    %s159 = sadd.s32 %s158, 1
    %p162 = scmp.eq.s32.totalorder %s14, 1
    %p163 = scmp.ne.s32.totalorder %s158, %s160
    %p164 = scmp.eq.s32.totalorder %s14, 0
    %p165 = por %p163, %p164
    %p166 = scmp.ne.s32.totalorder %s158, %s160
    %p167 = scmp.eq.s32.totalorder %s19, 1
    %p168 = por %p166, %p167
    %p169 = scmp.ne.s32.totalorder %s160, %s161
    %p170 = scmp.eq.s32.totalorder %s19, 0
    %p171 = por %p169, %p170
    %p172 = scmp.ne.s32.totalorder %s160, %s161
    %p173 = scmp.eq.s32.totalorder %s20, 1
    %p174 = por %p172, %p173
    %p176 = scmp.ne.s32.totalorder %s161, %s175
    %p177 = scmp.eq.s32.totalorder %s20, 0
    %p178 = por %p176, %p177
    %s180 = sadd.s32 %s179, 1
    %p183 = scmp.eq.s32.totalorder %s14, 1
    %p184 = scmp.ne.s32.totalorder %s179, %s181
    %p185 = scmp.eq.s32.totalorder %s14, 0
    %p186 = por %p184, %p185
    %p187 = scmp.ne.s32.totalorder %s179, %s181
    %p188 = scmp.eq.s32.totalorder %s19, 1
    %p189 = por %p187, %p188
    %p190 = scmp.ne.s32.totalorder %s181, %s182
    %p191 = scmp.eq.s32.totalorder %s19, 0
    %p192 = por %p190, %p191
    %p193 = scmp.ne.s32.totalorder %s181, %s182
    %p194 = scmp.eq.s32.totalorder %s20, 1
    %p195 = por %p193, %p194
    %p197 = scmp.ne.s32.totalorder %s182, %s196
    %p198 = scmp.eq.s32.totalorder %s20, 0
    %p199 = por %p197, %p198
    %s200 = ssub.s32 %s14, %s21
    %p201 = scmp.eq.s32.totalorder %s200, 0
    %s203 = sadd.s32 %s202, 1
    %s204 = scalar_select %p201, %s202, %s203
    %p207 = pneg %p201
    %p208 = scmp.eq.s32.totalorder %s14, 1
    %p209 = por %p207, %p208
    %p210 = scmp.ne.s32.totalorder %s202, %s205
    %p211 = scmp.eq.s32.totalorder %s14, 0
    %p212 = por %p210, %p211
    %p213 = scmp.ne.s32.totalorder %s202, %s205
    %p214 = scmp.eq.s32.totalorder %s19, 1
    %p215 = por %p213, %p214
    %p216 = scmp.ne.s32.totalorder %s205, %s206
    %p217 = scmp.eq.s32.totalorder %s19, 0
    %p218 = por %p216, %p217
    %p219 = scmp.ne.s32.totalorder %s205, %s206
    %p220 = scmp.eq.s32.totalorder %s20, 1
    %p221 = por %p219, %p220
    %p223 = scmp.ne.s32.totalorder %s206, %s222
    %p224 = scmp.eq.s32.totalorder %s20, 0
    %p225 = por %p223, %p224
    %p226 = scmp.le.s32.totalorder 1, %s14
    %p227 = scmp.lt.s32.totalorder %s14, 3
    %p228 = pnand %p226, %p227
    %p229 = pneg %p228
    // Predicated region
    $region9: #{forward.18} parent=5 // pred_check
      _
    $region10: #{forward.18} parent=5 // pred_check_branch
      %231 = sbr.rel (%p228) target = $region12
    $region11: #{forward.18} parent=5 // pred_region
      %s232 = ssub.s32 %s14, 1
      // Predicated region
      $region13: #{forward.18} parent=11 // pred_check
        %p233 = pneg %p61
      $region14: #{forward.18} parent=11 // pred_check_branch
        %235 = sbr.rel (%p233) target = $region16
      $region15: #{forward.18} parent=11 // pred_region
        _
      $region16: #{forward.18} parent=11 // pred_fallthru
        _
      // Predicated region
      $region17: #{forward.18} parent=11 // pred_check
        %p236 = pneg %p82
      $region18: #{forward.18} parent=11 // pred_check_branch
        %238 = sbr.rel (%p236) target = $region20
      $region19: #{forward.18} parent=11 // pred_region
        _
      $region20: #{forward.18} parent=11 // pred_fallthru
        _
      // Predicated region
      $region21: #{forward.18} parent=11 // pred_check
        %p239 = pneg %p103
      $region22: #{forward.18} parent=11 // pred_check_branch
        %241 = sbr.rel (%p239) target = $region24
      $region23: #{forward.18} parent=11 // pred_region
        _
      $region24: #{forward.18} parent=11 // pred_fallthru
        _
      // Predicated region
      $region25: #{forward.18} parent=11 // pred_check
        %p242 = pneg %p150
      $region26: #{forward.18} parent=11 // pred_check_branch
        %244 = sbr.rel (%p242) target = $region28
      $region27: #{forward.18} parent=11 // pred_region
        _
      $region28: #{forward.18} parent=11 // pred_fallthru
        _
      // Predicated region
      $region29: #{forward.18} parent=11 // pred_check
        %p245 = pneg %p171
      $region30: #{forward.18} parent=11 // pred_check_branch
        %247 = sbr.rel (%p245) target = $region32
      $region31: #{forward.18} parent=11 // pred_region
        _
      $region32: #{forward.18} parent=11 // pred_fallthru
        _
      // Predicated region
      $region33: #{forward.18} parent=11 // pred_check
        %p248 = pneg %p192
      $region34: #{forward.18} parent=11 // pred_check_branch
        %250 = sbr.rel (%p248) target = $region36
      $region35: #{forward.18} parent=11 // pred_region
        _
      $region36: #{forward.18} parent=11 // pred_fallthru
        _
    $region12: #{forward.18} parent=5 // pred_fallthru
      _
    %p251 = scmp.lt.s32.totalorder %s14, 2
    // Predicated region
    $region37: #{forward.18} parent=5 // pred_check
      %p252 = pneg %p251
    $region38: #{forward.18} parent=5 // pred_check_branch
      %254 = sbr.rel (%p252) target = $region40
    $region39: #{forward.18} parent=5 // pred_region
      // Predicated region
      $region41: #{forward.18} parent=39 // pred_check
        %p255 = pneg %p34
      $region42: #{forward.18} parent=39 // pred_check_branch
        %257 = sbr.rel (%p255) target = $region44
      $region43: #{forward.18} parent=39 // pred_region
        %p258 = scmp.lt.s32.totalorder %s14, 1
        %s259 = scalar_select %p258, %s14, 1
        %s260 = smul.addr %s259, 16
        %s261 = smul.addr %s260, 4
        %s262 = scalar_lea.vmem %s0, %s261
      $region44: #{forward.18} parent=39 // pred_fallthru
        _
      // Predicated region
      $region45: #{forward.18} parent=39 // pred_check
        %p263 = pneg %p123
      $region46: #{forward.18} parent=39 // pred_check_branch
        %265 = sbr.rel (%p263) target = $region48
      $region47: #{forward.18} parent=39 // pred_region
        %p266 = scmp.lt.s32.totalorder %s14, 1
        %s267 = scalar_select %p266, %s14, 1
        %s268 = smul.addr %s267, 8
        %s269 = smul.addr %s268, 4
        %s270 = scalar_lea.vmem %s4, %s269
      $region48: #{forward.18} parent=39 // pred_fallthru
        _
    $region40: #{forward.18} parent=5 // pred_fallthru
      _
    %p271 = scmp.le.s32.totalorder 1, %s14
    %p272 = scmp.lt.s32.totalorder %s14, 3
    %p273 = pnand %p271, %p272
    %p274 = pneg %p273
    // Predicated region
    $region49: #{forward.18} parent=5 // pred_check
      _
    $region50: #{forward.18} parent=5 // pred_check_branch
      %276 = sbr.rel (%p273) target = $region52
    $region51: #{forward.18} parent=5 // pred_region
      %s277 = ssub.s32 %s14, 1
      %p278 = scmp.lt.s32.totalorder %s19, 1
      %s279 = scalar_select %p278, %s19, 1
      %s280 = smul.addr %s279, 16
      %s281 = smul.addr %s280, 4
      %s282 = scalar_lea.vmem %s0, %s281
      %p283 = pneg %p40
      %p284 = pneg %p37
      %p285 = pneg %p61
      %p286 = pneg %p58
      %p287 = pneg %p82
      %p288 = pneg %p79
      %p289 = pneg %p103
      %p290 = pneg %p100
      %p291 = scmp.lt.s32.totalorder %s19, 1
      %s292 = scalar_select %p291, %s19, 1
      %s293 = smul.addr %s292, 8
      %s294 = smul.addr %s293, 4
      %s295 = scalar_lea.vmem %s4, %s294
      %p296 = pneg %p129
      %p297 = pneg %p126
      %p298 = pneg %p150
      %p299 = pneg %p147
      %p300 = pneg %p171
      %p301 = pneg %p168
      %p302 = pneg %p192
      %p303 = pneg %p189
      %p304 = pneg %p218
      %p305 = pneg %p215
      %p306 = scmp.lt.s32.totalorder %s19, 1
      %s307 = scalar_select %p306, %s19, 1
      %s308 = smul.addr %s307, 8
      %s309 = smul.addr %s308, 8
      %s310 = scalar_lea.vmem %s8, %s309
      %p311 = scmp.lt.s32.totalorder %s19, 1
      %s312 = scalar_select %p311, %s19, 1
      %s313 = smul.addr %s312, 16
      %s314 = smul.addr %s313, 4
      %s315 = scalar_lea.vmem %s0, %s314
      %p316 = scmp.lt.s32.totalorder %s19, 1
      %s317 = scalar_select %p316, %s19, 1
      %s318 = smul.addr %s317, 8
      %s319 = smul.addr %s318, 4
      %s320 = scalar_lea.vmem %s4, %s319
      %p321 = scmp.lt.s32.totalorder %s19, 1
      %s322 = scalar_select %p321, %s19, 1
      %s323 = smul.addr %s322, 8
      %s324 = smul.addr %s323, 8
      %s325 = scalar_lea.vmem %s8, %s324
      %v327 = vld [vmem:[%s315] sm:$0xff]
      %v328 = vld [vmem:[%s315 + $0x8] sm:$0xff]
      %v329 = vld [vmem:[%s315 + $0x10] sm:$0xff]
      %v330 = vld [vmem:[%s315 + $0x18] sm:$0xff]
      %v331 = vld [vmem:[%s315 + $0x20] sm:$0xff]
      %v332 = vld [vmem:[%s315 + $0x28] sm:$0xff]
      %v333 = vld [vmem:[%s315 + $0x30] sm:$0xff]
      %v334 = vld [vmem:[%s315 + $0x38] sm:$0xff]
      %v335 = vld [vmem:[%s1] sm:$0xf]
      %v336 = vld [vmem:[%s1 + $0x4] sm:$0xf]
      %v337 = vld [vmem:[%s1 + $0x8] sm:$0xf]
      %v338 = vld [vmem:[%s1 + $0xc] sm:$0xf]
      %v339 = vld [vmem:[%s1 + $0x10] sm:$0xf]
      %v340 = vld [vmem:[%s1 + $0x14] sm:$0xf]
      %v341 = vld [vmem:[%s1 + $0x18] sm:$0xf]
      %v342 = vld [vmem:[%s1 + $0x1c] sm:$0xf]
      %v343 = vld [vmem:[%s1 + $0x20] sm:$0xf]
      %v344 = vld [vmem:[%s1 + $0x24] sm:$0xf]
      %v345 = vld [vmem:[%s1 + $0x28] sm:$0xf]
      %v346 = vld [vmem:[%s1 + $0x2c] sm:$0xf]
      %v347 = vld [vmem:[%s1 + $0x30] sm:$0xf]
      %v348 = vld [vmem:[%s1 + $0x34] sm:$0xf]
      %v349 = vld [vmem:[%s1 + $0x38] sm:$0xf]
      %v350 = vld [vmem:[%s1 + $0x3c] sm:$0xf]
      %v351 = vld [vmem:[%s1 + $0x40] sm:$0xf]
      %v352 = vld [vmem:[%s1 + $0x44] sm:$0xf]
      %v361 = vunpack.c.l.b16 %v327
      %v362 = vunpack.c.h.b16 %v327
      %v363 = vunpack.c.l.b16 %v328
      %v364 = vunpack.c.h.b16 %v328
      %v365 = vunpack.c.l.b16 %v329
      %v366 = vunpack.c.h.b16 %v329
      %v367 = vunpack.c.l.b16 %v330
      %v368 = vunpack.c.h.b16 %v330
      %v369 = vunpack.c.l.b16 %v331
      %v370 = vunpack.c.h.b16 %v331
      %v371 = vunpack.c.l.b16 %v332
      %v372 = vunpack.c.h.b16 %v332
      %v373 = vunpack.c.l.b16 %v333
      %v374 = vunpack.c.h.b16 %v333
      %v375 = vunpack.c.l.b16 %v334
      %v376 = vunpack.c.h.b16 %v334
      %v377 = vpack.c.b16 %v363, %v361
      %v378 = vpack.c.b16 %v364, %v362
      %v379 = vpack.c.b16 %v367, %v365
      %v380 = vpack.c.b16 %v368, %v366
      %v381 = vpack.c.b16 %v371, %v369
      %v382 = vpack.c.b16 %v372, %v370
      %v383 = vpack.c.b16 %v375, %v373
      %v384 = vpack.c.b16 %v376, %v374
      %v407 = vunpack.c.l.b16 %v335
      %v408 = vunpack.c.l.b16 %v336
      %v409 = vunpack.c.l.b16 %v337
      %v410 = vunpack.c.l.b16 %v338
      %v411 = vunpack.c.l.b16 %v339
      %v412 = vunpack.c.l.b16 %v340
      %v413 = vunpack.c.l.b16 %v341
      %v414 = vunpack.c.l.b16 %v342
      %v415 = vunpack.c.l.b16 %v343
      %v416 = vunpack.c.l.b16 %v344
      %v417 = vunpack.c.l.b16 %v345
      %v418 = vunpack.c.l.b16 %v346
      %v419 = vunpack.c.l.b16 %v347
      %v420 = vunpack.c.l.b16 %v348
      %v421 = vunpack.c.l.b16 %v349
      %v422 = vunpack.c.l.b16 %v350
      %v423 = vunpack.c.l.b16 %v351
      %v424 = vunpack.c.l.b16 %v352
      %v425 = vpack.c.b16 %v408, %v407
      %v426 = vpack.c.b16 %v410, %v409
      %v427 = vpack.c.b16 %v412, %v411
      %v428 = vpack.c.b16 %v414, %v413
      %v429 = vpack.c.b16 %v416, %v415
      %v430 = vpack.c.b16 %v418, %v417
      %v431 = vpack.c.b16 %v420, %v419
      %v432 = vpack.c.b16 %v422, %v421
      %v433 = vpack.c.b16 %v424, %v423
      %vm443 = vcmask 130048
      %v445 = vsel %vm443, %v378, 0
      %v448 = vsel %vm443, %v380, 0
      %v451 = vsel %vm443, %v382, 0
      %v454 = vsel %vm443, %v384, 0
      %456 = vmatpush.bf16.msra.mxu0 %v432
      %457 = vmatpush.bf16.msra.mxu0 %v431
      %458 = vmatpush.bf16.msra.mxu0 %v430
      %459 = vmatpush.bf16.msra.mxu0 %v429
      %460 = vmatpush.bf16.msra.mxu0 %v428
      %461 = vmatpush.bf16.msra.mxu0 %v427
      %462 = vmatpush.bf16.msra.mxu0 %v426
      %463 = vmatpush.bf16.msra.mxu0 %v425
      %464 = vmatmul.bf16.gmra.mxu0 %v377
      %v465 = vpop.f32.mrf.mxu0
      %v466 = vadd.f32 0.0, %v465
      %v467 = vpop.f32.mrf.mxu0
      %v468 = vadd.f32 0.0, %v467
      %469 = vmatmul.bf16.gmra.mxu0 %v379
      %v470 = vpop.f32.mrf.mxu0
      %v471 = vadd.f32 0.0, %v470
      %v472 = vpop.f32.mrf.mxu0
      %v473 = vadd.f32 0.0, %v472
      %474 = vmatmul.bf16.gmra.mxu0 %v381
      %v475 = vpop.f32.mrf.mxu0
      %v476 = vadd.f32 0.0, %v475
      %v477 = vpop.f32.mrf.mxu0
      %v478 = vadd.f32 0.0, %v477
      %479 = vmatmul.bf16.gmra.mxu0 %v383
      %v480 = vpop.f32.mrf.mxu0
      %v481 = vadd.f32 0.0, %v480
      %v482 = vpop.f32.mrf.mxu0
      %v483 = vadd.f32 0.0, %v482
      %484 = vdwg.mxu0
      %485 = vmatpush.bf16.msra.mxu0 0
      %486 = vmatpush.bf16.msra.mxu0 0
      %487 = vmatpush.bf16.msra.mxu0 0
      %488 = vmatpush.bf16.msra.mxu0 0
      %489 = vmatpush.bf16.msra.mxu0 0
      %490 = vmatpush.bf16.msra.mxu0 0
      %491 = vmatpush.bf16.msra.mxu0 0
      %492 = vmatpush.bf16.msra.mxu0 %v433
      %493 = vmatmul.bf16.gmra.mxu0 %v445
      %v494 = vpop.f32.mrf.mxu0
      %v495 = vadd.f32 %v466, %v494
      %v496 = vpop.f32.mrf.mxu0
      %v497 = vadd.f32 %v468, %v496
      %498 = vmatmul.bf16.gmra.mxu0 %v448
      %v499 = vpop.f32.mrf.mxu0
      %v500 = vadd.f32 %v471, %v499
      %v501 = vpop.f32.mrf.mxu0
      %v502 = vadd.f32 %v473, %v501
      %503 = vmatmul.bf16.gmra.mxu0 %v451
      %v504 = vpop.f32.mrf.mxu0
      %v505 = vadd.f32 %v476, %v504
      %v506 = vpop.f32.mrf.mxu0
      %v507 = vadd.f32 %v478, %v506
      %508 = vmatmul.bf16.gmra.mxu0 %v454
      %v509 = vpop.f32.mrf.mxu0
      %v510 = vadd.f32 %v481, %v509
      %v511 = vpop.f32.mrf.mxu0
      %v512 = vadd.f32 %v483, %v511
      %513 = vdwg.mxu0
      %v514 = vld [vmem:[%s2] sm:$0x1]
      %v515 = vld [vmem:[%s3] sm:$0x1]
      %v516 = vsel %vm443, %v495, 0.0
      %v517 = vsel %vm443, %v497, 0.0
      %v518 = vadd.f32 %v516, %v517
      %v519 = vsel %vm443, %v500, 0.0
      %v520 = vadd.f32 %v518, %v519
      %v521 = vsel %vm443, %v502, 0.0
      %v522 = vadd.f32 %v520, %v521
      %v523 = vsel %vm443, %v505, 0.0
      %v524 = vadd.f32 %v522, %v523
      %v525 = vsel %vm443, %v507, 0.0
      %v526 = vadd.f32 %v524, %v525
      %v527 = vsel %vm443, %v510, 0.0
      %v528 = vadd.f32 %v526, %v527
      %v529 = vsel %vm443, %v512, 0.0
      %v530 = vadd.f32 %v528, %v529
      %v531 = vrot.slane %v530, 4
      %v532 = vadd.f32 %v530, %v531
      %v533 = vrot.slane %v532, 2
      %v534 = vadd.f32 %v532, %v533
      %v535 = vrot.slane %v534, 1
      %v536 = vadd.f32 %v534, %v535
      %v537 = vrcp.pop 64.0
      %v538 = vmul.f32 64.0, %v537
      %v539 = vsub.f32 1.0, %v538
      %v540 = vmul.f32 %v537, %v539
      %v541 = vadd.f32 %v537, %v540
      %vm542 = vweird.f32 %v537
      %v543 = vsel %vm542, %v537, %v541
      %v544 = vmul.f32 %v536, %v543
      %v545 = vsub.f32 %v495, %v544
      %v546 = vsub.f32 %v497, %v544
      %v547 = vsub.f32 %v500, %v544
      %v548 = vsub.f32 %v502, %v544
      %v549 = vsub.f32 %v505, %v544
      %v550 = vsub.f32 %v507, %v544
      %v551 = vsub.f32 %v510, %v544
      %v552 = vsub.f32 %v512, %v544
      %v553 = vmul.f32 %v545, %v545
      %v554 = vmul.f32 %v546, %v546
      %v555 = vmul.f32 %v547, %v547
      %v556 = vmul.f32 %v548, %v548
      %v557 = vmul.f32 %v549, %v549
      %v558 = vmul.f32 %v550, %v550
      %v559 = vmul.f32 %v551, %v551
      %v560 = vmul.f32 %v552, %v552
      %v561 = vsel %vm443, %v553, 0.0
      %v562 = vsel %vm443, %v554, 0.0
      %v563 = vadd.f32 %v561, %v562
      %v564 = vsel %vm443, %v555, 0.0
      %v565 = vadd.f32 %v563, %v564
      %v566 = vsel %vm443, %v556, 0.0
      %v567 = vadd.f32 %v565, %v566
      %v568 = vsel %vm443, %v557, 0.0
      %v569 = vadd.f32 %v567, %v568
      %v570 = vsel %vm443, %v558, 0.0
      %v571 = vadd.f32 %v569, %v570
      %v572 = vsel %vm443, %v559, 0.0
      %v573 = vadd.f32 %v571, %v572
      %v574 = vsel %vm443, %v560, 0.0
      %v575 = vadd.f32 %v573, %v574
      %v576 = vrot.slane %v575, 4
      %v577 = vadd.f32 %v575, %v576
      %v578 = vrot.slane %v577, 2
      %v579 = vadd.f32 %v577, %v578
      %v580 = vrot.slane %v579, 1
      %v581 = vadd.f32 %v579, %v580
      %v582 = vmul.f32 %v581, %v543
      %v583 = vadd.f32 %v582, 1e-05
      %v584 = vrsqrt.pop %v583
      %v585 = vmul.f32 %v584, %v583
      %v586 = vmul.f32 %v585, %v584
      %v587 = vmul.f32 0.5, %v586
      %v588 = vsub.f32 1.5, %v587
      %v589 = vmul.f32 %v584, %v588
      %vm590 = vweird.f32 %v583
      %vm591 = vweird.f32 %v584
      %vm592 = vmor %vm590, %vm591
      %v593 = vsel %vm592, %v584, %v589
      %v594 = vmul.f32 %v545, %v593
      %v595 = vmul.f32 %v546, %v593
      %v596 = vmul.f32 %v547, %v593
      %v597 = vmul.f32 %v548, %v593
      %v598 = vmul.f32 %v549, %v593
      %v599 = vmul.f32 %v550, %v593
      %v600 = vmul.f32 %v551, %v593
      %v601 = vmul.f32 %v552, %v593
      %v603 = vperm.slane %v514, 0
      %v605 = vmul.f32 %v594, %v603
      %v606 = vmul.f32 %v595, %v603
      %v607 = vmul.f32 %v596, %v603
      %v608 = vmul.f32 %v597, %v603
      %v609 = vmul.f32 %v598, %v603
      %v610 = vmul.f32 %v599, %v603
      %v611 = vmul.f32 %v600, %v603
      %v612 = vmul.f32 %v601, %v603
      %v614 = vperm.slane %v515, 0
      %v616 = vadd.f32 %v605, %v614
      %v617 = vadd.f32 %v606, %v614
      %v618 = vadd.f32 %v607, %v614
      %v619 = vadd.f32 %v608, %v614
      %v620 = vadd.f32 %v609, %v614
      %v621 = vadd.f32 %v610, %v614
      %v622 = vadd.f32 %v611, %v614
      %v623 = vadd.f32 %v612, %v614
      %v624 = vld [vmem:[%s320] sm:$0xf]
      %v625 = vld [vmem:[%s320 + $0x4] sm:$0xf]
      %v626 = vld [vmem:[%s320 + $0x8] sm:$0xf]
      %v627 = vld [vmem:[%s320 + $0xc] sm:$0xf]
      %v628 = vld [vmem:[%s320 + $0x10] sm:$0xf]
      %v629 = vld [vmem:[%s320 + $0x14] sm:$0xf]
      %v630 = vld [vmem:[%s320 + $0x18] sm:$0xf]
      %v631 = vld [vmem:[%s320 + $0x1c] sm:$0xf]
      %v632 = vld [vmem:[%s5] sm:$0xf]
      %v641 = vunpack.c.l.b16 %v624
      %v642 = vunpack.c.l.b16 %v625
      %v643 = vunpack.c.l.b16 %v626
      %v644 = vunpack.c.l.b16 %v627
      %v645 = vunpack.c.l.b16 %v628
      %v646 = vunpack.c.l.b16 %v629
      %v647 = vunpack.c.l.b16 %v630
      %v648 = vunpack.c.l.b16 %v631
      %v649 = vpack.c.b16 %v642, %v641
      %v650 = vpack.c.b16 %v644, %v643
      %v651 = vpack.c.b16 %v646, %v645
      %v652 = vpack.c.b16 %v648, %v647
      %vm653 = vcmask 64512
      %v655 = vsel %vm653, %v649, 0
      %v658 = vsel %vm653, %v650, 0
      %v661 = vsel %vm653, %v651, 0
      %v664 = vsel %vm653, %v652, 0
      %vm666 = vcmask 1043456
      %v668 = vsel %vm666, %v632, 0
      %670 = vmatpush.bf16.msra.mxu0 0
      %671 = vmatpush.bf16.msra.mxu0 0
      %672 = vmatpush.bf16.msra.mxu0 0
      %673 = vmatpush.bf16.msra.mxu0 0
      %674 = vmatpush.bf16.msra.mxu0 0
      %675 = vmatpush.bf16.msra.mxu0 0
      %676 = vmatpush.bf16.msra.mxu0 0
      %677 = vmatpush.bf16.msra.mxu0 %v668
      %678 = vmatmul.bf16.gmra.mxu0 %v655
      %v679 = vpop.f32.mrf.mxu0
      %v680 = vadd.f32 0.0, %v679
      %v681 = vpop.f32.mrf.mxu0
      %v682 = vadd.f32 0.0, %v681
      %683 = vmatmul.bf16.gmra.mxu0 %v658
      %v684 = vpop.f32.mrf.mxu0
      %v685 = vadd.f32 0.0, %v684
      %v686 = vpop.f32.mrf.mxu0
      %v687 = vadd.f32 0.0, %v686
      %688 = vmatmul.bf16.gmra.mxu0 %v661
      %v689 = vpop.f32.mrf.mxu0
      %v690 = vadd.f32 0.0, %v689
      %v691 = vpop.f32.mrf.mxu0
      %v692 = vadd.f32 0.0, %v691
      %693 = vmatmul.bf16.gmra.mxu0 %v664
      %v694 = vpop.f32.mrf.mxu0
      %v695 = vadd.f32 0.0, %v694
      %v696 = vpop.f32.mrf.mxu0
      %v697 = vadd.f32 0.0, %v696
      %698 = vdwg.mxu0
      %v699 = vld [vmem:[%s6] sm:$0x1]
      %v700 = vld [vmem:[%s7] sm:$0x1]
      %v701 = vsel %vm443, %v680, 0.0
      %v702 = vsel %vm443, %v682, 0.0
      %v703 = vadd.f32 %v701, %v702
      %v704 = vsel %vm443, %v685, 0.0
      %v705 = vadd.f32 %v703, %v704
      %v706 = vsel %vm443, %v687, 0.0
      %v707 = vadd.f32 %v705, %v706
      %v708 = vsel %vm443, %v690, 0.0
      %v709 = vadd.f32 %v707, %v708
      %v710 = vsel %vm443, %v692, 0.0
      %v711 = vadd.f32 %v709, %v710
      %v712 = vsel %vm443, %v695, 0.0
      %v713 = vadd.f32 %v711, %v712
      %v714 = vsel %vm443, %v697, 0.0
      %v715 = vadd.f32 %v713, %v714
      %v716 = vrot.slane %v715, 4
      %v717 = vadd.f32 %v715, %v716
      %v718 = vrot.slane %v717, 2
      %v719 = vadd.f32 %v717, %v718
      %v720 = vrot.slane %v719, 1
      %v721 = vadd.f32 %v719, %v720
      %v722 = vmul.f32 %v721, %v543
      %v723 = vsub.f32 %v680, %v722
      %v724 = vsub.f32 %v682, %v722
      %v725 = vsub.f32 %v685, %v722
      %v726 = vsub.f32 %v687, %v722
      %v727 = vsub.f32 %v690, %v722
      %v728 = vsub.f32 %v692, %v722
      %v729 = vsub.f32 %v695, %v722
      %v730 = vsub.f32 %v697, %v722
      %v731 = vmul.f32 %v723, %v723
      %v732 = vmul.f32 %v724, %v724
      %v733 = vmul.f32 %v725, %v725
      %v734 = vmul.f32 %v726, %v726
      %v735 = vmul.f32 %v727, %v727
      %v736 = vmul.f32 %v728, %v728
      %v737 = vmul.f32 %v729, %v729
      %v738 = vmul.f32 %v730, %v730
      %v739 = vsel %vm443, %v731, 0.0
      %v740 = vsel %vm443, %v732, 0.0
      %v741 = vadd.f32 %v739, %v740
      %v742 = vsel %vm443, %v733, 0.0
      %v743 = vadd.f32 %v741, %v742
      %v744 = vsel %vm443, %v734, 0.0
      %v745 = vadd.f32 %v743, %v744
      %v746 = vsel %vm443, %v735, 0.0
      %v747 = vadd.f32 %v745, %v746
      %v748 = vsel %vm443, %v736, 0.0
      %v749 = vadd.f32 %v747, %v748
      %v750 = vsel %vm443, %v737, 0.0
      %v751 = vadd.f32 %v749, %v750
      %v752 = vsel %vm443, %v738, 0.0
      %v753 = vadd.f32 %v751, %v752
      %v754 = vrot.slane %v753, 4
      %v755 = vadd.f32 %v753, %v754
      %v756 = vrot.slane %v755, 2
      %v757 = vadd.f32 %v755, %v756
      %v758 = vrot.slane %v757, 1
      %v759 = vadd.f32 %v757, %v758
      %v760 = vmul.f32 %v759, %v543
      %v761 = vadd.f32 %v760, 1e-05
      %v762 = vrsqrt.pop %v761
      %v763 = vmul.f32 %v762, %v761
      %v764 = vmul.f32 %v763, %v762
      %v765 = vmul.f32 0.5, %v764
      %v766 = vsub.f32 1.5, %v765
      %v767 = vmul.f32 %v762, %v766
      %vm768 = vweird.f32 %v761
      %vm769 = vweird.f32 %v762
      %vm770 = vmor %vm768, %vm769
      %v771 = vsel %vm770, %v762, %v767
      %v772 = vmul.f32 %v723, %v771
      %v773 = vmul.f32 %v724, %v771
      %v774 = vmul.f32 %v725, %v771
      %v775 = vmul.f32 %v726, %v771
      %v776 = vmul.f32 %v727, %v771
      %v777 = vmul.f32 %v728, %v771
      %v778 = vmul.f32 %v729, %v771
      %v779 = vmul.f32 %v730, %v771
      %v781 = vperm.slane %v699, 0
      %v783 = vmul.f32 %v772, %v781
      %v784 = vmul.f32 %v773, %v781
      %v785 = vmul.f32 %v774, %v781
      %v786 = vmul.f32 %v775, %v781
      %v787 = vmul.f32 %v776, %v781
      %v788 = vmul.f32 %v777, %v781
      %v789 = vmul.f32 %v778, %v781
      %v790 = vmul.f32 %v779, %v781
      %v792 = vperm.slane %v700, 0
      %v794 = vadd.f32 %v783, %v792
      %v795 = vadd.f32 %v784, %v792
      %v796 = vadd.f32 %v785, %v792
      %v797 = vadd.f32 %v786, %v792
      %v798 = vadd.f32 %v787, %v792
      %v799 = vadd.f32 %v788, %v792
      %v800 = vadd.f32 %v789, %v792
      %v801 = vadd.f32 %v790, %v792
      %v802 = vadd.f32 %v616, %v794
      %v803 = vadd.f32 %v617, %v795
      %v804 = vadd.f32 %v618, %v796
      %v805 = vadd.f32 %v619, %v797
      %v806 = vadd.f32 %v620, %v798
      %v807 = vadd.f32 %v621, %v799
      %v808 = vadd.f32 %v622, %v800
      %v809 = vadd.f32 %v623, %v801
      %v810 = vmul.f32 %v802, 0.01
      %v811 = vmul.f32 %v803, 0.01
      %v812 = vmul.f32 %v804, 0.01
      %v813 = vmul.f32 %v805, 0.01
      %v814 = vmul.f32 %v806, 0.01
      %v815 = vmul.f32 %v807, 0.01
      %v816 = vmul.f32 %v808, 0.01
      %v817 = vmul.f32 %v809, 0.01
      %v818 = vmax.f32 %v802, %v810
      %v819 = vmax.f32 %v803, %v811
      %v820 = vmax.f32 %v804, %v812
      %v821 = vmax.f32 %v805, %v813
      %v822 = vmax.f32 %v806, %v814
      %v823 = vmax.f32 %v807, %v815
      %v824 = vmax.f32 %v808, %v816
      %v825 = vmax.f32 %v809, %v817
      %826 = vst.msk [vmem:[%s325] sm:$0xff] %vm443, %v818
      %827 = vst.msk [vmem:[%s325 + $0x8] sm:$0xff] %vm443, %v819
      %828 = vst.msk [vmem:[%s325 + $0x10] sm:$0xff] %vm443, %v820
      %829 = vst.msk [vmem:[%s325 + $0x18] sm:$0xff] %vm443, %v821
      %830 = vst.msk [vmem:[%s325 + $0x20] sm:$0xff] %vm443, %v822
      %831 = vst.msk [vmem:[%s325 + $0x28] sm:$0xff] %vm443, %v823
      %832 = vst.msk [vmem:[%s325 + $0x30] sm:$0xff] %vm443, %v824
      %833 = vst.msk [vmem:[%s325 + $0x38] sm:$0xff] %vm443, %v825
      %p834 = scmp.lt.s32.totalorder %s19, 1
      %s835 = scalar_select %p834, %s19, 1
      %s836 = smul.addr %s835, 8
      %s837 = smul.addr %s836, 8
      %s838 = scalar_lea.vmem %s8, %s837
      // Predicated region
      $region53: #{forward.18} parent=51 // pred_check
        %p839 = pneg %p215
      $region54: #{forward.18} parent=51 // pred_check_branch
        %841 = sbr.rel (%p839) target = $region56
      $region55: #{forward.18} parent=51 // pred_region
        _
      $region56: #{forward.18} parent=51 // pred_fallthru
        _
    $region52: #{forward.18} parent=5 // pred_fallthru
      _
    %p842 = scmp.le.s32.totalorder 2, %s14
    // Predicated region
    $region57: #{forward.18} parent=5 // pred_check
      %p843 = pneg %p842
    $region58: #{forward.18} parent=5 // pred_check_branch
      %845 = sbr.rel (%p843) target = $region60
    $region59: #{forward.18} parent=5 // pred_region
      %s846 = ssub.s32 %s14, 2
      // Predicated region
      $region61: #{forward.18} parent=59 // pred_check
        %p847 = pneg %p221
      $region62: #{forward.18} parent=59 // pred_check_branch
        %849 = sbr.rel (%p847) target = $region64
      $region63: #{forward.18} parent=59 // pred_region
        %p850 = scmp.lt.s32.totalorder %s20, 1
        %s851 = scalar_select %p850, %s20, 1
        %s852 = smul.addr %s851, 8
        %s853 = smul.addr %s852, 8
        %s854 = scalar_lea.vmem %s8, %s853
      $region64: #{forward.18} parent=59 // pred_fallthru
        _
    $region60: #{forward.18} parent=5 // pred_fallthru
      _
  $region6: #{forward.18} parent=0 // loop_footer
    %s18 = sadd.s32 1, %s14
  $region7: #{forward.18} parent=0 // loop_footer_branch
    %13 = sbr.rel target = $region3
  $region8: #{forward.18} parent=0 // loop_exit
    _

// kernel: forward.19
$region0: #{forward.19}
  #allocation0 [shape = 'u32[]', space=smem, size = 0x4, offset = 0x4, fixed_abs, tag = 'smem constant byte address 0x4 - core index']
  #allocation1 [shape = 'u32[72,128]{1,0:T(1,128)}', space=vmem, size = 0x9000, scoped, tag = 'internal scratch']
  %s0 = inlined_call_operand.vmem [shape: bf16[2,64,144], index: 0, kind: input, shape index: {}]
  %s1 = inlined_call_operand.vmem [shape: bf16[144,16], index: 1, kind: input, shape index: {}]
  %s2 = inlined_call_operand.vmem [shape: f32[1,16], index: 2, kind: input, shape index: {}]
  %s3 = inlined_call_operand.vmem [shape: f32[1,16], index: 3, kind: input, shape index: {}]
  %s4 = inlined_call_operand.vmem [shape: f32[2,64,16], index: 4, kind: output, shape index: {}]
  %s5 = sld [smem:[#allocation0]]
  $region49: #{forward.19} parent=0
    _
  %s7 = ssub.s32 1, %s5
  %s8 = scalar_select 0, %s7, %s5
  loop: start=0, step=1, limit=4
  $region2: #{forward.19} parent=0 // loop_pre_header
    _
  $region3: #{forward.19} parent=0 // loop_header
    %s10 = sphi 0, %s14
    %p11 = scmp.ge.s32.totalorder %s10, 4
    %s20 = sphi 0, %s22
    %s23 = sphi 0, %s20
    %s24 = sphi 0, %s23
    %s40 = sphi 0, %s24
    %s44 = sphi 0, %s44
    %s46 = sphi 0, %s44
    %s47 = sphi 0, %s46
    %s61 = sphi 0, %s47
    %s65 = sphi 0, %s65
    %s67 = sphi 0, %s65
    %s68 = sphi 0, %s67
    %s82 = sphi 0, %s68
    %s86 = sphi 0, %s86
    %s88 = sphi 0, %s86
    %s89 = sphi 0, %s88
    %s103 = sphi 0, %s89
    %s109 = sphi 0, %s111
    %s112 = sphi 0, %s109
    %s113 = sphi 0, %s112
    %s129 = sphi 0, %s113
  $region4: #{forward.19} parent=0 // loop_header_branch
    %13 = sbr.rel (%p11) target = $region8
  $region5: #{forward.19} parent=0 // loop_body
    %s15 = ssub.s32 %s10, 1
    %s16 = ssub.s32 %s10, 2
    %s17 = sadd.s32 %s10, 1
    %s18 = ssub.s32 %s10, %s17
    %p19 = scmp.eq.s32.totalorder %s18, 0
    %s21 = sadd.s32 %s20, 1
    %s22 = scalar_select %p19, %s20, %s21
    %p25 = pneg %p19
    %p26 = scmp.eq.s32.totalorder %s10, 1
    %p27 = por %p25, %p26
    %p28 = scmp.ne.s32.totalorder %s20, %s23
    %p29 = scmp.eq.s32.totalorder %s10, 0
    %p30 = por %p28, %p29
    %p31 = scmp.ne.s32.totalorder %s20, %s23
    %p32 = scmp.eq.s32.totalorder %s15, 1
    %p33 = por %p31, %p32
    %p34 = scmp.ne.s32.totalorder %s23, %s24
    %p35 = scmp.eq.s32.totalorder %s15, 0
    %p36 = por %p34, %p35
    %p37 = scmp.ne.s32.totalorder %s23, %s24
    %p38 = scmp.eq.s32.totalorder %s16, 1
    %p39 = por %p37, %p38
    %p41 = scmp.ne.s32.totalorder %s24, %s40
    %p42 = scmp.eq.s32.totalorder %s16, 0
    %p43 = por %p41, %p42
    %s45 = sadd.s32 %s44, 1
    %p48 = scmp.eq.s32.totalorder %s10, 1
    %p49 = scmp.ne.s32.totalorder %s44, %s46
    %p50 = scmp.eq.s32.totalorder %s10, 0
    %p51 = por %p49, %p50
    %p52 = scmp.ne.s32.totalorder %s44, %s46
    %p53 = scmp.eq.s32.totalorder %s15, 1
    %p54 = por %p52, %p53
    %p55 = scmp.ne.s32.totalorder %s46, %s47
    %p56 = scmp.eq.s32.totalorder %s15, 0
    %p57 = por %p55, %p56
    %p58 = scmp.ne.s32.totalorder %s46, %s47
    %p59 = scmp.eq.s32.totalorder %s16, 1
    %p60 = por %p58, %p59
    %p62 = scmp.ne.s32.totalorder %s47, %s61
    %p63 = scmp.eq.s32.totalorder %s16, 0
    %p64 = por %p62, %p63
    %s66 = sadd.s32 %s65, 1
    %p69 = scmp.eq.s32.totalorder %s10, 1
    %p70 = scmp.ne.s32.totalorder %s65, %s67
    %p71 = scmp.eq.s32.totalorder %s10, 0
    %p72 = por %p70, %p71
    %p73 = scmp.ne.s32.totalorder %s65, %s67
    %p74 = scmp.eq.s32.totalorder %s15, 1
    %p75 = por %p73, %p74
    %p76 = scmp.ne.s32.totalorder %s67, %s68
    %p77 = scmp.eq.s32.totalorder %s15, 0
    %p78 = por %p76, %p77
    %p79 = scmp.ne.s32.totalorder %s67, %s68
    %p80 = scmp.eq.s32.totalorder %s16, 1
    %p81 = por %p79, %p80
    %p83 = scmp.ne.s32.totalorder %s68, %s82
    %p84 = scmp.eq.s32.totalorder %s16, 0
    %p85 = por %p83, %p84
    %s87 = sadd.s32 %s86, 1
    %p90 = scmp.eq.s32.totalorder %s10, 1
    %p91 = scmp.ne.s32.totalorder %s86, %s88
    %p92 = scmp.eq.s32.totalorder %s10, 0
    %p93 = por %p91, %p92
    %p94 = scmp.ne.s32.totalorder %s86, %s88
    %p95 = scmp.eq.s32.totalorder %s15, 1
    %p96 = por %p94, %p95
    %p97 = scmp.ne.s32.totalorder %s88, %s89
    %p98 = scmp.eq.s32.totalorder %s15, 0
    %p99 = por %p97, %p98
    %p100 = scmp.ne.s32.totalorder %s88, %s89
    %p101 = scmp.eq.s32.totalorder %s16, 1
    %p102 = por %p100, %p101
    %p104 = scmp.ne.s32.totalorder %s89, %s103
    %p105 = scmp.eq.s32.totalorder %s16, 0
    %p106 = por %p104, %p105
    %s107 = ssub.s32 %s10, %s17
    %p108 = scmp.eq.s32.totalorder %s107, 0
    %s110 = sadd.s32 %s109, 1
    %s111 = scalar_select %p108, %s109, %s110
    %p114 = pneg %p108
    %p115 = scmp.eq.s32.totalorder %s10, 1
    %p116 = por %p114, %p115
    %p117 = scmp.ne.s32.totalorder %s109, %s112
    %p118 = scmp.eq.s32.totalorder %s10, 0
    %p119 = por %p117, %p118
    %p120 = scmp.ne.s32.totalorder %s109, %s112
    %p121 = scmp.eq.s32.totalorder %s15, 1
    %p122 = por %p120, %p121
    %p123 = scmp.ne.s32.totalorder %s112, %s113
    %p124 = scmp.eq.s32.totalorder %s15, 0
    %p125 = por %p123, %p124
    %p126 = scmp.ne.s32.totalorder %s112, %s113
    %p127 = scmp.eq.s32.totalorder %s16, 1
    %p128 = por %p126, %p127
    %p130 = scmp.ne.s32.totalorder %s113, %s129
    %p131 = scmp.eq.s32.totalorder %s16, 0
    %p132 = por %p130, %p131
    %p133 = scmp.le.s32.totalorder 1, %s10
    %p134 = scmp.lt.s32.totalorder %s10, 3
    %p135 = pnand %p133, %p134
    %p136 = pneg %p135
    // Predicated region
    $region9: #{forward.19} parent=5 // pred_check
      _
    $region10: #{forward.19} parent=5 // pred_check_branch
      %138 = sbr.rel (%p135) target = $region12
    $region11: #{forward.19} parent=5 // pred_region
      %s139 = ssub.s32 %s10, 1
      // Predicated region
      $region13: #{forward.19} parent=11 // pred_check
        %p140 = pneg %p57
      $region14: #{forward.19} parent=11 // pred_check_branch
        %142 = sbr.rel (%p140) target = $region16
      $region15: #{forward.19} parent=11 // pred_region
        _
      $region16: #{forward.19} parent=11 // pred_fallthru
        _
      // Predicated region
      $region17: #{forward.19} parent=11 // pred_check
        %p143 = pneg %p78
      $region18: #{forward.19} parent=11 // pred_check_branch
        %145 = sbr.rel (%p143) target = $region20
      $region19: #{forward.19} parent=11 // pred_region
        _
      $region20: #{forward.19} parent=11 // pred_fallthru
        _
      // Predicated region
      $region21: #{forward.19} parent=11 // pred_check
        %p146 = pneg %p99
      $region22: #{forward.19} parent=11 // pred_check_branch
        %148 = sbr.rel (%p146) target = $region24
      $region23: #{forward.19} parent=11 // pred_region
        _
      $region24: #{forward.19} parent=11 // pred_fallthru
        _
    $region12: #{forward.19} parent=5 // pred_fallthru
      _
    %p149 = scmp.lt.s32.totalorder %s10, 2
    // Predicated region
    $region25: #{forward.19} parent=5 // pred_check
      %p150 = pneg %p149
    $region26: #{forward.19} parent=5 // pred_check_branch
      %152 = sbr.rel (%p150) target = $region28
    $region27: #{forward.19} parent=5 // pred_region
      // Predicated region
      $region29: #{forward.19} parent=27 // pred_check
        %p153 = pneg %p30
      $region30: #{forward.19} parent=27 // pred_check_branch
        %155 = sbr.rel (%p153) target = $region32
      $region31: #{forward.19} parent=27 // pred_region
        %p156 = scmp.lt.s32.totalorder %s10, 1
        %s157 = scalar_select %p156, %s10, 1
        %s158 = smul.addr %s157, 16
        %s159 = smul.addr %s158, 4
        %s160 = scalar_lea.vmem %s0, %s159
      $region32: #{forward.19} parent=27 // pred_fallthru
        _
    $region28: #{forward.19} parent=5 // pred_fallthru
      _
    %p161 = scmp.le.s32.totalorder 1, %s10
    %p162 = scmp.lt.s32.totalorder %s10, 3
    %p163 = pnand %p161, %p162
    %p164 = pneg %p163
    // Predicated region
    $region33: #{forward.19} parent=5 // pred_check
      _
    $region34: #{forward.19} parent=5 // pred_check_branch
      %166 = sbr.rel (%p163) target = $region36
    $region35: #{forward.19} parent=5 // pred_region
      %s167 = ssub.s32 %s10, 1
      %p168 = scmp.lt.s32.totalorder %s15, 1
      %s169 = scalar_select %p168, %s15, 1
      %s170 = smul.addr %s169, 16
      %s171 = smul.addr %s170, 4
      %s172 = scalar_lea.vmem %s0, %s171
      %p173 = pneg %p36
      %p174 = pneg %p33
      %p175 = pneg %p57
      %p176 = pneg %p54
      %p177 = pneg %p78
      %p178 = pneg %p75
      %p179 = pneg %p99
      %p180 = pneg %p96
      %p181 = pneg %p125
      %p182 = pneg %p122
      %p183 = scmp.lt.s32.totalorder %s15, 1
      %s184 = scalar_select %p183, %s15, 1
      %s185 = smul.addr %s184, 8
      %s186 = smul.addr %s185, 8
      %s187 = scalar_lea.vmem %s4, %s186
      %p188 = scmp.lt.s32.totalorder %s15, 1
      %s189 = scalar_select %p188, %s15, 1
      %s190 = smul.addr %s189, 16
      %s191 = smul.addr %s190, 4
      %s192 = scalar_lea.vmem %s0, %s191
      %p193 = scmp.lt.s32.totalorder %s15, 1
      %s194 = scalar_select %p193, %s15, 1
      %s195 = smul.addr %s194, 8
      %s196 = smul.addr %s195, 8
      %s197 = scalar_lea.vmem %s4, %s196
      %v199 = vld [vmem:[%s192] sm:$0xff]
      %v200 = vld [vmem:[%s192 + $0x8] sm:$0xff]
      %v201 = vld [vmem:[%s192 + $0x10] sm:$0xff]
      %v202 = vld [vmem:[%s192 + $0x18] sm:$0xff]
      %v203 = vld [vmem:[%s192 + $0x20] sm:$0xff]
      %v204 = vld [vmem:[%s192 + $0x28] sm:$0xff]
      %v205 = vld [vmem:[%s192 + $0x30] sm:$0xff]
      %v206 = vld [vmem:[%s192 + $0x38] sm:$0xff]
      %v207 = vld [vmem:[%s1] sm:$0xf]
      %v208 = vld [vmem:[%s1 + $0x4] sm:$0xf]
      %v209 = vld [vmem:[%s1 + $0x8] sm:$0xf]
      %v210 = vld [vmem:[%s1 + $0xc] sm:$0xf]
      %v211 = vld [vmem:[%s1 + $0x10] sm:$0xf]
      %v212 = vld [vmem:[%s1 + $0x14] sm:$0xf]
      %v213 = vld [vmem:[%s1 + $0x18] sm:$0xf]
      %v214 = vld [vmem:[%s1 + $0x1c] sm:$0xf]
      %v215 = vld [vmem:[%s1 + $0x20] sm:$0xf]
      %v216 = vld [vmem:[%s1 + $0x24] sm:$0xf]
      %v217 = vld [vmem:[%s1 + $0x28] sm:$0xf]
      %v218 = vld [vmem:[%s1 + $0x2c] sm:$0xf]
      %v219 = vld [vmem:[%s1 + $0x30] sm:$0xf]
      %v220 = vld [vmem:[%s1 + $0x34] sm:$0xf]
      %v221 = vld [vmem:[%s1 + $0x38] sm:$0xf]
      %v222 = vld [vmem:[%s1 + $0x3c] sm:$0xf]
      %v223 = vld [vmem:[%s1 + $0x40] sm:$0xf]
      %v224 = vld [vmem:[%s1 + $0x44] sm:$0xf]
      %v233 = vunpack.c.l.b16 %v199
      %v234 = vunpack.c.h.b16 %v199
      %v235 = vunpack.c.l.b16 %v200
      %v236 = vunpack.c.h.b16 %v200
      %v237 = vunpack.c.l.b16 %v201
      %v238 = vunpack.c.h.b16 %v201
      %v239 = vunpack.c.l.b16 %v202
      %v240 = vunpack.c.h.b16 %v202
      %v241 = vunpack.c.l.b16 %v203
      %v242 = vunpack.c.h.b16 %v203
      %v243 = vunpack.c.l.b16 %v204
      %v244 = vunpack.c.h.b16 %v204
      %v245 = vunpack.c.l.b16 %v205
      %v246 = vunpack.c.h.b16 %v205
      %v247 = vunpack.c.l.b16 %v206
      %v248 = vunpack.c.h.b16 %v206
      %v249 = vpack.c.b16 %v235, %v233
      %v250 = vpack.c.b16 %v236, %v234
      %v251 = vpack.c.b16 %v239, %v237
      %v252 = vpack.c.b16 %v240, %v238
      %v253 = vpack.c.b16 %v243, %v241
      %v254 = vpack.c.b16 %v244, %v242
      %v255 = vpack.c.b16 %v247, %v245
      %v256 = vpack.c.b16 %v248, %v246
      %v279 = vunpack.c.l.b16 %v207
      %v280 = vunpack.c.l.b16 %v208
      %v281 = vunpack.c.l.b16 %v209
      %v282 = vunpack.c.l.b16 %v210
      %v283 = vunpack.c.l.b16 %v211
      %v284 = vunpack.c.l.b16 %v212
      %v285 = vunpack.c.l.b16 %v213
      %v286 = vunpack.c.l.b16 %v214
      %v287 = vunpack.c.l.b16 %v215
      %v288 = vunpack.c.l.b16 %v216
      %v289 = vunpack.c.l.b16 %v217
      %v290 = vunpack.c.l.b16 %v218
      %v291 = vunpack.c.l.b16 %v219
      %v292 = vunpack.c.l.b16 %v220
      %v293 = vunpack.c.l.b16 %v221
      %v294 = vunpack.c.l.b16 %v222
      %v295 = vunpack.c.l.b16 %v223
      %v296 = vunpack.c.l.b16 %v224
      %v297 = vpack.c.b16 %v280, %v279
      %v298 = vpack.c.b16 %v282, %v281
      %v299 = vpack.c.b16 %v284, %v283
      %v300 = vpack.c.b16 %v286, %v285
      %v301 = vpack.c.b16 %v288, %v287
      %v302 = vpack.c.b16 %v290, %v289
      %v303 = vpack.c.b16 %v292, %v291
      %v304 = vpack.c.b16 %v294, %v293
      %v305 = vpack.c.b16 %v296, %v295
      %vm315 = vcmask 130048
      %v317 = vsel %vm315, %v250, 0
      %v320 = vsel %vm315, %v252, 0
      %v323 = vsel %vm315, %v254, 0
      %v326 = vsel %vm315, %v256, 0
      %328 = vmatpush.bf16.msra.mxu0 %v304
      %329 = vmatpush.bf16.msra.mxu0 %v303
      %330 = vmatpush.bf16.msra.mxu0 %v302
      %331 = vmatpush.bf16.msra.mxu0 %v301
      %332 = vmatpush.bf16.msra.mxu0 %v300
      %333 = vmatpush.bf16.msra.mxu0 %v299
      %334 = vmatpush.bf16.msra.mxu0 %v298
      %335 = vmatpush.bf16.msra.mxu0 %v297
      %336 = vmatmul.bf16.gmra.mxu0 %v249
      %v337 = vpop.f32.mrf.mxu0
      %v338 = vadd.f32 0.0, %v337
      %v339 = vpop.f32.mrf.mxu0
      %v340 = vadd.f32 0.0, %v339
      %341 = vmatmul.bf16.gmra.mxu0 %v251
      %v342 = vpop.f32.mrf.mxu0
      %v343 = vadd.f32 0.0, %v342
      %v344 = vpop.f32.mrf.mxu0
      %v345 = vadd.f32 0.0, %v344
      %346 = vmatmul.bf16.gmra.mxu0 %v253
      %v347 = vpop.f32.mrf.mxu0
      %v348 = vadd.f32 0.0, %v347
      %v349 = vpop.f32.mrf.mxu0
      %v350 = vadd.f32 0.0, %v349
      %351 = vmatmul.bf16.gmra.mxu0 %v255
      %v352 = vpop.f32.mrf.mxu0
      %v353 = vadd.f32 0.0, %v352
      %v354 = vpop.f32.mrf.mxu0
      %v355 = vadd.f32 0.0, %v354
      %356 = vdwg.mxu0
      %357 = vmatpush.bf16.msra.mxu0 0
      %358 = vmatpush.bf16.msra.mxu0 0
      %359 = vmatpush.bf16.msra.mxu0 0
      %360 = vmatpush.bf16.msra.mxu0 0
      %361 = vmatpush.bf16.msra.mxu0 0
      %362 = vmatpush.bf16.msra.mxu0 0
      %363 = vmatpush.bf16.msra.mxu0 0
      %364 = vmatpush.bf16.msra.mxu0 %v305
      %365 = vmatmul.bf16.gmra.mxu0 %v317
      %v366 = vpop.f32.mrf.mxu0
      %v367 = vadd.f32 %v338, %v366
      %v368 = vpop.f32.mrf.mxu0
      %v369 = vadd.f32 %v340, %v368
      %370 = vmatmul.bf16.gmra.mxu0 %v320
      %v371 = vpop.f32.mrf.mxu0
      %v372 = vadd.f32 %v343, %v371
      %v373 = vpop.f32.mrf.mxu0
      %v374 = vadd.f32 %v345, %v373
      %375 = vmatmul.bf16.gmra.mxu0 %v323
      %v376 = vpop.f32.mrf.mxu0
      %v377 = vadd.f32 %v348, %v376
      %v378 = vpop.f32.mrf.mxu0
      %v379 = vadd.f32 %v350, %v378
      %380 = vmatmul.bf16.gmra.mxu0 %v326
      %v381 = vpop.f32.mrf.mxu0
      %v382 = vadd.f32 %v353, %v381
      %v383 = vpop.f32.mrf.mxu0
      %v384 = vadd.f32 %v355, %v383
      %385 = vdwg.mxu0
      %v386 = vld [vmem:[%s2] sm:$0x1]
      %v387 = vld [vmem:[%s3] sm:$0x1]
      %v388 = vsel %vm315, %v367, 0.0
      %v389 = vsel %vm315, %v369, 0.0
      %v390 = vadd.f32 %v388, %v389
      %v391 = vsel %vm315, %v372, 0.0
      %v392 = vadd.f32 %v390, %v391
      %v393 = vsel %vm315, %v374, 0.0
      %v394 = vadd.f32 %v392, %v393
      %v395 = vsel %vm315, %v377, 0.0
      %v396 = vadd.f32 %v394, %v395
      %v397 = vsel %vm315, %v379, 0.0
      %v398 = vadd.f32 %v396, %v397
      %v399 = vsel %vm315, %v382, 0.0
      %v400 = vadd.f32 %v398, %v399
      %v401 = vsel %vm315, %v384, 0.0
      %v402 = vadd.f32 %v400, %v401
      %v403 = vrot.slane %v402, 4
      %v404 = vadd.f32 %v402, %v403
      %v405 = vrot.slane %v404, 2
      %v406 = vadd.f32 %v404, %v405
      %v407 = vrot.slane %v406, 1
      %v408 = vadd.f32 %v406, %v407
      %v409 = vrcp.pop 64.0
      %v410 = vmul.f32 64.0, %v409
      %v411 = vsub.f32 1.0, %v410
      %v412 = vmul.f32 %v409, %v411
      %v413 = vadd.f32 %v409, %v412
      %vm414 = vweird.f32 %v409
      %v415 = vsel %vm414, %v409, %v413
      %v416 = vmul.f32 %v408, %v415
      %v417 = vsub.f32 %v367, %v416
      %v418 = vsub.f32 %v369, %v416
      %v419 = vsub.f32 %v372, %v416
      %v420 = vsub.f32 %v374, %v416
      %v421 = vsub.f32 %v377, %v416
      %v422 = vsub.f32 %v379, %v416
      %v423 = vsub.f32 %v382, %v416
      %v424 = vsub.f32 %v384, %v416
      %v425 = vmul.f32 %v417, %v417
      %v426 = vmul.f32 %v418, %v418
      %v427 = vmul.f32 %v419, %v419
      %v428 = vmul.f32 %v420, %v420
      %v429 = vmul.f32 %v421, %v421
      %v430 = vmul.f32 %v422, %v422
      %v431 = vmul.f32 %v423, %v423
      %v432 = vmul.f32 %v424, %v424
      %v433 = vsel %vm315, %v425, 0.0
      %v434 = vsel %vm315, %v426, 0.0
      %v435 = vadd.f32 %v433, %v434
      %v436 = vsel %vm315, %v427, 0.0
      %v437 = vadd.f32 %v435, %v436
      %v438 = vsel %vm315, %v428, 0.0
      %v439 = vadd.f32 %v437, %v438
      %v440 = vsel %vm315, %v429, 0.0
      %v441 = vadd.f32 %v439, %v440
      %v442 = vsel %vm315, %v430, 0.0
      %v443 = vadd.f32 %v441, %v442
      %v444 = vsel %vm315, %v431, 0.0
      %v445 = vadd.f32 %v443, %v444
      %v446 = vsel %vm315, %v432, 0.0
      %v447 = vadd.f32 %v445, %v446
      %v448 = vrot.slane %v447, 4
      %v449 = vadd.f32 %v447, %v448
      %v450 = vrot.slane %v449, 2
      %v451 = vadd.f32 %v449, %v450
      %v452 = vrot.slane %v451, 1
      %v453 = vadd.f32 %v451, %v452
      %v454 = vmul.f32 %v453, %v415
      %v455 = vadd.f32 %v454, 1e-05
      %v456 = vrsqrt.pop %v455
      %v457 = vmul.f32 %v456, %v455
      %v458 = vmul.f32 %v457, %v456
      %v459 = vmul.f32 0.5, %v458
      %v460 = vsub.f32 1.5, %v459
      %v461 = vmul.f32 %v456, %v460
      %vm462 = vweird.f32 %v455
      %vm463 = vweird.f32 %v456
      %vm464 = vmor %vm462, %vm463
      %v465 = vsel %vm464, %v456, %v461
      %v466 = vmul.f32 %v417, %v465
      %v467 = vmul.f32 %v418, %v465
      %v468 = vmul.f32 %v419, %v465
      %v469 = vmul.f32 %v420, %v465
      %v470 = vmul.f32 %v421, %v465
      %v471 = vmul.f32 %v422, %v465
      %v472 = vmul.f32 %v423, %v465
      %v473 = vmul.f32 %v424, %v465
      %v475 = vperm.slane %v386, 0
      %v477 = vmul.f32 %v466, %v475
      %v478 = vmul.f32 %v467, %v475
      %v479 = vmul.f32 %v468, %v475
      %v480 = vmul.f32 %v469, %v475
      %v481 = vmul.f32 %v470, %v475
      %v482 = vmul.f32 %v471, %v475
      %v483 = vmul.f32 %v472, %v475
      %v484 = vmul.f32 %v473, %v475
      %v486 = vperm.slane %v387, 0
      %v488 = vadd.f32 %v477, %v486
      %v489 = vadd.f32 %v478, %v486
      %v490 = vadd.f32 %v479, %v486
      %v491 = vadd.f32 %v480, %v486
      %v492 = vadd.f32 %v481, %v486
      %v493 = vadd.f32 %v482, %v486
      %v494 = vadd.f32 %v483, %v486
      %v495 = vadd.f32 %v484, %v486
      %v496 = vmul.f32 %v488, 0.01
      %v497 = vmul.f32 %v489, 0.01
      %v498 = vmul.f32 %v490, 0.01
      %v499 = vmul.f32 %v491, 0.01
      %v500 = vmul.f32 %v492, 0.01
      %v501 = vmul.f32 %v493, 0.01
      %v502 = vmul.f32 %v494, 0.01
      %v503 = vmul.f32 %v495, 0.01
      %v504 = vmax.f32 %v488, %v496
      %v505 = vmax.f32 %v489, %v497
      %v506 = vmax.f32 %v490, %v498
      %v507 = vmax.f32 %v491, %v499
      %v508 = vmax.f32 %v492, %v500
      %v509 = vmax.f32 %v493, %v501
      %v510 = vmax.f32 %v494, %v502
      %v511 = vmax.f32 %v495, %v503
      %512 = vst.msk [vmem:[%s197] sm:$0xff] %vm315, %v504
      %513 = vst.msk [vmem:[%s197 + $0x8] sm:$0xff] %vm315, %v505
      %514 = vst.msk [vmem:[%s197 + $0x10] sm:$0xff] %vm315, %v506
      %515 = vst.msk [vmem:[%s197 + $0x18] sm:$0xff] %vm315, %v507
      %516 = vst.msk [vmem:[%s197 + $0x20] sm:$0xff] %vm315, %v508
      %517 = vst.msk [vmem:[%s197 + $0x28] sm:$0xff] %vm315, %v509
      %518 = vst.msk [vmem:[%s197 + $0x30] sm:$0xff] %vm315, %v510
      %519 = vst.msk [vmem:[%s197 + $0x38] sm:$0xff] %vm315, %v511
      %p520 = scmp.lt.s32.totalorder %s15, 1
      %s521 = scalar_select %p520, %s15, 1
      %s522 = smul.addr %s521, 8
      %s523 = smul.addr %s522, 8
      %s524 = scalar_lea.vmem %s4, %s523
      // Predicated region
      $region37: #{forward.19} parent=35 // pred_check
        %p525 = pneg %p122
      $region38: #{forward.19} parent=35 // pred_check_branch
        %527 = sbr.rel (%p525) target = $region40
      $region39: #{forward.19} parent=35 // pred_region
        _
      $region40: #{forward.19} parent=35 // pred_fallthru
        _
    $region36: #{forward.19} parent=5 // pred_fallthru
      _
    %p528 = scmp.le.s32.totalorder 2, %s10
    // Predicated region
    $region41: #{forward.19} parent=5 // pred_check
      %p529 = pneg %p528
    $region42: #{forward.19} parent=5 // pred_check_branch
      %531 = sbr.rel (%p529) target = $region44
    $region43: #{forward.19} parent=5 // pred_region
      %s532 = ssub.s32 %s10, 2
      // Predicated region
      $region45: #{forward.19} parent=43 // pred_check
        %p533 = pneg %p128
      $region46: #{forward.19} parent=43 // pred_check_branch
        %535 = sbr.rel (%p533) target = $region48
      $region47: #{forward.19} parent=43 // pred_region
        %p536 = scmp.lt.s32.totalorder %s16, 1
        %s537 = scalar_select %p536, %s16, 1
        %s538 = smul.addr %s537, 8
        %s539 = smul.addr %s538, 8
        %s540 = scalar_lea.vmem %s4, %s539
      $region48: #{forward.19} parent=43 // pred_fallthru
        _
    $region44: #{forward.19} parent=5 // pred_fallthru
      _
  $region6: #{forward.19} parent=0 // loop_footer
    %s14 = sadd.s32 1, %s10
  $region7: #{forward.19} parent=0 // loop_footer_branch
    %9 = sbr.rel target = $region3
  $region8: #{forward.19} parent=0 // loop_exit
    _

// kernel: forward.20
$region0: #{forward.20}
  #allocation0 [shape = 'u32[]', space=smem, size = 0x4, offset = 0x4, fixed_abs, tag = 'smem constant byte address 0x4 - core index']
  #allocation1 [shape = 'u32[72,128]{1,0:T(1,128)}', space=vmem, size = 0x9000, scoped, tag = 'internal scratch']
  %s0 = inlined_call_operand.vmem [shape: bf16[2,64,144], index: 0, kind: input, shape index: {}]
  %s1 = inlined_call_operand.vmem [shape: bf16[144,16], index: 1, kind: input, shape index: {}]
  %s2 = inlined_call_operand.vmem [shape: f32[1,16], index: 2, kind: input, shape index: {}]
  %s3 = inlined_call_operand.vmem [shape: f32[1,16], index: 3, kind: input, shape index: {}]
  %s4 = inlined_call_operand.vmem [shape: f32[2,64,16], index: 4, kind: input, shape index: {}]
  %s5 = inlined_call_operand.vmem [shape: f32[2,64,16], index: 5, kind: output, shape index: {}]
  %s6 = sld [smem:[#allocation0]]
  $region53: #{forward.20} parent=0
    _
  %s8 = ssub.s32 1, %s6
  %s9 = scalar_select 0, %s8, %s6
  loop: start=0, step=1, limit=4
  $region2: #{forward.20} parent=0 // loop_pre_header
    _
  $region3: #{forward.20} parent=0 // loop_header
    %s11 = sphi 0, %s15
    %p12 = scmp.ge.s32.totalorder %s11, 4
    %s21 = sphi 0, %s23
    %s24 = sphi 0, %s21
    %s25 = sphi 0, %s24
    %s41 = sphi 0, %s25
    %s45 = sphi 0, %s45
    %s47 = sphi 0, %s45
    %s48 = sphi 0, %s47
    %s62 = sphi 0, %s48
    %s66 = sphi 0, %s66
    %s68 = sphi 0, %s66
    %s69 = sphi 0, %s68
    %s83 = sphi 0, %s69
    %s87 = sphi 0, %s87
    %s89 = sphi 0, %s87
    %s90 = sphi 0, %s89
    %s104 = sphi 0, %s90
    %s110 = sphi 0, %s112
    %s113 = sphi 0, %s110
    %s114 = sphi 0, %s113
    %s130 = sphi 0, %s114
    %s136 = sphi 0, %s138
    %s139 = sphi 0, %s136
    %s140 = sphi 0, %s139
    %s156 = sphi 0, %s140
  $region4: #{forward.20} parent=0 // loop_header_branch
    %14 = sbr.rel (%p12) target = $region8
  $region5: #{forward.20} parent=0 // loop_body
    %s16 = ssub.s32 %s11, 1
    %s17 = ssub.s32 %s11, 2
    %s18 = sadd.s32 %s11, 1
    %s19 = ssub.s32 %s11, %s18
    %p20 = scmp.eq.s32.totalorder %s19, 0
    %s22 = sadd.s32 %s21, 1
    %s23 = scalar_select %p20, %s21, %s22
    %p26 = pneg %p20
    %p27 = scmp.eq.s32.totalorder %s11, 1
    %p28 = por %p26, %p27
    %p29 = scmp.ne.s32.totalorder %s21, %s24
    %p30 = scmp.eq.s32.totalorder %s11, 0
    %p31 = por %p29, %p30
    %p32 = scmp.ne.s32.totalorder %s21, %s24
    %p33 = scmp.eq.s32.totalorder %s16, 1
    %p34 = por %p32, %p33
    %p35 = scmp.ne.s32.totalorder %s24, %s25
    %p36 = scmp.eq.s32.totalorder %s16, 0
    %p37 = por %p35, %p36
    %p38 = scmp.ne.s32.totalorder %s24, %s25
    %p39 = scmp.eq.s32.totalorder %s17, 1
    %p40 = por %p38, %p39
    %p42 = scmp.ne.s32.totalorder %s25, %s41
    %p43 = scmp.eq.s32.totalorder %s17, 0
    %p44 = por %p42, %p43
    %s46 = sadd.s32 %s45, 1
    %p49 = scmp.eq.s32.totalorder %s11, 1
    %p50 = scmp.ne.s32.totalorder %s45, %s47
    %p51 = scmp.eq.s32.totalorder %s11, 0
    %p52 = por %p50, %p51
    %p53 = scmp.ne.s32.totalorder %s45, %s47
    %p54 = scmp.eq.s32.totalorder %s16, 1
    %p55 = por %p53, %p54
    %p56 = scmp.ne.s32.totalorder %s47, %s48
    %p57 = scmp.eq.s32.totalorder %s16, 0
    %p58 = por %p56, %p57
    %p59 = scmp.ne.s32.totalorder %s47, %s48
    %p60 = scmp.eq.s32.totalorder %s17, 1
    %p61 = por %p59, %p60
    %p63 = scmp.ne.s32.totalorder %s48, %s62
    %p64 = scmp.eq.s32.totalorder %s17, 0
    %p65 = por %p63, %p64
    %s67 = sadd.s32 %s66, 1
    %p70 = scmp.eq.s32.totalorder %s11, 1
    %p71 = scmp.ne.s32.totalorder %s66, %s68
    %p72 = scmp.eq.s32.totalorder %s11, 0
    %p73 = por %p71, %p72
    %p74 = scmp.ne.s32.totalorder %s66, %s68
    %p75 = scmp.eq.s32.totalorder %s16, 1
    %p76 = por %p74, %p75
    %p77 = scmp.ne.s32.totalorder %s68, %s69
    %p78 = scmp.eq.s32.totalorder %s16, 0
    %p79 = por %p77, %p78
    %p80 = scmp.ne.s32.totalorder %s68, %s69
    %p81 = scmp.eq.s32.totalorder %s17, 1
    %p82 = por %p80, %p81
    %p84 = scmp.ne.s32.totalorder %s69, %s83
    %p85 = scmp.eq.s32.totalorder %s17, 0
    %p86 = por %p84, %p85
    %s88 = sadd.s32 %s87, 1
    %p91 = scmp.eq.s32.totalorder %s11, 1
    %p92 = scmp.ne.s32.totalorder %s87, %s89
    %p93 = scmp.eq.s32.totalorder %s11, 0
    %p94 = por %p92, %p93
    %p95 = scmp.ne.s32.totalorder %s87, %s89
    %p96 = scmp.eq.s32.totalorder %s16, 1
    %p97 = por %p95, %p96
    %p98 = scmp.ne.s32.totalorder %s89, %s90
    %p99 = scmp.eq.s32.totalorder %s16, 0
    %p100 = por %p98, %p99
    %p101 = scmp.ne.s32.totalorder %s89, %s90
    %p102 = scmp.eq.s32.totalorder %s17, 1
    %p103 = por %p101, %p102
    %p105 = scmp.ne.s32.totalorder %s90, %s104
    %p106 = scmp.eq.s32.totalorder %s17, 0
    %p107 = por %p105, %p106
    %s108 = ssub.s32 %s11, %s18
    %p109 = scmp.eq.s32.totalorder %s108, 0
    %s111 = sadd.s32 %s110, 1
    %s112 = scalar_select %p109, %s110, %s111
    %p115 = pneg %p109
    %p116 = scmp.eq.s32.totalorder %s11, 1
    %p117 = por %p115, %p116
    %p118 = scmp.ne.s32.totalorder %s110, %s113
    %p119 = scmp.eq.s32.totalorder %s11, 0
    %p120 = por %p118, %p119
    %p121 = scmp.ne.s32.totalorder %s110, %s113
    %p122 = scmp.eq.s32.totalorder %s16, 1
    %p123 = por %p121, %p122
    %p124 = scmp.ne.s32.totalorder %s113, %s114
    %p125 = scmp.eq.s32.totalorder %s16, 0
    %p126 = por %p124, %p125
    %p127 = scmp.ne.s32.totalorder %s113, %s114
    %p128 = scmp.eq.s32.totalorder %s17, 1
    %p129 = por %p127, %p128
    %p131 = scmp.ne.s32.totalorder %s114, %s130
    %p132 = scmp.eq.s32.totalorder %s17, 0
    %p133 = por %p131, %p132
    %s134 = ssub.s32 %s11, %s18
    %p135 = scmp.eq.s32.totalorder %s134, 0
    %s137 = sadd.s32 %s136, 1
    %s138 = scalar_select %p135, %s136, %s137
    %p141 = pneg %p135
    %p142 = scmp.eq.s32.totalorder %s11, 1
    %p143 = por %p141, %p142
    %p144 = scmp.ne.s32.totalorder %s136, %s139
    %p145 = scmp.eq.s32.totalorder %s11, 0
    %p146 = por %p144, %p145
    %p147 = scmp.ne.s32.totalorder %s136, %s139
    %p148 = scmp.eq.s32.totalorder %s16, 1
    %p149 = por %p147, %p148
    %p150 = scmp.ne.s32.totalorder %s139, %s140
    %p151 = scmp.eq.s32.totalorder %s16, 0
    %p152 = por %p150, %p151
    %p153 = scmp.ne.s32.totalorder %s139, %s140
    %p154 = scmp.eq.s32.totalorder %s17, 1
    %p155 = por %p153, %p154
    %p157 = scmp.ne.s32.totalorder %s140, %s156
    %p158 = scmp.eq.s32.totalorder %s17, 0
    %p159 = por %p157, %p158
    %p160 = scmp.le.s32.totalorder 1, %s11
    %p161 = scmp.lt.s32.totalorder %s11, 3
    %p162 = pnand %p160, %p161
    %p163 = pneg %p162
    // Predicated region
    $region9: #{forward.20} parent=5 // pred_check
      _
    $region10: #{forward.20} parent=5 // pred_check_branch
      %165 = sbr.rel (%p162) target = $region12
    $region11: #{forward.20} parent=5 // pred_region
      %s166 = ssub.s32 %s11, 1
      // Predicated region
      $region13: #{forward.20} parent=11 // pred_check
        %p167 = pneg %p58
      $region14: #{forward.20} parent=11 // pred_check_branch
        %169 = sbr.rel (%p167) target = $region16
      $region15: #{forward.20} parent=11 // pred_region
        _
      $region16: #{forward.20} parent=11 // pred_fallthru
        _
      // Predicated region
      $region17: #{forward.20} parent=11 // pred_check
        %p170 = pneg %p79
      $region18: #{forward.20} parent=11 // pred_check_branch
        %172 = sbr.rel (%p170) target = $region20
      $region19: #{forward.20} parent=11 // pred_region
        _
      $region20: #{forward.20} parent=11 // pred_fallthru
        _
      // Predicated region
      $region21: #{forward.20} parent=11 // pred_check
        %p173 = pneg %p100
      $region22: #{forward.20} parent=11 // pred_check_branch
        %175 = sbr.rel (%p173) target = $region24
      $region23: #{forward.20} parent=11 // pred_region
        _
      $region24: #{forward.20} parent=11 // pred_fallthru
        _
    $region12: #{forward.20} parent=5 // pred_fallthru
      _
    %p176 = scmp.lt.s32.totalorder %s11, 2
    // Predicated region
    $region25: #{forward.20} parent=5 // pred_check
      %p177 = pneg %p176
    $region26: #{forward.20} parent=5 // pred_check_branch
      %179 = sbr.rel (%p177) target = $region28
    $region27: #{forward.20} parent=5 // pred_region
      // Predicated region
      $region29: #{forward.20} parent=27 // pred_check
        %p180 = pneg %p31
      $region30: #{forward.20} parent=27 // pred_check_branch
        %182 = sbr.rel (%p180) target = $region32
      $region31: #{forward.20} parent=27 // pred_region
        %p183 = scmp.lt.s32.totalorder %s11, 1
        %s184 = scalar_select %p183, %s11, 1
        %s185 = smul.addr %s184, 16
        %s186 = smul.addr %s185, 4
        %s187 = scalar_lea.vmem %s0, %s186
      $region32: #{forward.20} parent=27 // pred_fallthru
        _
      // Predicated region
      $region33: #{forward.20} parent=27 // pred_check
        %p188 = pneg %p120
      $region34: #{forward.20} parent=27 // pred_check_branch
        %190 = sbr.rel (%p188) target = $region36
      $region35: #{forward.20} parent=27 // pred_region
        %p191 = scmp.lt.s32.totalorder %s11, 1
        %s192 = scalar_select %p191, %s11, 1
        %s193 = smul.addr %s192, 8
        %s194 = smul.addr %s193, 8
        %s195 = scalar_lea.vmem %s4, %s194
      $region36: #{forward.20} parent=27 // pred_fallthru
        _
    $region28: #{forward.20} parent=5 // pred_fallthru
      _
    %p196 = scmp.le.s32.totalorder 1, %s11
    %p197 = scmp.lt.s32.totalorder %s11, 3
    %p198 = pnand %p196, %p197
    %p199 = pneg %p198
    // Predicated region
    $region37: #{forward.20} parent=5 // pred_check
      _
    $region38: #{forward.20} parent=5 // pred_check_branch
      %201 = sbr.rel (%p198) target = $region40
    $region39: #{forward.20} parent=5 // pred_region
      %s202 = ssub.s32 %s11, 1
      %p203 = scmp.lt.s32.totalorder %s16, 1
      %s204 = scalar_select %p203, %s16, 1
      %s205 = smul.addr %s204, 16
      %s206 = smul.addr %s205, 4
      %s207 = scalar_lea.vmem %s0, %s206
      %p208 = pneg %p37
      %p209 = pneg %p34
      %p210 = pneg %p58
      %p211 = pneg %p55
      %p212 = pneg %p79
      %p213 = pneg %p76
      %p214 = pneg %p100
      %p215 = pneg %p97
      %p216 = scmp.lt.s32.totalorder %s16, 1
      %s217 = scalar_select %p216, %s16, 1
      %s218 = smul.addr %s217, 8
      %s219 = smul.addr %s218, 8
      %s220 = scalar_lea.vmem %s4, %s219
      %p221 = pneg %p126
      %p222 = pneg %p123
      %p223 = pneg %p152
      %p224 = pneg %p149
      %p225 = scmp.lt.s32.totalorder %s16, 1
      %s226 = scalar_select %p225, %s16, 1
      %s227 = smul.addr %s226, 8
      %s228 = smul.addr %s227, 8
      %s229 = scalar_lea.vmem %s5, %s228
      %p230 = scmp.lt.s32.totalorder %s16, 1
      %s231 = scalar_select %p230, %s16, 1
      %s232 = smul.addr %s231, 16
      %s233 = smul.addr %s232, 4
      %s234 = scalar_lea.vmem %s0, %s233
      %p235 = scmp.lt.s32.totalorder %s16, 1
      %s236 = scalar_select %p235, %s16, 1
      %s237 = smul.addr %s236, 8
      %s238 = smul.addr %s237, 8
      %s239 = scalar_lea.vmem %s4, %s238
      %p240 = scmp.lt.s32.totalorder %s16, 1
      %s241 = scalar_select %p240, %s16, 1
      %s242 = smul.addr %s241, 8
      %s243 = smul.addr %s242, 8
      %s244 = scalar_lea.vmem %s5, %s243
      %v246 = vld [vmem:[%s234] sm:$0xff]
      %v247 = vld [vmem:[%s234 + $0x8] sm:$0xff]
      %v248 = vld [vmem:[%s234 + $0x10] sm:$0xff]
      %v249 = vld [vmem:[%s234 + $0x18] sm:$0xff]
      %v250 = vld [vmem:[%s234 + $0x20] sm:$0xff]
      %v251 = vld [vmem:[%s234 + $0x28] sm:$0xff]
      %v252 = vld [vmem:[%s234 + $0x30] sm:$0xff]
      %v253 = vld [vmem:[%s234 + $0x38] sm:$0xff]
      %v254 = vld [vmem:[%s1] sm:$0xf]
      %v255 = vld [vmem:[%s1 + $0x4] sm:$0xf]
      %v256 = vld [vmem:[%s1 + $0x8] sm:$0xf]
      %v257 = vld [vmem:[%s1 + $0xc] sm:$0xf]
      %v258 = vld [vmem:[%s1 + $0x10] sm:$0xf]
      %v259 = vld [vmem:[%s1 + $0x14] sm:$0xf]
      %v260 = vld [vmem:[%s1 + $0x18] sm:$0xf]
      %v261 = vld [vmem:[%s1 + $0x1c] sm:$0xf]
      %v262 = vld [vmem:[%s1 + $0x20] sm:$0xf]
      %v263 = vld [vmem:[%s1 + $0x24] sm:$0xf]
      %v264 = vld [vmem:[%s1 + $0x28] sm:$0xf]
      %v265 = vld [vmem:[%s1 + $0x2c] sm:$0xf]
      %v266 = vld [vmem:[%s1 + $0x30] sm:$0xf]
      %v267 = vld [vmem:[%s1 + $0x34] sm:$0xf]
      %v268 = vld [vmem:[%s1 + $0x38] sm:$0xf]
      %v269 = vld [vmem:[%s1 + $0x3c] sm:$0xf]
      %v270 = vld [vmem:[%s1 + $0x40] sm:$0xf]
      %v271 = vld [vmem:[%s1 + $0x44] sm:$0xf]
      %v280 = vunpack.c.l.b16 %v246
      %v281 = vunpack.c.h.b16 %v246
      %v282 = vunpack.c.l.b16 %v247
      %v283 = vunpack.c.h.b16 %v247
      %v284 = vunpack.c.l.b16 %v248
      %v285 = vunpack.c.h.b16 %v248
      %v286 = vunpack.c.l.b16 %v249
      %v287 = vunpack.c.h.b16 %v249
      %v288 = vunpack.c.l.b16 %v250
      %v289 = vunpack.c.h.b16 %v250
      %v290 = vunpack.c.l.b16 %v251
      %v291 = vunpack.c.h.b16 %v251
      %v292 = vunpack.c.l.b16 %v252
      %v293 = vunpack.c.h.b16 %v252
      %v294 = vunpack.c.l.b16 %v253
      %v295 = vunpack.c.h.b16 %v253
      %v296 = vpack.c.b16 %v282, %v280
      %v297 = vpack.c.b16 %v283, %v281
      %v298 = vpack.c.b16 %v286, %v284
      %v299 = vpack.c.b16 %v287, %v285
      %v300 = vpack.c.b16 %v290, %v288
      %v301 = vpack.c.b16 %v291, %v289
      %v302 = vpack.c.b16 %v294, %v292
      %v303 = vpack.c.b16 %v295, %v293
      %v326 = vunpack.c.l.b16 %v254
      %v327 = vunpack.c.l.b16 %v255
      %v328 = vunpack.c.l.b16 %v256
      %v329 = vunpack.c.l.b16 %v257
      %v330 = vunpack.c.l.b16 %v258
      %v331 = vunpack.c.l.b16 %v259
      %v332 = vunpack.c.l.b16 %v260
      %v333 = vunpack.c.l.b16 %v261
      %v334 = vunpack.c.l.b16 %v262
      %v335 = vunpack.c.l.b16 %v263
      %v336 = vunpack.c.l.b16 %v264
      %v337 = vunpack.c.l.b16 %v265
      %v338 = vunpack.c.l.b16 %v266
      %v339 = vunpack.c.l.b16 %v267
      %v340 = vunpack.c.l.b16 %v268
      %v341 = vunpack.c.l.b16 %v269
      %v342 = vunpack.c.l.b16 %v270
      %v343 = vunpack.c.l.b16 %v271
      %v344 = vpack.c.b16 %v327, %v326
      %v345 = vpack.c.b16 %v329, %v328
      %v346 = vpack.c.b16 %v331, %v330
      %v347 = vpack.c.b16 %v333, %v332
      %v348 = vpack.c.b16 %v335, %v334
      %v349 = vpack.c.b16 %v337, %v336
      %v350 = vpack.c.b16 %v339, %v338
      %v351 = vpack.c.b16 %v341, %v340
      %v352 = vpack.c.b16 %v343, %v342
      %vm362 = vcmask 130048
      %v364 = vsel %vm362, %v297, 0
      %v367 = vsel %vm362, %v299, 0
      %v370 = vsel %vm362, %v301, 0
      %v373 = vsel %vm362, %v303, 0
      %375 = vmatpush.bf16.msra.mxu0 %v351
      %376 = vmatpush.bf16.msra.mxu0 %v350
      %377 = vmatpush.bf16.msra.mxu0 %v349
      %378 = vmatpush.bf16.msra.mxu0 %v348
      %379 = vmatpush.bf16.msra.mxu0 %v347
      %380 = vmatpush.bf16.msra.mxu0 %v346
      %381 = vmatpush.bf16.msra.mxu0 %v345
      %382 = vmatpush.bf16.msra.mxu0 %v344
      %383 = vmatmul.bf16.gmra.mxu0 %v296
      %v384 = vpop.f32.mrf.mxu0
      %v385 = vadd.f32 0.0, %v384
      %v386 = vpop.f32.mrf.mxu0
      %v387 = vadd.f32 0.0, %v386
      %388 = vmatmul.bf16.gmra.mxu0 %v298
      %v389 = vpop.f32.mrf.mxu0
      %v390 = vadd.f32 0.0, %v389
      %v391 = vpop.f32.mrf.mxu0
      %v392 = vadd.f32 0.0, %v391
      %393 = vmatmul.bf16.gmra.mxu0 %v300
      %v394 = vpop.f32.mrf.mxu0
      %v395 = vadd.f32 0.0, %v394
      %v396 = vpop.f32.mrf.mxu0
      %v397 = vadd.f32 0.0, %v396
      %398 = vmatmul.bf16.gmra.mxu0 %v302
      %v399 = vpop.f32.mrf.mxu0
      %v400 = vadd.f32 0.0, %v399
      %v401 = vpop.f32.mrf.mxu0
      %v402 = vadd.f32 0.0, %v401
      %403 = vdwg.mxu0
      %404 = vmatpush.bf16.msra.mxu0 0
      %405 = vmatpush.bf16.msra.mxu0 0
      %406 = vmatpush.bf16.msra.mxu0 0
      %407 = vmatpush.bf16.msra.mxu0 0
      %408 = vmatpush.bf16.msra.mxu0 0
      %409 = vmatpush.bf16.msra.mxu0 0
      %410 = vmatpush.bf16.msra.mxu0 0
      %411 = vmatpush.bf16.msra.mxu0 %v352
      %412 = vmatmul.bf16.gmra.mxu0 %v364
      %v413 = vpop.f32.mrf.mxu0
      %v414 = vadd.f32 %v385, %v413
      %v415 = vpop.f32.mrf.mxu0
      %v416 = vadd.f32 %v387, %v415
      %417 = vmatmul.bf16.gmra.mxu0 %v367
      %v418 = vpop.f32.mrf.mxu0
      %v419 = vadd.f32 %v390, %v418
      %v420 = vpop.f32.mrf.mxu0
      %v421 = vadd.f32 %v392, %v420
      %422 = vmatmul.bf16.gmra.mxu0 %v370
      %v423 = vpop.f32.mrf.mxu0
      %v424 = vadd.f32 %v395, %v423
      %v425 = vpop.f32.mrf.mxu0
      %v426 = vadd.f32 %v397, %v425
      %427 = vmatmul.bf16.gmra.mxu0 %v373
      %v428 = vpop.f32.mrf.mxu0
      %v429 = vadd.f32 %v400, %v428
      %v430 = vpop.f32.mrf.mxu0
      %v431 = vadd.f32 %v402, %v430
      %432 = vdwg.mxu0
      %v433 = vld [vmem:[%s2] sm:$0x1]
      %v434 = vld [vmem:[%s3] sm:$0x1]
      %v435 = vsel %vm362, %v414, 0.0
      %v436 = vsel %vm362, %v416, 0.0
      %v437 = vadd.f32 %v435, %v436
      %v438 = vsel %vm362, %v419, 0.0
      %v439 = vadd.f32 %v437, %v438
      %v440 = vsel %vm362, %v421, 0.0
      %v441 = vadd.f32 %v439, %v440
      %v442 = vsel %vm362, %v424, 0.0
      %v443 = vadd.f32 %v441, %v442
      %v444 = vsel %vm362, %v426, 0.0
      %v445 = vadd.f32 %v443, %v444
      %v446 = vsel %vm362, %v429, 0.0
      %v447 = vadd.f32 %v445, %v446
      %v448 = vsel %vm362, %v431, 0.0
      %v449 = vadd.f32 %v447, %v448
      %v450 = vrot.slane %v449, 4
      %v451 = vadd.f32 %v449, %v450
      %v452 = vrot.slane %v451, 2
      %v453 = vadd.f32 %v451, %v452
      %v454 = vrot.slane %v453, 1
      %v455 = vadd.f32 %v453, %v454
      %v456 = vrcp.pop 64.0
      %v457 = vmul.f32 64.0, %v456
      %v458 = vsub.f32 1.0, %v457
      %v459 = vmul.f32 %v456, %v458
      %v460 = vadd.f32 %v456, %v459
      %vm461 = vweird.f32 %v456
      %v462 = vsel %vm461, %v456, %v460
      %v463 = vmul.f32 %v455, %v462
      %v464 = vsub.f32 %v414, %v463
      %v465 = vsub.f32 %v416, %v463
      %v466 = vsub.f32 %v419, %v463
      %v467 = vsub.f32 %v421, %v463
      %v468 = vsub.f32 %v424, %v463
      %v469 = vsub.f32 %v426, %v463
      %v470 = vsub.f32 %v429, %v463
      %v471 = vsub.f32 %v431, %v463
      %v472 = vmul.f32 %v464, %v464
      %v473 = vmul.f32 %v465, %v465
      %v474 = vmul.f32 %v466, %v466
      %v475 = vmul.f32 %v467, %v467
      %v476 = vmul.f32 %v468, %v468
      %v477 = vmul.f32 %v469, %v469
      %v478 = vmul.f32 %v470, %v470
      %v479 = vmul.f32 %v471, %v471
      %v480 = vsel %vm362, %v472, 0.0
      %v481 = vsel %vm362, %v473, 0.0
      %v482 = vadd.f32 %v480, %v481
      %v483 = vsel %vm362, %v474, 0.0
      %v484 = vadd.f32 %v482, %v483
      %v485 = vsel %vm362, %v475, 0.0
      %v486 = vadd.f32 %v484, %v485
      %v487 = vsel %vm362, %v476, 0.0
      %v488 = vadd.f32 %v486, %v487
      %v489 = vsel %vm362, %v477, 0.0
      %v490 = vadd.f32 %v488, %v489
      %v491 = vsel %vm362, %v478, 0.0
      %v492 = vadd.f32 %v490, %v491
      %v493 = vsel %vm362, %v479, 0.0
      %v494 = vadd.f32 %v492, %v493
      %v495 = vrot.slane %v494, 4
      %v496 = vadd.f32 %v494, %v495
      %v497 = vrot.slane %v496, 2
      %v498 = vadd.f32 %v496, %v497
      %v499 = vrot.slane %v498, 1
      %v500 = vadd.f32 %v498, %v499
      %v501 = vmul.f32 %v500, %v462
      %v502 = vadd.f32 %v501, 1e-05
      %v503 = vrsqrt.pop %v502
      %v504 = vmul.f32 %v503, %v502
      %v505 = vmul.f32 %v504, %v503
      %v506 = vmul.f32 0.5, %v505
      %v507 = vsub.f32 1.5, %v506
      %v508 = vmul.f32 %v503, %v507
      %vm509 = vweird.f32 %v502
      %vm510 = vweird.f32 %v503
      %vm511 = vmor %vm509, %vm510
      %v512 = vsel %vm511, %v503, %v508
      %v513 = vmul.f32 %v464, %v512
      %v514 = vmul.f32 %v465, %v512
      %v515 = vmul.f32 %v466, %v512
      %v516 = vmul.f32 %v467, %v512
      %v517 = vmul.f32 %v468, %v512
      %v518 = vmul.f32 %v469, %v512
      %v519 = vmul.f32 %v470, %v512
      %v520 = vmul.f32 %v471, %v512
      %v522 = vperm.slane %v433, 0
      %v524 = vmul.f32 %v513, %v522
      %v525 = vmul.f32 %v514, %v522
      %v526 = vmul.f32 %v515, %v522
      %v527 = vmul.f32 %v516, %v522
      %v528 = vmul.f32 %v517, %v522
      %v529 = vmul.f32 %v518, %v522
      %v530 = vmul.f32 %v519, %v522
      %v531 = vmul.f32 %v520, %v522
      %v533 = vperm.slane %v434, 0
      %v535 = vadd.f32 %v524, %v533
      %v536 = vadd.f32 %v525, %v533
      %v537 = vadd.f32 %v526, %v533
      %v538 = vadd.f32 %v527, %v533
      %v539 = vadd.f32 %v528, %v533
      %v540 = vadd.f32 %v529, %v533
      %v541 = vadd.f32 %v530, %v533
      %v542 = vadd.f32 %v531, %v533
      %v543 = vld [vmem:[%s239] sm:$0xff]
      %v544 = vld [vmem:[%s239 + $0x8] sm:$0xff]
      %v545 = vld [vmem:[%s239 + $0x10] sm:$0xff]
      %v546 = vld [vmem:[%s239 + $0x18] sm:$0xff]
      %v547 = vld [vmem:[%s239 + $0x20] sm:$0xff]
      %v548 = vld [vmem:[%s239 + $0x28] sm:$0xff]
      %v549 = vld [vmem:[%s239 + $0x30] sm:$0xff]
      %v550 = vld [vmem:[%s239 + $0x38] sm:$0xff]
      %v551 = vadd.f32 %v535, %v543
      %v552 = vadd.f32 %v536, %v544
      %v553 = vadd.f32 %v537, %v545
      %v554 = vadd.f32 %v538, %v546
      %v555 = vadd.f32 %v539, %v547
      %v556 = vadd.f32 %v540, %v548
      %v557 = vadd.f32 %v541, %v549
      %v558 = vadd.f32 %v542, %v550
      %v559 = vmul.f32 %v551, 0.01
      %v560 = vmul.f32 %v552, 0.01
      %v561 = vmul.f32 %v553, 0.01
      %v562 = vmul.f32 %v554, 0.01
      %v563 = vmul.f32 %v555, 0.01
      %v564 = vmul.f32 %v556, 0.01
      %v565 = vmul.f32 %v557, 0.01
      %v566 = vmul.f32 %v558, 0.01
      %v567 = vmax.f32 %v551, %v559
      %v568 = vmax.f32 %v552, %v560
      %v569 = vmax.f32 %v553, %v561
      %v570 = vmax.f32 %v554, %v562
      %v571 = vmax.f32 %v555, %v563
      %v572 = vmax.f32 %v556, %v564
      %v573 = vmax.f32 %v557, %v565
      %v574 = vmax.f32 %v558, %v566
      %575 = vst.msk [vmem:[%s244] sm:$0xff] %vm362, %v567
      %576 = vst.msk [vmem:[%s244 + $0x8] sm:$0xff] %vm362, %v568
      %577 = vst.msk [vmem:[%s244 + $0x10] sm:$0xff] %vm362, %v569
      %578 = vst.msk [vmem:[%s244 + $0x18] sm:$0xff] %vm362, %v570
      %579 = vst.msk [vmem:[%s244 + $0x20] sm:$0xff] %vm362, %v571
      %580 = vst.msk [vmem:[%s244 + $0x28] sm:$0xff] %vm362, %v572
      %581 = vst.msk [vmem:[%s244 + $0x30] sm:$0xff] %vm362, %v573
      %582 = vst.msk [vmem:[%s244 + $0x38] sm:$0xff] %vm362, %v574
      %p583 = scmp.lt.s32.totalorder %s16, 1
      %s584 = scalar_select %p583, %s16, 1
      %s585 = smul.addr %s584, 8
      %s586 = smul.addr %s585, 8
      %s587 = scalar_lea.vmem %s5, %s586
      // Predicated region
      $region41: #{forward.20} parent=39 // pred_check
        %p588 = pneg %p149
      $region42: #{forward.20} parent=39 // pred_check_branch
        %590 = sbr.rel (%p588) target = $region44
      $region43: #{forward.20} parent=39 // pred_region
        _
      $region44: #{forward.20} parent=39 // pred_fallthru
        _
    $region40: #{forward.20} parent=5 // pred_fallthru
      _
    %p591 = scmp.le.s32.totalorder 2, %s11
    // Predicated region
    $region45: #{forward.20} parent=5 // pred_check
      %p592 = pneg %p591
    $region46: #{forward.20} parent=5 // pred_check_branch
      %594 = sbr.rel (%p592) target = $region48
    $region47: #{forward.20} parent=5 // pred_region
      %s595 = ssub.s32 %s11, 2
      // Predicated region
      $region49: #{forward.20} parent=47 // pred_check
        %p596 = pneg %p155
      $region50: #{forward.20} parent=47 // pred_check_branch
        %598 = sbr.rel (%p596) target = $region52
      $region51: #{forward.20} parent=47 // pred_region
        %p599 = scmp.lt.s32.totalorder %s17, 1
        %s600 = scalar_select %p599, %s17, 1
        %s601 = smul.addr %s600, 8
        %s602 = smul.addr %s601, 8
        %s603 = scalar_lea.vmem %s5, %s602
      $region52: #{forward.20} parent=47 // pred_fallthru
        _
    $region48: #{forward.20} parent=5 // pred_fallthru
      _
  $region6: #{forward.20} parent=0 // loop_footer
    %s15 = sadd.s32 1, %s11
  $region7: #{forward.20} parent=0 // loop_footer_branch
    %10 = sbr.rel target = $region3
  $region8: #{forward.20} parent=0 // loop_exit
    _

// kernel: forward.21
$region0: #{forward.21}
  #allocation0 [shape = 'u32[]', space=smem, size = 0x4, offset = 0x4, fixed_abs, tag = 'smem constant byte address 0x4 - core index']
  #allocation1 [shape = 'u32[72,128]{1,0:T(1,128)}', space=vmem, size = 0x9000, scoped, tag = 'internal scratch']
  %s0 = inlined_call_operand.vmem [shape: bf16[2,16,144], index: 0, kind: input, shape index: {}]
  %s1 = inlined_call_operand.vmem [shape: bf16[144,32], index: 1, kind: input, shape index: {}]
  %s2 = inlined_call_operand.vmem [shape: f32[1,32], index: 2, kind: input, shape index: {}]
  %s3 = inlined_call_operand.vmem [shape: f32[1,32], index: 3, kind: input, shape index: {}]
  %s4 = inlined_call_operand.vmem [shape: f32[2,16,32], index: 4, kind: output, shape index: {}]
  %s5 = sld [smem:[#allocation0]]
  $region49: #{forward.21} parent=0
    _
  %s7 = ssub.s32 1, %s5
  %s8 = scalar_select 0, %s7, %s5
  loop: start=0, step=1, limit=4
  $region2: #{forward.21} parent=0 // loop_pre_header
    _
  $region3: #{forward.21} parent=0 // loop_header
    %s10 = sphi 0, %s14
    %p11 = scmp.ge.s32.totalorder %s10, 4
    %s20 = sphi 0, %s22
    %s23 = sphi 0, %s20
    %s24 = sphi 0, %s23
    %s40 = sphi 0, %s24
    %s44 = sphi 0, %s44
    %s46 = sphi 0, %s44
    %s47 = sphi 0, %s46
    %s61 = sphi 0, %s47
    %s65 = sphi 0, %s65
    %s67 = sphi 0, %s65
    %s68 = sphi 0, %s67
    %s82 = sphi 0, %s68
    %s86 = sphi 0, %s86
    %s88 = sphi 0, %s86
    %s89 = sphi 0, %s88
    %s103 = sphi 0, %s89
    %s109 = sphi 0, %s111
    %s112 = sphi 0, %s109
    %s113 = sphi 0, %s112
    %s129 = sphi 0, %s113
  $region4: #{forward.21} parent=0 // loop_header_branch
    %13 = sbr.rel (%p11) target = $region8
  $region5: #{forward.21} parent=0 // loop_body
    %s15 = ssub.s32 %s10, 1
    %s16 = ssub.s32 %s10, 2
    %s17 = sadd.s32 %s10, 1
    %s18 = ssub.s32 %s10, %s17
    %p19 = scmp.eq.s32.totalorder %s18, 0
    %s21 = sadd.s32 %s20, 1
    %s22 = scalar_select %p19, %s20, %s21
    %p25 = pneg %p19
    %p26 = scmp.eq.s32.totalorder %s10, 1
    %p27 = por %p25, %p26
    %p28 = scmp.ne.s32.totalorder %s20, %s23
    %p29 = scmp.eq.s32.totalorder %s10, 0
    %p30 = por %p28, %p29
    %p31 = scmp.ne.s32.totalorder %s20, %s23
    %p32 = scmp.eq.s32.totalorder %s15, 1
    %p33 = por %p31, %p32
    %p34 = scmp.ne.s32.totalorder %s23, %s24
    %p35 = scmp.eq.s32.totalorder %s15, 0
    %p36 = por %p34, %p35
    %p37 = scmp.ne.s32.totalorder %s23, %s24
    %p38 = scmp.eq.s32.totalorder %s16, 1
    %p39 = por %p37, %p38
    %p41 = scmp.ne.s32.totalorder %s24, %s40
    %p42 = scmp.eq.s32.totalorder %s16, 0
    %p43 = por %p41, %p42
    %s45 = sadd.s32 %s44, 1
    %p48 = scmp.eq.s32.totalorder %s10, 1
    %p49 = scmp.ne.s32.totalorder %s44, %s46
    %p50 = scmp.eq.s32.totalorder %s10, 0
    %p51 = por %p49, %p50
    %p52 = scmp.ne.s32.totalorder %s44, %s46
    %p53 = scmp.eq.s32.totalorder %s15, 1
    %p54 = por %p52, %p53
    %p55 = scmp.ne.s32.totalorder %s46, %s47
    %p56 = scmp.eq.s32.totalorder %s15, 0
    %p57 = por %p55, %p56
    %p58 = scmp.ne.s32.totalorder %s46, %s47
    %p59 = scmp.eq.s32.totalorder %s16, 1
    %p60 = por %p58, %p59
    %p62 = scmp.ne.s32.totalorder %s47, %s61
    %p63 = scmp.eq.s32.totalorder %s16, 0
    %p64 = por %p62, %p63
    %s66 = sadd.s32 %s65, 1
    %p69 = scmp.eq.s32.totalorder %s10, 1
    %p70 = scmp.ne.s32.totalorder %s65, %s67
    %p71 = scmp.eq.s32.totalorder %s10, 0
    %p72 = por %p70, %p71
    %p73 = scmp.ne.s32.totalorder %s65, %s67
    %p74 = scmp.eq.s32.totalorder %s15, 1
    %p75 = por %p73, %p74
    %p76 = scmp.ne.s32.totalorder %s67, %s68
    %p77 = scmp.eq.s32.totalorder %s15, 0
    %p78 = por %p76, %p77
    %p79 = scmp.ne.s32.totalorder %s67, %s68
    %p80 = scmp.eq.s32.totalorder %s16, 1
    %p81 = por %p79, %p80
    %p83 = scmp.ne.s32.totalorder %s68, %s82
    %p84 = scmp.eq.s32.totalorder %s16, 0
    %p85 = por %p83, %p84
    %s87 = sadd.s32 %s86, 1
    %p90 = scmp.eq.s32.totalorder %s10, 1
    %p91 = scmp.ne.s32.totalorder %s86, %s88
    %p92 = scmp.eq.s32.totalorder %s10, 0
    %p93 = por %p91, %p92
    %p94 = scmp.ne.s32.totalorder %s86, %s88
    %p95 = scmp.eq.s32.totalorder %s15, 1
    %p96 = por %p94, %p95
    %p97 = scmp.ne.s32.totalorder %s88, %s89
    %p98 = scmp.eq.s32.totalorder %s15, 0
    %p99 = por %p97, %p98
    %p100 = scmp.ne.s32.totalorder %s88, %s89
    %p101 = scmp.eq.s32.totalorder %s16, 1
    %p102 = por %p100, %p101
    %p104 = scmp.ne.s32.totalorder %s89, %s103
    %p105 = scmp.eq.s32.totalorder %s16, 0
    %p106 = por %p104, %p105
    %s107 = ssub.s32 %s10, %s17
    %p108 = scmp.eq.s32.totalorder %s107, 0
    %s110 = sadd.s32 %s109, 1
    %s111 = scalar_select %p108, %s109, %s110
    %p114 = pneg %p108
    %p115 = scmp.eq.s32.totalorder %s10, 1
    %p116 = por %p114, %p115
    %p117 = scmp.ne.s32.totalorder %s109, %s112
    %p118 = scmp.eq.s32.totalorder %s10, 0
    %p119 = por %p117, %p118
    %p120 = scmp.ne.s32.totalorder %s109, %s112
    %p121 = scmp.eq.s32.totalorder %s15, 1
    %p122 = por %p120, %p121
    %p123 = scmp.ne.s32.totalorder %s112, %s113
    %p124 = scmp.eq.s32.totalorder %s15, 0
    %p125 = por %p123, %p124
    %p126 = scmp.ne.s32.totalorder %s112, %s113
    %p127 = scmp.eq.s32.totalorder %s16, 1
    %p128 = por %p126, %p127
    %p130 = scmp.ne.s32.totalorder %s113, %s129
    %p131 = scmp.eq.s32.totalorder %s16, 0
    %p132 = por %p130, %p131
    %p133 = scmp.le.s32.totalorder 1, %s10
    %p134 = scmp.lt.s32.totalorder %s10, 3
    %p135 = pnand %p133, %p134
    %p136 = pneg %p135
    // Predicated region
    $region9: #{forward.21} parent=5 // pred_check
      _
    $region10: #{forward.21} parent=5 // pred_check_branch
      %138 = sbr.rel (%p135) target = $region12
    $region11: #{forward.21} parent=5 // pred_region
      %s139 = ssub.s32 %s10, 1
      // Predicated region
      $region13: #{forward.21} parent=11 // pred_check
        %p140 = pneg %p57
      $region14: #{forward.21} parent=11 // pred_check_branch
        %142 = sbr.rel (%p140) target = $region16
      $region15: #{forward.21} parent=11 // pred_region
        _
      $region16: #{forward.21} parent=11 // pred_fallthru
        _
      // Predicated region
      $region17: #{forward.21} parent=11 // pred_check
        %p143 = pneg %p78
      $region18: #{forward.21} parent=11 // pred_check_branch
        %145 = sbr.rel (%p143) target = $region20
      $region19: #{forward.21} parent=11 // pred_region
        _
      $region20: #{forward.21} parent=11 // pred_fallthru
        _
      // Predicated region
      $region21: #{forward.21} parent=11 // pred_check
        %p146 = pneg %p99
      $region22: #{forward.21} parent=11 // pred_check_branch
        %148 = sbr.rel (%p146) target = $region24
      $region23: #{forward.21} parent=11 // pred_region
        _
      $region24: #{forward.21} parent=11 // pred_fallthru
        _
    $region12: #{forward.21} parent=5 // pred_fallthru
      _
    %p149 = scmp.lt.s32.totalorder %s10, 2
    // Predicated region
    $region25: #{forward.21} parent=5 // pred_check
      %p150 = pneg %p149
    $region26: #{forward.21} parent=5 // pred_check_branch
      %152 = sbr.rel (%p150) target = $region28
    $region27: #{forward.21} parent=5 // pred_region
      // Predicated region
      $region29: #{forward.21} parent=27 // pred_check
        %p153 = pneg %p30
      $region30: #{forward.21} parent=27 // pred_check_branch
        %155 = sbr.rel (%p153) target = $region32
      $region31: #{forward.21} parent=27 // pred_region
        %p156 = scmp.lt.s32.totalorder %s10, 1
        %s157 = scalar_select %p156, %s10, 1
        %s158 = smul.addr %s157, 4
        %s159 = smul.addr %s158, 4
        %s160 = scalar_lea.vmem %s0, %s159
      $region32: #{forward.21} parent=27 // pred_fallthru
        _
    $region28: #{forward.21} parent=5 // pred_fallthru
      _
    %p161 = scmp.le.s32.totalorder 1, %s10
    %p162 = scmp.lt.s32.totalorder %s10, 3
    %p163 = pnand %p161, %p162
    %p164 = pneg %p163
    // Predicated region
    $region33: #{forward.21} parent=5 // pred_check
      _
    $region34: #{forward.21} parent=5 // pred_check_branch
      %166 = sbr.rel (%p163) target = $region36
    $region35: #{forward.21} parent=5 // pred_region
      %s167 = ssub.s32 %s10, 1
      %p168 = scmp.lt.s32.totalorder %s15, 1
      %s169 = scalar_select %p168, %s15, 1
      %s170 = smul.addr %s169, 4
      %s171 = smul.addr %s170, 4
      %s172 = scalar_lea.vmem %s0, %s171
      %p173 = pneg %p36
      %p174 = pneg %p33
      %p175 = pneg %p57
      %p176 = pneg %p54
      %p177 = pneg %p78
      %p178 = pneg %p75
      %p179 = pneg %p99
      %p180 = pneg %p96
      %p181 = pneg %p125
      %p182 = pneg %p122
      %p183 = scmp.lt.s32.totalorder %s15, 1
      %s184 = scalar_select %p183, %s15, 1
      %s185 = smul.addr %s184, 2
      %s186 = smul.addr %s185, 8
      %s187 = scalar_lea.vmem %s4, %s186
      %p188 = scmp.lt.s32.totalorder %s15, 1
      %s189 = scalar_select %p188, %s15, 1
      %s190 = smul.addr %s189, 4
      %s191 = smul.addr %s190, 4
      %s192 = scalar_lea.vmem %s0, %s191
      %p193 = scmp.lt.s32.totalorder %s15, 1
      %s194 = scalar_select %p193, %s15, 1
      %s195 = smul.addr %s194, 2
      %s196 = smul.addr %s195, 8
      %s197 = scalar_lea.vmem %s4, %s196
      %v199 = vld [vmem:[%s192] sm:$0xff]
      %v200 = vld [vmem:[%s192 + $0x8] sm:$0xff]
      %v201 = vld [vmem:[%s1] sm:$0xf]
      %v202 = vld [vmem:[%s1 + $0x4] sm:$0xf]
      %v203 = vld [vmem:[%s1 + $0x8] sm:$0xf]
      %v204 = vld [vmem:[%s1 + $0xc] sm:$0xf]
      %v205 = vld [vmem:[%s1 + $0x10] sm:$0xf]
      %v206 = vld [vmem:[%s1 + $0x14] sm:$0xf]
      %v207 = vld [vmem:[%s1 + $0x18] sm:$0xf]
      %v208 = vld [vmem:[%s1 + $0x1c] sm:$0xf]
      %v209 = vld [vmem:[%s1 + $0x20] sm:$0xf]
      %v210 = vld [vmem:[%s1 + $0x24] sm:$0xf]
      %v211 = vld [vmem:[%s1 + $0x28] sm:$0xf]
      %v212 = vld [vmem:[%s1 + $0x2c] sm:$0xf]
      %v213 = vld [vmem:[%s1 + $0x30] sm:$0xf]
      %v214 = vld [vmem:[%s1 + $0x34] sm:$0xf]
      %v215 = vld [vmem:[%s1 + $0x38] sm:$0xf]
      %v216 = vld [vmem:[%s1 + $0x3c] sm:$0xf]
      %v217 = vld [vmem:[%s1 + $0x40] sm:$0xf]
      %v218 = vld [vmem:[%s1 + $0x44] sm:$0xf]
      %v221 = vunpack.c.l.b16 %v199
      %v222 = vunpack.c.h.b16 %v199
      %v223 = vunpack.c.l.b16 %v200
      %v224 = vunpack.c.h.b16 %v200
      %v225 = vpack.c.b16 %v223, %v221
      %v226 = vpack.c.b16 %v224, %v222
      %v246 = vunpack.c.l.b16 %v201
      %v247 = vunpack.c.l.b16 %v202
      %v248 = vunpack.c.l.b16 %v203
      %v249 = vunpack.c.l.b16 %v204
      %v250 = vunpack.c.l.b16 %v205
      %v251 = vunpack.c.l.b16 %v206
      %v252 = vunpack.c.l.b16 %v207
      %v253 = vunpack.c.l.b16 %v208
      %v254 = vunpack.c.l.b16 %v209
      %v255 = vunpack.c.l.b16 %v210
      %v256 = vunpack.c.l.b16 %v211
      %v257 = vunpack.c.l.b16 %v212
      %v258 = vunpack.c.l.b16 %v213
      %v259 = vunpack.c.l.b16 %v214
      %v260 = vunpack.c.l.b16 %v215
      %v261 = vunpack.c.l.b16 %v216
      %v262 = vunpack.c.l.b16 %v217
      %v263 = vunpack.c.l.b16 %v218
      %v264 = vpack.c.b16 %v247, %v246
      %v265 = vpack.c.b16 %v249, %v248
      %v266 = vpack.c.b16 %v251, %v250
      %v267 = vpack.c.b16 %v253, %v252
      %v268 = vpack.c.b16 %v255, %v254
      %v269 = vpack.c.b16 %v257, %v256
      %v270 = vpack.c.b16 %v259, %v258
      %v271 = vpack.c.b16 %v261, %v260
      %v272 = vpack.c.b16 %v263, %v262
      %vm282 = vcmask 130048
      %v284 = vsel %vm282, %v226, 0
      %286 = vmatpush.bf16.msra.mxu0 %v271
      %287 = vmatpush.bf16.msra.mxu0 %v270
      %288 = vmatpush.bf16.msra.mxu0 %v269
      %289 = vmatpush.bf16.msra.mxu0 %v268
      %290 = vmatpush.bf16.msra.mxu0 %v267
      %291 = vmatpush.bf16.msra.mxu0 %v266
      %292 = vmatpush.bf16.msra.mxu0 %v265
      %293 = vmatpush.bf16.msra.mxu0 %v264
      %294 = vmatmul.bf16.gmra.mxu0 %v225
      %v295 = vpop.f32.mrf.mxu0
      %v296 = vadd.f32 0.0, %v295
      %v297 = vpop.f32.mrf.mxu0
      %v298 = vadd.f32 0.0, %v297
      %299 = vdwg.mxu0
      %300 = vmatpush.bf16.msra.mxu0 0
      %301 = vmatpush.bf16.msra.mxu0 0
      %302 = vmatpush.bf16.msra.mxu0 0
      %303 = vmatpush.bf16.msra.mxu0 0
      %304 = vmatpush.bf16.msra.mxu0 0
      %305 = vmatpush.bf16.msra.mxu0 0
      %306 = vmatpush.bf16.msra.mxu0 0
      %307 = vmatpush.bf16.msra.mxu0 %v272
      %308 = vmatmul.bf16.gmra.mxu0 %v284
      %v309 = vpop.f32.mrf.mxu0
      %v310 = vadd.f32 %v296, %v309
      %v311 = vpop.f32.mrf.mxu0
      %v312 = vadd.f32 %v298, %v311
      %313 = vdwg.mxu0
      %v314 = vld [vmem:[%s2] sm:$0x1]
      %v315 = vld [vmem:[%s3] sm:$0x1]
      %vm316 = vcmask 261120
      %v317 = vsel %vm316, %v310, 0.0
      %v318 = vsel %vm316, %v312, 0.0
      %v319 = vadd.f32 %v317, %v318
      %v320 = vrot.slane %v319, 4
      %v321 = vadd.f32 %v319, %v320
      %v322 = vrot.slane %v321, 2
      %v323 = vadd.f32 %v321, %v322
      %v324 = vrot.slane %v323, 1
      %v325 = vadd.f32 %v323, %v324
      %v326 = vrcp.pop 16.0
      %v327 = vmul.f32 16.0, %v326
      %v328 = vsub.f32 1.0, %v327
      %v329 = vmul.f32 %v326, %v328
      %v330 = vadd.f32 %v326, %v329
      %vm331 = vweird.f32 %v326
      %v332 = vsel %vm331, %v326, %v330
      %v333 = vmul.f32 %v325, %v332
      %v334 = vsub.f32 %v310, %v333
      %v335 = vsub.f32 %v312, %v333
      %v336 = vmul.f32 %v334, %v334
      %v337 = vmul.f32 %v335, %v335
      %v338 = vsel %vm316, %v336, 0.0
      %v339 = vsel %vm316, %v337, 0.0
      %v340 = vadd.f32 %v338, %v339
      %v341 = vrot.slane %v340, 4
      %v342 = vadd.f32 %v340, %v341
      %v343 = vrot.slane %v342, 2
      %v344 = vadd.f32 %v342, %v343
      %v345 = vrot.slane %v344, 1
      %v346 = vadd.f32 %v344, %v345
      %v347 = vmul.f32 %v346, %v332
      %v348 = vadd.f32 %v347, 1e-05
      %v349 = vrsqrt.pop %v348
      %v350 = vmul.f32 %v349, %v348
      %v351 = vmul.f32 %v350, %v349
      %v352 = vmul.f32 0.5, %v351
      %v353 = vsub.f32 1.5, %v352
      %v354 = vmul.f32 %v349, %v353
      %vm355 = vweird.f32 %v348
      %vm356 = vweird.f32 %v349
      %vm357 = vmor %vm355, %vm356
      %v358 = vsel %vm357, %v349, %v354
      %v359 = vmul.f32 %v334, %v358
      %v360 = vmul.f32 %v335, %v358
      %v362 = vperm.slane %v314, 0
      %v364 = vmul.f32 %v359, %v362
      %v365 = vmul.f32 %v360, %v362
      %v367 = vperm.slane %v315, 0
      %v369 = vadd.f32 %v364, %v367
      %v370 = vadd.f32 %v365, %v367
      %v371 = vmul.f32 %v369, 0.01
      %v372 = vmul.f32 %v370, 0.01
      %v373 = vmax.f32 %v369, %v371
      %v374 = vmax.f32 %v370, %v372
      %375 = vst.msk [vmem:[%s197] sm:$0xff] %vm316, %v373
      %376 = vst.msk [vmem:[%s197 + $0x8] sm:$0xff] %vm316, %v374
      %p377 = scmp.lt.s32.totalorder %s15, 1
      %s378 = scalar_select %p377, %s15, 1
      %s379 = smul.addr %s378, 2
      %s380 = smul.addr %s379, 8
      %s381 = scalar_lea.vmem %s4, %s380
      // Predicated region
      $region37: #{forward.21} parent=35 // pred_check
        %p382 = pneg %p122
      $region38: #{forward.21} parent=35 // pred_check_branch
        %384 = sbr.rel (%p382) target = $region40
      $region39: #{forward.21} parent=35 // pred_region
        _
      $region40: #{forward.21} parent=35 // pred_fallthru
        _
    $region36: #{forward.21} parent=5 // pred_fallthru
      _
    %p385 = scmp.le.s32.totalorder 2, %s10
    // Predicated region
    $region41: #{forward.21} parent=5 // pred_check
      %p386 = pneg %p385
    $region42: #{forward.21} parent=5 // pred_check_branch
      %388 = sbr.rel (%p386) target = $region44
    $region43: #{forward.21} parent=5 // pred_region
      %s389 = ssub.s32 %s10, 2
      // Predicated region
      $region45: #{forward.21} parent=43 // pred_check
        %p390 = pneg %p128
      $region46: #{forward.21} parent=43 // pred_check_branch
        %392 = sbr.rel (%p390) target = $region48
      $region47: #{forward.21} parent=43 // pred_region
        %p393 = scmp.lt.s32.totalorder %s16, 1
        %s394 = scalar_select %p393, %s16, 1
        %s395 = smul.addr %s394, 2
        %s396 = smul.addr %s395, 8
        %s397 = scalar_lea.vmem %s4, %s396
      $region48: #{forward.21} parent=43 // pred_fallthru
        _
    $region44: #{forward.21} parent=5 // pred_fallthru
      _
  $region6: #{forward.21} parent=0 // loop_footer
    %s14 = sadd.s32 1, %s10
  $region7: #{forward.21} parent=0 // loop_footer_branch
    %9 = sbr.rel target = $region3
  $region8: #{forward.21} parent=0 // loop_exit
    _

// kernel: forward.23
$region0: #{forward.23}
  #allocation0 [shape = 'u32[]', space=smem, size = 0x4, offset = 0x4, fixed_abs, tag = 'smem constant byte address 0x4 - core index']
  #allocation1 [shape = 'u32[72,128]{1,0:T(1,128)}', space=vmem, size = 0x9000, scoped, tag = 'internal scratch']
  %s0 = inlined_call_operand.vmem [shape: bf16[2,16,32], index: 0, kind: input, shape index: {}]
  %s1 = inlined_call_operand.vmem [shape: bf16[32,64], index: 1, kind: input, shape index: {}]
  %s2 = inlined_call_operand.vmem [shape: f32[2,16,64], index: 2, kind: output, shape index: {}]
  %s3 = sld [smem:[#allocation0]]
  $region41: #{forward.23} parent=0
    _
  %s5 = ssub.s32 1, %s3
  %s6 = scalar_select 0, %s5, %s3
  loop: start=0, step=1, limit=4
  $region2: #{forward.23} parent=0 // loop_pre_header
    _
  $region3: #{forward.23} parent=0 // loop_header
    %s8 = sphi 0, %s12
    %p9 = scmp.ge.s32.totalorder %s8, 4
    %s18 = sphi 0, %s20
    %s21 = sphi 0, %s18
    %s22 = sphi 0, %s21
    %s38 = sphi 0, %s22
    %s42 = sphi 0, %s42
    %s44 = sphi 0, %s42
    %s45 = sphi 0, %s44
    %s59 = sphi 0, %s45
    %s65 = sphi 0, %s67
    %s68 = sphi 0, %s65
    %s69 = sphi 0, %s68
    %s85 = sphi 0, %s69
  $region4: #{forward.23} parent=0 // loop_header_branch
    %11 = sbr.rel (%p9) target = $region8
  $region5: #{forward.23} parent=0 // loop_body
    %s13 = ssub.s32 %s8, 1
    %s14 = ssub.s32 %s8, 2
    %s15 = sadd.s32 %s8, 1
    %s16 = ssub.s32 %s8, %s15
    %p17 = scmp.eq.s32.totalorder %s16, 0
    %s19 = sadd.s32 %s18, 1
    %s20 = scalar_select %p17, %s18, %s19
    %p23 = pneg %p17
    %p24 = scmp.eq.s32.totalorder %s8, 1
    %p25 = por %p23, %p24
    %p26 = scmp.ne.s32.totalorder %s18, %s21
    %p27 = scmp.eq.s32.totalorder %s8, 0
    %p28 = por %p26, %p27
    %p29 = scmp.ne.s32.totalorder %s18, %s21
    %p30 = scmp.eq.s32.totalorder %s13, 1
    %p31 = por %p29, %p30
    %p32 = scmp.ne.s32.totalorder %s21, %s22
    %p33 = scmp.eq.s32.totalorder %s13, 0
    %p34 = por %p32, %p33
    %p35 = scmp.ne.s32.totalorder %s21, %s22
    %p36 = scmp.eq.s32.totalorder %s14, 1
    %p37 = por %p35, %p36
    %p39 = scmp.ne.s32.totalorder %s22, %s38
    %p40 = scmp.eq.s32.totalorder %s14, 0
    %p41 = por %p39, %p40
    %s43 = sadd.s32 %s42, 1
    %p46 = scmp.eq.s32.totalorder %s8, 1
    %p47 = scmp.ne.s32.totalorder %s42, %s44
    %p48 = scmp.eq.s32.totalorder %s8, 0
    %p49 = por %p47, %p48
    %p50 = scmp.ne.s32.totalorder %s42, %s44
    %p51 = scmp.eq.s32.totalorder %s13, 1
    %p52 = por %p50, %p51
    %p53 = scmp.ne.s32.totalorder %s44, %s45
    %p54 = scmp.eq.s32.totalorder %s13, 0
    %p55 = por %p53, %p54
    %p56 = scmp.ne.s32.totalorder %s44, %s45
    %p57 = scmp.eq.s32.totalorder %s14, 1
    %p58 = por %p56, %p57
    %p60 = scmp.ne.s32.totalorder %s45, %s59
    %p61 = scmp.eq.s32.totalorder %s14, 0
    %p62 = por %p60, %p61
    %s63 = ssub.s32 %s8, %s15
    %p64 = scmp.eq.s32.totalorder %s63, 0
    %s66 = sadd.s32 %s65, 1
    %s67 = scalar_select %p64, %s65, %s66
    %p70 = pneg %p64
    %p71 = scmp.eq.s32.totalorder %s8, 1
    %p72 = por %p70, %p71
    %p73 = scmp.ne.s32.totalorder %s65, %s68
    %p74 = scmp.eq.s32.totalorder %s8, 0
    %p75 = por %p73, %p74
    %p76 = scmp.ne.s32.totalorder %s65, %s68
    %p77 = scmp.eq.s32.totalorder %s13, 1
    %p78 = por %p76, %p77
    %p79 = scmp.ne.s32.totalorder %s68, %s69
    %p80 = scmp.eq.s32.totalorder %s13, 0
    %p81 = por %p79, %p80
    %p82 = scmp.ne.s32.totalorder %s68, %s69
    %p83 = scmp.eq.s32.totalorder %s14, 1
    %p84 = por %p82, %p83
    %p86 = scmp.ne.s32.totalorder %s69, %s85
    %p87 = scmp.eq.s32.totalorder %s14, 0
    %p88 = por %p86, %p87
    %p89 = scmp.le.s32.totalorder 1, %s8
    %p90 = scmp.lt.s32.totalorder %s8, 3
    %p91 = pnand %p89, %p90
    %p92 = pneg %p91
    // Predicated region
    $region9: #{forward.23} parent=5 // pred_check
      _
    $region10: #{forward.23} parent=5 // pred_check_branch
      %94 = sbr.rel (%p91) target = $region12
    $region11: #{forward.23} parent=5 // pred_region
      %s95 = ssub.s32 %s8, 1
      // Predicated region
      $region13: #{forward.23} parent=11 // pred_check
        %p96 = pneg %p55
      $region14: #{forward.23} parent=11 // pred_check_branch
        %98 = sbr.rel (%p96) target = $region16
      $region15: #{forward.23} parent=11 // pred_region
        _
      $region16: #{forward.23} parent=11 // pred_fallthru
        _
    $region12: #{forward.23} parent=5 // pred_fallthru
      _
    %p99 = scmp.lt.s32.totalorder %s8, 2
    // Predicated region
    $region17: #{forward.23} parent=5 // pred_check
      %p100 = pneg %p99
    $region18: #{forward.23} parent=5 // pred_check_branch
      %102 = sbr.rel (%p100) target = $region20
    $region19: #{forward.23} parent=5 // pred_region
      // Predicated region
      $region21: #{forward.23} parent=19 // pred_check
        %p103 = pneg %p28
      $region22: #{forward.23} parent=19 // pred_check_branch
        %105 = sbr.rel (%p103) target = $region24
      $region23: #{forward.23} parent=19 // pred_region
        %p106 = scmp.lt.s32.totalorder %s8, 1
        %s107 = scalar_select %p106, %s8, 1
        %s108 = smul.addr %s107, 2
        %s109 = smul.addr %s108, 4
        %s110 = scalar_lea.vmem %s0, %s109
      $region24: #{forward.23} parent=19 // pred_fallthru
        _
    $region20: #{forward.23} parent=5 // pred_fallthru
      _
    %p111 = scmp.le.s32.totalorder 1, %s8
    %p112 = scmp.lt.s32.totalorder %s8, 3
    %p113 = pnand %p111, %p112
    %p114 = pneg %p113
    // Predicated region
    $region25: #{forward.23} parent=5 // pred_check
      _
    $region26: #{forward.23} parent=5 // pred_check_branch
      %116 = sbr.rel (%p113) target = $region28
    $region27: #{forward.23} parent=5 // pred_region
      %s117 = ssub.s32 %s8, 1
      %p118 = scmp.lt.s32.totalorder %s13, 1
      %s119 = scalar_select %p118, %s13, 1
      %s120 = smul.addr %s119, 2
      %s121 = smul.addr %s120, 4
      %s122 = scalar_lea.vmem %s0, %s121
      %p123 = pneg %p34
      %p124 = pneg %p31
      %p125 = pneg %p55
      %p126 = pneg %p52
      %p127 = pneg %p81
      %p128 = pneg %p78
      %p129 = scmp.lt.s32.totalorder %s13, 1
      %s130 = scalar_select %p129, %s13, 1
      %s131 = smul.addr %s130, 2
      %s132 = smul.addr %s131, 8
      %s133 = scalar_lea.vmem %s2, %s132
      %p134 = scmp.lt.s32.totalorder %s13, 1
      %s135 = scalar_select %p134, %s13, 1
      %s136 = smul.addr %s135, 2
      %s137 = smul.addr %s136, 4
      %s138 = scalar_lea.vmem %s0, %s137
      %p139 = scmp.lt.s32.totalorder %s13, 1
      %s140 = scalar_select %p139, %s13, 1
      %s141 = smul.addr %s140, 2
      %s142 = smul.addr %s141, 8
      %s143 = scalar_lea.vmem %s2, %s142
      %v145 = vld [vmem:[%s138] sm:$0xf]
      %v146 = vld [vmem:[%s138 + $0x4] sm:$0xf]
      %v147 = vld [vmem:[%s1] sm:$0xf]
      %v148 = vld [vmem:[%s1 + $0x4] sm:$0xf]
      %v149 = vld [vmem:[%s1 + $0x8] sm:$0xf]
      %v150 = vld [vmem:[%s1 + $0xc] sm:$0xf]
      %v153 = vunpack.c.l.b16 %v145
      %v154 = vunpack.c.l.b16 %v146
      %v155 = vpack.c.b16 %v154, %v153
      %v160 = vunpack.c.l.b16 %v147
      %v161 = vunpack.c.l.b16 %v148
      %v162 = vunpack.c.l.b16 %v149
      %v163 = vunpack.c.l.b16 %v150
      %v164 = vpack.c.b16 %v161, %v160
      %v165 = vpack.c.b16 %v163, %v162
      %vm168 = vcmask 261120
      %v170 = vsel %vm168, %v155, 0
      %172 = vmatpush.bf16.msra.mxu0 0
      %173 = vmatpush.bf16.msra.mxu0 0
      %174 = vmatpush.bf16.msra.mxu0 0
      %175 = vmatpush.bf16.msra.mxu0 0
      %176 = vmatpush.bf16.msra.mxu0 0
      %177 = vmatpush.bf16.msra.mxu0 0
      %178 = vmatpush.bf16.msra.mxu0 %v165
      %179 = vmatpush.bf16.msra.mxu0 %v164
      %180 = vmatmul.bf16.gmra.mxu0 %v170
      %v181 = vpop.f32.mrf.mxu0
      %v182 = vadd.f32 0.0, %v181
      %v183 = vpop.f32.mrf.mxu0
      %v184 = vadd.f32 0.0, %v183
      %185 = vdwg.mxu0
      %vm186 = vcmask 523264
      %187 = vst.msk [vmem:[%s143] sm:$0xff] %vm186, %v182
      %188 = vst.msk [vmem:[%s143 + $0x8] sm:$0xff] %vm186, %v184
      %p189 = scmp.lt.s32.totalorder %s13, 1
      %s190 = scalar_select %p189, %s13, 1
      %s191 = smul.addr %s190, 2
      %s192 = smul.addr %s191, 8
      %s193 = scalar_lea.vmem %s2, %s192
      // Predicated region
      $region29: #{forward.23} parent=27 // pred_check
        %p194 = pneg %p78
      $region30: #{forward.23} parent=27 // pred_check_branch
        %196 = sbr.rel (%p194) target = $region32
      $region31: #{forward.23} parent=27 // pred_region
        _
      $region32: #{forward.23} parent=27 // pred_fallthru
        _
    $region28: #{forward.23} parent=5 // pred_fallthru
      _
    %p197 = scmp.le.s32.totalorder 2, %s8
    // Predicated region
    $region33: #{forward.23} parent=5 // pred_check
      %p198 = pneg %p197
    $region34: #{forward.23} parent=5 // pred_check_branch
      %200 = sbr.rel (%p198) target = $region36
    $region35: #{forward.23} parent=5 // pred_region
      %s201 = ssub.s32 %s8, 2
      // Predicated region
      $region37: #{forward.23} parent=35 // pred_check
        %p202 = pneg %p84
      $region38: #{forward.23} parent=35 // pred_check_branch
        %204 = sbr.rel (%p202) target = $region40
      $region39: #{forward.23} parent=35 // pred_region
        %p205 = scmp.lt.s32.totalorder %s14, 1
        %s206 = scalar_select %p205, %s14, 1
        %s207 = smul.addr %s206, 2
        %s208 = smul.addr %s207, 8
        %s209 = scalar_lea.vmem %s2, %s208
      $region40: #{forward.23} parent=35 // pred_fallthru
        _
    $region36: #{forward.23} parent=5 // pred_fallthru
      _
  $region6: #{forward.23} parent=0 // loop_footer
    %s12 = sadd.s32 1, %s8
  $region7: #{forward.23} parent=0 // loop_footer_branch
    %7 = sbr.rel target = $region3
  $region8: #{forward.23} parent=0 // loop_exit
    _

// kernel: forward.22
$region0: #{forward.22}
  #allocation0 [shape = 'u32[]', space=smem, size = 0x4, offset = 0x4, fixed_abs, tag = 'smem constant byte address 0x4 - core index']
  #allocation1 [shape = 'u32[72,128]{1,0:T(1,128)}', space=vmem, size = 0x9000, scoped, tag = 'internal scratch']
  %s0 = inlined_call_operand.vmem [shape: bf16[2,16,288], index: 0, kind: input, shape index: {}]
  %s1 = inlined_call_operand.vmem [shape: bf16[288,32], index: 1, kind: input, shape index: {}]
  %s2 = inlined_call_operand.vmem [shape: f32[1,32], index: 2, kind: input, shape index: {}]
  %s3 = inlined_call_operand.vmem [shape: f32[1,32], index: 3, kind: input, shape index: {}]
  %s4 = inlined_call_operand.vmem [shape: bf16[2,16,16], index: 4, kind: input, shape index: {}]
  %s5 = inlined_call_operand.vmem [shape: bf16[16,32], index: 5, kind: input, shape index: {}]
  %s6 = inlined_call_operand.vmem [shape: f32[1,32], index: 6, kind: input, shape index: {}]
  %s7 = inlined_call_operand.vmem [shape: f32[1,32], index: 7, kind: input, shape index: {}]
  %s8 = inlined_call_operand.vmem [shape: f32[2,16,32], index: 8, kind: output, shape index: {}]
  %s9 = sld [smem:[#allocation0]]
  $region65: #{forward.22} parent=0
    _
  %s11 = ssub.s32 1, %s9
  %s12 = scalar_select 0, %s11, %s9
  loop: start=0, step=1, limit=4
  $region2: #{forward.22} parent=0 // loop_pre_header
    _
  $region3: #{forward.22} parent=0 // loop_header
    %s14 = sphi 0, %s18
    %p15 = scmp.ge.s32.totalorder %s14, 4
    %s24 = sphi 0, %s26
    %s27 = sphi 0, %s24
    %s28 = sphi 0, %s27
    %s44 = sphi 0, %s28
    %s48 = sphi 0, %s48
    %s50 = sphi 0, %s48
    %s51 = sphi 0, %s50
    %s65 = sphi 0, %s51
    %s69 = sphi 0, %s69
    %s71 = sphi 0, %s69
    %s72 = sphi 0, %s71
    %s86 = sphi 0, %s72
    %s90 = sphi 0, %s90
    %s92 = sphi 0, %s90
    %s93 = sphi 0, %s92
    %s107 = sphi 0, %s93
    %s113 = sphi 0, %s115
    %s116 = sphi 0, %s113
    %s117 = sphi 0, %s116
    %s133 = sphi 0, %s117
    %s137 = sphi 0, %s137
    %s139 = sphi 0, %s137
    %s140 = sphi 0, %s139
    %s154 = sphi 0, %s140
    %s158 = sphi 0, %s158
    %s160 = sphi 0, %s158
    %s161 = sphi 0, %s160
    %s175 = sphi 0, %s161
    %s179 = sphi 0, %s179
    %s181 = sphi 0, %s179
    %s182 = sphi 0, %s181
    %s196 = sphi 0, %s182
    %s202 = sphi 0, %s204
    %s205 = sphi 0, %s202
    %s206 = sphi 0, %s205
    %s222 = sphi 0, %s206
  $region4: #{forward.22} parent=0 // loop_header_branch
    %17 = sbr.rel (%p15) target = $region8
  $region5: #{forward.22} parent=0 // loop_body
    %s19 = ssub.s32 %s14, 1
    %s20 = ssub.s32 %s14, 2
    %s21 = sadd.s32 %s14, 1
    %s22 = ssub.s32 %s14, %s21
    %p23 = scmp.eq.s32.totalorder %s22, 0
    %s25 = sadd.s32 %s24, 1
    %s26 = scalar_select %p23, %s24, %s25
    %p29 = pneg %p23
    %p30 = scmp.eq.s32.totalorder %s14, 1
    %p31 = por %p29, %p30
    %p32 = scmp.ne.s32.totalorder %s24, %s27
    %p33 = scmp.eq.s32.totalorder %s14, 0
    %p34 = por %p32, %p33
    %p35 = scmp.ne.s32.totalorder %s24, %s27
    %p36 = scmp.eq.s32.totalorder %s19, 1
    %p37 = por %p35, %p36
    %p38 = scmp.ne.s32.totalorder %s27, %s28
    %p39 = scmp.eq.s32.totalorder %s19, 0
    %p40 = por %p38, %p39
    %p41 = scmp.ne.s32.totalorder %s27, %s28
    %p42 = scmp.eq.s32.totalorder %s20, 1
    %p43 = por %p41, %p42
    %p45 = scmp.ne.s32.totalorder %s28, %s44
    %p46 = scmp.eq.s32.totalorder %s20, 0
    %p47 = por %p45, %p46
    %s49 = sadd.s32 %s48, 1
    %p52 = scmp.eq.s32.totalorder %s14, 1
    %p53 = scmp.ne.s32.totalorder %s48, %s50
    %p54 = scmp.eq.s32.totalorder %s14, 0
    %p55 = por %p53, %p54
    %p56 = scmp.ne.s32.totalorder %s48, %s50
    %p57 = scmp.eq.s32.totalorder %s19, 1
    %p58 = por %p56, %p57
    %p59 = scmp.ne.s32.totalorder %s50, %s51
    %p60 = scmp.eq.s32.totalorder %s19, 0
    %p61 = por %p59, %p60
    %p62 = scmp.ne.s32.totalorder %s50, %s51
    %p63 = scmp.eq.s32.totalorder %s20, 1
    %p64 = por %p62, %p63
    %p66 = scmp.ne.s32.totalorder %s51, %s65
    %p67 = scmp.eq.s32.totalorder %s20, 0
    %p68 = por %p66, %p67
    %s70 = sadd.s32 %s69, 1
    %p73 = scmp.eq.s32.totalorder %s14, 1
    %p74 = scmp.ne.s32.totalorder %s69, %s71
    %p75 = scmp.eq.s32.totalorder %s14, 0
    %p76 = por %p74, %p75
    %p77 = scmp.ne.s32.totalorder %s69, %s71
    %p78 = scmp.eq.s32.totalorder %s19, 1
    %p79 = por %p77, %p78
    %p80 = scmp.ne.s32.totalorder %s71, %s72
    %p81 = scmp.eq.s32.totalorder %s19, 0
    %p82 = por %p80, %p81
    %p83 = scmp.ne.s32.totalorder %s71, %s72
    %p84 = scmp.eq.s32.totalorder %s20, 1
    %p85 = por %p83, %p84
    %p87 = scmp.ne.s32.totalorder %s72, %s86
    %p88 = scmp.eq.s32.totalorder %s20, 0
    %p89 = por %p87, %p88
    %s91 = sadd.s32 %s90, 1
    %p94 = scmp.eq.s32.totalorder %s14, 1
    %p95 = scmp.ne.s32.totalorder %s90, %s92
    %p96 = scmp.eq.s32.totalorder %s14, 0
    %p97 = por %p95, %p96
    %p98 = scmp.ne.s32.totalorder %s90, %s92
    %p99 = scmp.eq.s32.totalorder %s19, 1
    %p100 = por %p98, %p99
    %p101 = scmp.ne.s32.totalorder %s92, %s93
    %p102 = scmp.eq.s32.totalorder %s19, 0
    %p103 = por %p101, %p102
    %p104 = scmp.ne.s32.totalorder %s92, %s93
    %p105 = scmp.eq.s32.totalorder %s20, 1
    %p106 = por %p104, %p105
    %p108 = scmp.ne.s32.totalorder %s93, %s107
    %p109 = scmp.eq.s32.totalorder %s20, 0
    %p110 = por %p108, %p109
    %s111 = ssub.s32 %s14, %s21
    %p112 = scmp.eq.s32.totalorder %s111, 0
    %s114 = sadd.s32 %s113, 1
    %s115 = scalar_select %p112, %s113, %s114
    %p118 = pneg %p112
    %p119 = scmp.eq.s32.totalorder %s14, 1
    %p120 = por %p118, %p119
    %p121 = scmp.ne.s32.totalorder %s113, %s116
    %p122 = scmp.eq.s32.totalorder %s14, 0
    %p123 = por %p121, %p122
    %p124 = scmp.ne.s32.totalorder %s113, %s116
    %p125 = scmp.eq.s32.totalorder %s19, 1
    %p126 = por %p124, %p125
    %p127 = scmp.ne.s32.totalorder %s116, %s117
    %p128 = scmp.eq.s32.totalorder %s19, 0
    %p129 = por %p127, %p128
    %p130 = scmp.ne.s32.totalorder %s116, %s117
    %p131 = scmp.eq.s32.totalorder %s20, 1
    %p132 = por %p130, %p131
    %p134 = scmp.ne.s32.totalorder %s117, %s133
    %p135 = scmp.eq.s32.totalorder %s20, 0
    %p136 = por %p134, %p135
    %s138 = sadd.s32 %s137, 1
    %p141 = scmp.eq.s32.totalorder %s14, 1
    %p142 = scmp.ne.s32.totalorder %s137, %s139
    %p143 = scmp.eq.s32.totalorder %s14, 0
    %p144 = por %p142, %p143
    %p145 = scmp.ne.s32.totalorder %s137, %s139
    %p146 = scmp.eq.s32.totalorder %s19, 1
    %p147 = por %p145, %p146
    %p148 = scmp.ne.s32.totalorder %s139, %s140
    %p149 = scmp.eq.s32.totalorder %s19, 0
    %p150 = por %p148, %p149
    %p151 = scmp.ne.s32.totalorder %s139, %s140
    %p152 = scmp.eq.s32.totalorder %s20, 1
    %p153 = por %p151, %p152
    %p155 = scmp.ne.s32.totalorder %s140, %s154
    %p156 = scmp.eq.s32.totalorder %s20, 0
    %p157 = por %p155, %p156
    %s159 = sadd.s32 %s158, 1
    %p162 = scmp.eq.s32.totalorder %s14, 1
    %p163 = scmp.ne.s32.totalorder %s158, %s160
    %p164 = scmp.eq.s32.totalorder %s14, 0
    %p165 = por %p163, %p164
    %p166 = scmp.ne.s32.totalorder %s158, %s160
    %p167 = scmp.eq.s32.totalorder %s19, 1
    %p168 = por %p166, %p167
    %p169 = scmp.ne.s32.totalorder %s160, %s161
    %p170 = scmp.eq.s32.totalorder %s19, 0
    %p171 = por %p169, %p170
    %p172 = scmp.ne.s32.totalorder %s160, %s161
    %p173 = scmp.eq.s32.totalorder %s20, 1
    %p174 = por %p172, %p173
    %p176 = scmp.ne.s32.totalorder %s161, %s175
    %p177 = scmp.eq.s32.totalorder %s20, 0
    %p178 = por %p176, %p177
    %s180 = sadd.s32 %s179, 1
    %p183 = scmp.eq.s32.totalorder %s14, 1
    %p184 = scmp.ne.s32.totalorder %s179, %s181
    %p185 = scmp.eq.s32.totalorder %s14, 0
    %p186 = por %p184, %p185
    %p187 = scmp.ne.s32.totalorder %s179, %s181
    %p188 = scmp.eq.s32.totalorder %s19, 1
    %p189 = por %p187, %p188
    %p190 = scmp.ne.s32.totalorder %s181, %s182
    %p191 = scmp.eq.s32.totalorder %s19, 0
    %p192 = por %p190, %p191
    %p193 = scmp.ne.s32.totalorder %s181, %s182
    %p194 = scmp.eq.s32.totalorder %s20, 1
    %p195 = por %p193, %p194
    %p197 = scmp.ne.s32.totalorder %s182, %s196
    %p198 = scmp.eq.s32.totalorder %s20, 0
    %p199 = por %p197, %p198
    %s200 = ssub.s32 %s14, %s21
    %p201 = scmp.eq.s32.totalorder %s200, 0
    %s203 = sadd.s32 %s202, 1
    %s204 = scalar_select %p201, %s202, %s203
    %p207 = pneg %p201
    %p208 = scmp.eq.s32.totalorder %s14, 1
    %p209 = por %p207, %p208
    %p210 = scmp.ne.s32.totalorder %s202, %s205
    %p211 = scmp.eq.s32.totalorder %s14, 0
    %p212 = por %p210, %p211
    %p213 = scmp.ne.s32.totalorder %s202, %s205
    %p214 = scmp.eq.s32.totalorder %s19, 1
    %p215 = por %p213, %p214
    %p216 = scmp.ne.s32.totalorder %s205, %s206
    %p217 = scmp.eq.s32.totalorder %s19, 0
    %p218 = por %p216, %p217
    %p219 = scmp.ne.s32.totalorder %s205, %s206
    %p220 = scmp.eq.s32.totalorder %s20, 1
    %p221 = por %p219, %p220
    %p223 = scmp.ne.s32.totalorder %s206, %s222
    %p224 = scmp.eq.s32.totalorder %s20, 0
    %p225 = por %p223, %p224
    %p226 = scmp.le.s32.totalorder 1, %s14
    %p227 = scmp.lt.s32.totalorder %s14, 3
    %p228 = pnand %p226, %p227
    %p229 = pneg %p228
    // Predicated region
    $region9: #{forward.22} parent=5 // pred_check
      _
    $region10: #{forward.22} parent=5 // pred_check_branch
      %231 = sbr.rel (%p228) target = $region12
    $region11: #{forward.22} parent=5 // pred_region
      %s232 = ssub.s32 %s14, 1
      // Predicated region
      $region13: #{forward.22} parent=11 // pred_check
        %p233 = pneg %p61
      $region14: #{forward.22} parent=11 // pred_check_branch
        %235 = sbr.rel (%p233) target = $region16
      $region15: #{forward.22} parent=11 // pred_region
        _
      $region16: #{forward.22} parent=11 // pred_fallthru
        _
      // Predicated region
      $region17: #{forward.22} parent=11 // pred_check
        %p236 = pneg %p82
      $region18: #{forward.22} parent=11 // pred_check_branch
        %238 = sbr.rel (%p236) target = $region20
      $region19: #{forward.22} parent=11 // pred_region
        _
      $region20: #{forward.22} parent=11 // pred_fallthru
        _
      // Predicated region
      $region21: #{forward.22} parent=11 // pred_check
        %p239 = pneg %p103
      $region22: #{forward.22} parent=11 // pred_check_branch
        %241 = sbr.rel (%p239) target = $region24
      $region23: #{forward.22} parent=11 // pred_region
        _
      $region24: #{forward.22} parent=11 // pred_fallthru
        _
      // Predicated region
      $region25: #{forward.22} parent=11 // pred_check
        %p242 = pneg %p150
      $region26: #{forward.22} parent=11 // pred_check_branch
        %244 = sbr.rel (%p242) target = $region28
      $region27: #{forward.22} parent=11 // pred_region
        _
      $region28: #{forward.22} parent=11 // pred_fallthru
        _
      // Predicated region
      $region29: #{forward.22} parent=11 // pred_check
        %p245 = pneg %p171
      $region30: #{forward.22} parent=11 // pred_check_branch
        %247 = sbr.rel (%p245) target = $region32
      $region31: #{forward.22} parent=11 // pred_region
        _
      $region32: #{forward.22} parent=11 // pred_fallthru
        _
      // Predicated region
      $region33: #{forward.22} parent=11 // pred_check
        %p248 = pneg %p192
      $region34: #{forward.22} parent=11 // pred_check_branch
        %250 = sbr.rel (%p248) target = $region36
      $region35: #{forward.22} parent=11 // pred_region
        _
      $region36: #{forward.22} parent=11 // pred_fallthru
        _
    $region12: #{forward.22} parent=5 // pred_fallthru
      _
    %p251 = scmp.lt.s32.totalorder %s14, 2
    // Predicated region
    $region37: #{forward.22} parent=5 // pred_check
      %p252 = pneg %p251
    $region38: #{forward.22} parent=5 // pred_check_branch
      %254 = sbr.rel (%p252) target = $region40
    $region39: #{forward.22} parent=5 // pred_region
      // Predicated region
      $region41: #{forward.22} parent=39 // pred_check
        %p255 = pneg %p34
      $region42: #{forward.22} parent=39 // pred_check_branch
        %257 = sbr.rel (%p255) target = $region44
      $region43: #{forward.22} parent=39 // pred_region
        %p258 = scmp.lt.s32.totalorder %s14, 1
        %s259 = scalar_select %p258, %s14, 1
        %s260 = smul.addr %s259, 6
        %s261 = smul.addr %s260, 4
        %s262 = scalar_lea.vmem %s0, %s261
      $region44: #{forward.22} parent=39 // pred_fallthru
        _
      // Predicated region
      $region45: #{forward.22} parent=39 // pred_check
        %p263 = pneg %p123
      $region46: #{forward.22} parent=39 // pred_check_branch
        %265 = sbr.rel (%p263) target = $region48
      $region47: #{forward.22} parent=39 // pred_region
        %p266 = scmp.lt.s32.totalorder %s14, 1
        %s267 = scalar_select %p266, %s14, 1
        %s268 = smul.addr %s267, 2
        %s269 = smul.addr %s268, 4
        %s270 = scalar_lea.vmem %s4, %s269
      $region48: #{forward.22} parent=39 // pred_fallthru
        _
    $region40: #{forward.22} parent=5 // pred_fallthru
      _
    %p271 = scmp.le.s32.totalorder 1, %s14
    %p272 = scmp.lt.s32.totalorder %s14, 3
    %p273 = pnand %p271, %p272
    %p274 = pneg %p273
    // Predicated region
    $region49: #{forward.22} parent=5 // pred_check
      _
    $region50: #{forward.22} parent=5 // pred_check_branch
      %276 = sbr.rel (%p273) target = $region52
    $region51: #{forward.22} parent=5 // pred_region
      %s277 = ssub.s32 %s14, 1
      %p278 = scmp.lt.s32.totalorder %s19, 1
      %s279 = scalar_select %p278, %s19, 1
      %s280 = smul.addr %s279, 6
      %s281 = smul.addr %s280, 4
      %s282 = scalar_lea.vmem %s0, %s281
      %p283 = pneg %p40
      %p284 = pneg %p37
      %p285 = pneg %p61
      %p286 = pneg %p58
      %p287 = pneg %p82
      %p288 = pneg %p79
      %p289 = pneg %p103
      %p290 = pneg %p100
      %p291 = scmp.lt.s32.totalorder %s19, 1
      %s292 = scalar_select %p291, %s19, 1
      %s293 = smul.addr %s292, 2
      %s294 = smul.addr %s293, 4
      %s295 = scalar_lea.vmem %s4, %s294
      %p296 = pneg %p129
      %p297 = pneg %p126
      %p298 = pneg %p150
      %p299 = pneg %p147
      %p300 = pneg %p171
      %p301 = pneg %p168
      %p302 = pneg %p192
      %p303 = pneg %p189
      %p304 = pneg %p218
      %p305 = pneg %p215
      %p306 = scmp.lt.s32.totalorder %s19, 1
      %s307 = scalar_select %p306, %s19, 1
      %s308 = smul.addr %s307, 2
      %s309 = smul.addr %s308, 8
      %s310 = scalar_lea.vmem %s8, %s309
      %p311 = scmp.lt.s32.totalorder %s19, 1
      %s312 = scalar_select %p311, %s19, 1
      %s313 = smul.addr %s312, 6
      %s314 = smul.addr %s313, 4
      %s315 = scalar_lea.vmem %s0, %s314
      %p316 = scmp.lt.s32.totalorder %s19, 1
      %s317 = scalar_select %p316, %s19, 1
      %s318 = smul.addr %s317, 2
      %s319 = smul.addr %s318, 4
      %s320 = scalar_lea.vmem %s4, %s319
      %p321 = scmp.lt.s32.totalorder %s19, 1
      %s322 = scalar_select %p321, %s19, 1
      %s323 = smul.addr %s322, 2
      %s324 = smul.addr %s323, 8
      %s325 = scalar_lea.vmem %s8, %s324
      %v327 = vld [vmem:[%s315] sm:$0xff]
      %v328 = vld [vmem:[%s315 + $0x8] sm:$0xf]
      %v329 = vld [vmem:[%s315 + $0xc] sm:$0xff]
      %v330 = vld [vmem:[%s315 + $0x14] sm:$0xf]
      %v331 = vld [vmem:[%s1] sm:$0xf]
      %v332 = vld [vmem:[%s1 + $0x4] sm:$0xf]
      %v333 = vld [vmem:[%s1 + $0x8] sm:$0xf]
      %v334 = vld [vmem:[%s1 + $0xc] sm:$0xf]
      %v335 = vld [vmem:[%s1 + $0x10] sm:$0xf]
      %v336 = vld [vmem:[%s1 + $0x14] sm:$0xf]
      %v337 = vld [vmem:[%s1 + $0x18] sm:$0xf]
      %v338 = vld [vmem:[%s1 + $0x1c] sm:$0xf]
      %v339 = vld [vmem:[%s1 + $0x20] sm:$0xf]
      %v340 = vld [vmem:[%s1 + $0x24] sm:$0xf]
      %v341 = vld [vmem:[%s1 + $0x28] sm:$0xf]
      %v342 = vld [vmem:[%s1 + $0x2c] sm:$0xf]
      %v343 = vld [vmem:[%s1 + $0x30] sm:$0xf]
      %v344 = vld [vmem:[%s1 + $0x34] sm:$0xf]
      %v345 = vld [vmem:[%s1 + $0x38] sm:$0xf]
      %v346 = vld [vmem:[%s1 + $0x3c] sm:$0xf]
      %v347 = vld [vmem:[%s1 + $0x40] sm:$0xf]
      %v348 = vld [vmem:[%s1 + $0x44] sm:$0xf]
      %v349 = vld [vmem:[%s1 + $0x48] sm:$0xf]
      %v350 = vld [vmem:[%s1 + $0x4c] sm:$0xf]
      %v351 = vld [vmem:[%s1 + $0x50] sm:$0xf]
      %v352 = vld [vmem:[%s1 + $0x54] sm:$0xf]
      %v353 = vld [vmem:[%s1 + $0x58] sm:$0xf]
      %v354 = vld [vmem:[%s1 + $0x5c] sm:$0xf]
      %v355 = vld [vmem:[%s1 + $0x60] sm:$0xf]
      %v356 = vld [vmem:[%s1 + $0x64] sm:$0xf]
      %v357 = vld [vmem:[%s1 + $0x68] sm:$0xf]
      %v358 = vld [vmem:[%s1 + $0x6c] sm:$0xf]
      %v359 = vld [vmem:[%s1 + $0x70] sm:$0xf]
      %v360 = vld [vmem:[%s1 + $0x74] sm:$0xf]
      %v361 = vld [vmem:[%s1 + $0x78] sm:$0xf]
      %v362 = vld [vmem:[%s1 + $0x7c] sm:$0xf]
      %v363 = vld [vmem:[%s1 + $0x80] sm:$0xf]
      %v364 = vld [vmem:[%s1 + $0x84] sm:$0xf]
      %v365 = vld [vmem:[%s1 + $0x88] sm:$0xf]
      %v366 = vld [vmem:[%s1 + $0x8c] sm:$0xf]
      %v371 = vunpack.c.l.b16 %v327
      %v372 = vunpack.c.h.b16 %v327
      %v373 = vunpack.c.l.b16 %v328
      %v374 = vunpack.c.l.b16 %v329
      %v375 = vunpack.c.h.b16 %v329
      %v376 = vunpack.c.l.b16 %v330
      %v377 = vpack.c.b16 %v374, %v371
      %v378 = vpack.c.b16 %v375, %v372
      %v379 = vpack.c.b16 %v376, %v373
      %v418 = vunpack.c.l.b16 %v331
      %v419 = vunpack.c.l.b16 %v332
      %v420 = vunpack.c.l.b16 %v333
      %v421 = vunpack.c.l.b16 %v334
      %v422 = vunpack.c.l.b16 %v335
      %v423 = vunpack.c.l.b16 %v336
      %v424 = vunpack.c.l.b16 %v337
      %v425 = vunpack.c.l.b16 %v338
      %v426 = vunpack.c.l.b16 %v339
      %v427 = vunpack.c.l.b16 %v340
      %v428 = vunpack.c.l.b16 %v341
      %v429 = vunpack.c.l.b16 %v342
      %v430 = vunpack.c.l.b16 %v343
      %v431 = vunpack.c.l.b16 %v344
      %v432 = vunpack.c.l.b16 %v345
      %v433 = vunpack.c.l.b16 %v346
      %v434 = vunpack.c.l.b16 %v347
      %v435 = vunpack.c.l.b16 %v348
      %v436 = vunpack.c.l.b16 %v349
      %v437 = vunpack.c.l.b16 %v350
      %v438 = vunpack.c.l.b16 %v351
      %v439 = vunpack.c.l.b16 %v352
      %v440 = vunpack.c.l.b16 %v353
      %v441 = vunpack.c.l.b16 %v354
      %v442 = vunpack.c.l.b16 %v355
      %v443 = vunpack.c.l.b16 %v356
      %v444 = vunpack.c.l.b16 %v357
      %v445 = vunpack.c.l.b16 %v358
      %v446 = vunpack.c.l.b16 %v359
      %v447 = vunpack.c.l.b16 %v360
      %v448 = vunpack.c.l.b16 %v361
      %v449 = vunpack.c.l.b16 %v362
      %v450 = vunpack.c.l.b16 %v363
      %v451 = vunpack.c.l.b16 %v364
      %v452 = vunpack.c.l.b16 %v365
      %v453 = vunpack.c.l.b16 %v366
      %v454 = vpack.c.b16 %v419, %v418
      %v455 = vpack.c.b16 %v421, %v420
      %v456 = vpack.c.b16 %v423, %v422
      %v457 = vpack.c.b16 %v425, %v424
      %v458 = vpack.c.b16 %v427, %v426
      %v459 = vpack.c.b16 %v429, %v428
      %v460 = vpack.c.b16 %v431, %v430
      %v461 = vpack.c.b16 %v433, %v432
      %v462 = vpack.c.b16 %v435, %v434
      %v463 = vpack.c.b16 %v437, %v436
      %v464 = vpack.c.b16 %v439, %v438
      %v465 = vpack.c.b16 %v441, %v440
      %v466 = vpack.c.b16 %v443, %v442
      %v467 = vpack.c.b16 %v445, %v444
      %v468 = vpack.c.b16 %v447, %v446
      %v469 = vpack.c.b16 %v449, %v448
      %v470 = vpack.c.b16 %v451, %v450
      %v471 = vpack.c.b16 %v453, %v452
      %vm490 = vcmask 261120
      %v492 = vsel %vm490, %v379, 0
      %494 = vmatpush.bf16.msra.mxu0 %v461
      %495 = vmatpush.bf16.msra.mxu0 %v460
      %496 = vmatpush.bf16.msra.mxu0 %v459
      %497 = vmatpush.bf16.msra.mxu0 %v458
      %498 = vmatpush.bf16.msra.mxu0 %v457
      %499 = vmatpush.bf16.msra.mxu0 %v456
      %500 = vmatpush.bf16.msra.mxu0 %v455
      %501 = vmatpush.bf16.msra.mxu0 %v454
      %502 = vmatmul.bf16.gmra.mxu0 %v377
      %v503 = vpop.f32.mrf.mxu0
      %v504 = vadd.f32 0.0, %v503
      %v505 = vpop.f32.mrf.mxu0
      %v506 = vadd.f32 0.0, %v505
      %507 = vdwg.mxu0
      %508 = vmatpush.bf16.msra.mxu0 %v469
      %509 = vmatpush.bf16.msra.mxu0 %v468
      %510 = vmatpush.bf16.msra.mxu0 %v467
      %511 = vmatpush.bf16.msra.mxu0 %v466
      %512 = vmatpush.bf16.msra.mxu0 %v465
      %513 = vmatpush.bf16.msra.mxu0 %v464
      %514 = vmatpush.bf16.msra.mxu0 %v463
      %515 = vmatpush.bf16.msra.mxu0 %v462
      %516 = vmatmul.bf16.gmra.mxu0 %v378
      %v517 = vpop.f32.mrf.mxu0
      %v518 = vadd.f32 %v504, %v517
      %v519 = vpop.f32.mrf.mxu0
      %v520 = vadd.f32 %v506, %v519
      %521 = vdwg.mxu0
      %522 = vmatpush.bf16.msra.mxu0 0
      %523 = vmatpush.bf16.msra.mxu0 0
      %524 = vmatpush.bf16.msra.mxu0 0
      %525 = vmatpush.bf16.msra.mxu0 0
      %526 = vmatpush.bf16.msra.mxu0 0
      %527 = vmatpush.bf16.msra.mxu0 0
      %528 = vmatpush.bf16.msra.mxu0 %v471
      %529 = vmatpush.bf16.msra.mxu0 %v470
      %530 = vmatmul.bf16.gmra.mxu0 %v492
      %v531 = vpop.f32.mrf.mxu0
      %v532 = vadd.f32 %v518, %v531
      %v533 = vpop.f32.mrf.mxu0
      %v534 = vadd.f32 %v520, %v533
      %535 = vdwg.mxu0
      %v536 = vld [vmem:[%s2] sm:$0x1]
      %v537 = vld [vmem:[%s3] sm:$0x1]
      %v538 = vsel %vm490, %v532, 0.0
      %v539 = vsel %vm490, %v534, 0.0
      %v540 = vadd.f32 %v538, %v539
      %v541 = vrot.slane %v540, 4
      %v542 = vadd.f32 %v540, %v541
      %v543 = vrot.slane %v542, 2
      %v544 = vadd.f32 %v542, %v543
      %v545 = vrot.slane %v544, 1
      %v546 = vadd.f32 %v544, %v545
      %v547 = vrcp.pop 16.0
      %v548 = vmul.f32 16.0, %v547
      %v549 = vsub.f32 1.0, %v548
      %v550 = vmul.f32 %v547, %v549
      %v551 = vadd.f32 %v547, %v550
      %vm552 = vweird.f32 %v547
      %v553 = vsel %vm552, %v547, %v551
      %v554 = vmul.f32 %v546, %v553
      %v555 = vsub.f32 %v532, %v554
      %v556 = vsub.f32 %v534, %v554
      %v557 = vmul.f32 %v555, %v555
      %v558 = vmul.f32 %v556, %v556
      %v559 = vsel %vm490, %v557, 0.0
      %v560 = vsel %vm490, %v558, 0.0
      %v561 = vadd.f32 %v559, %v560
      %v562 = vrot.slane %v561, 4
      %v563 = vadd.f32 %v561, %v562
      %v564 = vrot.slane %v563, 2
      %v565 = vadd.f32 %v563, %v564
      %v566 = vrot.slane %v565, 1
      %v567 = vadd.f32 %v565, %v566
      %v568 = vmul.f32 %v567, %v553
      %v569 = vadd.f32 %v568, 1e-05
      %v570 = vrsqrt.pop %v569
      %v571 = vmul.f32 %v570, %v569
      %v572 = vmul.f32 %v571, %v570
      %v573 = vmul.f32 0.5, %v572
      %v574 = vsub.f32 1.5, %v573
      %v575 = vmul.f32 %v570, %v574
      %vm576 = vweird.f32 %v569
      %vm577 = vweird.f32 %v570
      %vm578 = vmor %vm576, %vm577
      %v579 = vsel %vm578, %v570, %v575
      %v580 = vmul.f32 %v555, %v579
      %v581 = vmul.f32 %v556, %v579
      %v583 = vperm.slane %v536, 0
      %v585 = vmul.f32 %v580, %v583
      %v586 = vmul.f32 %v581, %v583
      %v588 = vperm.slane %v537, 0
      %v590 = vadd.f32 %v585, %v588
      %v591 = vadd.f32 %v586, %v588
      %v592 = vld [vmem:[%s320] sm:$0xf]
      %v593 = vld [vmem:[%s320 + $0x4] sm:$0xf]
      %v594 = vld [vmem:[%s5] sm:$0xf]
      %v595 = vld [vmem:[%s5 + $0x4] sm:$0xf]
      %v598 = vunpack.c.l.b16 %v592
      %v599 = vunpack.c.l.b16 %v593
      %v600 = vpack.c.b16 %v599, %v598
      %v603 = vunpack.c.l.b16 %v594
      %v604 = vunpack.c.l.b16 %v595
      %v605 = vpack.c.b16 %v604, %v603
      %vm607 = vcmask 130048
      %v609 = vsel %vm607, %v600, 0
      %611 = vmatpush.bf16.msra.mxu0 0
      %612 = vmatpush.bf16.msra.mxu0 0
      %613 = vmatpush.bf16.msra.mxu0 0
      %614 = vmatpush.bf16.msra.mxu0 0
      %615 = vmatpush.bf16.msra.mxu0 0
      %616 = vmatpush.bf16.msra.mxu0 0
      %617 = vmatpush.bf16.msra.mxu0 0
      %618 = vmatpush.bf16.msra.mxu0 %v605
      %619 = vmatmul.bf16.gmra.mxu0 %v609
      %v620 = vpop.f32.mrf.mxu0
      %v621 = vadd.f32 0.0, %v620
      %v622 = vpop.f32.mrf.mxu0
      %v623 = vadd.f32 0.0, %v622
      %624 = vdwg.mxu0
      %v625 = vld [vmem:[%s6] sm:$0x1]
      %v626 = vld [vmem:[%s7] sm:$0x1]
      %v627 = vsel %vm490, %v621, 0.0
      %v628 = vsel %vm490, %v623, 0.0
      %v629 = vadd.f32 %v627, %v628
      %v630 = vrot.slane %v629, 4
      %v631 = vadd.f32 %v629, %v630
      %v632 = vrot.slane %v631, 2
      %v633 = vadd.f32 %v631, %v632
      %v634 = vrot.slane %v633, 1
      %v635 = vadd.f32 %v633, %v634
      %v636 = vmul.f32 %v635, %v553
      %v637 = vsub.f32 %v621, %v636
      %v638 = vsub.f32 %v623, %v636
      %v639 = vmul.f32 %v637, %v637
      %v640 = vmul.f32 %v638, %v638
      %v641 = vsel %vm490, %v639, 0.0
      %v642 = vsel %vm490, %v640, 0.0
      %v643 = vadd.f32 %v641, %v642
      %v644 = vrot.slane %v643, 4
      %v645 = vadd.f32 %v643, %v644
      %v646 = vrot.slane %v645, 2
      %v647 = vadd.f32 %v645, %v646
      %v648 = vrot.slane %v647, 1
      %v649 = vadd.f32 %v647, %v648
      %v650 = vmul.f32 %v649, %v553
      %v651 = vadd.f32 %v650, 1e-05
      %v652 = vrsqrt.pop %v651
      %v653 = vmul.f32 %v652, %v651
      %v654 = vmul.f32 %v653, %v652
      %v655 = vmul.f32 0.5, %v654
      %v656 = vsub.f32 1.5, %v655
      %v657 = vmul.f32 %v652, %v656
      %vm658 = vweird.f32 %v651
      %vm659 = vweird.f32 %v652
      %vm660 = vmor %vm658, %vm659
      %v661 = vsel %vm660, %v652, %v657
      %v662 = vmul.f32 %v637, %v661
      %v663 = vmul.f32 %v638, %v661
      %v665 = vperm.slane %v625, 0
      %v667 = vmul.f32 %v662, %v665
      %v668 = vmul.f32 %v663, %v665
      %v670 = vperm.slane %v626, 0
      %v672 = vadd.f32 %v667, %v670
      %v673 = vadd.f32 %v668, %v670
      %v674 = vadd.f32 %v590, %v672
      %v675 = vadd.f32 %v591, %v673
      %v676 = vmul.f32 %v674, 0.01
      %v677 = vmul.f32 %v675, 0.01
      %v678 = vmax.f32 %v674, %v676
      %v679 = vmax.f32 %v675, %v677
      %680 = vst.msk [vmem:[%s325] sm:$0xff] %vm490, %v678
      %681 = vst.msk [vmem:[%s325 + $0x8] sm:$0xff] %vm490, %v679
      %p682 = scmp.lt.s32.totalorder %s19, 1
      %s683 = scalar_select %p682, %s19, 1
      %s684 = smul.addr %s683, 2
      %s685 = smul.addr %s684, 8
      %s686 = scalar_lea.vmem %s8, %s685
      // Predicated region
      $region53: #{forward.22} parent=51 // pred_check
        %p687 = pneg %p215
      $region54: #{forward.22} parent=51 // pred_check_branch
        %689 = sbr.rel (%p687) target = $region56
      $region55: #{forward.22} parent=51 // pred_region
        _
      $region56: #{forward.22} parent=51 // pred_fallthru
        _
    $region52: #{forward.22} parent=5 // pred_fallthru
      _
    %p690 = scmp.le.s32.totalorder 2, %s14
    // Predicated region
    $region57: #{forward.22} parent=5 // pred_check
      %p691 = pneg %p690
    $region58: #{forward.22} parent=5 // pred_check_branch
      %693 = sbr.rel (%p691) target = $region60
    $region59: #{forward.22} parent=5 // pred_region
      %s694 = ssub.s32 %s14, 2
      // Predicated region
      $region61: #{forward.22} parent=59 // pred_check
        %p695 = pneg %p221
      $region62: #{forward.22} parent=59 // pred_check_branch
        %697 = sbr.rel (%p695) target = $region64
      $region63: #{forward.22} parent=59 // pred_region
        %p698 = scmp.lt.s32.totalorder %s20, 1
        %s699 = scalar_select %p698, %s20, 1
        %s700 = smul.addr %s699, 2
        %s701 = smul.addr %s700, 8
        %s702 = scalar_lea.vmem %s8, %s701
      $region64: #{forward.22} parent=59 // pred_fallthru
        _
    $region60: #{forward.22} parent=5 // pred_fallthru
      _
  $region6: #{forward.22} parent=0 // loop_footer
    %s18 = sadd.s32 1, %s14
  $region7: #{forward.22} parent=0 // loop_footer_branch
    %13 = sbr.rel target = $region3
  $region8: #{forward.22} parent=0 // loop_exit
    _

// kernel: forward.25
$region0: #{forward.25}
  #allocation0 [shape = 'u32[]', space=smem, size = 0x4, offset = 0x4, fixed_abs, tag = 'smem constant byte address 0x4 - core index']
  #allocation1 [shape = 'u32[72,128]{1,0:T(1,128)}', space=vmem, size = 0x9000, scoped, tag = 'internal scratch']
  %s0 = inlined_call_operand.vmem [shape: bf16[2,64,16], index: 0, kind: input, shape index: {}]
  %s1 = inlined_call_operand.vmem [shape: bf16[16,32], index: 1, kind: input, shape index: {}]
  %s2 = inlined_call_operand.vmem [shape: f32[2,64,32], index: 2, kind: output, shape index: {}]
  %s3 = sld [smem:[#allocation0]]
  $region41: #{forward.25} parent=0
    _
  %s5 = ssub.s32 1, %s3
  %s6 = scalar_select 0, %s5, %s3
  loop: start=0, step=1, limit=4
  $region2: #{forward.25} parent=0 // loop_pre_header
    _
  $region3: #{forward.25} parent=0 // loop_header
    %s8 = sphi 0, %s12
    %p9 = scmp.ge.s32.totalorder %s8, 4
    %s18 = sphi 0, %s20
    %s21 = sphi 0, %s18
    %s22 = sphi 0, %s21
    %s38 = sphi 0, %s22
    %s42 = sphi 0, %s42
    %s44 = sphi 0, %s42
    %s45 = sphi 0, %s44
    %s59 = sphi 0, %s45
    %s65 = sphi 0, %s67
    %s68 = sphi 0, %s65
    %s69 = sphi 0, %s68
    %s85 = sphi 0, %s69
  $region4: #{forward.25} parent=0 // loop_header_branch
    %11 = sbr.rel (%p9) target = $region8
  $region5: #{forward.25} parent=0 // loop_body
    %s13 = ssub.s32 %s8, 1
    %s14 = ssub.s32 %s8, 2
    %s15 = sadd.s32 %s8, 1
    %s16 = ssub.s32 %s8, %s15
    %p17 = scmp.eq.s32.totalorder %s16, 0
    %s19 = sadd.s32 %s18, 1
    %s20 = scalar_select %p17, %s18, %s19
    %p23 = pneg %p17
    %p24 = scmp.eq.s32.totalorder %s8, 1
    %p25 = por %p23, %p24
    %p26 = scmp.ne.s32.totalorder %s18, %s21
    %p27 = scmp.eq.s32.totalorder %s8, 0
    %p28 = por %p26, %p27
    %p29 = scmp.ne.s32.totalorder %s18, %s21
    %p30 = scmp.eq.s32.totalorder %s13, 1
    %p31 = por %p29, %p30
    %p32 = scmp.ne.s32.totalorder %s21, %s22
    %p33 = scmp.eq.s32.totalorder %s13, 0
    %p34 = por %p32, %p33
    %p35 = scmp.ne.s32.totalorder %s21, %s22
    %p36 = scmp.eq.s32.totalorder %s14, 1
    %p37 = por %p35, %p36
    %p39 = scmp.ne.s32.totalorder %s22, %s38
    %p40 = scmp.eq.s32.totalorder %s14, 0
    %p41 = por %p39, %p40
    %s43 = sadd.s32 %s42, 1
    %p46 = scmp.eq.s32.totalorder %s8, 1
    %p47 = scmp.ne.s32.totalorder %s42, %s44
    %p48 = scmp.eq.s32.totalorder %s8, 0
    %p49 = por %p47, %p48
    %p50 = scmp.ne.s32.totalorder %s42, %s44
    %p51 = scmp.eq.s32.totalorder %s13, 1
    %p52 = por %p50, %p51
    %p53 = scmp.ne.s32.totalorder %s44, %s45
    %p54 = scmp.eq.s32.totalorder %s13, 0
    %p55 = por %p53, %p54
    %p56 = scmp.ne.s32.totalorder %s44, %s45
    %p57 = scmp.eq.s32.totalorder %s14, 1
    %p58 = por %p56, %p57
    %p60 = scmp.ne.s32.totalorder %s45, %s59
    %p61 = scmp.eq.s32.totalorder %s14, 0
    %p62 = por %p60, %p61
    %s63 = ssub.s32 %s8, %s15
    %p64 = scmp.eq.s32.totalorder %s63, 0
    %s66 = sadd.s32 %s65, 1
    %s67 = scalar_select %p64, %s65, %s66
    %p70 = pneg %p64
    %p71 = scmp.eq.s32.totalorder %s8, 1
    %p72 = por %p70, %p71
    %p73 = scmp.ne.s32.totalorder %s65, %s68
    %p74 = scmp.eq.s32.totalorder %s8, 0
    %p75 = por %p73, %p74
    %p76 = scmp.ne.s32.totalorder %s65, %s68
    %p77 = scmp.eq.s32.totalorder %s13, 1
    %p78 = por %p76, %p77
    %p79 = scmp.ne.s32.totalorder %s68, %s69
    %p80 = scmp.eq.s32.totalorder %s13, 0
    %p81 = por %p79, %p80
    %p82 = scmp.ne.s32.totalorder %s68, %s69
    %p83 = scmp.eq.s32.totalorder %s14, 1
    %p84 = por %p82, %p83
    %p86 = scmp.ne.s32.totalorder %s69, %s85
    %p87 = scmp.eq.s32.totalorder %s14, 0
    %p88 = por %p86, %p87
    %p89 = scmp.le.s32.totalorder 1, %s8
    %p90 = scmp.lt.s32.totalorder %s8, 3
    %p91 = pnand %p89, %p90
    %p92 = pneg %p91
    // Predicated region
    $region9: #{forward.25} parent=5 // pred_check
      _
    $region10: #{forward.25} parent=5 // pred_check_branch
      %94 = sbr.rel (%p91) target = $region12
    $region11: #{forward.25} parent=5 // pred_region
      %s95 = ssub.s32 %s8, 1
      // Predicated region
      $region13: #{forward.25} parent=11 // pred_check
        %p96 = pneg %p55
      $region14: #{forward.25} parent=11 // pred_check_branch
        %98 = sbr.rel (%p96) target = $region16
      $region15: #{forward.25} parent=11 // pred_region
        _
      $region16: #{forward.25} parent=11 // pred_fallthru
        _
    $region12: #{forward.25} parent=5 // pred_fallthru
      _
    %p99 = scmp.lt.s32.totalorder %s8, 2
    // Predicated region
    $region17: #{forward.25} parent=5 // pred_check
      %p100 = pneg %p99
    $region18: #{forward.25} parent=5 // pred_check_branch
      %102 = sbr.rel (%p100) target = $region20
    $region19: #{forward.25} parent=5 // pred_region
      // Predicated region
      $region21: #{forward.25} parent=19 // pred_check
        %p103 = pneg %p28
      $region22: #{forward.25} parent=19 // pred_check_branch
        %105 = sbr.rel (%p103) target = $region24
      $region23: #{forward.25} parent=19 // pred_region
        %p106 = scmp.lt.s32.totalorder %s8, 1
        %s107 = scalar_select %p106, %s8, 1
        %s108 = smul.addr %s107, 8
        %s109 = smul.addr %s108, 4
        %s110 = scalar_lea.vmem %s0, %s109
      $region24: #{forward.25} parent=19 // pred_fallthru
        _
    $region20: #{forward.25} parent=5 // pred_fallthru
      _
    %p111 = scmp.le.s32.totalorder 1, %s8
    %p112 = scmp.lt.s32.totalorder %s8, 3
    %p113 = pnand %p111, %p112
    %p114 = pneg %p113
    // Predicated region
    $region25: #{forward.25} parent=5 // pred_check
      _
    $region26: #{forward.25} parent=5 // pred_check_branch
      %116 = sbr.rel (%p113) target = $region28
    $region27: #{forward.25} parent=5 // pred_region
      %s117 = ssub.s32 %s8, 1
      %p118 = scmp.lt.s32.totalorder %s13, 1
      %s119 = scalar_select %p118, %s13, 1
      %s120 = smul.addr %s119, 8
      %s121 = smul.addr %s120, 4
      %s122 = scalar_lea.vmem %s0, %s121
      %p123 = pneg %p34
      %p124 = pneg %p31
      %p125 = pneg %p55
      %p126 = pneg %p52
      %p127 = pneg %p81
      %p128 = pneg %p78
      %p129 = scmp.lt.s32.totalorder %s13, 1
      %s130 = scalar_select %p129, %s13, 1
      %s131 = smul.addr %s130, 8
      %s132 = smul.addr %s131, 8
      %s133 = scalar_lea.vmem %s2, %s132
      %p134 = scmp.lt.s32.totalorder %s13, 1
      %s135 = scalar_select %p134, %s13, 1
      %s136 = smul.addr %s135, 8
      %s137 = smul.addr %s136, 4
      %s138 = scalar_lea.vmem %s0, %s137
      %p139 = scmp.lt.s32.totalorder %s13, 1
      %s140 = scalar_select %p139, %s13, 1
      %s141 = smul.addr %s140, 8
      %s142 = smul.addr %s141, 8
      %s143 = scalar_lea.vmem %s2, %s142
      %v145 = vld [vmem:[%s138] sm:$0xf]
      %v146 = vld [vmem:[%s138 + $0x4] sm:$0xf]
      %v147 = vld [vmem:[%s138 + $0x8] sm:$0xf]
      %v148 = vld [vmem:[%s138 + $0xc] sm:$0xf]
      %v149 = vld [vmem:[%s138 + $0x10] sm:$0xf]
      %v150 = vld [vmem:[%s138 + $0x14] sm:$0xf]
      %v151 = vld [vmem:[%s138 + $0x18] sm:$0xf]
      %v152 = vld [vmem:[%s138 + $0x1c] sm:$0xf]
      %v153 = vld [vmem:[%s1] sm:$0xf]
      %v154 = vld [vmem:[%s1 + $0x4] sm:$0xf]
      %v163 = vunpack.c.l.b16 %v145
      %v164 = vunpack.c.l.b16 %v146
      %v165 = vunpack.c.l.b16 %v147
      %v166 = vunpack.c.l.b16 %v148
      %v167 = vunpack.c.l.b16 %v149
      %v168 = vunpack.c.l.b16 %v150
      %v169 = vunpack.c.l.b16 %v151
      %v170 = vunpack.c.l.b16 %v152
      %v171 = vpack.c.b16 %v164, %v163
      %v172 = vpack.c.b16 %v166, %v165
      %v173 = vpack.c.b16 %v168, %v167
      %v174 = vpack.c.b16 %v170, %v169
      %v177 = vunpack.c.l.b16 %v153
      %v178 = vunpack.c.l.b16 %v154
      %v179 = vpack.c.b16 %v178, %v177
      %vm181 = vcmask 130048
      %v183 = vsel %vm181, %v171, 0
      %v186 = vsel %vm181, %v172, 0
      %v189 = vsel %vm181, %v173, 0
      %v192 = vsel %vm181, %v174, 0
      %194 = vmatpush.bf16.msra.mxu0 0
      %195 = vmatpush.bf16.msra.mxu0 0
      %196 = vmatpush.bf16.msra.mxu0 0
      %197 = vmatpush.bf16.msra.mxu0 0
      %198 = vmatpush.bf16.msra.mxu0 0
      %199 = vmatpush.bf16.msra.mxu0 0
      %200 = vmatpush.bf16.msra.mxu0 0
      %201 = vmatpush.bf16.msra.mxu0 %v179
      %202 = vmatmul.bf16.gmra.mxu0 %v183
      %v203 = vpop.f32.mrf.mxu0
      %v204 = vadd.f32 0.0, %v203
      %v205 = vpop.f32.mrf.mxu0
      %v206 = vadd.f32 0.0, %v205
      %207 = vmatmul.bf16.gmra.mxu0 %v186
      %v208 = vpop.f32.mrf.mxu0
      %v209 = vadd.f32 0.0, %v208
      %v210 = vpop.f32.mrf.mxu0
      %v211 = vadd.f32 0.0, %v210
      %212 = vmatmul.bf16.gmra.mxu0 %v189
      %v213 = vpop.f32.mrf.mxu0
      %v214 = vadd.f32 0.0, %v213
      %v215 = vpop.f32.mrf.mxu0
      %v216 = vadd.f32 0.0, %v215
      %217 = vmatmul.bf16.gmra.mxu0 %v192
      %v218 = vpop.f32.mrf.mxu0
      %v219 = vadd.f32 0.0, %v218
      %v220 = vpop.f32.mrf.mxu0
      %v221 = vadd.f32 0.0, %v220
      %222 = vdwg.mxu0
      %vm223 = vcmask 261120
      %224 = vst.msk [vmem:[%s143] sm:$0xff] %vm223, %v204
      %225 = vst.msk [vmem:[%s143 + $0x8] sm:$0xff] %vm223, %v206
      %226 = vst.msk [vmem:[%s143 + $0x10] sm:$0xff] %vm223, %v209
      %227 = vst.msk [vmem:[%s143 + $0x18] sm:$0xff] %vm223, %v211
      %228 = vst.msk [vmem:[%s143 + $0x20] sm:$0xff] %vm223, %v214
      %229 = vst.msk [vmem:[%s143 + $0x28] sm:$0xff] %vm223, %v216
      %230 = vst.msk [vmem:[%s143 + $0x30] sm:$0xff] %vm223, %v219
      %231 = vst.msk [vmem:[%s143 + $0x38] sm:$0xff] %vm223, %v221
      %p232 = scmp.lt.s32.totalorder %s13, 1
      %s233 = scalar_select %p232, %s13, 1
      %s234 = smul.addr %s233, 8
      %s235 = smul.addr %s234, 8
      %s236 = scalar_lea.vmem %s2, %s235
      // Predicated region
      $region29: #{forward.25} parent=27 // pred_check
        %p237 = pneg %p78
      $region30: #{forward.25} parent=27 // pred_check_branch
        %239 = sbr.rel (%p237) target = $region32
      $region31: #{forward.25} parent=27 // pred_region
        _
      $region32: #{forward.25} parent=27 // pred_fallthru
        _
    $region28: #{forward.25} parent=5 // pred_fallthru
      _
    %p240 = scmp.le.s32.totalorder 2, %s8
    // Predicated region
    $region33: #{forward.25} parent=5 // pred_check
      %p241 = pneg %p240
    $region34: #{forward.25} parent=5 // pred_check_branch
      %243 = sbr.rel (%p241) target = $region36
    $region35: #{forward.25} parent=5 // pred_region
      %s244 = ssub.s32 %s8, 2
      // Predicated region
      $region37: #{forward.25} parent=35 // pred_check
        %p245 = pneg %p84
      $region38: #{forward.25} parent=35 // pred_check_branch
        %247 = sbr.rel (%p245) target = $region40
      $region39: #{forward.25} parent=35 // pred_region
        %p248 = scmp.lt.s32.totalorder %s14, 1
        %s249 = scalar_select %p248, %s14, 1
        %s250 = smul.addr %s249, 8
        %s251 = smul.addr %s250, 8
        %s252 = scalar_lea.vmem %s2, %s251
      $region40: #{forward.25} parent=35 // pred_fallthru
        _
    $region36: #{forward.25} parent=5 // pred_fallthru
      _
  $region6: #{forward.25} parent=0 // loop_footer
    %s12 = sadd.s32 1, %s8
  $region7: #{forward.25} parent=0 // loop_footer_branch
    %7 = sbr.rel target = $region3
  $region8: #{forward.25} parent=0 // loop_exit
    _

// kernel: forward.24
$region0: #{forward.24}
  #allocation0 [shape = 'u32[]', space=smem, size = 0x4, offset = 0x4, fixed_abs, tag = 'smem constant byte address 0x4 - core index']
  #allocation1 [shape = 'u32[72,128]{1,0:T(1,128)}', space=vmem, size = 0x9000, scoped, tag = 'internal scratch']
  %s0 = inlined_call_operand.vmem [shape: bf16[2,64,288], index: 0, kind: input, shape index: {}]
  %s1 = inlined_call_operand.vmem [shape: bf16[288,16], index: 1, kind: input, shape index: {}]
  %s2 = inlined_call_operand.vmem [shape: f32[1,16], index: 2, kind: input, shape index: {}]
  %s3 = inlined_call_operand.vmem [shape: f32[1,16], index: 3, kind: input, shape index: {}]
  %s4 = inlined_call_operand.vmem [shape: f32[2,64,16], index: 4, kind: output, shape index: {}]
  %s5 = sld [smem:[#allocation0]]
  $region49: #{forward.24} parent=0
    _
  %s7 = ssub.s32 1, %s5
  %s8 = scalar_select 0, %s7, %s5
  loop: start=0, step=1, limit=4
  $region2: #{forward.24} parent=0 // loop_pre_header
    _
  $region3: #{forward.24} parent=0 // loop_header
    %s10 = sphi 0, %s14
    %p11 = scmp.ge.s32.totalorder %s10, 4
    %s20 = sphi 0, %s22
    %s23 = sphi 0, %s20
    %s24 = sphi 0, %s23
    %s40 = sphi 0, %s24
    %s44 = sphi 0, %s44
    %s46 = sphi 0, %s44
    %s47 = sphi 0, %s46
    %s61 = sphi 0, %s47
    %s65 = sphi 0, %s65
    %s67 = sphi 0, %s65
    %s68 = sphi 0, %s67
    %s82 = sphi 0, %s68
    %s86 = sphi 0, %s86
    %s88 = sphi 0, %s86
    %s89 = sphi 0, %s88
    %s103 = sphi 0, %s89
    %s109 = sphi 0, %s111
    %s112 = sphi 0, %s109
    %s113 = sphi 0, %s112
    %s129 = sphi 0, %s113
  $region4: #{forward.24} parent=0 // loop_header_branch
    %13 = sbr.rel (%p11) target = $region8
  $region5: #{forward.24} parent=0 // loop_body
    %s15 = ssub.s32 %s10, 1
    %s16 = ssub.s32 %s10, 2
    %s17 = sadd.s32 %s10, 1
    %s18 = ssub.s32 %s10, %s17
    %p19 = scmp.eq.s32.totalorder %s18, 0
    %s21 = sadd.s32 %s20, 1
    %s22 = scalar_select %p19, %s20, %s21
    %p25 = pneg %p19
    %p26 = scmp.eq.s32.totalorder %s10, 1
    %p27 = por %p25, %p26
    %p28 = scmp.ne.s32.totalorder %s20, %s23
    %p29 = scmp.eq.s32.totalorder %s10, 0
    %p30 = por %p28, %p29
    %p31 = scmp.ne.s32.totalorder %s20, %s23
    %p32 = scmp.eq.s32.totalorder %s15, 1
    %p33 = por %p31, %p32
    %p34 = scmp.ne.s32.totalorder %s23, %s24
    %p35 = scmp.eq.s32.totalorder %s15, 0
    %p36 = por %p34, %p35
    %p37 = scmp.ne.s32.totalorder %s23, %s24
    %p38 = scmp.eq.s32.totalorder %s16, 1
    %p39 = por %p37, %p38
    %p41 = scmp.ne.s32.totalorder %s24, %s40
    %p42 = scmp.eq.s32.totalorder %s16, 0
    %p43 = por %p41, %p42
    %s45 = sadd.s32 %s44, 1
    %p48 = scmp.eq.s32.totalorder %s10, 1
    %p49 = scmp.ne.s32.totalorder %s44, %s46
    %p50 = scmp.eq.s32.totalorder %s10, 0
    %p51 = por %p49, %p50
    %p52 = scmp.ne.s32.totalorder %s44, %s46
    %p53 = scmp.eq.s32.totalorder %s15, 1
    %p54 = por %p52, %p53
    %p55 = scmp.ne.s32.totalorder %s46, %s47
    %p56 = scmp.eq.s32.totalorder %s15, 0
    %p57 = por %p55, %p56
    %p58 = scmp.ne.s32.totalorder %s46, %s47
    %p59 = scmp.eq.s32.totalorder %s16, 1
    %p60 = por %p58, %p59
    %p62 = scmp.ne.s32.totalorder %s47, %s61
    %p63 = scmp.eq.s32.totalorder %s16, 0
    %p64 = por %p62, %p63
    %s66 = sadd.s32 %s65, 1
    %p69 = scmp.eq.s32.totalorder %s10, 1
    %p70 = scmp.ne.s32.totalorder %s65, %s67
    %p71 = scmp.eq.s32.totalorder %s10, 0
    %p72 = por %p70, %p71
    %p73 = scmp.ne.s32.totalorder %s65, %s67
    %p74 = scmp.eq.s32.totalorder %s15, 1
    %p75 = por %p73, %p74
    %p76 = scmp.ne.s32.totalorder %s67, %s68
    %p77 = scmp.eq.s32.totalorder %s15, 0
    %p78 = por %p76, %p77
    %p79 = scmp.ne.s32.totalorder %s67, %s68
    %p80 = scmp.eq.s32.totalorder %s16, 1
    %p81 = por %p79, %p80
    %p83 = scmp.ne.s32.totalorder %s68, %s82
    %p84 = scmp.eq.s32.totalorder %s16, 0
    %p85 = por %p83, %p84
    %s87 = sadd.s32 %s86, 1
    %p90 = scmp.eq.s32.totalorder %s10, 1
    %p91 = scmp.ne.s32.totalorder %s86, %s88
    %p92 = scmp.eq.s32.totalorder %s10, 0
    %p93 = por %p91, %p92
    %p94 = scmp.ne.s32.totalorder %s86, %s88
    %p95 = scmp.eq.s32.totalorder %s15, 1
    %p96 = por %p94, %p95
    %p97 = scmp.ne.s32.totalorder %s88, %s89
    %p98 = scmp.eq.s32.totalorder %s15, 0
    %p99 = por %p97, %p98
    %p100 = scmp.ne.s32.totalorder %s88, %s89
    %p101 = scmp.eq.s32.totalorder %s16, 1
    %p102 = por %p100, %p101
    %p104 = scmp.ne.s32.totalorder %s89, %s103
    %p105 = scmp.eq.s32.totalorder %s16, 0
    %p106 = por %p104, %p105
    %s107 = ssub.s32 %s10, %s17
    %p108 = scmp.eq.s32.totalorder %s107, 0
    %s110 = sadd.s32 %s109, 1
    %s111 = scalar_select %p108, %s109, %s110
    %p114 = pneg %p108
    %p115 = scmp.eq.s32.totalorder %s10, 1
    %p116 = por %p114, %p115
    %p117 = scmp.ne.s32.totalorder %s109, %s112
    %p118 = scmp.eq.s32.totalorder %s10, 0
    %p119 = por %p117, %p118
    %p120 = scmp.ne.s32.totalorder %s109, %s112
    %p121 = scmp.eq.s32.totalorder %s15, 1
    %p122 = por %p120, %p121
    %p123 = scmp.ne.s32.totalorder %s112, %s113
    %p124 = scmp.eq.s32.totalorder %s15, 0
    %p125 = por %p123, %p124
    %p126 = scmp.ne.s32.totalorder %s112, %s113
    %p127 = scmp.eq.s32.totalorder %s16, 1
    %p128 = por %p126, %p127
    %p130 = scmp.ne.s32.totalorder %s113, %s129
    %p131 = scmp.eq.s32.totalorder %s16, 0
    %p132 = por %p130, %p131
    %p133 = scmp.le.s32.totalorder 1, %s10
    %p134 = scmp.lt.s32.totalorder %s10, 3
    %p135 = pnand %p133, %p134
    %p136 = pneg %p135
    // Predicated region
    $region9: #{forward.24} parent=5 // pred_check
      _
    $region10: #{forward.24} parent=5 // pred_check_branch
      %138 = sbr.rel (%p135) target = $region12
    $region11: #{forward.24} parent=5 // pred_region
      %s139 = ssub.s32 %s10, 1
      // Predicated region
      $region13: #{forward.24} parent=11 // pred_check
        %p140 = pneg %p57
      $region14: #{forward.24} parent=11 // pred_check_branch
        %142 = sbr.rel (%p140) target = $region16
      $region15: #{forward.24} parent=11 // pred_region
        _
      $region16: #{forward.24} parent=11 // pred_fallthru
        _
      // Predicated region
      $region17: #{forward.24} parent=11 // pred_check
        %p143 = pneg %p78
      $region18: #{forward.24} parent=11 // pred_check_branch
        %145 = sbr.rel (%p143) target = $region20
      $region19: #{forward.24} parent=11 // pred_region
        _
      $region20: #{forward.24} parent=11 // pred_fallthru
        _
      // Predicated region
      $region21: #{forward.24} parent=11 // pred_check
        %p146 = pneg %p99
      $region22: #{forward.24} parent=11 // pred_check_branch
        %148 = sbr.rel (%p146) target = $region24
      $region23: #{forward.24} parent=11 // pred_region
        _
      $region24: #{forward.24} parent=11 // pred_fallthru
        _
    $region12: #{forward.24} parent=5 // pred_fallthru
      _
    %p149 = scmp.lt.s32.totalorder %s10, 2
    // Predicated region
    $region25: #{forward.24} parent=5 // pred_check
      %p150 = pneg %p149
    $region26: #{forward.24} parent=5 // pred_check_branch
      %152 = sbr.rel (%p150) target = $region28
    $region27: #{forward.24} parent=5 // pred_region
      // Predicated region
      $region29: #{forward.24} parent=27 // pred_check
        %p153 = pneg %p30
      $region30: #{forward.24} parent=27 // pred_check_branch
        %155 = sbr.rel (%p153) target = $region32
      $region31: #{forward.24} parent=27 // pred_region
        %p156 = scmp.lt.s32.totalorder %s10, 1
        %s157 = scalar_select %p156, %s10, 1
        %s158 = smul.addr %s157, 24
        %s159 = smul.addr %s158, 4
        %s160 = scalar_lea.vmem %s0, %s159
      $region32: #{forward.24} parent=27 // pred_fallthru
        _
    $region28: #{forward.24} parent=5 // pred_fallthru
      _
    %p161 = scmp.le.s32.totalorder 1, %s10
    %p162 = scmp.lt.s32.totalorder %s10, 3
    %p163 = pnand %p161, %p162
    %p164 = pneg %p163
    // Predicated region
    $region33: #{forward.24} parent=5 // pred_check
      _
    $region34: #{forward.24} parent=5 // pred_check_branch
      %166 = sbr.rel (%p163) target = $region36
    $region35: #{forward.24} parent=5 // pred_region
      %s167 = ssub.s32 %s10, 1
      %p168 = scmp.lt.s32.totalorder %s15, 1
      %s169 = scalar_select %p168, %s15, 1
      %s170 = smul.addr %s169, 24
      %s171 = smul.addr %s170, 4
      %s172 = scalar_lea.vmem %s0, %s171
      %p173 = pneg %p36
      %p174 = pneg %p33
      %p175 = pneg %p57
      %p176 = pneg %p54
      %p177 = pneg %p78
      %p178 = pneg %p75
      %p179 = pneg %p99
      %p180 = pneg %p96
      %p181 = pneg %p125
      %p182 = pneg %p122
      %p183 = scmp.lt.s32.totalorder %s15, 1
      %s184 = scalar_select %p183, %s15, 1
      %s185 = smul.addr %s184, 8
      %s186 = smul.addr %s185, 8
      %s187 = scalar_lea.vmem %s4, %s186
      %p188 = scmp.lt.s32.totalorder %s15, 1
      %s189 = scalar_select %p188, %s15, 1
      %s190 = smul.addr %s189, 24
      %s191 = smul.addr %s190, 4
      %s192 = scalar_lea.vmem %s0, %s191
      %p193 = scmp.lt.s32.totalorder %s15, 1
      %s194 = scalar_select %p193, %s15, 1
      %s195 = smul.addr %s194, 8
      %s196 = smul.addr %s195, 8
      %s197 = scalar_lea.vmem %s4, %s196
      %v199 = vld [vmem:[%s192] sm:$0xff]
      %v200 = vld [vmem:[%s192 + $0x8] sm:$0xf]
      %v201 = vld [vmem:[%s192 + $0xc] sm:$0xff]
      %v202 = vld [vmem:[%s192 + $0x14] sm:$0xf]
      %v203 = vld [vmem:[%s192 + $0x18] sm:$0xff]
      %v204 = vld [vmem:[%s192 + $0x20] sm:$0xf]
      %v205 = vld [vmem:[%s192 + $0x24] sm:$0xff]
      %v206 = vld [vmem:[%s192 + $0x2c] sm:$0xf]
      %v207 = vld [vmem:[%s192 + $0x30] sm:$0xff]
      %v208 = vld [vmem:[%s192 + $0x38] sm:$0xf]
      %v209 = vld [vmem:[%s192 + $0x3c] sm:$0xff]
      %v210 = vld [vmem:[%s192 + $0x44] sm:$0xf]
      %v211 = vld [vmem:[%s192 + $0x48] sm:$0xff]
      %v212 = vld [vmem:[%s192 + $0x50] sm:$0xf]
      %v213 = vld [vmem:[%s192 + $0x54] sm:$0xff]
      %v214 = vld [vmem:[%s192 + $0x5c] sm:$0xf]
      %v215 = vld [vmem:[%s1] sm:$0xf]
      %v216 = vld [vmem:[%s1 + $0x4] sm:$0xf]
      %v217 = vld [vmem:[%s1 + $0x8] sm:$0xf]
      %v218 = vld [vmem:[%s1 + $0xc] sm:$0xf]
      %v219 = vld [vmem:[%s1 + $0x10] sm:$0xf]
      %v220 = vld [vmem:[%s1 + $0x14] sm:$0xf]
      %v221 = vld [vmem:[%s1 + $0x18] sm:$0xf]
      %v222 = vld [vmem:[%s1 + $0x1c] sm:$0xf]
      %v223 = vld [vmem:[%s1 + $0x20] sm:$0xf]
      %v224 = vld [vmem:[%s1 + $0x24] sm:$0xf]
      %v225 = vld [vmem:[%s1 + $0x28] sm:$0xf]
      %v226 = vld [vmem:[%s1 + $0x2c] sm:$0xf]
      %v227 = vld [vmem:[%s1 + $0x30] sm:$0xf]
      %v228 = vld [vmem:[%s1 + $0x34] sm:$0xf]
      %v229 = vld [vmem:[%s1 + $0x38] sm:$0xf]
      %v230 = vld [vmem:[%s1 + $0x3c] sm:$0xf]
      %v231 = vld [vmem:[%s1 + $0x40] sm:$0xf]
      %v232 = vld [vmem:[%s1 + $0x44] sm:$0xf]
      %v233 = vld [vmem:[%s1 + $0x48] sm:$0xf]
      %v234 = vld [vmem:[%s1 + $0x4c] sm:$0xf]
      %v235 = vld [vmem:[%s1 + $0x50] sm:$0xf]
      %v236 = vld [vmem:[%s1 + $0x54] sm:$0xf]
      %v237 = vld [vmem:[%s1 + $0x58] sm:$0xf]
      %v238 = vld [vmem:[%s1 + $0x5c] sm:$0xf]
      %v239 = vld [vmem:[%s1 + $0x60] sm:$0xf]
      %v240 = vld [vmem:[%s1 + $0x64] sm:$0xf]
      %v241 = vld [vmem:[%s1 + $0x68] sm:$0xf]
      %v242 = vld [vmem:[%s1 + $0x6c] sm:$0xf]
      %v243 = vld [vmem:[%s1 + $0x70] sm:$0xf]
      %v244 = vld [vmem:[%s1 + $0x74] sm:$0xf]
      %v245 = vld [vmem:[%s1 + $0x78] sm:$0xf]
      %v246 = vld [vmem:[%s1 + $0x7c] sm:$0xf]
      %v247 = vld [vmem:[%s1 + $0x80] sm:$0xf]
      %v248 = vld [vmem:[%s1 + $0x84] sm:$0xf]
      %v249 = vld [vmem:[%s1 + $0x88] sm:$0xf]
      %v250 = vld [vmem:[%s1 + $0x8c] sm:$0xf]
      %v267 = vunpack.c.l.b16 %v199
      %v268 = vunpack.c.h.b16 %v199
      %v269 = vunpack.c.l.b16 %v200
      %v270 = vunpack.c.l.b16 %v201
      %v271 = vunpack.c.h.b16 %v201
      %v272 = vunpack.c.l.b16 %v202
      %v273 = vunpack.c.l.b16 %v203
      %v274 = vunpack.c.h.b16 %v203
      %v275 = vunpack.c.l.b16 %v204
      %v276 = vunpack.c.l.b16 %v205
      %v277 = vunpack.c.h.b16 %v205
      %v278 = vunpack.c.l.b16 %v206
      %v279 = vunpack.c.l.b16 %v207
      %v280 = vunpack.c.h.b16 %v207
      %v281 = vunpack.c.l.b16 %v208
      %v282 = vunpack.c.l.b16 %v209
      %v283 = vunpack.c.h.b16 %v209
      %v284 = vunpack.c.l.b16 %v210
      %v285 = vunpack.c.l.b16 %v211
      %v286 = vunpack.c.h.b16 %v211
      %v287 = vunpack.c.l.b16 %v212
      %v288 = vunpack.c.l.b16 %v213
      %v289 = vunpack.c.h.b16 %v213
      %v290 = vunpack.c.l.b16 %v214
      %v291 = vpack.c.b16 %v270, %v267
      %v292 = vpack.c.b16 %v271, %v268
      %v293 = vpack.c.b16 %v272, %v269
      %v294 = vpack.c.b16 %v276, %v273
      %v295 = vpack.c.b16 %v277, %v274
      %v296 = vpack.c.b16 %v278, %v275
      %v297 = vpack.c.b16 %v282, %v279
      %v298 = vpack.c.b16 %v283, %v280
      %v299 = vpack.c.b16 %v284, %v281
      %v300 = vpack.c.b16 %v288, %v285
      %v301 = vpack.c.b16 %v289, %v286
      %v302 = vpack.c.b16 %v290, %v287
      %v347 = vunpack.c.l.b16 %v215
      %v348 = vunpack.c.l.b16 %v216
      %v349 = vunpack.c.l.b16 %v217
      %v350 = vunpack.c.l.b16 %v218
      %v351 = vunpack.c.l.b16 %v219
      %v352 = vunpack.c.l.b16 %v220
      %v353 = vunpack.c.l.b16 %v221
      %v354 = vunpack.c.l.b16 %v222
      %v355 = vunpack.c.l.b16 %v223
      %v356 = vunpack.c.l.b16 %v224
      %v357 = vunpack.c.l.b16 %v225
      %v358 = vunpack.c.l.b16 %v226
      %v359 = vunpack.c.l.b16 %v227
      %v360 = vunpack.c.l.b16 %v228
      %v361 = vunpack.c.l.b16 %v229
      %v362 = vunpack.c.l.b16 %v230
      %v363 = vunpack.c.l.b16 %v231
      %v364 = vunpack.c.l.b16 %v232
      %v365 = vunpack.c.l.b16 %v233
      %v366 = vunpack.c.l.b16 %v234
      %v367 = vunpack.c.l.b16 %v235
      %v368 = vunpack.c.l.b16 %v236
      %v369 = vunpack.c.l.b16 %v237
      %v370 = vunpack.c.l.b16 %v238
      %v371 = vunpack.c.l.b16 %v239
      %v372 = vunpack.c.l.b16 %v240
      %v373 = vunpack.c.l.b16 %v241
      %v374 = vunpack.c.l.b16 %v242
      %v375 = vunpack.c.l.b16 %v243
      %v376 = vunpack.c.l.b16 %v244
      %v377 = vunpack.c.l.b16 %v245
      %v378 = vunpack.c.l.b16 %v246
      %v379 = vunpack.c.l.b16 %v247
      %v380 = vunpack.c.l.b16 %v248
      %v381 = vunpack.c.l.b16 %v249
      %v382 = vunpack.c.l.b16 %v250
      %v383 = vpack.c.b16 %v348, %v347
      %v384 = vpack.c.b16 %v350, %v349
      %v385 = vpack.c.b16 %v352, %v351
      %v386 = vpack.c.b16 %v354, %v353
      %v387 = vpack.c.b16 %v356, %v355
      %v388 = vpack.c.b16 %v358, %v357
      %v389 = vpack.c.b16 %v360, %v359
      %v390 = vpack.c.b16 %v362, %v361
      %v391 = vpack.c.b16 %v364, %v363
      %v392 = vpack.c.b16 %v366, %v365
      %v393 = vpack.c.b16 %v368, %v367
      %v394 = vpack.c.b16 %v370, %v369
      %v395 = vpack.c.b16 %v372, %v371
      %v396 = vpack.c.b16 %v374, %v373
      %v397 = vpack.c.b16 %v376, %v375
      %v398 = vpack.c.b16 %v378, %v377
      %v399 = vpack.c.b16 %v380, %v379
      %v400 = vpack.c.b16 %v382, %v381
      %vm419 = vcmask 261120
      %v421 = vsel %vm419, %v293, 0
      %v424 = vsel %vm419, %v296, 0
      %v427 = vsel %vm419, %v299, 0
      %v430 = vsel %vm419, %v302, 0
      %432 = vmatpush.bf16.msra.mxu0 %v390
      %433 = vmatpush.bf16.msra.mxu0 %v389
      %434 = vmatpush.bf16.msra.mxu0 %v388
      %435 = vmatpush.bf16.msra.mxu0 %v387
      %436 = vmatpush.bf16.msra.mxu0 %v386
      %437 = vmatpush.bf16.msra.mxu0 %v385
      %438 = vmatpush.bf16.msra.mxu0 %v384
      %439 = vmatpush.bf16.msra.mxu0 %v383
      %440 = vmatmul.bf16.gmra.mxu0 %v291
      %v441 = vpop.f32.mrf.mxu0
      %v442 = vadd.f32 0.0, %v441
      %v443 = vpop.f32.mrf.mxu0
      %v444 = vadd.f32 0.0, %v443
      %445 = vmatmul.bf16.gmra.mxu0 %v294
      %v446 = vpop.f32.mrf.mxu0
      %v447 = vadd.f32 0.0, %v446
      %v448 = vpop.f32.mrf.mxu0
      %v449 = vadd.f32 0.0, %v448
      %450 = vmatmul.bf16.gmra.mxu0 %v297
      %v451 = vpop.f32.mrf.mxu0
      %v452 = vadd.f32 0.0, %v451
      %v453 = vpop.f32.mrf.mxu0
      %v454 = vadd.f32 0.0, %v453
      %455 = vmatmul.bf16.gmra.mxu0 %v300
      %v456 = vpop.f32.mrf.mxu0
      %v457 = vadd.f32 0.0, %v456
      %v458 = vpop.f32.mrf.mxu0
      %v459 = vadd.f32 0.0, %v458
      %460 = vdwg.mxu0
      %461 = vmatpush.bf16.msra.mxu0 %v398
      %462 = vmatpush.bf16.msra.mxu0 %v397
      %463 = vmatpush.bf16.msra.mxu0 %v396
      %464 = vmatpush.bf16.msra.mxu0 %v395
      %465 = vmatpush.bf16.msra.mxu0 %v394
      %466 = vmatpush.bf16.msra.mxu0 %v393
      %467 = vmatpush.bf16.msra.mxu0 %v392
      %468 = vmatpush.bf16.msra.mxu0 %v391
      %469 = vmatmul.bf16.gmra.mxu0 %v292
      %v470 = vpop.f32.mrf.mxu0
      %v471 = vadd.f32 %v442, %v470
      %v472 = vpop.f32.mrf.mxu0
      %v473 = vadd.f32 %v444, %v472
      %474 = vmatmul.bf16.gmra.mxu0 %v295
      %v475 = vpop.f32.mrf.mxu0
      %v476 = vadd.f32 %v447, %v475
      %v477 = vpop.f32.mrf.mxu0
      %v478 = vadd.f32 %v449, %v477
      %479 = vmatmul.bf16.gmra.mxu0 %v298
      %v480 = vpop.f32.mrf.mxu0
      %v481 = vadd.f32 %v452, %v480
      %v482 = vpop.f32.mrf.mxu0
      %v483 = vadd.f32 %v454, %v482
      %484 = vmatmul.bf16.gmra.mxu0 %v301
      %v485 = vpop.f32.mrf.mxu0
      %v486 = vadd.f32 %v457, %v485
      %v487 = vpop.f32.mrf.mxu0
      %v488 = vadd.f32 %v459, %v487
      %489 = vdwg.mxu0
      %490 = vmatpush.bf16.msra.mxu0 0
      %491 = vmatpush.bf16.msra.mxu0 0
      %492 = vmatpush.bf16.msra.mxu0 0
      %493 = vmatpush.bf16.msra.mxu0 0
      %494 = vmatpush.bf16.msra.mxu0 0
      %495 = vmatpush.bf16.msra.mxu0 0
      %496 = vmatpush.bf16.msra.mxu0 %v400
      %497 = vmatpush.bf16.msra.mxu0 %v399
      %498 = vmatmul.bf16.gmra.mxu0 %v421
      %v499 = vpop.f32.mrf.mxu0
      %v500 = vadd.f32 %v471, %v499
      %v501 = vpop.f32.mrf.mxu0
      %v502 = vadd.f32 %v473, %v501
      %503 = vmatmul.bf16.gmra.mxu0 %v424
      %v504 = vpop.f32.mrf.mxu0
      %v505 = vadd.f32 %v476, %v504
      %v506 = vpop.f32.mrf.mxu0
      %v507 = vadd.f32 %v478, %v506
      %508 = vmatmul.bf16.gmra.mxu0 %v427
      %v509 = vpop.f32.mrf.mxu0
      %v510 = vadd.f32 %v481, %v509
      %v511 = vpop.f32.mrf.mxu0
      %v512 = vadd.f32 %v483, %v511
      %513 = vmatmul.bf16.gmra.mxu0 %v430
      %v514 = vpop.f32.mrf.mxu0
      %v515 = vadd.f32 %v486, %v514
      %v516 = vpop.f32.mrf.mxu0
      %v517 = vadd.f32 %v488, %v516
      %518 = vdwg.mxu0
      %v519 = vld [vmem:[%s2] sm:$0x1]
      %v520 = vld [vmem:[%s3] sm:$0x1]
      %vm521 = vcmask 130048
      %v522 = vsel %vm521, %v500, 0.0
      %v523 = vsel %vm521, %v502, 0.0
      %v524 = vadd.f32 %v522, %v523
      %v525 = vsel %vm521, %v505, 0.0
      %v526 = vadd.f32 %v524, %v525
      %v527 = vsel %vm521, %v507, 0.0
      %v528 = vadd.f32 %v526, %v527
      %v529 = vsel %vm521, %v510, 0.0
      %v530 = vadd.f32 %v528, %v529
      %v531 = vsel %vm521, %v512, 0.0
      %v532 = vadd.f32 %v530, %v531
      %v533 = vsel %vm521, %v515, 0.0
      %v534 = vadd.f32 %v532, %v533
      %v535 = vsel %vm521, %v517, 0.0
      %v536 = vadd.f32 %v534, %v535
      %v537 = vrot.slane %v536, 4
      %v538 = vadd.f32 %v536, %v537
      %v539 = vrot.slane %v538, 2
      %v540 = vadd.f32 %v538, %v539
      %v541 = vrot.slane %v540, 1
      %v542 = vadd.f32 %v540, %v541
      %v543 = vrcp.pop 64.0
      %v544 = vmul.f32 64.0, %v543
      %v545 = vsub.f32 1.0, %v544
      %v546 = vmul.f32 %v543, %v545
      %v547 = vadd.f32 %v543, %v546
      %vm548 = vweird.f32 %v543
      %v549 = vsel %vm548, %v543, %v547
      %v550 = vmul.f32 %v542, %v549
      %v551 = vsub.f32 %v500, %v550
      %v552 = vsub.f32 %v502, %v550
      %v553 = vsub.f32 %v505, %v550
      %v554 = vsub.f32 %v507, %v550
      %v555 = vsub.f32 %v510, %v550
      %v556 = vsub.f32 %v512, %v550
      %v557 = vsub.f32 %v515, %v550
      %v558 = vsub.f32 %v517, %v550
      %v559 = vmul.f32 %v551, %v551
      %v560 = vmul.f32 %v552, %v552
      %v561 = vmul.f32 %v553, %v553
      %v562 = vmul.f32 %v554, %v554
      %v563 = vmul.f32 %v555, %v555
      %v564 = vmul.f32 %v556, %v556
      %v565 = vmul.f32 %v557, %v557
      %v566 = vmul.f32 %v558, %v558
      %v567 = vsel %vm521, %v559, 0.0
      %v568 = vsel %vm521, %v560, 0.0
      %v569 = vadd.f32 %v567, %v568
      %v570 = vsel %vm521, %v561, 0.0
      %v571 = vadd.f32 %v569, %v570
      %v572 = vsel %vm521, %v562, 0.0
      %v573 = vadd.f32 %v571, %v572
      %v574 = vsel %vm521, %v563, 0.0
      %v575 = vadd.f32 %v573, %v574
      %v576 = vsel %vm521, %v564, 0.0
      %v577 = vadd.f32 %v575, %v576
      %v578 = vsel %vm521, %v565, 0.0
      %v579 = vadd.f32 %v577, %v578
      %v580 = vsel %vm521, %v566, 0.0
      %v581 = vadd.f32 %v579, %v580
      %v582 = vrot.slane %v581, 4
      %v583 = vadd.f32 %v581, %v582
      %v584 = vrot.slane %v583, 2
      %v585 = vadd.f32 %v583, %v584
      %v586 = vrot.slane %v585, 1
      %v587 = vadd.f32 %v585, %v586
      %v588 = vmul.f32 %v587, %v549
      %v589 = vadd.f32 %v588, 1e-05
      %v590 = vrsqrt.pop %v589
      %v591 = vmul.f32 %v590, %v589
      %v592 = vmul.f32 %v591, %v590
      %v593 = vmul.f32 0.5, %v592
      %v594 = vsub.f32 1.5, %v593
      %v595 = vmul.f32 %v590, %v594
      %vm596 = vweird.f32 %v589
      %vm597 = vweird.f32 %v590
      %vm598 = vmor %vm596, %vm597
      %v599 = vsel %vm598, %v590, %v595
      %v600 = vmul.f32 %v551, %v599
      %v601 = vmul.f32 %v552, %v599
      %v602 = vmul.f32 %v553, %v599
      %v603 = vmul.f32 %v554, %v599
      %v604 = vmul.f32 %v555, %v599
      %v605 = vmul.f32 %v556, %v599
      %v606 = vmul.f32 %v557, %v599
      %v607 = vmul.f32 %v558, %v599
      %v609 = vperm.slane %v519, 0
      %v611 = vmul.f32 %v600, %v609
      %v612 = vmul.f32 %v601, %v609
      %v613 = vmul.f32 %v602, %v609
      %v614 = vmul.f32 %v603, %v609
      %v615 = vmul.f32 %v604, %v609
      %v616 = vmul.f32 %v605, %v609
      %v617 = vmul.f32 %v606, %v609
      %v618 = vmul.f32 %v607, %v609
      %v620 = vperm.slane %v520, 0
      %v622 = vadd.f32 %v611, %v620
      %v623 = vadd.f32 %v612, %v620
      %v624 = vadd.f32 %v613, %v620
      %v625 = vadd.f32 %v614, %v620
      %v626 = vadd.f32 %v615, %v620
      %v627 = vadd.f32 %v616, %v620
      %v628 = vadd.f32 %v617, %v620
      %v629 = vadd.f32 %v618, %v620
      %v630 = vmul.f32 %v622, 0.01
      %v631 = vmul.f32 %v623, 0.01
      %v632 = vmul.f32 %v624, 0.01
      %v633 = vmul.f32 %v625, 0.01
      %v634 = vmul.f32 %v626, 0.01
      %v635 = vmul.f32 %v627, 0.01
      %v636 = vmul.f32 %v628, 0.01
      %v637 = vmul.f32 %v629, 0.01
      %v638 = vmax.f32 %v622, %v630
      %v639 = vmax.f32 %v623, %v631
      %v640 = vmax.f32 %v624, %v632
      %v641 = vmax.f32 %v625, %v633
      %v642 = vmax.f32 %v626, %v634
      %v643 = vmax.f32 %v627, %v635
      %v644 = vmax.f32 %v628, %v636
      %v645 = vmax.f32 %v629, %v637
      %646 = vst.msk [vmem:[%s197] sm:$0xff] %vm521, %v638
      %647 = vst.msk [vmem:[%s197 + $0x8] sm:$0xff] %vm521, %v639
      %648 = vst.msk [vmem:[%s197 + $0x10] sm:$0xff] %vm521, %v640
      %649 = vst.msk [vmem:[%s197 + $0x18] sm:$0xff] %vm521, %v641
      %650 = vst.msk [vmem:[%s197 + $0x20] sm:$0xff] %vm521, %v642
      %651 = vst.msk [vmem:[%s197 + $0x28] sm:$0xff] %vm521, %v643
      %652 = vst.msk [vmem:[%s197 + $0x30] sm:$0xff] %vm521, %v644
      %653 = vst.msk [vmem:[%s197 + $0x38] sm:$0xff] %vm521, %v645
      %p654 = scmp.lt.s32.totalorder %s15, 1
      %s655 = scalar_select %p654, %s15, 1
      %s656 = smul.addr %s655, 8
      %s657 = smul.addr %s656, 8
      %s658 = scalar_lea.vmem %s4, %s657
      // Predicated region
      $region37: #{forward.24} parent=35 // pred_check
        %p659 = pneg %p122
      $region38: #{forward.24} parent=35 // pred_check_branch
        %661 = sbr.rel (%p659) target = $region40
      $region39: #{forward.24} parent=35 // pred_region
        _
      $region40: #{forward.24} parent=35 // pred_fallthru
        _
    $region36: #{forward.24} parent=5 // pred_fallthru
      _
    %p662 = scmp.le.s32.totalorder 2, %s10
    // Predicated region
    $region41: #{forward.24} parent=5 // pred_check
      %p663 = pneg %p662
    $region42: #{forward.24} parent=5 // pred_check_branch
      %665 = sbr.rel (%p663) target = $region44
    $region43: #{forward.24} parent=5 // pred_region
      %s666 = ssub.s32 %s10, 2
      // Predicated region
      $region45: #{forward.24} parent=43 // pred_check
        %p667 = pneg %p128
      $region46: #{forward.24} parent=43 // pred_check_branch
        %669 = sbr.rel (%p667) target = $region48
      $region47: #{forward.24} parent=43 // pred_region
        %p670 = scmp.lt.s32.totalorder %s16, 1
        %s671 = scalar_select %p670, %s16, 1
        %s672 = smul.addr %s671, 8
        %s673 = smul.addr %s672, 8
        %s674 = scalar_lea.vmem %s4, %s673
      $region48: #{forward.24} parent=43 // pred_fallthru
        _
    $region44: #{forward.24} parent=5 // pred_fallthru
      _
  $region6: #{forward.24} parent=0 // loop_footer
    %s14 = sadd.s32 1, %s10
  $region7: #{forward.24} parent=0 // loop_footer_branch
    %9 = sbr.rel target = $region3
  $region8: #{forward.24} parent=0 // loop_exit
    _

// kernel: forward.27
$region0: #{forward.27}
  #allocation0 [shape = 'u32[]', space=smem, size = 0x4, offset = 0x4, fixed_abs, tag = 'smem constant byte address 0x4 - core index']
  #allocation1 [shape = 'u32[72,128]{1,0:T(1,128)}', space=vmem, size = 0x9000, scoped, tag = 'internal scratch']
  %s0 = inlined_call_operand.vmem [shape: bf16[2,256,8], index: 0, kind: input, shape index: {}]
  %s1 = inlined_call_operand.vmem [shape: bf16[8,2], index: 1, kind: input, shape index: {}]
  %s2 = inlined_call_operand.vmem [shape: f32[1,2], index: 2, kind: input, shape index: {}]
  %s3 = inlined_call_operand.vmem [shape: f32[2,256,2], index: 3, kind: output, shape index: {}]
  %s4 = sld [smem:[#allocation0]]
  $region45: #{forward.27} parent=0
    _
  %s6 = ssub.s32 1, %s4
  %s7 = scalar_select 0, %s6, %s4
  loop: start=0, step=1, limit=4
  $region2: #{forward.27} parent=0 // loop_pre_header
    _
  $region3: #{forward.27} parent=0 // loop_header
    %s9 = sphi 0, %s13
    %p10 = scmp.ge.s32.totalorder %s9, 4
    %s19 = sphi 0, %s21
    %s22 = sphi 0, %s19
    %s23 = sphi 0, %s22
    %s39 = sphi 0, %s23
    %s43 = sphi 0, %s43
    %s45 = sphi 0, %s43
    %s46 = sphi 0, %s45
    %s60 = sphi 0, %s46
    %s64 = sphi 0, %s64
    %s66 = sphi 0, %s64
    %s67 = sphi 0, %s66
    %s81 = sphi 0, %s67
    %s87 = sphi 0, %s89
    %s90 = sphi 0, %s87
    %s91 = sphi 0, %s90
    %s107 = sphi 0, %s91
  $region4: #{forward.27} parent=0 // loop_header_branch
    %12 = sbr.rel (%p10) target = $region8
  $region5: #{forward.27} parent=0 // loop_body
    %s14 = ssub.s32 %s9, 1
    %s15 = ssub.s32 %s9, 2
    %s16 = sadd.s32 %s9, 1
    %s17 = ssub.s32 %s9, %s16
    %p18 = scmp.eq.s32.totalorder %s17, 0
    %s20 = sadd.s32 %s19, 1
    %s21 = scalar_select %p18, %s19, %s20
    %p24 = pneg %p18
    %p25 = scmp.eq.s32.totalorder %s9, 1
    %p26 = por %p24, %p25
    %p27 = scmp.ne.s32.totalorder %s19, %s22
    %p28 = scmp.eq.s32.totalorder %s9, 0
    %p29 = por %p27, %p28
    %p30 = scmp.ne.s32.totalorder %s19, %s22
    %p31 = scmp.eq.s32.totalorder %s14, 1
    %p32 = por %p30, %p31
    %p33 = scmp.ne.s32.totalorder %s22, %s23
    %p34 = scmp.eq.s32.totalorder %s14, 0
    %p35 = por %p33, %p34
    %p36 = scmp.ne.s32.totalorder %s22, %s23
    %p37 = scmp.eq.s32.totalorder %s15, 1
    %p38 = por %p36, %p37
    %p40 = scmp.ne.s32.totalorder %s23, %s39
    %p41 = scmp.eq.s32.totalorder %s15, 0
    %p42 = por %p40, %p41
    %s44 = sadd.s32 %s43, 1
    %p47 = scmp.eq.s32.totalorder %s9, 1
    %p48 = scmp.ne.s32.totalorder %s43, %s45
    %p49 = scmp.eq.s32.totalorder %s9, 0
    %p50 = por %p48, %p49
    %p51 = scmp.ne.s32.totalorder %s43, %s45
    %p52 = scmp.eq.s32.totalorder %s14, 1
    %p53 = por %p51, %p52
    %p54 = scmp.ne.s32.totalorder %s45, %s46
    %p55 = scmp.eq.s32.totalorder %s14, 0
    %p56 = por %p54, %p55
    %p57 = scmp.ne.s32.totalorder %s45, %s46
    %p58 = scmp.eq.s32.totalorder %s15, 1
    %p59 = por %p57, %p58
    %p61 = scmp.ne.s32.totalorder %s46, %s60
    %p62 = scmp.eq.s32.totalorder %s15, 0
    %p63 = por %p61, %p62
    %s65 = sadd.s32 %s64, 1
    %p68 = scmp.eq.s32.totalorder %s9, 1
    %p69 = scmp.ne.s32.totalorder %s64, %s66
    %p70 = scmp.eq.s32.totalorder %s9, 0
    %p71 = por %p69, %p70
    %p72 = scmp.ne.s32.totalorder %s64, %s66
    %p73 = scmp.eq.s32.totalorder %s14, 1
    %p74 = por %p72, %p73
    %p75 = scmp.ne.s32.totalorder %s66, %s67
    %p76 = scmp.eq.s32.totalorder %s14, 0
    %p77 = por %p75, %p76
    %p78 = scmp.ne.s32.totalorder %s66, %s67
    %p79 = scmp.eq.s32.totalorder %s15, 1
    %p80 = por %p78, %p79
    %p82 = scmp.ne.s32.totalorder %s67, %s81
    %p83 = scmp.eq.s32.totalorder %s15, 0
    %p84 = por %p82, %p83
    %s85 = ssub.s32 %s9, %s16
    %p86 = scmp.eq.s32.totalorder %s85, 0
    %s88 = sadd.s32 %s87, 1
    %s89 = scalar_select %p86, %s87, %s88
    %p92 = pneg %p86
    %p93 = scmp.eq.s32.totalorder %s9, 1
    %p94 = por %p92, %p93
    %p95 = scmp.ne.s32.totalorder %s87, %s90
    %p96 = scmp.eq.s32.totalorder %s9, 0
    %p97 = por %p95, %p96
    %p98 = scmp.ne.s32.totalorder %s87, %s90
    %p99 = scmp.eq.s32.totalorder %s14, 1
    %p100 = por %p98, %p99
    %p101 = scmp.ne.s32.totalorder %s90, %s91
    %p102 = scmp.eq.s32.totalorder %s14, 0
    %p103 = por %p101, %p102
    %p104 = scmp.ne.s32.totalorder %s90, %s91
    %p105 = scmp.eq.s32.totalorder %s15, 1
    %p106 = por %p104, %p105
    %p108 = scmp.ne.s32.totalorder %s91, %s107
    %p109 = scmp.eq.s32.totalorder %s15, 0
    %p110 = por %p108, %p109
    %p111 = scmp.le.s32.totalorder 1, %s9
    %p112 = scmp.lt.s32.totalorder %s9, 3
    %p113 = pnand %p111, %p112
    %p114 = pneg %p113
    // Predicated region
    $region9: #{forward.27} parent=5 // pred_check
      _
    $region10: #{forward.27} parent=5 // pred_check_branch
      %116 = sbr.rel (%p113) target = $region12
    $region11: #{forward.27} parent=5 // pred_region
      %s117 = ssub.s32 %s9, 1
      // Predicated region
      $region13: #{forward.27} parent=11 // pred_check
        %p118 = pneg %p56
      $region14: #{forward.27} parent=11 // pred_check_branch
        %120 = sbr.rel (%p118) target = $region16
      $region15: #{forward.27} parent=11 // pred_region
        _
      $region16: #{forward.27} parent=11 // pred_fallthru
        _
      // Predicated region
      $region17: #{forward.27} parent=11 // pred_check
        %p121 = pneg %p77
      $region18: #{forward.27} parent=11 // pred_check_branch
        %123 = sbr.rel (%p121) target = $region20
      $region19: #{forward.27} parent=11 // pred_region
        _
      $region20: #{forward.27} parent=11 // pred_fallthru
        _
    $region12: #{forward.27} parent=5 // pred_fallthru
      _
    %p124 = scmp.lt.s32.totalorder %s9, 2
    // Predicated region
    $region21: #{forward.27} parent=5 // pred_check
      %p125 = pneg %p124
    $region22: #{forward.27} parent=5 // pred_check_branch
      %127 = sbr.rel (%p125) target = $region24
    $region23: #{forward.27} parent=5 // pred_region
      // Predicated region
      $region25: #{forward.27} parent=23 // pred_check
        %p128 = pneg %p29
      $region26: #{forward.27} parent=23 // pred_check_branch
        %130 = sbr.rel (%p128) target = $region28
      $region27: #{forward.27} parent=23 // pred_region
        %p131 = scmp.lt.s32.totalorder %s9, 1
        %s132 = scalar_select %p131, %s9, 1
        %s133 = smul.addr %s132, 32
        %s134 = smul.addr %s133, 4
        %s135 = scalar_lea.vmem %s0, %s134
      $region28: #{forward.27} parent=23 // pred_fallthru
        _
    $region24: #{forward.27} parent=5 // pred_fallthru
      _
    %p136 = scmp.le.s32.totalorder 1, %s9
    %p137 = scmp.lt.s32.totalorder %s9, 3
    %p138 = pnand %p136, %p137
    %p139 = pneg %p138
    // Predicated region
    $region29: #{forward.27} parent=5 // pred_check
      _
    $region30: #{forward.27} parent=5 // pred_check_branch
      %141 = sbr.rel (%p138) target = $region32
    $region31: #{forward.27} parent=5 // pred_region
      %s142 = ssub.s32 %s9, 1
      %p143 = scmp.lt.s32.totalorder %s14, 1
      %s144 = scalar_select %p143, %s14, 1
      %s145 = smul.addr %s144, 32
      %s146 = smul.addr %s145, 4
      %s147 = scalar_lea.vmem %s0, %s146
      %p148 = pneg %p35
      %p149 = pneg %p32
      %p150 = pneg %p56
      %p151 = pneg %p53
      %p152 = pneg %p77
      %p153 = pneg %p74
      %p154 = pneg %p103
      %p155 = pneg %p100
      %p156 = scmp.lt.s32.totalorder %s14, 1
      %s157 = scalar_select %p156, %s14, 1
      %s158 = smul.addr %s157, 32
      %s159 = smul.addr %s158, 8
      %s160 = scalar_lea.vmem %s3, %s159
      %p161 = scmp.lt.s32.totalorder %s14, 1
      %s162 = scalar_select %p161, %s14, 1
      %s163 = smul.addr %s162, 32
      %s164 = smul.addr %s163, 4
      %s165 = scalar_lea.vmem %s0, %s164
      %p166 = scmp.lt.s32.totalorder %s14, 1
      %s167 = scalar_select %p166, %s14, 1
      %s168 = smul.addr %s167, 32
      %s169 = smul.addr %s168, 8
      %s170 = scalar_lea.vmem %s3, %s169
      %v172 = vld [vmem:[%s165] sm:$0xf]
      %v173 = vld [vmem:[%s165 + $0x4] sm:$0xf]
      %v174 = vld [vmem:[%s165 + $0x8] sm:$0xf]
      %v175 = vld [vmem:[%s165 + $0xc] sm:$0xf]
      %v176 = vld [vmem:[%s165 + $0x10] sm:$0xf]
      %v177 = vld [vmem:[%s165 + $0x14] sm:$0xf]
      %v178 = vld [vmem:[%s165 + $0x18] sm:$0xf]
      %v179 = vld [vmem:[%s165 + $0x1c] sm:$0xf]
      %v180 = vld [vmem:[%s165 + $0x20] sm:$0xf]
      %v181 = vld [vmem:[%s165 + $0x24] sm:$0xf]
      %v182 = vld [vmem:[%s165 + $0x28] sm:$0xf]
      %v183 = vld [vmem:[%s165 + $0x2c] sm:$0xf]
      %v184 = vld [vmem:[%s165 + $0x30] sm:$0xf]
      %v185 = vld [vmem:[%s165 + $0x34] sm:$0xf]
      %v186 = vld [vmem:[%s165 + $0x38] sm:$0xf]
      %v187 = vld [vmem:[%s165 + $0x3c] sm:$0xf]
      %v188 = vld [vmem:[%s165 + $0x40] sm:$0xf]
      %v189 = vld [vmem:[%s165 + $0x44] sm:$0xf]
      %v190 = vld [vmem:[%s165 + $0x48] sm:$0xf]
      %v191 = vld [vmem:[%s165 + $0x4c] sm:$0xf]
      %v192 = vld [vmem:[%s165 + $0x50] sm:$0xf]
      %v193 = vld [vmem:[%s165 + $0x54] sm:$0xf]
      %v194 = vld [vmem:[%s165 + $0x58] sm:$0xf]
      %v195 = vld [vmem:[%s165 + $0x5c] sm:$0xf]
      %v196 = vld [vmem:[%s165 + $0x60] sm:$0xf]
      %v197 = vld [vmem:[%s165 + $0x64] sm:$0xf]
      %v198 = vld [vmem:[%s165 + $0x68] sm:$0xf]
      %v199 = vld [vmem:[%s165 + $0x6c] sm:$0xf]
      %v200 = vld [vmem:[%s165 + $0x70] sm:$0xf]
      %v201 = vld [vmem:[%s165 + $0x74] sm:$0xf]
      %v202 = vld [vmem:[%s165 + $0x78] sm:$0xf]
      %v203 = vld [vmem:[%s165 + $0x7c] sm:$0xf]
      %v204 = vld [vmem:[%s1] sm:$0xf]
      %v205 = vld [vmem:[%s2] sm:$0x1]
      %v207 = vperm.slane %v205, 0
      %v241 = vunpack.c.l.b16 %v172
      %v242 = vunpack.c.l.b16 %v173
      %v243 = vunpack.c.l.b16 %v174
      %v244 = vunpack.c.l.b16 %v175
      %v245 = vunpack.c.l.b16 %v176
      %v246 = vunpack.c.l.b16 %v177
      %v247 = vunpack.c.l.b16 %v178
      %v248 = vunpack.c.l.b16 %v179
      %v249 = vunpack.c.l.b16 %v180
      %v250 = vunpack.c.l.b16 %v181
      %v251 = vunpack.c.l.b16 %v182
      %v252 = vunpack.c.l.b16 %v183
      %v253 = vunpack.c.l.b16 %v184
      %v254 = vunpack.c.l.b16 %v185
      %v255 = vunpack.c.l.b16 %v186
      %v256 = vunpack.c.l.b16 %v187
      %v257 = vunpack.c.l.b16 %v188
      %v258 = vunpack.c.l.b16 %v189
      %v259 = vunpack.c.l.b16 %v190
      %v260 = vunpack.c.l.b16 %v191
      %v261 = vunpack.c.l.b16 %v192
      %v262 = vunpack.c.l.b16 %v193
      %v263 = vunpack.c.l.b16 %v194
      %v264 = vunpack.c.l.b16 %v195
      %v265 = vunpack.c.l.b16 %v196
      %v266 = vunpack.c.l.b16 %v197
      %v267 = vunpack.c.l.b16 %v198
      %v268 = vunpack.c.l.b16 %v199
      %v269 = vunpack.c.l.b16 %v200
      %v270 = vunpack.c.l.b16 %v201
      %v271 = vunpack.c.l.b16 %v202
      %v272 = vunpack.c.l.b16 %v203
      %v273 = vpack.c.b16 %v242, %v241
      %v274 = vpack.c.b16 %v244, %v243
      %v275 = vpack.c.b16 %v246, %v245
      %v276 = vpack.c.b16 %v248, %v247
      %v277 = vpack.c.b16 %v250, %v249
      %v278 = vpack.c.b16 %v252, %v251
      %v279 = vpack.c.b16 %v254, %v253
      %v280 = vpack.c.b16 %v256, %v255
      %v281 = vpack.c.b16 %v258, %v257
      %v282 = vpack.c.b16 %v260, %v259
      %v283 = vpack.c.b16 %v262, %v261
      %v284 = vpack.c.b16 %v264, %v263
      %v285 = vpack.c.b16 %v266, %v265
      %v286 = vpack.c.b16 %v268, %v267
      %v287 = vpack.c.b16 %v270, %v269
      %v288 = vpack.c.b16 %v272, %v271
      %vm289 = vcmask 64512
      %v291 = vsel %vm289, %v273, 0
      %v294 = vsel %vm289, %v274, 0
      %v297 = vsel %vm289, %v275, 0
      %v300 = vsel %vm289, %v276, 0
      %v303 = vsel %vm289, %v277, 0
      %v306 = vsel %vm289, %v278, 0
      %v309 = vsel %vm289, %v279, 0
      %v312 = vsel %vm289, %v280, 0
      %v315 = vsel %vm289, %v281, 0
      %v318 = vsel %vm289, %v282, 0
      %v321 = vsel %vm289, %v283, 0
      %v324 = vsel %vm289, %v284, 0
      %v327 = vsel %vm289, %v285, 0
      %v330 = vsel %vm289, %v286, 0
      %v333 = vsel %vm289, %v287, 0
      %v336 = vsel %vm289, %v288, 0
      %vm338 = vcmask 1043456
      %v340 = vsel %vm338, %v204, 0
      %342 = vmatpush.bf16.msra.mxu0 0
      %343 = vmatpush.bf16.msra.mxu0 0
      %344 = vmatpush.bf16.msra.mxu0 0
      %345 = vmatpush.bf16.msra.mxu0 0
      %346 = vmatpush.bf16.msra.mxu0 0
      %347 = vmatpush.bf16.msra.mxu0 0
      %348 = vmatpush.bf16.msra.mxu0 0
      %349 = vmatpush.bf16.msra.mxu0 %v340
      %350 = vmatmul.bf16.gmra.mxu0 %v291
      %v351 = vpop.f32.mrf.mxu0
      %v352 = vadd.f32 %v207, %v351
      %v353 = vpop.f32.mrf.mxu0
      %v354 = vadd.f32 %v207, %v353
      %355 = vmatmul.bf16.gmra.mxu0 %v294
      %v356 = vpop.f32.mrf.mxu0
      %v357 = vadd.f32 %v207, %v356
      %v358 = vpop.f32.mrf.mxu0
      %v359 = vadd.f32 %v207, %v358
      %360 = vmatmul.bf16.gmra.mxu0 %v297
      %v361 = vpop.f32.mrf.mxu0
      %v362 = vadd.f32 %v207, %v361
      %v363 = vpop.f32.mrf.mxu0
      %v364 = vadd.f32 %v207, %v363
      %365 = vmatmul.bf16.gmra.mxu0 %v300
      %v366 = vpop.f32.mrf.mxu0
      %v367 = vadd.f32 %v207, %v366
      %v368 = vpop.f32.mrf.mxu0
      %v369 = vadd.f32 %v207, %v368
      %370 = vmatmul.bf16.gmra.mxu0 %v303
      %v371 = vpop.f32.mrf.mxu0
      %v372 = vadd.f32 %v207, %v371
      %v373 = vpop.f32.mrf.mxu0
      %v374 = vadd.f32 %v207, %v373
      %375 = vmatmul.bf16.gmra.mxu0 %v306
      %v376 = vpop.f32.mrf.mxu0
      %v377 = vadd.f32 %v207, %v376
      %v378 = vpop.f32.mrf.mxu0
      %v379 = vadd.f32 %v207, %v378
      %380 = vmatmul.bf16.gmra.mxu0 %v309
      %v381 = vpop.f32.mrf.mxu0
      %v382 = vadd.f32 %v207, %v381
      %v383 = vpop.f32.mrf.mxu0
      %v384 = vadd.f32 %v207, %v383
      %385 = vmatmul.bf16.gmra.mxu0 %v312
      %v386 = vpop.f32.mrf.mxu0
      %v387 = vadd.f32 %v207, %v386
      %v388 = vpop.f32.mrf.mxu0
      %v389 = vadd.f32 %v207, %v388
      %390 = vmatmul.bf16.gmra.mxu0 %v315
      %v391 = vpop.f32.mrf.mxu0
      %v392 = vadd.f32 %v207, %v391
      %v393 = vpop.f32.mrf.mxu0
      %v394 = vadd.f32 %v207, %v393
      %395 = vmatmul.bf16.gmra.mxu0 %v318
      %v396 = vpop.f32.mrf.mxu0
      %v397 = vadd.f32 %v207, %v396
      %v398 = vpop.f32.mrf.mxu0
      %v399 = vadd.f32 %v207, %v398
      %400 = vmatmul.bf16.gmra.mxu0 %v321
      %v401 = vpop.f32.mrf.mxu0
      %v402 = vadd.f32 %v207, %v401
      %v403 = vpop.f32.mrf.mxu0
      %v404 = vadd.f32 %v207, %v403
      %405 = vmatmul.bf16.gmra.mxu0 %v324
      %v406 = vpop.f32.mrf.mxu0
      %v407 = vadd.f32 %v207, %v406
      %v408 = vpop.f32.mrf.mxu0
      %v409 = vadd.f32 %v207, %v408
      %410 = vmatmul.bf16.gmra.mxu0 %v327
      %v411 = vpop.f32.mrf.mxu0
      %v412 = vadd.f32 %v207, %v411
      %v413 = vpop.f32.mrf.mxu0
      %v414 = vadd.f32 %v207, %v413
      %415 = vmatmul.bf16.gmra.mxu0 %v330
      %v416 = vpop.f32.mrf.mxu0
      %v417 = vadd.f32 %v207, %v416
      %v418 = vpop.f32.mrf.mxu0
      %v419 = vadd.f32 %v207, %v418
      %420 = vmatmul.bf16.gmra.mxu0 %v333
      %v421 = vpop.f32.mrf.mxu0
      %v422 = vadd.f32 %v207, %v421
      %v423 = vpop.f32.mrf.mxu0
      %v424 = vadd.f32 %v207, %v423
      %425 = vmatmul.bf16.gmra.mxu0 %v336
      %v426 = vpop.f32.mrf.mxu0
      %v427 = vadd.f32 %v207, %v426
      %v428 = vpop.f32.mrf.mxu0
      %v429 = vadd.f32 %v207, %v428
      %430 = vdwg.mxu0
      %vm431 = vcmask 15360
      %432 = vst.msk [vmem:[%s170] sm:$0xff] %vm431, %v352
      %433 = vst.msk [vmem:[%s170 + $0x8] sm:$0xff] %vm431, %v354
      %434 = vst.msk [vmem:[%s170 + $0x10] sm:$0xff] %vm431, %v357
      %435 = vst.msk [vmem:[%s170 + $0x18] sm:$0xff] %vm431, %v359
      %436 = vst.msk [vmem:[%s170 + $0x20] sm:$0xff] %vm431, %v362
      %437 = vst.msk [vmem:[%s170 + $0x28] sm:$0xff] %vm431, %v364
      %438 = vst.msk [vmem:[%s170 + $0x30] sm:$0xff] %vm431, %v367
      %439 = vst.msk [vmem:[%s170 + $0x38] sm:$0xff] %vm431, %v369
      %440 = vst.msk [vmem:[%s170 + $0x40] sm:$0xff] %vm431, %v372
      %441 = vst.msk [vmem:[%s170 + $0x48] sm:$0xff] %vm431, %v374
      %442 = vst.msk [vmem:[%s170 + $0x50] sm:$0xff] %vm431, %v377
      %443 = vst.msk [vmem:[%s170 + $0x58] sm:$0xff] %vm431, %v379
      %444 = vst.msk [vmem:[%s170 + $0x60] sm:$0xff] %vm431, %v382
      %445 = vst.msk [vmem:[%s170 + $0x68] sm:$0xff] %vm431, %v384
      %446 = vst.msk [vmem:[%s170 + $0x70] sm:$0xff] %vm431, %v387
      %447 = vst.msk [vmem:[%s170 + $0x78] sm:$0xff] %vm431, %v389
      %448 = vst.msk [vmem:[%s170 + $0x80] sm:$0xff] %vm431, %v392
      %449 = vst.msk [vmem:[%s170 + $0x88] sm:$0xff] %vm431, %v394
      %450 = vst.msk [vmem:[%s170 + $0x90] sm:$0xff] %vm431, %v397
      %451 = vst.msk [vmem:[%s170 + $0x98] sm:$0xff] %vm431, %v399
      %452 = vst.msk [vmem:[%s170 + $0xa0] sm:$0xff] %vm431, %v402
      %453 = vst.msk [vmem:[%s170 + $0xa8] sm:$0xff] %vm431, %v404
      %454 = vst.msk [vmem:[%s170 + $0xb0] sm:$0xff] %vm431, %v407
      %455 = vst.msk [vmem:[%s170 + $0xb8] sm:$0xff] %vm431, %v409
      %456 = vst.msk [vmem:[%s170 + $0xc0] sm:$0xff] %vm431, %v412
      %457 = vst.msk [vmem:[%s170 + $0xc8] sm:$0xff] %vm431, %v414
      %458 = vst.msk [vmem:[%s170 + $0xd0] sm:$0xff] %vm431, %v417
      %459 = vst.msk [vmem:[%s170 + $0xd8] sm:$0xff] %vm431, %v419
      %460 = vst.msk [vmem:[%s170 + $0xe0] sm:$0xff] %vm431, %v422
      %461 = vst.msk [vmem:[%s170 + $0xe8] sm:$0xff] %vm431, %v424
      %462 = vst.msk [vmem:[%s170 + $0xf0] sm:$0xff] %vm431, %v427
      %463 = vst.msk [vmem:[%s170 + $0xf8] sm:$0xff] %vm431, %v429
      %p464 = scmp.lt.s32.totalorder %s14, 1
      %s465 = scalar_select %p464, %s14, 1
      %s466 = smul.addr %s465, 32
      %s467 = smul.addr %s466, 8
      %s468 = scalar_lea.vmem %s3, %s467
      // Predicated region
      $region33: #{forward.27} parent=31 // pred_check
        %p469 = pneg %p100
      $region34: #{forward.27} parent=31 // pred_check_branch
        %471 = sbr.rel (%p469) target = $region36
      $region35: #{forward.27} parent=31 // pred_region
        _
      $region36: #{forward.27} parent=31 // pred_fallthru
        _
    $region32: #{forward.27} parent=5 // pred_fallthru
      _
    %p472 = scmp.le.s32.totalorder 2, %s9
    // Predicated region
    $region37: #{forward.27} parent=5 // pred_check
      %p473 = pneg %p472
    $region38: #{forward.27} parent=5 // pred_check_branch
      %475 = sbr.rel (%p473) target = $region40
    $region39: #{forward.27} parent=5 // pred_region
      %s476 = ssub.s32 %s9, 2
      // Predicated region
      $region41: #{forward.27} parent=39 // pred_check
        %p477 = pneg %p106
      $region42: #{forward.27} parent=39 // pred_check_branch
        %479 = sbr.rel (%p477) target = $region44
      $region43: #{forward.27} parent=39 // pred_region
        %p480 = scmp.lt.s32.totalorder %s15, 1
        %s481 = scalar_select %p480, %s15, 1
        %s482 = smul.addr %s481, 32
        %s483 = smul.addr %s482, 8
        %s484 = scalar_lea.vmem %s3, %s483
      $region44: #{forward.27} parent=39 // pred_fallthru
        _
    $region40: #{forward.27} parent=5 // pred_fallthru
      _
  $region6: #{forward.27} parent=0 // loop_footer
    %s13 = sadd.s32 1, %s9
  $region7: #{forward.27} parent=0 // loop_footer_branch
    %8 = sbr.rel target = $region3
  $region8: #{forward.27} parent=0 // loop_exit
    _

// kernel: forward.26
$region0: #{forward.26}
  #allocation0 [shape = 'u32[]', space=smem, size = 0x4, offset = 0x4, fixed_abs, tag = 'smem constant byte address 0x4 - core index']
  #allocation1 [shape = 'u32[72,128]{1,0:T(1,128)}', space=vmem, size = 0x9000, scoped, tag = 'internal scratch']
  %s0 = inlined_call_operand.vmem [shape: bf16[2,256,144], index: 0, kind: input, shape index: {}]
  %s1 = inlined_call_operand.vmem [shape: bf16[144,8], index: 1, kind: input, shape index: {}]
  %s2 = inlined_call_operand.vmem [shape: f32[1,8], index: 2, kind: input, shape index: {}]
  %s3 = inlined_call_operand.vmem [shape: f32[1,8], index: 3, kind: input, shape index: {}]
  %s4 = inlined_call_operand.vmem [shape: f32[2,256,8], index: 4, kind: output, shape index: {}]
  %s5 = sld [smem:[#allocation0]]
  $region49: #{forward.26} parent=0
    _
  %s7 = ssub.s32 1, %s5
  %s8 = scalar_select 0, %s7, %s5
  loop: start=0, step=1, limit=4
  $region2: #{forward.26} parent=0 // loop_pre_header
    _
  $region3: #{forward.26} parent=0 // loop_header
    %s10 = sphi 0, %s14
    %p11 = scmp.ge.s32.totalorder %s10, 4
    %s20 = sphi 0, %s22
    %s23 = sphi 0, %s20
    %s24 = sphi 0, %s23
    %s40 = sphi 0, %s24
    %s44 = sphi 0, %s44
    %s46 = sphi 0, %s44
    %s47 = sphi 0, %s46
    %s61 = sphi 0, %s47
    %s65 = sphi 0, %s65
    %s67 = sphi 0, %s65
    %s68 = sphi 0, %s67
    %s82 = sphi 0, %s68
    %s86 = sphi 0, %s86
    %s88 = sphi 0, %s86
    %s89 = sphi 0, %s88
    %s103 = sphi 0, %s89
    %s109 = sphi 0, %s111
    %s112 = sphi 0, %s109
    %s113 = sphi 0, %s112
    %s129 = sphi 0, %s113
  $region4: #{forward.26} parent=0 // loop_header_branch
    %13 = sbr.rel (%p11) target = $region8
  $region5: #{forward.26} parent=0 // loop_body
    %s15 = ssub.s32 %s10, 1
    %s16 = ssub.s32 %s10, 2
    %s17 = sadd.s32 %s10, 1
    %s18 = ssub.s32 %s10, %s17
    %p19 = scmp.eq.s32.totalorder %s18, 0
    %s21 = sadd.s32 %s20, 1
    %s22 = scalar_select %p19, %s20, %s21
    %p25 = pneg %p19
    %p26 = scmp.eq.s32.totalorder %s10, 1
    %p27 = por %p25, %p26
    %p28 = scmp.ne.s32.totalorder %s20, %s23
    %p29 = scmp.eq.s32.totalorder %s10, 0
    %p30 = por %p28, %p29
    %p31 = scmp.ne.s32.totalorder %s20, %s23
    %p32 = scmp.eq.s32.totalorder %s15, 1
    %p33 = por %p31, %p32
    %p34 = scmp.ne.s32.totalorder %s23, %s24
    %p35 = scmp.eq.s32.totalorder %s15, 0
    %p36 = por %p34, %p35
    %p37 = scmp.ne.s32.totalorder %s23, %s24
    %p38 = scmp.eq.s32.totalorder %s16, 1
    %p39 = por %p37, %p38
    %p41 = scmp.ne.s32.totalorder %s24, %s40
    %p42 = scmp.eq.s32.totalorder %s16, 0
    %p43 = por %p41, %p42
    %s45 = sadd.s32 %s44, 1
    %p48 = scmp.eq.s32.totalorder %s10, 1
    %p49 = scmp.ne.s32.totalorder %s44, %s46
    %p50 = scmp.eq.s32.totalorder %s10, 0
    %p51 = por %p49, %p50
    %p52 = scmp.ne.s32.totalorder %s44, %s46
    %p53 = scmp.eq.s32.totalorder %s15, 1
    %p54 = por %p52, %p53
    %p55 = scmp.ne.s32.totalorder %s46, %s47
    %p56 = scmp.eq.s32.totalorder %s15, 0
    %p57 = por %p55, %p56
    %p58 = scmp.ne.s32.totalorder %s46, %s47
    %p59 = scmp.eq.s32.totalorder %s16, 1
    %p60 = por %p58, %p59
    %p62 = scmp.ne.s32.totalorder %s47, %s61
    %p63 = scmp.eq.s32.totalorder %s16, 0
    %p64 = por %p62, %p63
    %s66 = sadd.s32 %s65, 1
    %p69 = scmp.eq.s32.totalorder %s10, 1
    %p70 = scmp.ne.s32.totalorder %s65, %s67
    %p71 = scmp.eq.s32.totalorder %s10, 0
    %p72 = por %p70, %p71
    %p73 = scmp.ne.s32.totalorder %s65, %s67
    %p74 = scmp.eq.s32.totalorder %s15, 1
    %p75 = por %p73, %p74
    %p76 = scmp.ne.s32.totalorder %s67, %s68
    %p77 = scmp.eq.s32.totalorder %s15, 0
    %p78 = por %p76, %p77
    %p79 = scmp.ne.s32.totalorder %s67, %s68
    %p80 = scmp.eq.s32.totalorder %s16, 1
    %p81 = por %p79, %p80
    %p83 = scmp.ne.s32.totalorder %s68, %s82
    %p84 = scmp.eq.s32.totalorder %s16, 0
    %p85 = por %p83, %p84
    %s87 = sadd.s32 %s86, 1
    %p90 = scmp.eq.s32.totalorder %s10, 1
    %p91 = scmp.ne.s32.totalorder %s86, %s88
    %p92 = scmp.eq.s32.totalorder %s10, 0
    %p93 = por %p91, %p92
    %p94 = scmp.ne.s32.totalorder %s86, %s88
    %p95 = scmp.eq.s32.totalorder %s15, 1
    %p96 = por %p94, %p95
    %p97 = scmp.ne.s32.totalorder %s88, %s89
    %p98 = scmp.eq.s32.totalorder %s15, 0
    %p99 = por %p97, %p98
    %p100 = scmp.ne.s32.totalorder %s88, %s89
    %p101 = scmp.eq.s32.totalorder %s16, 1
    %p102 = por %p100, %p101
    %p104 = scmp.ne.s32.totalorder %s89, %s103
    %p105 = scmp.eq.s32.totalorder %s16, 0
    %p106 = por %p104, %p105
    %s107 = ssub.s32 %s10, %s17
    %p108 = scmp.eq.s32.totalorder %s107, 0
    %s110 = sadd.s32 %s109, 1
    %s111 = scalar_select %p108, %s109, %s110
    %p114 = pneg %p108
    %p115 = scmp.eq.s32.totalorder %s10, 1
    %p116 = por %p114, %p115
    %p117 = scmp.ne.s32.totalorder %s109, %s112
    %p118 = scmp.eq.s32.totalorder %s10, 0
    %p119 = por %p117, %p118
    %p120 = scmp.ne.s32.totalorder %s109, %s112
    %p121 = scmp.eq.s32.totalorder %s15, 1
    %p122 = por %p120, %p121
    %p123 = scmp.ne.s32.totalorder %s112, %s113
    %p124 = scmp.eq.s32.totalorder %s15, 0
    %p125 = por %p123, %p124
    %p126 = scmp.ne.s32.totalorder %s112, %s113
    %p127 = scmp.eq.s32.totalorder %s16, 1
    %p128 = por %p126, %p127
    %p130 = scmp.ne.s32.totalorder %s113, %s129
    %p131 = scmp.eq.s32.totalorder %s16, 0
    %p132 = por %p130, %p131
    %p133 = scmp.le.s32.totalorder 1, %s10
    %p134 = scmp.lt.s32.totalorder %s10, 3
    %p135 = pnand %p133, %p134
    %p136 = pneg %p135
    // Predicated region
    $region9: #{forward.26} parent=5 // pred_check
      _
    $region10: #{forward.26} parent=5 // pred_check_branch
      %138 = sbr.rel (%p135) target = $region12
    $region11: #{forward.26} parent=5 // pred_region
      %s139 = ssub.s32 %s10, 1
      // Predicated region
      $region13: #{forward.26} parent=11 // pred_check
        %p140 = pneg %p57
      $region14: #{forward.26} parent=11 // pred_check_branch
        %142 = sbr.rel (%p140) target = $region16
      $region15: #{forward.26} parent=11 // pred_region
        _
      $region16: #{forward.26} parent=11 // pred_fallthru
        _
      // Predicated region
      $region17: #{forward.26} parent=11 // pred_check
        %p143 = pneg %p78
      $region18: #{forward.26} parent=11 // pred_check_branch
        %145 = sbr.rel (%p143) target = $region20
      $region19: #{forward.26} parent=11 // pred_region
        _
      $region20: #{forward.26} parent=11 // pred_fallthru
        _
      // Predicated region
      $region21: #{forward.26} parent=11 // pred_check
        %p146 = pneg %p99
      $region22: #{forward.26} parent=11 // pred_check_branch
        %148 = sbr.rel (%p146) target = $region24
      $region23: #{forward.26} parent=11 // pred_region
        _
      $region24: #{forward.26} parent=11 // pred_fallthru
        _
    $region12: #{forward.26} parent=5 // pred_fallthru
      _
    %p149 = scmp.lt.s32.totalorder %s10, 2
    // Predicated region
    $region25: #{forward.26} parent=5 // pred_check
      %p150 = pneg %p149
    $region26: #{forward.26} parent=5 // pred_check_branch
      %152 = sbr.rel (%p150) target = $region28
    $region27: #{forward.26} parent=5 // pred_region
      // Predicated region
      $region29: #{forward.26} parent=27 // pred_check
        %p153 = pneg %p30
      $region30: #{forward.26} parent=27 // pred_check_branch
        %155 = sbr.rel (%p153) target = $region32
      $region31: #{forward.26} parent=27 // pred_region
        %p156 = scmp.lt.s32.totalorder %s10, 1
        %s157 = scalar_select %p156, %s10, 1
        %s158 = smul.addr %s157, 64
        %s159 = smul.addr %s158, 4
        %s160 = scalar_lea.vmem %s0, %s159
      $region32: #{forward.26} parent=27 // pred_fallthru
        _
    $region28: #{forward.26} parent=5 // pred_fallthru
      _
    %p161 = scmp.le.s32.totalorder 1, %s10
    %p162 = scmp.lt.s32.totalorder %s10, 3
    %p163 = pnand %p161, %p162
    %p164 = pneg %p163
    // Predicated region
    $region33: #{forward.26} parent=5 // pred_check
      _
    $region34: #{forward.26} parent=5 // pred_check_branch
      %166 = sbr.rel (%p163) target = $region36
    $region35: #{forward.26} parent=5 // pred_region
      %s167 = ssub.s32 %s10, 1
      %p168 = scmp.lt.s32.totalorder %s15, 1
      %s169 = scalar_select %p168, %s15, 1
      %s170 = smul.addr %s169, 64
      %s171 = smul.addr %s170, 4
      %s172 = scalar_lea.vmem %s0, %s171
      %p173 = pneg %p36
      %p174 = pneg %p33
      %p175 = pneg %p57
      %p176 = pneg %p54
      %p177 = pneg %p78
      %p178 = pneg %p75
      %p179 = pneg %p99
      %p180 = pneg %p96
      %p181 = pneg %p125
      %p182 = pneg %p122
      %p183 = scmp.lt.s32.totalorder %s15, 1
      %s184 = scalar_select %p183, %s15, 1
      %s185 = smul.addr %s184, 32
      %s186 = smul.addr %s185, 8
      %s187 = scalar_lea.vmem %s4, %s186
      %p188 = scmp.lt.s32.totalorder %s15, 1
      %s189 = scalar_select %p188, %s15, 1
      %s190 = smul.addr %s189, 64
      %s191 = smul.addr %s190, 4
      %s192 = scalar_lea.vmem %s0, %s191
      %p193 = scmp.lt.s32.totalorder %s15, 1
      %s194 = scalar_select %p193, %s15, 1
      %s195 = smul.addr %s194, 32
      %s196 = smul.addr %s195, 8
      %s197 = scalar_lea.vmem %s4, %s196
      %v199 = vld [vmem:[%s192] sm:$0xff]
      %v200 = vld [vmem:[%s192 + $0x8] sm:$0xff]
      %v201 = vld [vmem:[%s192 + $0x10] sm:$0xff]
      %v202 = vld [vmem:[%s192 + $0x18] sm:$0xff]
      %v203 = vld [vmem:[%s192 + $0x20] sm:$0xff]
      %v204 = vld [vmem:[%s192 + $0x28] sm:$0xff]
      %v205 = vld [vmem:[%s192 + $0x30] sm:$0xff]
      %v206 = vld [vmem:[%s192 + $0x38] sm:$0xff]
      %v207 = vld [vmem:[%s192 + $0x40] sm:$0xff]
      %v208 = vld [vmem:[%s192 + $0x48] sm:$0xff]
      %v209 = vld [vmem:[%s192 + $0x50] sm:$0xff]
      %v210 = vld [vmem:[%s192 + $0x58] sm:$0xff]
      %v211 = vld [vmem:[%s192 + $0x60] sm:$0xff]
      %v212 = vld [vmem:[%s192 + $0x68] sm:$0xff]
      %v213 = vld [vmem:[%s192 + $0x70] sm:$0xff]
      %v214 = vld [vmem:[%s192 + $0x78] sm:$0xff]
      %v215 = vld [vmem:[%s192 + $0x80] sm:$0xff]
      %v216 = vld [vmem:[%s192 + $0x88] sm:$0xff]
      %v217 = vld [vmem:[%s192 + $0x90] sm:$0xff]
      %v218 = vld [vmem:[%s192 + $0x98] sm:$0xff]
      %v219 = vld [vmem:[%s192 + $0xa0] sm:$0xff]
      %v220 = vld [vmem:[%s192 + $0xa8] sm:$0xff]
      %v221 = vld [vmem:[%s192 + $0xb0] sm:$0xff]
      %v222 = vld [vmem:[%s192 + $0xb8] sm:$0xff]
      %v223 = vld [vmem:[%s192 + $0xc0] sm:$0xff]
      %v224 = vld [vmem:[%s192 + $0xc8] sm:$0xff]
      %v225 = vld [vmem:[%s192 + $0xd0] sm:$0xff]
      %v226 = vld [vmem:[%s192 + $0xd8] sm:$0xff]
      %v227 = vld [vmem:[%s192 + $0xe0] sm:$0xff]
      %v228 = vld [vmem:[%s192 + $0xe8] sm:$0xff]
      %v229 = vld [vmem:[%s192 + $0xf0] sm:$0xff]
      %v230 = vld [vmem:[%s192 + $0xf8] sm:$0xff]
      %v231 = vld [vmem:[%s1] sm:$0xf]
      %v232 = vld [vmem:[%s1 + $0x4] sm:$0xf]
      %v233 = vld [vmem:[%s1 + $0x8] sm:$0xf]
      %v234 = vld [vmem:[%s1 + $0xc] sm:$0xf]
      %v235 = vld [vmem:[%s1 + $0x10] sm:$0xf]
      %v236 = vld [vmem:[%s1 + $0x14] sm:$0xf]
      %v237 = vld [vmem:[%s1 + $0x18] sm:$0xf]
      %v238 = vld [vmem:[%s1 + $0x1c] sm:$0xf]
      %v239 = vld [vmem:[%s1 + $0x20] sm:$0xf]
      %v240 = vld [vmem:[%s1 + $0x24] sm:$0xf]
      %v241 = vld [vmem:[%s1 + $0x28] sm:$0xf]
      %v242 = vld [vmem:[%s1 + $0x2c] sm:$0xf]
      %v243 = vld [vmem:[%s1 + $0x30] sm:$0xf]
      %v244 = vld [vmem:[%s1 + $0x34] sm:$0xf]
      %v245 = vld [vmem:[%s1 + $0x38] sm:$0xf]
      %v246 = vld [vmem:[%s1 + $0x3c] sm:$0xf]
      %v247 = vld [vmem:[%s1 + $0x40] sm:$0xf]
      %v248 = vld [vmem:[%s1 + $0x44] sm:$0xf]
      %v281 = vunpack.c.l.b16 %v199
      %v282 = vunpack.c.h.b16 %v199
      %v283 = vunpack.c.l.b16 %v200
      %v284 = vunpack.c.h.b16 %v200
      %v285 = vunpack.c.l.b16 %v201
      %v286 = vunpack.c.h.b16 %v201
      %v287 = vunpack.c.l.b16 %v202
      %v288 = vunpack.c.h.b16 %v202
      %v289 = vunpack.c.l.b16 %v203
      %v290 = vunpack.c.h.b16 %v203
      %v291 = vunpack.c.l.b16 %v204
      %v292 = vunpack.c.h.b16 %v204
      %v293 = vunpack.c.l.b16 %v205
      %v294 = vunpack.c.h.b16 %v205
      %v295 = vunpack.c.l.b16 %v206
      %v296 = vunpack.c.h.b16 %v206
      %v297 = vunpack.c.l.b16 %v207
      %v298 = vunpack.c.h.b16 %v207
      %v299 = vunpack.c.l.b16 %v208
      %v300 = vunpack.c.h.b16 %v208
      %v301 = vunpack.c.l.b16 %v209
      %v302 = vunpack.c.h.b16 %v209
      %v303 = vunpack.c.l.b16 %v210
      %v304 = vunpack.c.h.b16 %v210
      %v305 = vunpack.c.l.b16 %v211
      %v306 = vunpack.c.h.b16 %v211
      %v307 = vunpack.c.l.b16 %v212
      %v308 = vunpack.c.h.b16 %v212
      %v309 = vunpack.c.l.b16 %v213
      %v310 = vunpack.c.h.b16 %v213
      %v311 = vunpack.c.l.b16 %v214
      %v312 = vunpack.c.h.b16 %v214
      %v313 = vunpack.c.l.b16 %v215
      %v314 = vunpack.c.h.b16 %v215
      %v315 = vunpack.c.l.b16 %v216
      %v316 = vunpack.c.h.b16 %v216
      %v317 = vunpack.c.l.b16 %v217
      %v318 = vunpack.c.h.b16 %v217
      %v319 = vunpack.c.l.b16 %v218
      %v320 = vunpack.c.h.b16 %v218
      %v321 = vunpack.c.l.b16 %v219
      %v322 = vunpack.c.h.b16 %v219
      %v323 = vunpack.c.l.b16 %v220
      %v324 = vunpack.c.h.b16 %v220
      %v325 = vunpack.c.l.b16 %v221
      %v326 = vunpack.c.h.b16 %v221
      %v327 = vunpack.c.l.b16 %v222
      %v328 = vunpack.c.h.b16 %v222
      %v329 = vunpack.c.l.b16 %v223
      %v330 = vunpack.c.h.b16 %v223
      %v331 = vunpack.c.l.b16 %v224
      %v332 = vunpack.c.h.b16 %v224
      %v333 = vunpack.c.l.b16 %v225
      %v334 = vunpack.c.h.b16 %v225
      %v335 = vunpack.c.l.b16 %v226
      %v336 = vunpack.c.h.b16 %v226
      %v337 = vunpack.c.l.b16 %v227
      %v338 = vunpack.c.h.b16 %v227
      %v339 = vunpack.c.l.b16 %v228
      %v340 = vunpack.c.h.b16 %v228
      %v341 = vunpack.c.l.b16 %v229
      %v342 = vunpack.c.h.b16 %v229
      %v343 = vunpack.c.l.b16 %v230
      %v344 = vunpack.c.h.b16 %v230
      %v345 = vpack.c.b16 %v283, %v281
      %v346 = vpack.c.b16 %v284, %v282
      %v347 = vpack.c.b16 %v287, %v285
      %v348 = vpack.c.b16 %v288, %v286
      %v349 = vpack.c.b16 %v291, %v289
      %v350 = vpack.c.b16 %v292, %v290
      %v351 = vpack.c.b16 %v295, %v293
      %v352 = vpack.c.b16 %v296, %v294
      %v353 = vpack.c.b16 %v299, %v297
      %v354 = vpack.c.b16 %v300, %v298
      %v355 = vpack.c.b16 %v303, %v301
      %v356 = vpack.c.b16 %v304, %v302
      %v357 = vpack.c.b16 %v307, %v305
      %v358 = vpack.c.b16 %v308, %v306
      %v359 = vpack.c.b16 %v311, %v309
      %v360 = vpack.c.b16 %v312, %v310
      %v361 = vpack.c.b16 %v315, %v313
      %v362 = vpack.c.b16 %v316, %v314
      %v363 = vpack.c.b16 %v319, %v317
      %v364 = vpack.c.b16 %v320, %v318
      %v365 = vpack.c.b16 %v323, %v321
      %v366 = vpack.c.b16 %v324, %v322
      %v367 = vpack.c.b16 %v327, %v325
      %v368 = vpack.c.b16 %v328, %v326
      %v369 = vpack.c.b16 %v331, %v329
      %v370 = vpack.c.b16 %v332, %v330
      %v371 = vpack.c.b16 %v335, %v333
      %v372 = vpack.c.b16 %v336, %v334
      %v373 = vpack.c.b16 %v339, %v337
      %v374 = vpack.c.b16 %v340, %v338
      %v375 = vpack.c.b16 %v343, %v341
      %v376 = vpack.c.b16 %v344, %v342
      %v411 = vunpack.c.l.b16 %v231
      %v412 = vunpack.c.l.b16 %v232
      %v413 = vunpack.c.l.b16 %v233
      %v414 = vunpack.c.l.b16 %v234
      %v415 = vunpack.c.l.b16 %v235
      %v416 = vunpack.c.l.b16 %v236
      %v417 = vunpack.c.l.b16 %v237
      %v418 = vunpack.c.l.b16 %v238
      %v419 = vunpack.c.l.b16 %v239
      %v420 = vunpack.c.l.b16 %v240
      %v421 = vunpack.c.l.b16 %v241
      %v422 = vunpack.c.l.b16 %v242
      %v423 = vunpack.c.l.b16 %v243
      %v424 = vunpack.c.l.b16 %v244
      %v425 = vunpack.c.l.b16 %v245
      %v426 = vunpack.c.l.b16 %v246
      %v427 = vunpack.c.l.b16 %v247
      %v428 = vunpack.c.l.b16 %v248
      %v429 = vpack.c.b16 %v412, %v411
      %v430 = vpack.c.b16 %v414, %v413
      %v431 = vpack.c.b16 %v416, %v415
      %v432 = vpack.c.b16 %v418, %v417
      %v433 = vpack.c.b16 %v420, %v419
      %v434 = vpack.c.b16 %v422, %v421
      %v435 = vpack.c.b16 %v424, %v423
      %v436 = vpack.c.b16 %v426, %v425
      %v437 = vpack.c.b16 %v428, %v427
      %vm447 = vcmask 130048
      %v449 = vsel %vm447, %v346, 0
      %v452 = vsel %vm447, %v348, 0
      %v455 = vsel %vm447, %v350, 0
      %v458 = vsel %vm447, %v352, 0
      %v461 = vsel %vm447, %v354, 0
      %v464 = vsel %vm447, %v356, 0
      %v467 = vsel %vm447, %v358, 0
      %v470 = vsel %vm447, %v360, 0
      %v473 = vsel %vm447, %v362, 0
      %v476 = vsel %vm447, %v364, 0
      %v479 = vsel %vm447, %v366, 0
      %v482 = vsel %vm447, %v368, 0
      %v485 = vsel %vm447, %v370, 0
      %v488 = vsel %vm447, %v372, 0
      %v491 = vsel %vm447, %v374, 0
      %v494 = vsel %vm447, %v376, 0
      %496 = vmatpush.bf16.msra.mxu0 %v436
      %497 = vmatpush.bf16.msra.mxu0 %v435
      %498 = vmatpush.bf16.msra.mxu0 %v434
      %499 = vmatpush.bf16.msra.mxu0 %v433
      %500 = vmatpush.bf16.msra.mxu0 %v432
      %501 = vmatpush.bf16.msra.mxu0 %v431
      %502 = vmatpush.bf16.msra.mxu0 %v430
      %503 = vmatpush.bf16.msra.mxu0 %v429
      %504 = vmatmul.bf16.gmra.mxu0 %v345
      %v505 = vpop.f32.mrf.mxu0
      %v506 = vadd.f32 0.0, %v505
      %v507 = vpop.f32.mrf.mxu0
      %v508 = vadd.f32 0.0, %v507
      %509 = vmatmul.bf16.gmra.mxu0 %v347
      %v510 = vpop.f32.mrf.mxu0
      %v511 = vadd.f32 0.0, %v510
      %v512 = vpop.f32.mrf.mxu0
      %v513 = vadd.f32 0.0, %v512
      %514 = vmatmul.bf16.gmra.mxu0 %v349
      %v515 = vpop.f32.mrf.mxu0
      %v516 = vadd.f32 0.0, %v515
      %v517 = vpop.f32.mrf.mxu0
      %v518 = vadd.f32 0.0, %v517
      %519 = vmatmul.bf16.gmra.mxu0 %v351
      %v520 = vpop.f32.mrf.mxu0
      %v521 = vadd.f32 0.0, %v520
      %v522 = vpop.f32.mrf.mxu0
      %v523 = vadd.f32 0.0, %v522
      %524 = vmatmul.bf16.gmra.mxu0 %v353
      %v525 = vpop.f32.mrf.mxu0
      %v526 = vadd.f32 0.0, %v525
      %v527 = vpop.f32.mrf.mxu0
      %v528 = vadd.f32 0.0, %v527
      %529 = vmatmul.bf16.gmra.mxu0 %v355
      %v530 = vpop.f32.mrf.mxu0
      %v531 = vadd.f32 0.0, %v530
      %v532 = vpop.f32.mrf.mxu0
      %v533 = vadd.f32 0.0, %v532
      %534 = vmatmul.bf16.gmra.mxu0 %v357
      %v535 = vpop.f32.mrf.mxu0
      %v536 = vadd.f32 0.0, %v535
      %v537 = vpop.f32.mrf.mxu0
      %v538 = vadd.f32 0.0, %v537
      %539 = vmatmul.bf16.gmra.mxu0 %v359
      %v540 = vpop.f32.mrf.mxu0
      %v541 = vadd.f32 0.0, %v540
      %v542 = vpop.f32.mrf.mxu0
      %v543 = vadd.f32 0.0, %v542
      %544 = vmatmul.bf16.gmra.mxu0 %v361
      %v545 = vpop.f32.mrf.mxu0
      %v546 = vadd.f32 0.0, %v545
      %v547 = vpop.f32.mrf.mxu0
      %v548 = vadd.f32 0.0, %v547
      %549 = vmatmul.bf16.gmra.mxu0 %v363
      %v550 = vpop.f32.mrf.mxu0
      %v551 = vadd.f32 0.0, %v550
      %v552 = vpop.f32.mrf.mxu0
      %v553 = vadd.f32 0.0, %v552
      %554 = vmatmul.bf16.gmra.mxu0 %v365
      %v555 = vpop.f32.mrf.mxu0
      %v556 = vadd.f32 0.0, %v555
      %v557 = vpop.f32.mrf.mxu0
      %v558 = vadd.f32 0.0, %v557
      %559 = vmatmul.bf16.gmra.mxu0 %v367
      %v560 = vpop.f32.mrf.mxu0
      %v561 = vadd.f32 0.0, %v560
      %v562 = vpop.f32.mrf.mxu0
      %v563 = vadd.f32 0.0, %v562
      %564 = vmatmul.bf16.gmra.mxu0 %v369
      %v565 = vpop.f32.mrf.mxu0
      %v566 = vadd.f32 0.0, %v565
      %v567 = vpop.f32.mrf.mxu0
      %v568 = vadd.f32 0.0, %v567
      %569 = vmatmul.bf16.gmra.mxu0 %v371
      %v570 = vpop.f32.mrf.mxu0
      %v571 = vadd.f32 0.0, %v570
      %v572 = vpop.f32.mrf.mxu0
      %v573 = vadd.f32 0.0, %v572
      %574 = vmatmul.bf16.gmra.mxu0 %v373
      %v575 = vpop.f32.mrf.mxu0
      %v576 = vadd.f32 0.0, %v575
      %v577 = vpop.f32.mrf.mxu0
      %v578 = vadd.f32 0.0, %v577
      %579 = vmatmul.bf16.gmra.mxu0 %v375
      %v580 = vpop.f32.mrf.mxu0
      %v581 = vadd.f32 0.0, %v580
      %v582 = vpop.f32.mrf.mxu0
      %v583 = vadd.f32 0.0, %v582
      %584 = vdwg.mxu0
      %585 = vmatpush.bf16.msra.mxu0 0
      %586 = vmatpush.bf16.msra.mxu0 0
      %587 = vmatpush.bf16.msra.mxu0 0
      %588 = vmatpush.bf16.msra.mxu0 0
      %589 = vmatpush.bf16.msra.mxu0 0
      %590 = vmatpush.bf16.msra.mxu0 0
      %591 = vmatpush.bf16.msra.mxu0 0
      %592 = vmatpush.bf16.msra.mxu0 %v437
      %593 = vmatmul.bf16.gmra.mxu0 %v449
      %v594 = vpop.f32.mrf.mxu0
      %v595 = vadd.f32 %v506, %v594
      %v596 = vpop.f32.mrf.mxu0
      %v597 = vadd.f32 %v508, %v596
      %598 = vmatmul.bf16.gmra.mxu0 %v452
      %v599 = vpop.f32.mrf.mxu0
      %v600 = vadd.f32 %v511, %v599
      %v601 = vpop.f32.mrf.mxu0
      %v602 = vadd.f32 %v513, %v601
      %603 = vmatmul.bf16.gmra.mxu0 %v455
      %v604 = vpop.f32.mrf.mxu0
      %v605 = vadd.f32 %v516, %v604
      %v606 = vpop.f32.mrf.mxu0
      %v607 = vadd.f32 %v518, %v606
      %608 = vmatmul.bf16.gmra.mxu0 %v458
      %v609 = vpop.f32.mrf.mxu0
      %v610 = vadd.f32 %v521, %v609
      %v611 = vpop.f32.mrf.mxu0
      %v612 = vadd.f32 %v523, %v611
      %613 = vmatmul.bf16.gmra.mxu0 %v461
      %v614 = vpop.f32.mrf.mxu0
      %v615 = vadd.f32 %v526, %v614
      %v616 = vpop.f32.mrf.mxu0
      %v617 = vadd.f32 %v528, %v616
      %618 = vmatmul.bf16.gmra.mxu0 %v464
      %v619 = vpop.f32.mrf.mxu0
      %v620 = vadd.f32 %v531, %v619
      %v621 = vpop.f32.mrf.mxu0
      %v622 = vadd.f32 %v533, %v621
      %623 = vmatmul.bf16.gmra.mxu0 %v467
      %v624 = vpop.f32.mrf.mxu0
      %v625 = vadd.f32 %v536, %v624
      %v626 = vpop.f32.mrf.mxu0
      %v627 = vadd.f32 %v538, %v626
      %628 = vmatmul.bf16.gmra.mxu0 %v470
      %v629 = vpop.f32.mrf.mxu0
      %v630 = vadd.f32 %v541, %v629
      %v631 = vpop.f32.mrf.mxu0
      %v632 = vadd.f32 %v543, %v631
      %633 = vmatmul.bf16.gmra.mxu0 %v473
      %v634 = vpop.f32.mrf.mxu0
      %v635 = vadd.f32 %v546, %v634
      %v636 = vpop.f32.mrf.mxu0
      %v637 = vadd.f32 %v548, %v636
      %638 = vmatmul.bf16.gmra.mxu0 %v476
      %v639 = vpop.f32.mrf.mxu0
      %v640 = vadd.f32 %v551, %v639
      %v641 = vpop.f32.mrf.mxu0
      %v642 = vadd.f32 %v553, %v641
      %643 = vmatmul.bf16.gmra.mxu0 %v479
      %v644 = vpop.f32.mrf.mxu0
      %v645 = vadd.f32 %v556, %v644
      %v646 = vpop.f32.mrf.mxu0
      %v647 = vadd.f32 %v558, %v646
      %648 = vmatmul.bf16.gmra.mxu0 %v482
      %v649 = vpop.f32.mrf.mxu0
      %v650 = vadd.f32 %v561, %v649
      %v651 = vpop.f32.mrf.mxu0
      %v652 = vadd.f32 %v563, %v651
      %653 = vmatmul.bf16.gmra.mxu0 %v485
      %v654 = vpop.f32.mrf.mxu0
      %v655 = vadd.f32 %v566, %v654
      %v656 = vpop.f32.mrf.mxu0
      %v657 = vadd.f32 %v568, %v656
      %658 = vmatmul.bf16.gmra.mxu0 %v488
      %v659 = vpop.f32.mrf.mxu0
      %v660 = vadd.f32 %v571, %v659
      %v661 = vpop.f32.mrf.mxu0
      %v662 = vadd.f32 %v573, %v661
      %663 = vmatmul.bf16.gmra.mxu0 %v491
      %v664 = vpop.f32.mrf.mxu0
      %v665 = vadd.f32 %v576, %v664
      %v666 = vpop.f32.mrf.mxu0
      %v667 = vadd.f32 %v578, %v666
      %668 = vmatmul.bf16.gmra.mxu0 %v494
      %v669 = vpop.f32.mrf.mxu0
      %v670 = vadd.f32 %v581, %v669
      %v671 = vpop.f32.mrf.mxu0
      %v672 = vadd.f32 %v583, %v671
      %673 = vdwg.mxu0
      %v674 = vld [vmem:[%s2] sm:$0x1]
      %v675 = vld [vmem:[%s3] sm:$0x1]
      %vm676 = vcmask 64512
      %v677 = vsel %vm676, %v595, 0.0
      %v678 = vsel %vm676, %v597, 0.0
      %v679 = vadd.f32 %v677, %v678
      %v680 = vsel %vm676, %v600, 0.0
      %v681 = vadd.f32 %v679, %v680
      %v682 = vsel %vm676, %v602, 0.0
      %v683 = vadd.f32 %v681, %v682
      %v684 = vsel %vm676, %v605, 0.0
      %v685 = vadd.f32 %v683, %v684
      %v686 = vsel %vm676, %v607, 0.0
      %v687 = vadd.f32 %v685, %v686
      %v688 = vsel %vm676, %v610, 0.0
      %v689 = vadd.f32 %v687, %v688
      %v690 = vsel %vm676, %v612, 0.0
      %v691 = vadd.f32 %v689, %v690
      %v692 = vsel %vm676, %v615, 0.0
      %v693 = vadd.f32 %v691, %v692
      %v694 = vsel %vm676, %v617, 0.0
      %v695 = vadd.f32 %v693, %v694
      %v696 = vsel %vm676, %v620, 0.0
      %v697 = vadd.f32 %v695, %v696
      %v698 = vsel %vm676, %v622, 0.0
      %v699 = vadd.f32 %v697, %v698
      %v700 = vsel %vm676, %v625, 0.0
      %v701 = vadd.f32 %v699, %v700
      %v702 = vsel %vm676, %v627, 0.0
      %v703 = vadd.f32 %v701, %v702
      %v704 = vsel %vm676, %v630, 0.0
      %v705 = vadd.f32 %v703, %v704
      %v706 = vsel %vm676, %v632, 0.0
      %v707 = vadd.f32 %v705, %v706
      %v708 = vsel %vm676, %v635, 0.0
      %v709 = vadd.f32 %v707, %v708
      %v710 = vsel %vm676, %v637, 0.0
      %v711 = vadd.f32 %v709, %v710
      %v712 = vsel %vm676, %v640, 0.0
      %v713 = vadd.f32 %v711, %v712
      %v714 = vsel %vm676, %v642, 0.0
      %v715 = vadd.f32 %v713, %v714
      %v716 = vsel %vm676, %v645, 0.0
      %v717 = vadd.f32 %v715, %v716
      %v718 = vsel %vm676, %v647, 0.0
      %v719 = vadd.f32 %v717, %v718
      %v720 = vsel %vm676, %v650, 0.0
      %v721 = vadd.f32 %v719, %v720
      %v722 = vsel %vm676, %v652, 0.0
      %v723 = vadd.f32 %v721, %v722
      %v724 = vsel %vm676, %v655, 0.0
      %v725 = vadd.f32 %v723, %v724
      %v726 = vsel %vm676, %v657, 0.0
      %v727 = vadd.f32 %v725, %v726
      %v728 = vsel %vm676, %v660, 0.0
      %v729 = vadd.f32 %v727, %v728
      %v730 = vsel %vm676, %v662, 0.0
      %v731 = vadd.f32 %v729, %v730
      %v732 = vsel %vm676, %v665, 0.0
      %v733 = vadd.f32 %v731, %v732
      %v734 = vsel %vm676, %v667, 0.0
      %v735 = vadd.f32 %v733, %v734
      %v736 = vsel %vm676, %v670, 0.0
      %v737 = vadd.f32 %v735, %v736
      %v738 = vsel %vm676, %v672, 0.0
      %v739 = vadd.f32 %v737, %v738
      %v740 = vrot.slane %v739, 4
      %v741 = vadd.f32 %v739, %v740
      %v742 = vrot.slane %v741, 2
      %v743 = vadd.f32 %v741, %v742
      %v744 = vrot.slane %v743, 1
      %v745 = vadd.f32 %v743, %v744
      %v746 = vrcp.pop 256.0
      %v747 = vmul.f32 256.0, %v746
      %v748 = vsub.f32 1.0, %v747
      %v749 = vmul.f32 %v746, %v748
      %v750 = vadd.f32 %v746, %v749
      %vm751 = vweird.f32 %v746
      %v752 = vsel %vm751, %v746, %v750
      %v753 = vmul.f32 %v745, %v752
      %v754 = vsub.f32 %v595, %v753
      %v755 = vsub.f32 %v597, %v753
      %v756 = vsub.f32 %v600, %v753
      %v757 = vsub.f32 %v602, %v753
      %v758 = vsub.f32 %v605, %v753
      %v759 = vsub.f32 %v607, %v753
      %v760 = vsub.f32 %v610, %v753
      %v761 = vsub.f32 %v612, %v753
      %v762 = vsub.f32 %v615, %v753
      %v763 = vsub.f32 %v617, %v753
      %v764 = vsub.f32 %v620, %v753
      %v765 = vsub.f32 %v622, %v753
      %v766 = vsub.f32 %v625, %v753
      %v767 = vsub.f32 %v627, %v753
      %v768 = vsub.f32 %v630, %v753
      %v769 = vsub.f32 %v632, %v753
      %v770 = vsub.f32 %v635, %v753
      %v771 = vsub.f32 %v637, %v753
      %v772 = vsub.f32 %v640, %v753
      %v773 = vsub.f32 %v642, %v753
      %v774 = vsub.f32 %v645, %v753
      %v775 = vsub.f32 %v647, %v753
      %v776 = vsub.f32 %v650, %v753
      %v777 = vsub.f32 %v652, %v753
      %v778 = vsub.f32 %v655, %v753
      %v779 = vsub.f32 %v657, %v753
      %v780 = vsub.f32 %v660, %v753
      %v781 = vsub.f32 %v662, %v753
      %v782 = vsub.f32 %v665, %v753
      %v783 = vsub.f32 %v667, %v753
      %v784 = vsub.f32 %v670, %v753
      %v785 = vsub.f32 %v672, %v753
      %v786 = vmul.f32 %v754, %v754
      %v787 = vmul.f32 %v755, %v755
      %v788 = vmul.f32 %v756, %v756
      %v789 = vmul.f32 %v757, %v757
      %v790 = vmul.f32 %v758, %v758
      %v791 = vmul.f32 %v759, %v759
      %v792 = vmul.f32 %v760, %v760
      %v793 = vmul.f32 %v761, %v761
      %v794 = vmul.f32 %v762, %v762
      %v795 = vmul.f32 %v763, %v763
      %v796 = vmul.f32 %v764, %v764
      %v797 = vmul.f32 %v765, %v765
      %v798 = vmul.f32 %v766, %v766
      %v799 = vmul.f32 %v767, %v767
      %v800 = vmul.f32 %v768, %v768
      %v801 = vmul.f32 %v769, %v769
      %v802 = vmul.f32 %v770, %v770
      %v803 = vmul.f32 %v771, %v771
      %v804 = vmul.f32 %v772, %v772
      %v805 = vmul.f32 %v773, %v773
      %v806 = vmul.f32 %v774, %v774
      %v807 = vmul.f32 %v775, %v775
      %v808 = vmul.f32 %v776, %v776
      %v809 = vmul.f32 %v777, %v777
      %v810 = vmul.f32 %v778, %v778
      %v811 = vmul.f32 %v779, %v779
      %v812 = vmul.f32 %v780, %v780
      %v813 = vmul.f32 %v781, %v781
      %v814 = vmul.f32 %v782, %v782
      %v815 = vmul.f32 %v783, %v783
      %v816 = vmul.f32 %v784, %v784
      %v817 = vmul.f32 %v785, %v785
      %v818 = vsel %vm676, %v786, 0.0
      %v819 = vsel %vm676, %v787, 0.0
      %v820 = vadd.f32 %v818, %v819
      %v821 = vsel %vm676, %v788, 0.0
      %v822 = vadd.f32 %v820, %v821
      %v823 = vsel %vm676, %v789, 0.0
      %v824 = vadd.f32 %v822, %v823
      %v825 = vsel %vm676, %v790, 0.0
      %v826 = vadd.f32 %v824, %v825
      %v827 = vsel %vm676, %v791, 0.0
      %v828 = vadd.f32 %v826, %v827
      %v829 = vsel %vm676, %v792, 0.0
      %v830 = vadd.f32 %v828, %v829
      %v831 = vsel %vm676, %v793, 0.0
      %v832 = vadd.f32 %v830, %v831
      %v833 = vsel %vm676, %v794, 0.0
      %v834 = vadd.f32 %v832, %v833
      %v835 = vsel %vm676, %v795, 0.0
      %v836 = vadd.f32 %v834, %v835
      %v837 = vsel %vm676, %v796, 0.0
      %v838 = vadd.f32 %v836, %v837
      %v839 = vsel %vm676, %v797, 0.0
      %v840 = vadd.f32 %v838, %v839
      %v841 = vsel %vm676, %v798, 0.0
      %v842 = vadd.f32 %v840, %v841
      %v843 = vsel %vm676, %v799, 0.0
      %v844 = vadd.f32 %v842, %v843
      %v845 = vsel %vm676, %v800, 0.0
      %v846 = vadd.f32 %v844, %v845
      %v847 = vsel %vm676, %v801, 0.0
      %v848 = vadd.f32 %v846, %v847
      %v849 = vsel %vm676, %v802, 0.0
      %v850 = vadd.f32 %v848, %v849
      %v851 = vsel %vm676, %v803, 0.0
      %v852 = vadd.f32 %v850, %v851
      %v853 = vsel %vm676, %v804, 0.0
      %v854 = vadd.f32 %v852, %v853
      %v855 = vsel %vm676, %v805, 0.0
      %v856 = vadd.f32 %v854, %v855
      %v857 = vsel %vm676, %v806, 0.0
      %v858 = vadd.f32 %v856, %v857
      %v859 = vsel %vm676, %v807, 0.0
      %v860 = vadd.f32 %v858, %v859
      %v861 = vsel %vm676, %v808, 0.0
      %v862 = vadd.f32 %v860, %v861
      %v863 = vsel %vm676, %v809, 0.0
      %v864 = vadd.f32 %v862, %v863
      %v865 = vsel %vm676, %v810, 0.0
      %v866 = vadd.f32 %v864, %v865
      %v867 = vsel %vm676, %v811, 0.0
      %v868 = vadd.f32 %v866, %v867
      %v869 = vsel %vm676, %v812, 0.0
      %v870 = vadd.f32 %v868, %v869
      %v871 = vsel %vm676, %v813, 0.0
      %v872 = vadd.f32 %v870, %v871
      %v873 = vsel %vm676, %v814, 0.0
      %v874 = vadd.f32 %v872, %v873
      %v875 = vsel %vm676, %v815, 0.0
      %v876 = vadd.f32 %v874, %v875
      %v877 = vsel %vm676, %v816, 0.0
      %v878 = vadd.f32 %v876, %v877
      %v879 = vsel %vm676, %v817, 0.0
      %v880 = vadd.f32 %v878, %v879
      %v881 = vrot.slane %v880, 4
      %v882 = vadd.f32 %v880, %v881
      %v883 = vrot.slane %v882, 2
      %v884 = vadd.f32 %v882, %v883
      %v885 = vrot.slane %v884, 1
      %v886 = vadd.f32 %v884, %v885
      %v887 = vmul.f32 %v886, %v752
      %v888 = vadd.f32 %v887, 1e-05
      %v889 = vrsqrt.pop %v888
      %v890 = vmul.f32 %v889, %v888
      %v891 = vmul.f32 %v890, %v889
      %v892 = vmul.f32 0.5, %v891
      %v893 = vsub.f32 1.5, %v892
      %v894 = vmul.f32 %v889, %v893
      %vm895 = vweird.f32 %v888
      %vm896 = vweird.f32 %v889
      %vm897 = vmor %vm895, %vm896
      %v898 = vsel %vm897, %v889, %v894
      %v899 = vmul.f32 %v754, %v898
      %v900 = vmul.f32 %v755, %v898
      %v901 = vmul.f32 %v756, %v898
      %v902 = vmul.f32 %v757, %v898
      %v903 = vmul.f32 %v758, %v898
      %v904 = vmul.f32 %v759, %v898
      %v905 = vmul.f32 %v760, %v898
      %v906 = vmul.f32 %v761, %v898
      %v907 = vmul.f32 %v762, %v898
      %v908 = vmul.f32 %v763, %v898
      %v909 = vmul.f32 %v764, %v898
      %v910 = vmul.f32 %v765, %v898
      %v911 = vmul.f32 %v766, %v898
      %v912 = vmul.f32 %v767, %v898
      %v913 = vmul.f32 %v768, %v898
      %v914 = vmul.f32 %v769, %v898
      %v915 = vmul.f32 %v770, %v898
      %v916 = vmul.f32 %v771, %v898
      %v917 = vmul.f32 %v772, %v898
      %v918 = vmul.f32 %v773, %v898
      %v919 = vmul.f32 %v774, %v898
      %v920 = vmul.f32 %v775, %v898
      %v921 = vmul.f32 %v776, %v898
      %v922 = vmul.f32 %v777, %v898
      %v923 = vmul.f32 %v778, %v898
      %v924 = vmul.f32 %v779, %v898
      %v925 = vmul.f32 %v780, %v898
      %v926 = vmul.f32 %v781, %v898
      %v927 = vmul.f32 %v782, %v898
      %v928 = vmul.f32 %v783, %v898
      %v929 = vmul.f32 %v784, %v898
      %v930 = vmul.f32 %v785, %v898
      %v932 = vperm.slane %v674, 0
      %v934 = vmul.f32 %v899, %v932
      %v935 = vmul.f32 %v900, %v932
      %v936 = vmul.f32 %v901, %v932
      %v937 = vmul.f32 %v902, %v932
      %v938 = vmul.f32 %v903, %v932
      %v939 = vmul.f32 %v904, %v932
      %v940 = vmul.f32 %v905, %v932
      %v941 = vmul.f32 %v906, %v932
      %v942 = vmul.f32 %v907, %v932
      %v943 = vmul.f32 %v908, %v932
      %v944 = vmul.f32 %v909, %v932
      %v945 = vmul.f32 %v910, %v932
      %v946 = vmul.f32 %v911, %v932
      %v947 = vmul.f32 %v912, %v932
      %v948 = vmul.f32 %v913, %v932
      %v949 = vmul.f32 %v914, %v932
      %v950 = vmul.f32 %v915, %v932
      %v951 = vmul.f32 %v916, %v932
      %v952 = vmul.f32 %v917, %v932
      %v953 = vmul.f32 %v918, %v932
      %v954 = vmul.f32 %v919, %v932
      %v955 = vmul.f32 %v920, %v932
      %v956 = vmul.f32 %v921, %v932
      %v957 = vmul.f32 %v922, %v932
      %v958 = vmul.f32 %v923, %v932
      %v959 = vmul.f32 %v924, %v932
      %v960 = vmul.f32 %v925, %v932
      %v961 = vmul.f32 %v926, %v932
      %v962 = vmul.f32 %v927, %v932
      %v963 = vmul.f32 %v928, %v932
      %v964 = vmul.f32 %v929, %v932
      %v965 = vmul.f32 %v930, %v932
      %v967 = vperm.slane %v675, 0
      %v969 = vadd.f32 %v934, %v967
      %v970 = vadd.f32 %v935, %v967
      %v971 = vadd.f32 %v936, %v967
      %v972 = vadd.f32 %v937, %v967
      %v973 = vadd.f32 %v938, %v967
      %v974 = vadd.f32 %v939, %v967
      %v975 = vadd.f32 %v940, %v967
      %v976 = vadd.f32 %v941, %v967
      %v977 = vadd.f32 %v942, %v967
      %v978 = vadd.f32 %v943, %v967
      %v979 = vadd.f32 %v944, %v967
      %v980 = vadd.f32 %v945, %v967
      %v981 = vadd.f32 %v946, %v967
      %v982 = vadd.f32 %v947, %v967
      %v983 = vadd.f32 %v948, %v967
      %v984 = vadd.f32 %v949, %v967
      %v985 = vadd.f32 %v950, %v967
      %v986 = vadd.f32 %v951, %v967
      %v987 = vadd.f32 %v952, %v967
      %v988 = vadd.f32 %v953, %v967
      %v989 = vadd.f32 %v954, %v967
      %v990 = vadd.f32 %v955, %v967
      %v991 = vadd.f32 %v956, %v967
      %v992 = vadd.f32 %v957, %v967
      %v993 = vadd.f32 %v958, %v967
      %v994 = vadd.f32 %v959, %v967
      %v995 = vadd.f32 %v960, %v967
      %v996 = vadd.f32 %v961, %v967
      %v997 = vadd.f32 %v962, %v967
      %v998 = vadd.f32 %v963, %v967
      %v999 = vadd.f32 %v964, %v967
      %v1000 = vadd.f32 %v965, %v967
      %v1001 = vmul.f32 %v969, 0.01
      %v1002 = vmul.f32 %v970, 0.01
      %v1003 = vmul.f32 %v971, 0.01
      %v1004 = vmul.f32 %v972, 0.01
      %v1005 = vmul.f32 %v973, 0.01
      %v1006 = vmul.f32 %v974, 0.01
      %v1007 = vmul.f32 %v975, 0.01
      %v1008 = vmul.f32 %v976, 0.01
      %v1009 = vmul.f32 %v977, 0.01
      %v1010 = vmul.f32 %v978, 0.01
      %v1011 = vmul.f32 %v979, 0.01
      %v1012 = vmul.f32 %v980, 0.01
      %v1013 = vmul.f32 %v981, 0.01
      %v1014 = vmul.f32 %v982, 0.01
      %v1015 = vmul.f32 %v983, 0.01
      %v1016 = vmul.f32 %v984, 0.01
      %v1017 = vmul.f32 %v985, 0.01
      %v1018 = vmul.f32 %v986, 0.01
      %v1019 = vmul.f32 %v987, 0.01
      %v1020 = vmul.f32 %v988, 0.01
      %v1021 = vmul.f32 %v989, 0.01
      %v1022 = vmul.f32 %v990, 0.01
      %v1023 = vmul.f32 %v991, 0.01
      %v1024 = vmul.f32 %v992, 0.01
      %v1025 = vmul.f32 %v993, 0.01
      %v1026 = vmul.f32 %v994, 0.01
      %v1027 = vmul.f32 %v995, 0.01
      %v1028 = vmul.f32 %v996, 0.01
      %v1029 = vmul.f32 %v997, 0.01
      %v1030 = vmul.f32 %v998, 0.01
      %v1031 = vmul.f32 %v999, 0.01
      %v1032 = vmul.f32 %v1000, 0.01
      %v1033 = vmax.f32 %v969, %v1001
      %v1034 = vmax.f32 %v970, %v1002
      %v1035 = vmax.f32 %v971, %v1003
      %v1036 = vmax.f32 %v972, %v1004
      %v1037 = vmax.f32 %v973, %v1005
      %v1038 = vmax.f32 %v974, %v1006
      %v1039 = vmax.f32 %v975, %v1007
      %v1040 = vmax.f32 %v976, %v1008
      %v1041 = vmax.f32 %v977, %v1009
      %v1042 = vmax.f32 %v978, %v1010
      %v1043 = vmax.f32 %v979, %v1011
      %v1044 = vmax.f32 %v980, %v1012
      %v1045 = vmax.f32 %v981, %v1013
      %v1046 = vmax.f32 %v982, %v1014
      %v1047 = vmax.f32 %v983, %v1015
      %v1048 = vmax.f32 %v984, %v1016
      %v1049 = vmax.f32 %v985, %v1017
      %v1050 = vmax.f32 %v986, %v1018
      %v1051 = vmax.f32 %v987, %v1019
      %v1052 = vmax.f32 %v988, %v1020
      %v1053 = vmax.f32 %v989, %v1021
      %v1054 = vmax.f32 %v990, %v1022
      %v1055 = vmax.f32 %v991, %v1023
      %v1056 = vmax.f32 %v992, %v1024
      %v1057 = vmax.f32 %v993, %v1025
      %v1058 = vmax.f32 %v994, %v1026
      %v1059 = vmax.f32 %v995, %v1027
      %v1060 = vmax.f32 %v996, %v1028
      %v1061 = vmax.f32 %v997, %v1029
      %v1062 = vmax.f32 %v998, %v1030
      %v1063 = vmax.f32 %v999, %v1031
      %v1064 = vmax.f32 %v1000, %v1032
      %1065 = vst.msk [vmem:[%s197] sm:$0xff] %vm676, %v1033
      %1066 = vst.msk [vmem:[%s197 + $0x8] sm:$0xff] %vm676, %v1034
      %1067 = vst.msk [vmem:[%s197 + $0x10] sm:$0xff] %vm676, %v1035
      %1068 = vst.msk [vmem:[%s197 + $0x18] sm:$0xff] %vm676, %v1036
      %1069 = vst.msk [vmem:[%s197 + $0x20] sm:$0xff] %vm676, %v1037
      %1070 = vst.msk [vmem:[%s197 + $0x28] sm:$0xff] %vm676, %v1038
      %1071 = vst.msk [vmem:[%s197 + $0x30] sm:$0xff] %vm676, %v1039
      %1072 = vst.msk [vmem:[%s197 + $0x38] sm:$0xff] %vm676, %v1040
      %1073 = vst.msk [vmem:[%s197 + $0x40] sm:$0xff] %vm676, %v1041
      %1074 = vst.msk [vmem:[%s197 + $0x48] sm:$0xff] %vm676, %v1042
      %1075 = vst.msk [vmem:[%s197 + $0x50] sm:$0xff] %vm676, %v1043
      %1076 = vst.msk [vmem:[%s197 + $0x58] sm:$0xff] %vm676, %v1044
      %1077 = vst.msk [vmem:[%s197 + $0x60] sm:$0xff] %vm676, %v1045
      %1078 = vst.msk [vmem:[%s197 + $0x68] sm:$0xff] %vm676, %v1046
      %1079 = vst.msk [vmem:[%s197 + $0x70] sm:$0xff] %vm676, %v1047
      %1080 = vst.msk [vmem:[%s197 + $0x78] sm:$0xff] %vm676, %v1048
      %1081 = vst.msk [vmem:[%s197 + $0x80] sm:$0xff] %vm676, %v1049
      %1082 = vst.msk [vmem:[%s197 + $0x88] sm:$0xff] %vm676, %v1050
      %1083 = vst.msk [vmem:[%s197 + $0x90] sm:$0xff] %vm676, %v1051
      %1084 = vst.msk [vmem:[%s197 + $0x98] sm:$0xff] %vm676, %v1052
      %1085 = vst.msk [vmem:[%s197 + $0xa0] sm:$0xff] %vm676, %v1053
      %1086 = vst.msk [vmem:[%s197 + $0xa8] sm:$0xff] %vm676, %v1054
      %1087 = vst.msk [vmem:[%s197 + $0xb0] sm:$0xff] %vm676, %v1055
      %1088 = vst.msk [vmem:[%s197 + $0xb8] sm:$0xff] %vm676, %v1056
      %1089 = vst.msk [vmem:[%s197 + $0xc0] sm:$0xff] %vm676, %v1057
      %1090 = vst.msk [vmem:[%s197 + $0xc8] sm:$0xff] %vm676, %v1058
      %1091 = vst.msk [vmem:[%s197 + $0xd0] sm:$0xff] %vm676, %v1059
      %1092 = vst.msk [vmem:[%s197 + $0xd8] sm:$0xff] %vm676, %v1060
      %1093 = vst.msk [vmem:[%s197 + $0xe0] sm:$0xff] %vm676, %v1061
      %1094 = vst.msk [vmem:[%s197 + $0xe8] sm:$0xff] %vm676, %v1062
      %1095 = vst.msk [vmem:[%s197 + $0xf0] sm:$0xff] %vm676, %v1063
      %1096 = vst.msk [vmem:[%s197 + $0xf8] sm:$0xff] %vm676, %v1064
      %p1097 = scmp.lt.s32.totalorder %s15, 1
      %s1098 = scalar_select %p1097, %s15, 1
      %s1099 = smul.addr %s1098, 32
      %s1100 = smul.addr %s1099, 8
      %s1101 = scalar_lea.vmem %s4, %s1100
      // Predicated region
      $region37: #{forward.26} parent=35 // pred_check
        %p1102 = pneg %p122
      $region38: #{forward.26} parent=35 // pred_check_branch
        %1104 = sbr.rel (%p1102) target = $region40
      $region39: #{forward.26} parent=35 // pred_region
        _
      $region40: #{forward.26} parent=35 // pred_fallthru
        _
    $region36: #{forward.26} parent=5 // pred_fallthru
      _
    %p1105 = scmp.le.s32.totalorder 2, %s10
    // Predicated region
    $region41: #{forward.26} parent=5 // pred_check
      %p1106 = pneg %p1105
    $region42: #{forward.26} parent=5 // pred_check_branch
      %1108 = sbr.rel (%p1106) target = $region44
    $region43: #{forward.26} parent=5 // pred_region
      %s1109 = ssub.s32 %s10, 2
      // Predicated region
      $region45: #{forward.26} parent=43 // pred_check
        %p1110 = pneg %p128
      $region46: #{forward.26} parent=43 // pred_check_branch
        %1112 = sbr.rel (%p1110) target = $region48
      $region47: #{forward.26} parent=43 // pred_region
        %p1113 = scmp.lt.s32.totalorder %s16, 1
        %s1114 = scalar_select %p1113, %s16, 1
        %s1115 = smul.addr %s1114, 32
        %s1116 = smul.addr %s1115, 8
        %s1117 = scalar_lea.vmem %s4, %s1116
      $region48: #{forward.26} parent=43 // pred_fallthru
        _
    $region44: #{forward.26} parent=5 // pred_fallthru
      _
  $region6: #{forward.26} parent=0 // loop_footer
    %s14 = sadd.s32 1, %s10
  $region7: #{forward.26} parent=0 // loop_footer_branch
    %9 = sbr.rel target = $region3
  $region8: #{forward.26} parent=0 // loop_exit
    _

</llo_original>
